<compile_context>
chip_gen: v6e
topology: v6e:2x2x1
jax: 0.10.0
libtpu: 0.0.40
codegen_flags: <defaults>
</compile_context>

<pallas_src>
import functools

import jax
import jax.numpy as jnp
import numpy as np
from jax.experimental import pallas as pl
from jax.experimental.pallas import tpu as pltpu


def _gru_fc_kernel(x_ref,
                   wih0_ref, whh0_ref, bih0_ref, bhh0_ref,
                   wih1_ref, whh1_ref, bih1_ref, bhh1_ref,
                   wfc_ref, bfc_ref,
                   out_ref,
                   *, hidden_size, seq_length):
    """Whole forward pass in one kernel: 2-layer GRU recurrence + fused fc.

    x_ref    : (T, B, I)            time-major input
    wih*_ref : (3, in, H)           per-gate input weights (transposed)
    whh*_ref : (3, H, H)            per-gate hidden weights (transposed)
    b*_ref   : (3, 1, H)            per-gate biases
    wfc_ref  : (T, H, C)            fc weight, per-timestep slab
    bfc_ref  : (1, C)
    out_ref  : (B, C)
    """
    H = hidden_size
    T = seq_length
    B = x_ref.shape[1]
    I = x_ref.shape[2]
    C = out_ref.shape[1]
    f32 = jnp.float32

    # Per-gate weights / biases.  NOTE: keeping them resident as values is fine
    # at H=32 (a few vregs total); for H >= 128 read weight tiles from the refs
    # inside the unrolled loop instead to avoid register spills.
    wih0 = [wih0_ref[g] for g in range(3)]          # (I, H) each
    whh0 = [whh0_ref[g] for g in range(3)]          # (H, H) each
    wih1 = [wih1_ref[g] for g in range(3)]          # (H, H) each
    whh1 = [whh1_ref[g] for g in range(3)]          # (H, H) each
    b0_r = bih0_ref[0] + bhh0_ref[0]                # (1, H)
    b0_z = bih0_ref[1] + bhh0_ref[1]
    b0_in, b0_hn = bih0_ref[2], bhh0_ref[2]
    b1_r = bih1_ref[0] + bhh1_ref[0]
    b1_z = bih1_ref[1] + bhh1_ref[1]
    b1_in, b1_hn = bih1_ref[2], bhh1_ref[2]

    def dot(a, b):
        return jnp.dot(a, b, preferred_element_type=f32)

    # ---- Hoisted layer-0 input projection (no hidden-state dependence) ------
    # gx0_* : (T, B, H).  For I == 1 a broadcast multiply replaces a K=1 matmul.
    x_all = x_ref[...]                               # (T, B, I)
    if I == 1:
        gx0_r = x_all * wih0[0][None] + b0_r
        gx0_z = x_all * wih0[1][None] + b0_z
        gx0_n = x_all * wih0[2][None] + b0_in
    else:
        xf = x_all.reshape(T * B, I)
        gx0_r = (dot(xf, wih0[0]) + b0_r).reshape(T, B, H)
        gx0_z = (dot(xf, wih0[1]) + b0_z).reshape(T, B, H)
        gx0_n = (dot(xf, wih0[2]) + b0_in).reshape(T, B, H)

    h0 = jnp.zeros((B, H), f32)                      # PyTorch h0 = zeros
    h1 = jnp.zeros((B, H), f32)
    acc = jnp.zeros((B, C), f32)                     # fc accumulator

    # ---- Fully unrolled T-step recurrence (T static & small) ----------------
    for t in range(T):
        # layer 0: only the hidden projection sits on the serial path
        r0 = jax.nn.sigmoid(gx0_r[t] + dot(h0, whh0[0]))
        z0 = jax.nn.sigmoid(gx0_z[t] + dot(h0, whh0[1]))
        n0 = jnp.tanh(gx0_n[t] + r0 * (dot(h0, whh0[2]) + b0_hn))
        h0 = (1.0 - z0) * n0 + z0 * h0
        # layer 1
        r1 = jax.nn.sigmoid(dot(h0, wih1[0]) + dot(h1, whh1[0]) + b1_r)
        z1 = jax.nn.sigmoid(dot(h0, wih1[1]) + dot(h1, whh1[1]) + b1_z)
        n1 = jnp.tanh(dot(h0, wih1[2]) + b1_in + r1 * (dot(h1, whh1[2]) + b1_hn))
        h1 = (1.0 - z1) * n1 + z1 * h1
        # fc contribution: MXU dot, off the recurrence dependency chain
        acc = acc + dot(h1, wfc_ref[t])

    out_ref[...] = acc + bfc_ref[...]


def rnn_gru_forward(x, params, *, hidden_size, seq_length, n_classes):
    """Pallas forward matching RNN_GRU.forward (x: (B, T, input_size))."""
    B, T, I = x.shape
    assert T == seq_length
    H = hidden_size
    C = n_classes

    # Pad batch to a multiple of 8 sublanes (pad rows are discarded).
    BP = max(8, ((B + 7) // 8) * 8)
    x = x.astype(jnp.float32)
    if BP != B:
        x = jnp.pad(x, ((0, BP - B), (0, 0), (0, 0)))
    x_tm = jnp.transpose(x, (1, 0, 2))                        # (T, BP, I)

    def gates_T(w):   # (3H, in) -> (3, in, H), gate order r, z, n
        return jnp.stack([w[g * H:(g + 1) * H, :].T for g in range(3)], axis=0)

    def gates_b(b):   # (3H,) -> (3, 1, H)
        return b.reshape(3, 1, H)

    inputs = [
        x_tm,
        gates_T(params["w_ih_l0"]), gates_T(params["w_hh_l0"]),
        gates_b(params["b_ih_l0"]), gates_b(params["b_hh_l0"]),
        gates_T(params["w_ih_l1"]), gates_T(params["w_hh_l1"]),
        gates_b(params["b_ih_l1"]), gates_b(params["b_hh_l1"]),
        # (C, T*H) -> (C, T, H) -> (T, H, C)   (preserves t-major flattening)
        jnp.transpose(params["w_fc"].reshape(C, T, H), (1, 2, 0)),
        params["b_fc"][None, :],                               # (1, C)
    ]
    inputs = [a.astype(jnp.float32) for a in inputs]

    # TODO(synk): for large T / C, stream x and wfc over a T grid axis with
    # BlockSpecs (accumulator output spec, "arbitrary" semantics) instead of
    # keeping everything VMEM-resident; not needed at these shapes.
    kernel = functools.partial(_gru_fc_kernel, hidden_size=H, seq_length=T)
    vmem_spec = pl.BlockSpec(memory_space=pltpu.MemorySpace.VMEM)
    out = pl.pallas_call(
        kernel,
        out_shape=jax.ShapeDtypeStruct((BP, C), jnp.float32),
        in_specs=[vmem_spec] * len(inputs),
        out_specs=vmem_spec,
    )(*inputs)
    return out[:B]


def _gru_ref(x, params, *, hidden_size):
    """Pure-JAX reference (PyTorch nn.GRU semantics, gate order r,z,n)."""
    H = hidden_size
    B, T, _ = x.shape
    hp = jax.lax.Precision.HIGHEST

    def cell(x_t, h, w_ih, w_hh, b_ih, b_hh):
        gx = jnp.dot(x_t, w_ih.T, precision=hp) + b_ih
        gh = jnp.dot(h, w_hh.T, precision=hp) + b_hh
        r = jax.nn.sigmoid(gx[:, :H] + gh[:, :H])
        z = jax.nn.sigmoid(gx[:, H:2 * H] + gh[:, H:2 * H])
        n = jnp.tanh(gx[:, 2 * H:] + r * gh[:, 2 * H:])
        return (1.0 - z) * n + z * h

    h0 = jnp.zeros((B, H), jnp.float32)
    h1 = jnp.zeros((B, H), jnp.float32)
    outs = []
    for t in range(T):
        h0 = cell(x[:, t, :], h0, params["w_ih_l0"], params["w_hh_l0"],
                  params["b_ih_l0"], params["b_hh_l0"])
        h1 = cell(h0, h1, params["w_ih_l1"], params["w_hh_l1"],
                  params["b_ih_l1"], params["b_hh_l1"])
        outs.append(h1)
    flat = jnp.stack(outs, axis=1).reshape(B, T * H)
    return jnp.dot(flat, params["w_fc"].T, precision=hp) + params["b_fc"]


def _init_params(key, *, input_size, hidden_size, seq_length, n_classes):
    """Deterministic init, same shapes / uniform(-1/sqrt(H), 1/sqrt(H)) as PyTorch."""
    H = hidden_size
    k = 1.0 / np.sqrt(H)
    names_shapes = [
        ("w_ih_l0", (3 * H, input_size)),
        ("w_hh_l0", (3 * H, H)),
        ("b_ih_l0", (3 * H,)),
        ("b_hh_l0", (3 * H,)),
        ("w_ih_l1", (3 * H, H)),
        ("w_hh_l1", (3 * H, H)),
        ("b_ih_l1", (3 * H,)),
        ("b_hh_l1", (3 * H,)),
        ("w_fc", (n_classes, H * seq_length)),
        ("b_fc", (n_classes,)),
    ]
    params = {}
    keys = jax.random.split(key, len(names_shapes))
    for sub, (name, shape) in zip(keys, names_shapes):
        params[name] = jax.random.uniform(
            sub, shape, dtype=jnp.float32, minval=-k, maxval=k)
    return params


if __name__ == "__main__":
    # Small shapes consistent with the module's forward pass.
    batch = 2
    seq_length = 8
    input_size = 1
    hidden_size = 32
    n_classes = 1

    key = jax.random.PRNGKey(0)
    k_x, k_p = jax.random.split(key)
    x = jax.random.normal(k_x, (batch, seq_length, input_size), dtype=jnp.float32)
    params = _init_params(k_p, input_size=input_size, hidden_size=hidden_size,
                          seq_length=seq_length, n_classes=n_classes)

    out = rnn_gru_forward(x, params, hidden_size=hidden_size,
                          seq_length=seq_length, n_classes=n_classes)
    out = jax.block_until_ready(out)

    ref = jax.block_until_ready(_gru_ref(x, params, hidden_size=hidden_size))
    np.testing.assert_allclose(np.asarray(out), np.asarray(ref),
                               rtol=2e-4, atol=2e-4)
    assert out.shape == (batch, n_classes)
    print("KERNEL_OK")
</pallas_src>

<mosaic_0001>
module attributes {stable_mosaic.version = 11 : i64} {
  func.func @_gru_fc_kernel(%arg0: memref<8x8x1xf32, #tpu.memory_space<vmem>>, %arg1: memref<3x1x32xf32, #tpu.memory_space<vmem>>, %arg2: memref<3x32x32xf32, #tpu.memory_space<vmem>>, %arg3: memref<3x1x32xf32, #tpu.memory_space<vmem>>, %arg4: memref<3x1x32xf32, #tpu.memory_space<vmem>>, %arg5: memref<3x32x32xf32, #tpu.memory_space<vmem>>, %arg6: memref<3x32x32xf32, #tpu.memory_space<vmem>>, %arg7: memref<3x1x32xf32, #tpu.memory_space<vmem>>, %arg8: memref<3x1x32xf32, #tpu.memory_space<vmem>>, %arg9: memref<8x32x1xf32, #tpu.memory_space<vmem>>, %arg10: memref<1x1xf32, #tpu.memory_space<vmem>>, %arg11: memref<8x1xf32, #tpu.memory_space<vmem>>) attributes {dimension_semantics = [], scalar_prefetch = 0 : i64, scratch_operands = 0 : i64, tpu.core_type = #tpu.core_type<tc>} {
    %c0 = arith.constant 0 : index
    %c0_0 = arith.constant 0 : index
    %c0_1 = arith.constant 0 : index
    %0 = vector.load %arg1[%c0, %c0_0, %c0_1] : memref<3x1x32xf32, #tpu.memory_space<vmem>>, vector<1x1x32xf32>
    %1 = vector.shape_cast %0 : vector<1x1x32xf32> to vector<1x32xf32>
    %c1 = arith.constant 1 : index
    %c0_2 = arith.constant 0 : index
    %c0_3 = arith.constant 0 : index
    %2 = vector.load %arg1[%c1, %c0_2, %c0_3] : memref<3x1x32xf32, #tpu.memory_space<vmem>>, vector<1x1x32xf32>
    %3 = vector.shape_cast %2 : vector<1x1x32xf32> to vector<1x32xf32>
    %c2 = arith.constant 2 : index
    %c0_4 = arith.constant 0 : index
    %c0_5 = arith.constant 0 : index
    %4 = vector.load %arg1[%c2, %c0_4, %c0_5] : memref<3x1x32xf32, #tpu.memory_space<vmem>>, vector<1x1x32xf32>
    %5 = vector.shape_cast %4 : vector<1x1x32xf32> to vector<1x32xf32>
    %c0_6 = arith.constant 0 : index
    %c0_7 = arith.constant 0 : index
    %c0_8 = arith.constant 0 : index
    %6 = vector.load %arg2[%c0_6, %c0_7, %c0_8] : memref<3x32x32xf32, #tpu.memory_space<vmem>>, vector<1x32x32xf32>
    %7 = vector.shape_cast %6 : vector<1x32x32xf32> to vector<32x32xf32>
    %c1_9 = arith.constant 1 : index
    %c0_10 = arith.constant 0 : index
    %c0_11 = arith.constant 0 : index
    %8 = vector.load %arg2[%c1_9, %c0_10, %c0_11] : memref<3x32x32xf32, #tpu.memory_space<vmem>>, vector<1x32x32xf32>
    %9 = vector.shape_cast %8 : vector<1x32x32xf32> to vector<32x32xf32>
    %c2_12 = arith.constant 2 : index
    %c0_13 = arith.constant 0 : index
    %c0_14 = arith.constant 0 : index
    %10 = vector.load %arg2[%c2_12, %c0_13, %c0_14] : memref<3x32x32xf32, #tpu.memory_space<vmem>>, vector<1x32x32xf32>
    %11 = vector.shape_cast %10 : vector<1x32x32xf32> to vector<32x32xf32>
    %c0_15 = arith.constant 0 : index
    %c0_16 = arith.constant 0 : index
    %c0_17 = arith.constant 0 : index
    %12 = vector.load %arg5[%c0_15, %c0_16, %c0_17] : memref<3x32x32xf32, #tpu.memory_space<vmem>>, vector<1x32x32xf32>
    %13 = vector.shape_cast %12 : vector<1x32x32xf32> to vector<32x32xf32>
    %c1_18 = arith.constant 1 : index
    %c0_19 = arith.constant 0 : index
    %c0_20 = arith.constant 0 : index
    %14 = vector.load %arg5[%c1_18, %c0_19, %c0_20] : memref<3x32x32xf32, #tpu.memory_space<vmem>>, vector<1x32x32xf32>
    %15 = vector.shape_cast %14 : vector<1x32x32xf32> to vector<32x32xf32>
    %c2_21 = arith.constant 2 : index
    %c0_22 = arith.constant 0 : index
    %c0_23 = arith.constant 0 : index
    %16 = vector.load %arg5[%c2_21, %c0_22, %c0_23] : memref<3x32x32xf32, #tpu.memory_space<vmem>>, vector<1x32x32xf32>
    %17 = vector.shape_cast %16 : vector<1x32x32xf32> to vector<32x32xf32>
    %c0_24 = arith.constant 0 : index
    %c0_25 = arith.constant 0 : index
    %c0_26 = arith.constant 0 : index
    %18 = vector.load %arg6[%c0_24, %c0_25, %c0_26] : memref<3x32x32xf32, #tpu.memory_space<vmem>>, vector<1x32x32xf32>
    %19 = vector.shape_cast %18 : vector<1x32x32xf32> to vector<32x32xf32>
    %c1_27 = arith.constant 1 : index
    %c0_28 = arith.constant 0 : index
    %c0_29 = arith.constant 0 : index
    %20 = vector.load %arg6[%c1_27, %c0_28, %c0_29] : memref<3x32x32xf32, #tpu.memory_space<vmem>>, vector<1x32x32xf32>
    %21 = vector.shape_cast %20 : vector<1x32x32xf32> to vector<32x32xf32>
    %c2_30 = arith.constant 2 : index
    %c0_31 = arith.constant 0 : index
    %c0_32 = arith.constant 0 : index
    %22 = vector.load %arg6[%c2_30, %c0_31, %c0_32] : memref<3x32x32xf32, #tpu.memory_space<vmem>>, vector<1x32x32xf32>
    %23 = vector.shape_cast %22 : vector<1x32x32xf32> to vector<32x32xf32>
    %c0_33 = arith.constant 0 : index
    %c0_34 = arith.constant 0 : index
    %c0_35 = arith.constant 0 : index
    %24 = vector.load %arg3[%c0_33, %c0_34, %c0_35] : memref<3x1x32xf32, #tpu.memory_space<vmem>>, vector<1x1x32xf32>
    %25 = vector.shape_cast %24 : vector<1x1x32xf32> to vector<1x32xf32>
    %c0_36 = arith.constant 0 : index
    %c0_37 = arith.constant 0 : index
    %c0_38 = arith.constant 0 : index
    %26 = vector.load %arg4[%c0_36, %c0_37, %c0_38] : memref<3x1x32xf32, #tpu.memory_space<vmem>>, vector<1x1x32xf32>
    %27 = vector.shape_cast %26 : vector<1x1x32xf32> to vector<1x32xf32>
    %28 = arith.addf %25, %27 : vector<1x32xf32>
    %c1_39 = arith.constant 1 : index
    %c0_40 = arith.constant 0 : index
    %c0_41 = arith.constant 0 : index
    %29 = vector.load %arg3[%c1_39, %c0_40, %c0_41] : memref<3x1x32xf32, #tpu.memory_space<vmem>>, vector<1x1x32xf32>
    %30 = vector.shape_cast %29 : vector<1x1x32xf32> to vector<1x32xf32>
    %c1_42 = arith.constant 1 : index
    %c0_43 = arith.constant 0 : index
    %c0_44 = arith.constant 0 : index
    %31 = vector.load %arg4[%c1_42, %c0_43, %c0_44] : memref<3x1x32xf32, #tpu.memory_space<vmem>>, vector<1x1x32xf32>
    %32 = vector.shape_cast %31 : vector<1x1x32xf32> to vector<1x32xf32>
    %33 = arith.addf %30, %32 : vector<1x32xf32>
    %c2_45 = arith.constant 2 : index
    %c0_46 = arith.constant 0 : index
    %c0_47 = arith.constant 0 : index
    %34 = vector.load %arg3[%c2_45, %c0_46, %c0_47] : memref<3x1x32xf32, #tpu.memory_space<vmem>>, vector<1x1x32xf32>
    %35 = vector.shape_cast %34 : vector<1x1x32xf32> to vector<1x32xf32>
    %c2_48 = arith.constant 2 : index
    %c0_49 = arith.constant 0 : index
    %c0_50 = arith.constant 0 : index
    %36 = vector.load %arg4[%c2_48, %c0_49, %c0_50] : memref<3x1x32xf32, #tpu.memory_space<vmem>>, vector<1x1x32xf32>
    %37 = vector.shape_cast %36 : vector<1x1x32xf32> to vector<1x32xf32>
    %c0_51 = arith.constant 0 : index
    %c0_52 = arith.constant 0 : index
    %c0_53 = arith.constant 0 : index
    %38 = vector.load %arg7[%c0_51, %c0_52, %c0_53] : memref<3x1x32xf32, #tpu.memory_space<vmem>>, vector<1x1x32xf32>
    %39 = vector.shape_cast %38 : vector<1x1x32xf32> to vector<1x32xf32>
    %c0_54 = arith.constant 0 : index
    %c0_55 = arith.constant 0 : index
    %c0_56 = arith.constant 0 : index
    %40 = vector.load %arg8[%c0_54, %c0_55, %c0_56] : memref<3x1x32xf32, #tpu.memory_space<vmem>>, vector<1x1x32xf32>
    %41 = vector.shape_cast %40 : vector<1x1x32xf32> to vector<1x32xf32>
    %42 = arith.addf %39, %41 : vector<1x32xf32>
    %c1_57 = arith.constant 1 : index
    %c0_58 = arith.constant 0 : index
    %c0_59 = arith.constant 0 : index
    %43 = vector.load %arg7[%c1_57, %c0_58, %c0_59] : memref<3x1x32xf32, #tpu.memory_space<vmem>>, vector<1x1x32xf32>
    %44 = vector.shape_cast %43 : vector<1x1x32xf32> to vector<1x32xf32>
    %c1_60 = arith.constant 1 : index
    %c0_61 = arith.constant 0 : index
    %c0_62 = arith.constant 0 : index
    %45 = vector.load %arg8[%c1_60, %c0_61, %c0_62] : memref<3x1x32xf32, #tpu.memory_space<vmem>>, vector<1x1x32xf32>
    %46 = vector.shape_cast %45 : vector<1x1x32xf32> to vector<1x32xf32>
    %47 = arith.addf %44, %46 : vector<1x32xf32>
    %c2_63 = arith.constant 2 : index
    %c0_64 = arith.constant 0 : index
    %c0_65 = arith.constant 0 : index
    %48 = vector.load %arg7[%c2_63, %c0_64, %c0_65] : memref<3x1x32xf32, #tpu.memory_space<vmem>>, vector<1x1x32xf32>
    %49 = vector.shape_cast %48 : vector<1x1x32xf32> to vector<1x32xf32>
    %c2_66 = arith.constant 2 : index
    %c0_67 = arith.constant 0 : index
    %c0_68 = arith.constant 0 : index
    %50 = vector.load %arg8[%c2_66, %c0_67, %c0_68] : memref<3x1x32xf32, #tpu.memory_space<vmem>>, vector<1x1x32xf32>
    %51 = vector.shape_cast %50 : vector<1x1x32xf32> to vector<1x32xf32>
    %c0_69 = arith.constant 0 : index
    %c0_70 = arith.constant 0 : index
    %c0_71 = arith.constant 0 : index
    %52 = vector.load %arg0[%c0_69, %c0_70, %c0_71] : memref<8x8x1xf32, #tpu.memory_space<vmem>>, vector<8x8x1xf32>
    %53 = vector.shape_cast %1 : vector<1x32xf32> to vector<1x1x32xf32>
    %54 = vector.broadcast %52 : vector<8x8x1xf32> to vector<8x8x32xf32>
    %55 = vector.broadcast %53 : vector<1x1x32xf32> to vector<8x8x32xf32>
    %56 = arith.mulf %54, %55 : vector<8x8x32xf32>
    %57 = vector.shape_cast %28 : vector<1x32xf32> to vector<1x1x32xf32>
    %58 = vector.broadcast %57 : vector<1x1x32xf32> to vector<8x8x32xf32>
    %59 = arith.addf %56, %58 : vector<8x8x32xf32>
    %60 = vector.shape_cast %3 : vector<1x32xf32> to vector<1x1x32xf32>
    %61 = vector.broadcast %52 : vector<8x8x1xf32> to vector<8x8x32xf32>
    %62 = vector.broadcast %60 : vector<1x1x32xf32> to vector<8x8x32xf32>
    %63 = arith.mulf %61, %62 : vector<8x8x32xf32>
    %64 = vector.shape_cast %33 : vector<1x32xf32> to vector<1x1x32xf32>
    %65 = vector.broadcast %64 : vector<1x1x32xf32> to vector<8x8x32xf32>
    %66 = arith.addf %63, %65 : vector<8x8x32xf32>
    %67 = vector.shape_cast %5 : vector<1x32xf32> to vector<1x1x32xf32>
    %68 = vector.broadcast %52 : vector<8x8x1xf32> to vector<8x8x32xf32>
    %69 = vector.broadcast %67 : vector<1x1x32xf32> to vector<8x8x32xf32>
    %70 = arith.mulf %68, %69 : vector<8x8x32xf32>
    %71 = vector.shape_cast %35 : vector<1x32xf32> to vector<1x1x32xf32>
    %72 = vector.broadcast %71 : vector<1x1x32xf32> to vector<8x8x32xf32>
    %73 = arith.addf %70, %72 : vector<8x8x32xf32>
    %cst = arith.constant 0.000000e+00 : f32
    %74 = vector.broadcast %cst : f32 to vector<8x32xf32>
    %cst_72 = arith.constant 0.000000e+00 : f32
    %75 = vector.broadcast %cst_72 : f32 to vector<8x32xf32>
    %cst_73 = arith.constant 0.000000e+00 : f32
    %76 = vector.broadcast %cst_73 : f32 to vector<8x1xf32>
    %77 = vector.extract_strided_slice %59 {offsets = [0, 0, 0], sizes = [1, 8, 32], strides = [1, 1, 1]} : vector<8x8x32xf32> to vector<1x8x32xf32>
    %78 = vector.shape_cast %77 : vector<1x8x32xf32> to vector<8x32xf32>
    %cst_74 = arith.constant dense<0.000000e+00> : vector<8x32xf32>
    %79 = tpu.matmul %74, %7, %cst_74 {dimension_numbers = #tpu.dot_dimension_numbers<[1], [0], [0], [1], [0, 0, 1, 1], [], []>} : vector<8x32xf32>, vector<32x32xf32>, vector<8x32xf32> -> vector<8x32xf32>
    %80 = arith.addf %78, %79 : vector<8x32xf32>
    %81 = arith.negf %80 : vector<8x32xf32>
    %82 = math.exp %81 : vector<8x32xf32>
    %cst_75 = arith.constant 1.000000e+00 : f32
    %83 = vector.broadcast %cst_75 : f32 to vector<8x32xf32>
    %84 = arith.addf %83, %82 : vector<8x32xf32>
    %85 = arith.divf %83, %84 : vector<8x32xf32>
    %86 = vector.extract_strided_slice %66 {offsets = [0, 0, 0], sizes = [1, 8, 32], strides = [1, 1, 1]} : vector<8x8x32xf32> to vector<1x8x32xf32>
    %87 = vector.shape_cast %86 : vector<1x8x32xf32> to vector<8x32xf32>
    %cst_76 = arith.constant dense<0.000000e+00> : vector<8x32xf32>
    %88 = tpu.matmul %74, %9, %cst_76 {dimension_numbers = #tpu.dot_dimension_numbers<[1], [0], [0], [1], [0, 0, 1, 1], [], []>} : vector<8x32xf32>, vector<32x32xf32>, vector<8x32xf32> -> vector<8x32xf32>
    %89 = arith.addf %87, %88 : vector<8x32xf32>
    %90 = arith.negf %89 : vector<8x32xf32>
    %91 = math.exp %90 : vector<8x32xf32>
    %cst_77 = arith.constant 1.000000e+00 : f32
    %92 = vector.broadcast %cst_77 : f32 to vector<8x32xf32>
    %93 = arith.addf %92, %91 : vector<8x32xf32>
    %94 = arith.divf %92, %93 : vector<8x32xf32>
    %95 = vector.extract_strided_slice %73 {offsets = [0, 0, 0], sizes = [1, 8, 32], strides = [1, 1, 1]} : vector<8x8x32xf32> to vector<1x8x32xf32>
    %96 = vector.shape_cast %95 : vector<1x8x32xf32> to vector<8x32xf32>
    %cst_78 = arith.constant dense<0.000000e+00> : vector<8x32xf32>
    %97 = tpu.matmul %74, %11, %cst_78 {dimension_numbers = #tpu.dot_dimension_numbers<[1], [0], [0], [1], [0, 0, 1, 1], [], []>} : vector<8x32xf32>, vector<32x32xf32>, vector<8x32xf32> -> vector<8x32xf32>
    %98 = vector.broadcast %37 : vector<1x32xf32> to vector<8x32xf32>
    %99 = arith.addf %97, %98 : vector<8x32xf32>
    %100 = arith.mulf %85, %99 : vector<8x32xf32>
    %101 = arith.addf %96, %100 : vector<8x32xf32>
    %102 = math.tanh %101 : vector<8x32xf32>
    %cst_79 = arith.constant 1.000000e+00 : f32
    %103 = vector.broadcast %cst_79 : f32 to vector<8x32xf32>
    %104 = arith.subf %103, %94 : vector<8x32xf32>
    %105 = arith.mulf %104, %102 : vector<8x32xf32>
    %106 = arith.mulf %94, %74 : vector<8x32xf32>
    %107 = arith.addf %105, %106 : vector<8x32xf32>
    %cst_80 = arith.constant dense<0.000000e+00> : vector<8x32xf32>
    %108 = tpu.matmul %107, %13, %cst_80 {dimension_numbers = #tpu.dot_dimension_numbers<[1], [0], [0], [1], [0, 0, 1, 1], [], []>} : vector<8x32xf32>, vector<32x32xf32>, vector<8x32xf32> -> vector<8x32xf32>
    %cst_81 = arith.constant dense<0.000000e+00> : vector<8x32xf32>
    %109 = tpu.matmul %75, %19, %cst_81 {dimension_numbers = #tpu.dot_dimension_numbers<[1], [0], [0], [1], [0, 0, 1, 1], [], []>} : vector<8x32xf32>, vector<32x32xf32>, vector<8x32xf32> -> vector<8x32xf32>
    %110 = arith.addf %108, %109 : vector<8x32xf32>
    %111 = vector.broadcast %42 : vector<1x32xf32> to vector<8x32xf32>
    %112 = arith.addf %110, %111 : vector<8x32xf32>
    %113 = arith.negf %112 : vector<8x32xf32>
    %114 = math.exp %113 : vector<8x32xf32>
    %cst_82 = arith.constant 1.000000e+00 : f32
    %115 = vector.broadcast %cst_82 : f32 to vector<8x32xf32>
    %116 = arith.addf %115, %114 : vector<8x32xf32>
    %117 = arith.divf %115, %116 : vector<8x32xf32>
    %cst_83 = arith.constant dense<0.000000e+00> : vector<8x32xf32>
    %118 = tpu.matmul %107, %15, %cst_83 {dimension_numbers = #tpu.dot_dimension_numbers<[1], [0], [0], [1], [0, 0, 1, 1], [], []>} : vector<8x32xf32>, vector<32x32xf32>, vector<8x32xf32> -> vector<8x32xf32>
    %cst_84 = arith.constant dense<0.000000e+00> : vector<8x32xf32>
    %119 = tpu.matmul %75, %21, %cst_84 {dimension_numbers = #tpu.dot_dimension_numbers<[1], [0], [0], [1], [0, 0, 1, 1], [], []>} : vector<8x32xf32>, vector<32x32xf32>, vector<8x32xf32> -> vector<8x32xf32>
    %120 = arith.addf %118, %119 : vector<8x32xf32>
    %121 = vector.broadcast %47 : vector<1x32xf32> to vector<8x32xf32>
    %122 = arith.addf %120, %121 : vector<8x32xf32>
    %123 = arith.negf %122 : vector<8x32xf32>
    %124 = math.exp %123 : vector<8x32xf32>
    %cst_85 = arith.constant 1.000000e+00 : f32
    %125 = vector.broadcast %cst_85 : f32 to vector<8x32xf32>
    %126 = arith.addf %125, %124 : vector<8x32xf32>
    %127 = arith.divf %125, %126 : vector<8x32xf32>
    %cst_86 = arith.constant dense<0.000000e+00> : vector<8x32xf32>
    %128 = tpu.matmul %107, %17, %cst_86 {dimension_numbers = #tpu.dot_dimension_numbers<[1], [0], [0], [1], [0, 0, 1, 1], [], []>} : vector<8x32xf32>, vector<32x32xf32>, vector<8x32xf32> -> vector<8x32xf32>
    %129 = vector.broadcast %49 : vector<1x32xf32> to vector<8x32xf32>
    %130 = arith.addf %128, %129 : vector<8x32xf32>
    %cst_87 = arith.constant dense<0.000000e+00> : vector<8x32xf32>
    %131 = tpu.matmul %75, %23, %cst_87 {dimension_numbers = #tpu.dot_dimension_numbers<[1], [0], [0], [1], [0, 0, 1, 1], [], []>} : vector<8x32xf32>, vector<32x32xf32>, vector<8x32xf32> -> vector<8x32xf32>
    %132 = vector.broadcast %51 : vector<1x32xf32> to vector<8x32xf32>
    %133 = arith.addf %131, %132 : vector<8x32xf32>
    %134 = arith.mulf %117, %133 : vector<8x32xf32>
    %135 = arith.addf %130, %134 : vector<8x32xf32>
    %136 = math.tanh %135 : vector<8x32xf32>
    %cst_88 = arith.constant 1.000000e+00 : f32
    %137 = vector.broadcast %cst_88 : f32 to vector<8x32xf32>
    %138 = arith.subf %137, %127 : vector<8x32xf32>
    %139 = arith.mulf %138, %136 : vector<8x32xf32>
    %140 = arith.mulf %127, %75 : vector<8x32xf32>
    %141 = arith.addf %139, %140 : vector<8x32xf32>
    %c0_89 = arith.constant 0 : index
    %c0_90 = arith.constant 0 : index
    %c0_91 = arith.constant 0 : index
    %142 = vector.load %arg9[%c0_89, %c0_90, %c0_91] : memref<8x32x1xf32, #tpu.memory_space<vmem>>, vector<1x32x1xf32>
    %143 = vector.shape_cast %142 : vector<1x32x1xf32> to vector<32x1xf32>
    %cst_92 = arith.constant dense<0.000000e+00> : vector<8x1xf32>
    %144 = tpu.matmul %141, %143, %cst_92 {dimension_numbers = #tpu.dot_dimension_numbers<[1], [0], [0], [1], [0, 0, 1, 1], [], []>} : vector<8x32xf32>, vector<32x1xf32>, vector<8x1xf32> -> vector<8x1xf32>
    %145 = arith.addf %76, %144 : vector<8x1xf32>
    %146 = vector.extract_strided_slice %59 {offsets = [1, 0, 0], sizes = [1, 8, 32], strides = [1, 1, 1]} : vector<8x8x32xf32> to vector<1x8x32xf32>
    %147 = vector.shape_cast %146 : vector<1x8x32xf32> to vector<8x32xf32>
    %cst_93 = arith.constant dense<0.000000e+00> : vector<8x32xf32>
    %148 = tpu.matmul %107, %7, %cst_93 {dimension_numbers = #tpu.dot_dimension_numbers<[1], [0], [0], [1], [0, 0, 1, 1], [], []>} : vector<8x32xf32>, vector<32x32xf32>, vector<8x32xf32> -> vector<8x32xf32>
    %149 = arith.addf %147, %148 : vector<8x32xf32>
    %150 = arith.negf %149 : vector<8x32xf32>
    %151 = math.exp %150 : vector<8x32xf32>
    %cst_94 = arith.constant 1.000000e+00 : f32
    %152 = vector.broadcast %cst_94 : f32 to vector<8x32xf32>
    %153 = arith.addf %152, %151 : vector<8x32xf32>
    %154 = arith.divf %152, %153 : vector<8x32xf32>
    %155 = vector.extract_strided_slice %66 {offsets = [1, 0, 0], sizes = [1, 8, 32], strides = [1, 1, 1]} : vector<8x8x32xf32> to vector<1x8x32xf32>
    %156 = vector.shape_cast %155 : vector<1x8x32xf32> to vector<8x32xf32>
    %cst_95 = arith.constant dense<0.000000e+00> : vector<8x32xf32>
    %157 = tpu.matmul %107, %9, %cst_95 {dimension_numbers = #tpu.dot_dimension_numbers<[1], [0], [0], [1], [0, 0, 1, 1], [], []>} : vector<8x32xf32>, vector<32x32xf32>, vector<8x32xf32> -> vector<8x32xf32>
    %158 = arith.addf %156, %157 : vector<8x32xf32>
    %159 = arith.negf %158 : vector<8x32xf32>
    %160 = math.exp %159 : vector<8x32xf32>
    %cst_96 = arith.constant 1.000000e+00 : f32
    %161 = vector.broadcast %cst_96 : f32 to vector<8x32xf32>
    %162 = arith.addf %161, %160 : vector<8x32xf32>
    %163 = arith.divf %161, %162 : vector<8x32xf32>
    %164 = vector.extract_strided_slice %73 {offsets = [1, 0, 0], sizes = [1, 8, 32], strides = [1, 1, 1]} : vector<8x8x32xf32> to vector<1x8x32xf32>
    %165 = vector.shape_cast %164 : vector<1x8x32xf32> to vector<8x32xf32>
    %cst_97 = arith.constant dense<0.000000e+00> : vector<8x32xf32>
    %166 = tpu.matmul %107, %11, %cst_97 {dimension_numbers = #tpu.dot_dimension_numbers<[1], [0], [0], [1], [0, 0, 1, 1], [], []>} : vector<8x32xf32>, vector<32x32xf32>, vector<8x32xf32> -> vector<8x32xf32>
    %167 = vector.broadcast %37 : vector<1x32xf32> to vector<8x32xf32>
    %168 = arith.addf %166, %167 : vector<8x32xf32>
    %169 = arith.mulf %154, %168 : vector<8x32xf32>
    %170 = arith.addf %165, %169 : vector<8x32xf32>
    %171 = math.tanh %170 : vector<8x32xf32>
    %cst_98 = arith.constant 1.000000e+00 : f32
    %172 = vector.broadcast %cst_98 : f32 to vector<8x32xf32>
    %173 = arith.subf %172, %163 : vector<8x32xf32>
    %174 = arith.mulf %173, %171 : vector<8x32xf32>
    %175 = arith.mulf %163, %107 : vector<8x32xf32>
    %176 = arith.addf %174, %175 : vector<8x32xf32>
    %cst_99 = arith.constant dense<0.000000e+00> : vector<8x32xf32>
    %177 = tpu.matmul %176, %13, %cst_99 {dimension_numbers = #tpu.dot_dimension_numbers<[1], [0], [0], [1], [0, 0, 1, 1], [], []>} : vector<8x32xf32>, vector<32x32xf32>, vector<8x32xf32> -> vector<8x32xf32>
    %cst_100 = arith.constant dense<0.000000e+00> : vector<8x32xf32>
    %178 = tpu.matmul %141, %19, %cst_100 {dimension_numbers = #tpu.dot_dimension_numbers<[1], [0], [0], [1], [0, 0, 1, 1], [], []>} : vector<8x32xf32>, vector<32x32xf32>, vector<8x32xf32> -> vector<8x32xf32>
    %179 = arith.addf %177, %178 : vector<8x32xf32>
    %180 = vector.broadcast %42 : vector<1x32xf32> to vector<8x32xf32>
    %181 = arith.addf %179, %180 : vector<8x32xf32>
    %182 = arith.negf %181 : vector<8x32xf32>
    %183 = math.exp %182 : vector<8x32xf32>
    %cst_101 = arith.constant 1.000000e+00 : f32
    %184 = vector.broadcast %cst_101 : f32 to vector<8x32xf32>
    %185 = arith.addf %184, %183 : vector<8x32xf32>
    %186 = arith.divf %184, %185 : vector<8x32xf32>
    %cst_102 = arith.constant dense<0.000000e+00> : vector<8x32xf32>
    %187 = tpu.matmul %176, %15, %cst_102 {dimension_numbers = #tpu.dot_dimension_numbers<[1], [0], [0], [1], [0, 0, 1, 1], [], []>} : vector<8x32xf32>, vector<32x32xf32>, vector<8x32xf32> -> vector<8x32xf32>
    %cst_103 = arith.constant dense<0.000000e+00> : vector<8x32xf32>
    %188 = tpu.matmul %141, %21, %cst_103 {dimension_numbers = #tpu.dot_dimension_numbers<[1], [0], [0], [1], [0, 0, 1, 1], [], []>} : vector<8x32xf32>, vector<32x32xf32>, vector<8x32xf32> -> vector<8x32xf32>
    %189 = arith.addf %187, %188 : vector<8x32xf32>
    %190 = vector.broadcast %47 : vector<1x32xf32> to vector<8x32xf32>
    %191 = arith.addf %189, %190 : vector<8x32xf32>
    %192 = arith.negf %191 : vector<8x32xf32>
    %193 = math.exp %192 : vector<8x32xf32>
    %cst_104 = arith.constant 1.000000e+00 : f32
    %194 = vector.broadcast %cst_104 : f32 to vector<8x32xf32>
    %195 = arith.addf %194, %193 : vector<8x32xf32>
    %196 = arith.divf %194, %195 : vector<8x32xf32>
    %cst_105 = arith.constant dense<0.000000e+00> : vector<8x32xf32>
    %197 = tpu.matmul %176, %17, %cst_105 {dimension_numbers = #tpu.dot_dimension_numbers<[1], [0], [0], [1], [0, 0, 1, 1], [], []>} : vector<8x32xf32>, vector<32x32xf32>, vector<8x32xf32> -> vector<8x32xf32>
    %198 = vector.broadcast %49 : vector<1x32xf32> to vector<8x32xf32>
    %199 = arith.addf %197, %198 : vector<8x32xf32>
    %cst_106 = arith.constant dense<0.000000e+00> : vector<8x32xf32>
    %200 = tpu.matmul %141, %23, %cst_106 {dimension_numbers = #tpu.dot_dimension_numbers<[1], [0], [0], [1], [0, 0, 1, 1], [], []>} : vector<8x32xf32>, vector<32x32xf32>, vector<8x32xf32> -> vector<8x32xf32>
    %201 = vector.broadcast %51 : vector<1x32xf32> to vector<8x32xf32>
    %202 = arith.addf %200, %201 : vector<8x32xf32>
    %203 = arith.mulf %186, %202 : vector<8x32xf32>
    %204 = arith.addf %199, %203 : vector<8x32xf32>
    %205 = math.tanh %204 : vector<8x32xf32>
    %cst_107 = arith.constant 1.000000e+00 : f32
    %206 = vector.broadcast %cst_107 : f32 to vector<8x32xf32>
    %207 = arith.subf %206, %196 : vector<8x32xf32>
    %208 = arith.mulf %207, %205 : vector<8x32xf32>
    %209 = arith.mulf %196, %141 : vector<8x32xf32>
    %210 = arith.addf %208, %209 : vector<8x32xf32>
    %c1_108 = arith.constant 1 : index
    %c0_109 = arith.constant 0 : index
    %c0_110 = arith.constant 0 : index
    %211 = vector.load %arg9[%c1_108, %c0_109, %c0_110] : memref<8x32x1xf32, #tpu.memory_space<vmem>>, vector<1x32x1xf32>
    %212 = vector.shape_cast %211 : vector<1x32x1xf32> to vector<32x1xf32>
    %cst_111 = arith.constant dense<0.000000e+00> : vector<8x1xf32>
    %213 = tpu.matmul %210, %212, %cst_111 {dimension_numbers = #tpu.dot_dimension_numbers<[1], [0], [0], [1], [0, 0, 1, 1], [], []>} : vector<8x32xf32>, vector<32x1xf32>, vector<8x1xf32> -> vector<8x1xf32>
    %214 = arith.addf %145, %213 : vector<8x1xf32>
    %215 = vector.extract_strided_slice %59 {offsets = [2, 0, 0], sizes = [1, 8, 32], strides = [1, 1, 1]} : vector<8x8x32xf32> to vector<1x8x32xf32>
    %216 = vector.shape_cast %215 : vector<1x8x32xf32> to vector<8x32xf32>
    %cst_112 = arith.constant dense<0.000000e+00> : vector<8x32xf32>
    %217 = tpu.matmul %176, %7, %cst_112 {dimension_numbers = #tpu.dot_dimension_numbers<[1], [0], [0], [1], [0, 0, 1, 1], [], []>} : vector<8x32xf32>, vector<32x32xf32>, vector<8x32xf32> -> vector<8x32xf32>
    %218 = arith.addf %216, %217 : vector<8x32xf32>
    %219 = arith.negf %218 : vector<8x32xf32>
    %220 = math.exp %219 : vector<8x32xf32>
    %cst_113 = arith.constant 1.000000e+00 : f32
    %221 = vector.broadcast %cst_113 : f32 to vector<8x32xf32>
    %222 = arith.addf %221, %220 : vector<8x32xf32>
    %223 = arith.divf %221, %222 : vector<8x32xf32>
    %224 = vector.extract_strided_slice %66 {offsets = [2, 0, 0], sizes = [1, 8, 32], strides = [1, 1, 1]} : vector<8x8x32xf32> to vector<1x8x32xf32>
    %225 = vector.shape_cast %224 : vector<1x8x32xf32> to vector<8x32xf32>
    %cst_114 = arith.constant dense<0.000000e+00> : vector<8x32xf32>
    %226 = tpu.matmul %176, %9, %cst_114 {dimension_numbers = #tpu.dot_dimension_numbers<[1], [0], [0], [1], [0, 0, 1, 1], [], []>} : vector<8x32xf32>, vector<32x32xf32>, vector<8x32xf32> -> vector<8x32xf32>
    %227 = arith.addf %225, %226 : vector<8x32xf32>
    %228 = arith.negf %227 : vector<8x32xf32>
    %229 = math.exp %228 : vector<8x32xf32>
    %cst_115 = arith.constant 1.000000e+00 : f32
    %230 = vector.broadcast %cst_115 : f32 to vector<8x32xf32>
    %231 = arith.addf %230, %229 : vector<8x32xf32>
    %232 = arith.divf %230, %231 : vector<8x32xf32>
    %233 = vector.extract_strided_slice %73 {offsets = [2, 0, 0], sizes = [1, 8, 32], strides = [1, 1, 1]} : vector<8x8x32xf32> to vector<1x8x32xf32>
    %234 = vector.shape_cast %233 : vector<1x8x32xf32> to vector<8x32xf32>
    %cst_116 = arith.constant dense<0.000000e+00> : vector<8x32xf32>
    %235 = tpu.matmul %176, %11, %cst_116 {dimension_numbers = #tpu.dot_dimension_numbers<[1], [0], [0], [1], [0, 0, 1, 1], [], []>} : vector<8x32xf32>, vector<32x32xf32>, vector<8x32xf32> -> vector<8x32xf32>
    %236 = vector.broadcast %37 : vector<1x32xf32> to vector<8x32xf32>
    %237 = arith.addf %235, %236 : vector<8x32xf32>
    %238 = arith.mulf %223, %237 : vector<8x32xf32>
    %239 = arith.addf %234, %238 : vector<8x32xf32>
    %240 = math.tanh %239 : vector<8x32xf32>
    %cst_117 = arith.constant 1.000000e+00 : f32
    %241 = vector.broadcast %cst_117 : f32 to vector<8x32xf32>
    %242 = arith.subf %241, %232 : vector<8x32xf32>
    %243 = arith.mulf %242, %240 : vector<8x32xf32>
    %244 = arith.mulf %232, %176 : vector<8x32xf32>
    %245 = arith.addf %243, %244 : vector<8x32xf32>
    %cst_118 = arith.constant dense<0.000000e+00> : vector<8x32xf32>
    %246 = tpu.matmul %245, %13, %cst_118 {dimension_numbers = #tpu.dot_dimension_numbers<[1], [0], [0], [1], [0, 0, 1, 1], [], []>} : vector<8x32xf32>, vector<32x32xf32>, vector<8x32xf32> -> vector<8x32xf32>
    %cst_119 = arith.constant dense<0.000000e+00> : vector<8x32xf32>
    %247 = tpu.matmul %210, %19, %cst_119 {dimension_numbers = #tpu.dot_dimension_numbers<[1], [0], [0], [1], [0, 0, 1, 1], [], []>} : vector<8x32xf32>, vector<32x32xf32>, vector<8x32xf32> -> vector<8x32xf32>
    %248 = arith.addf %246, %247 : vector<8x32xf32>
    %249 = vector.broadcast %42 : vector<1x32xf32> to vector<8x32xf32>
    %250 = arith.addf %248, %249 : vector<8x32xf32>
    %251 = arith.negf %250 : vector<8x32xf32>
    %252 = math.exp %251 : vector<8x32xf32>
    %cst_120 = arith.constant 1.000000e+00 : f32
    %253 = vector.broadcast %cst_120 : f32 to vector<8x32xf32>
    %254 = arith.addf %253, %252 : vector<8x32xf32>
    %255 = arith.divf %253, %254 : vector<8x32xf32>
    %cst_121 = arith.constant dense<0.000000e+00> : vector<8x32xf32>
    %256 = tpu.matmul %245, %15, %cst_121 {dimension_numbers = #tpu.dot_dimension_numbers<[1], [0], [0], [1], [0, 0, 1, 1], [], []>} : vector<8x32xf32>, vector<32x32xf32>, vector<8x32xf32> -> vector<8x32xf32>
    %cst_122 = arith.constant dense<0.000000e+00> : vector<8x32xf32>
    %257 = tpu.matmul %210, %21, %cst_122 {dimension_numbers = #tpu.dot_dimension_numbers<[1], [0], [0], [1], [0, 0, 1, 1], [], []>} : vector<8x32xf32>, vector<32x32xf32>, vector<8x32xf32> -> vector<8x32xf32>
    %258 = arith.addf %256, %257 : vector<8x32xf32>
    %259 = vector.broadcast %47 : vector<1x32xf32> to vector<8x32xf32>
    %260 = arith.addf %258, %259 : vector<8x32xf32>
    %261 = arith.negf %260 : vector<8x32xf32>
    %262 = math.exp %261 : vector<8x32xf32>
    %cst_123 = arith.constant 1.000000e+00 : f32
    %263 = vector.broadcast %cst_123 : f32 to vector<8x32xf32>
    %264 = arith.addf %263, %262 : vector<8x32xf32>
    %265 = arith.divf %263, %264 : vector<8x32xf32>
    %cst_124 = arith.constant dense<0.000000e+00> : vector<8x32xf32>
    %266 = tpu.matmul %245, %17, %cst_124 {dimension_numbers = #tpu.dot_dimension_numbers<[1], [0], [0], [1], [0, 0, 1, 1], [], []>} : vector<8x32xf32>, vector<32x32xf32>, vector<8x32xf32> -> vector<8x32xf32>
    %267 = vector.broadcast %49 : vector<1x32xf32> to vector<8x32xf32>
    %268 = arith.addf %266, %267 : vector<8x32xf32>
    %cst_125 = arith.constant dense<0.000000e+00> : vector<8x32xf32>
    %269 = tpu.matmul %210, %23, %cst_125 {dimension_numbers = #tpu.dot_dimension_numbers<[1], [0], [0], [1], [0, 0, 1, 1], [], []>} : vector<8x32xf32>, vector<32x32xf32>, vector<8x32xf32> -> vector<8x32xf32>
    %270 = vector.broadcast %51 : vector<1x32xf32> to vector<8x32xf32>
    %271 = arith.addf %269, %270 : vector<8x32xf32>
    %272 = arith.mulf %255, %271 : vector<8x32xf32>
    %273 = arith.addf %268, %272 : vector<8x32xf32>
    %274 = math.tanh %273 : vector<8x32xf32>
    %cst_126 = arith.constant 1.000000e+00 : f32
    %275 = vector.broadcast %cst_126 : f32 to vector<8x32xf32>
    %276 = arith.subf %275, %265 : vector<8x32xf32>
    %277 = arith.mulf %276, %274 : vector<8x32xf32>
    %278 = arith.mulf %265, %210 : vector<8x32xf32>
    %279 = arith.addf %277, %278 : vector<8x32xf32>
    %c2_127 = arith.constant 2 : index
    %c0_128 = arith.constant 0 : index
    %c0_129 = arith.constant 0 : index
    %280 = vector.load %arg9[%c2_127, %c0_128, %c0_129] : memref<8x32x1xf32, #tpu.memory_space<vmem>>, vector<1x32x1xf32>
    %281 = vector.shape_cast %280 : vector<1x32x1xf32> to vector<32x1xf32>
    %cst_130 = arith.constant dense<0.000000e+00> : vector<8x1xf32>
    %282 = tpu.matmul %279, %281, %cst_130 {dimension_numbers = #tpu.dot_dimension_numbers<[1], [0], [0], [1], [0, 0, 1, 1], [], []>} : vector<8x32xf32>, vector<32x1xf32>, vector<8x1xf32> -> vector<8x1xf32>
    %283 = arith.addf %214, %282 : vector<8x1xf32>
    %284 = vector.extract_strided_slice %59 {offsets = [3, 0, 0], sizes = [1, 8, 32], strides = [1, 1, 1]} : vector<8x8x32xf32> to vector<1x8x32xf32>
    %285 = vector.shape_cast %284 : vector<1x8x32xf32> to vector<8x32xf32>
    %cst_131 = arith.constant dense<0.000000e+00> : vector<8x32xf32>
    %286 = tpu.matmul %245, %7, %cst_131 {dimension_numbers = #tpu.dot_dimension_numbers<[1], [0], [0], [1], [0, 0, 1, 1], [], []>} : vector<8x32xf32>, vector<32x32xf32>, vector<8x32xf32> -> vector<8x32xf32>
    %287 = arith.addf %285, %286 : vector<8x32xf32>
    %288 = arith.negf %287 : vector<8x32xf32>
    %289 = math.exp %288 : vector<8x32xf32>
    %cst_132 = arith.constant 1.000000e+00 : f32
    %290 = vector.broadcast %cst_132 : f32 to vector<8x32xf32>
    %291 = arith.addf %290, %289 : vector<8x32xf32>
    %292 = arith.divf %290, %291 : vector<8x32xf32>
    %293 = vector.extract_strided_slice %66 {offsets = [3, 0, 0], sizes = [1, 8, 32], strides = [1, 1, 1]} : vector<8x8x32xf32> to vector<1x8x32xf32>
    %294 = vector.shape_cast %293 : vector<1x8x32xf32> to vector<8x32xf32>
    %cst_133 = arith.constant dense<0.000000e+00> : vector<8x32xf32>
    %295 = tpu.matmul %245, %9, %cst_133 {dimension_numbers = #tpu.dot_dimension_numbers<[1], [0], [0], [1], [0, 0, 1, 1], [], []>} : vector<8x32xf32>, vector<32x32xf32>, vector<8x32xf32> -> vector<8x32xf32>
    %296 = arith.addf %294, %295 : vector<8x32xf32>
    %297 = arith.negf %296 : vector<8x32xf32>
    %298 = math.exp %297 : vector<8x32xf32>
    %cst_134 = arith.constant 1.000000e+00 : f32
    %299 = vector.broadcast %cst_134 : f32 to vector<8x32xf32>
    %300 = arith.addf %299, %298 : vector<8x32xf32>
    %301 = arith.divf %299, %300 : vector<8x32xf32>
    %302 = vector.extract_strided_slice %73 {offsets = [3, 0, 0], sizes = [1, 8, 32], strides = [1, 1, 1]} : vector<8x8x32xf32> to vector<1x8x32xf32>
    %303 = vector.shape_cast %302 : vector<1x8x32xf32> to vector<8x32xf32>
    %cst_135 = arith.constant dense<0.000000e+00> : vector<8x32xf32>
    %304 = tpu.matmul %245, %11, %cst_135 {dimension_numbers = #tpu.dot_dimension_numbers<[1], [0], [0], [1], [0, 0, 1, 1], [], []>} : vector<8x32xf32>, vector<32x32xf32>, vector<8x32xf32> -> vector<8x32xf32>
    %305 = vector.broadcast %37 : vector<1x32xf32> to vector<8x32xf32>
    %306 = arith.addf %304, %305 : vector<8x32xf32>
    %307 = arith.mulf %292, %306 : vector<8x32xf32>
    %308 = arith.addf %303, %307 : vector<8x32xf32>
    %309 = math.tanh %308 : vector<8x32xf32>
    %cst_136 = arith.constant 1.000000e+00 : f32
    %310 = vector.broadcast %cst_136 : f32 to vector<8x32xf32>
    %311 = arith.subf %310, %301 : vector<8x32xf32>
    %312 = arith.mulf %311, %309 : vector<8x32xf32>
    %313 = arith.mulf %301, %245 : vector<8x32xf32>
    %314 = arith.addf %312, %313 : vector<8x32xf32>
    %cst_137 = arith.constant dense<0.000000e+00> : vector<8x32xf32>
    %315 = tpu.matmul %314, %13, %cst_137 {dimension_numbers = #tpu.dot_dimension_numbers<[1], [0], [0], [1], [0, 0, 1, 1], [], []>} : vector<8x32xf32>, vector<32x32xf32>, vector<8x32xf32> -> vector<8x32xf32>
    %cst_138 = arith.constant dense<0.000000e+00> : vector<8x32xf32>
    %316 = tpu.matmul %279, %19, %cst_138 {dimension_numbers = #tpu.dot_dimension_numbers<[1], [0], [0], [1], [0, 0, 1, 1], [], []>} : vector<8x32xf32>, vector<32x32xf32>, vector<8x32xf32> -> vector<8x32xf32>
    %317 = arith.addf %315, %316 : vector<8x32xf32>
    %318 = vector.broadcast %42 : vector<1x32xf32> to vector<8x32xf32>
    %319 = arith.addf %317, %318 : vector<8x32xf32>
    %320 = arith.negf %319 : vector<8x32xf32>
    %321 = math.exp %320 : vector<8x32xf32>
    %cst_139 = arith.constant 1.000000e+00 : f32
    %322 = vector.broadcast %cst_139 : f32 to vector<8x32xf32>
    %323 = arith.addf %322, %321 : vector<8x32xf32>
    %324 = arith.divf %322, %323 : vector<8x32xf32>
    %cst_140 = arith.constant dense<0.000000e+00> : vector<8x32xf32>
    %325 = tpu.matmul %314, %15, %cst_140 {dimension_numbers = #tpu.dot_dimension_numbers<[1], [0], [0], [1], [0, 0, 1, 1], [], []>} : vector<8x32xf32>, vector<32x32xf32>, vector<8x32xf32> -> vector<8x32xf32>
    %cst_141 = arith.constant dense<0.000000e+00> : vector<8x32xf32>
    %326 = tpu.matmul %279, %21, %cst_141 {dimension_numbers = #tpu.dot_dimension_numbers<[1], [0], [0], [1], [0, 0, 1, 1], [], []>} : vector<8x32xf32>, vector<32x32xf32>, vector<8x32xf32> -> vector<8x32xf32>
    %327 = arith.addf %325, %326 : vector<8x32xf32>
    %328 = vector.broadcast %47 : vector<1x32xf32> to vector<8x32xf32>
    %329 = arith.addf %327, %328 : vector<8x32xf32>
    %330 = arith.negf %329 : vector<8x32xf32>
    %331 = math.exp %330 : vector<8x32xf32>
    %cst_142 = arith.constant 1.000000e+00 : f32
    %332 = vector.broadcast %cst_142 : f32 to vector<8x32xf32>
    %333 = arith.addf %332, %331 : vector<8x32xf32>
    %334 = arith.divf %332, %333 : vector<8x32xf32>
    %cst_143 = arith.constant dense<0.000000e+00> : vector<8x32xf32>
    %335 = tpu.matmul %314, %17, %cst_143 {dimension_numbers = #tpu.dot_dimension_numbers<[1], [0], [0], [1], [0, 0, 1, 1], [], []>} : vector<8x32xf32>, vector<32x32xf32>, vector<8x32xf32> -> vector<8x32xf32>
    %336 = vector.broadcast %49 : vector<1x32xf32> to vector<8x32xf32>
    %337 = arith.addf %335, %336 : vector<8x32xf32>
    %cst_144 = arith.constant dense<0.000000e+00> : vector<8x32xf32>
    %338 = tpu.matmul %279, %23, %cst_144 {dimension_numbers = #tpu.dot_dimension_numbers<[1], [0], [0], [1], [0, 0, 1, 1], [], []>} : vector<8x32xf32>, vector<32x32xf32>, vector<8x32xf32> -> vector<8x32xf32>
    %339 = vector.broadcast %51 : vector<1x32xf32> to vector<8x32xf32>
    %340 = arith.addf %338, %339 : vector<8x32xf32>
    %341 = arith.mulf %324, %340 : vector<8x32xf32>
    %342 = arith.addf %337, %341 : vector<8x32xf32>
    %343 = math.tanh %342 : vector<8x32xf32>
    %cst_145 = arith.constant 1.000000e+00 : f32
    %344 = vector.broadcast %cst_145 : f32 to vector<8x32xf32>
    %345 = arith.subf %344, %334 : vector<8x32xf32>
    %346 = arith.mulf %345, %343 : vector<8x32xf32>
    %347 = arith.mulf %334, %279 : vector<8x32xf32>
    %348 = arith.addf %346, %347 : vector<8x32xf32>
    %c3 = arith.constant 3 : index
    %c0_146 = arith.constant 0 : index
    %c0_147 = arith.constant 0 : index
    %349 = vector.load %arg9[%c3, %c0_146, %c0_147] : memref<8x32x1xf32, #tpu.memory_space<vmem>>, vector<1x32x1xf32>
    %350 = vector.shape_cast %349 : vector<1x32x1xf32> to vector<32x1xf32>
    %cst_148 = arith.constant dense<0.000000e+00> : vector<8x1xf32>
    %351 = tpu.matmul %348, %350, %cst_148 {dimension_numbers = #tpu.dot_dimension_numbers<[1], [0], [0], [1], [0, 0, 1, 1], [], []>} : vector<8x32xf32>, vector<32x1xf32>, vector<8x1xf32> -> vector<8x1xf32>
    %352 = arith.addf %283, %351 : vector<8x1xf32>
    %353 = vector.extract_strided_slice %59 {offsets = [4, 0, 0], sizes = [1, 8, 32], strides = [1, 1, 1]} : vector<8x8x32xf32> to vector<1x8x32xf32>
    %354 = vector.shape_cast %353 : vector<1x8x32xf32> to vector<8x32xf32>
    %cst_149 = arith.constant dense<0.000000e+00> : vector<8x32xf32>
    %355 = tpu.matmul %314, %7, %cst_149 {dimension_numbers = #tpu.dot_dimension_numbers<[1], [0], [0], [1], [0, 0, 1, 1], [], []>} : vector<8x32xf32>, vector<32x32xf32>, vector<8x32xf32> -> vector<8x32xf32>
    %356 = arith.addf %354, %355 : vector<8x32xf32>
    %357 = arith.negf %356 : vector<8x32xf32>
    %358 = math.exp %357 : vector<8x32xf32>
    %cst_150 = arith.constant 1.000000e+00 : f32
    %359 = vector.broadcast %cst_150 : f32 to vector<8x32xf32>
    %360 = arith.addf %359, %358 : vector<8x32xf32>
    %361 = arith.divf %359, %360 : vector<8x32xf32>
    %362 = vector.extract_strided_slice %66 {offsets = [4, 0, 0], sizes = [1, 8, 32], strides = [1, 1, 1]} : vector<8x8x32xf32> to vector<1x8x32xf32>
    %363 = vector.shape_cast %362 : vector<1x8x32xf32> to vector<8x32xf32>
    %cst_151 = arith.constant dense<0.000000e+00> : vector<8x32xf32>
    %364 = tpu.matmul %314, %9, %cst_151 {dimension_numbers = #tpu.dot_dimension_numbers<[1], [0], [0], [1], [0, 0, 1, 1], [], []>} : vector<8x32xf32>, vector<32x32xf32>, vector<8x32xf32> -> vector<8x32xf32>
    %365 = arith.addf %363, %364 : vector<8x32xf32>
    %366 = arith.negf %365 : vector<8x32xf32>
    %367 = math.exp %366 : vector<8x32xf32>
    %cst_152 = arith.constant 1.000000e+00 : f32
    %368 = vector.broadcast %cst_152 : f32 to vector<8x32xf32>
    %369 = arith.addf %368, %367 : vector<8x32xf32>
    %370 = arith.divf %368, %369 : vector<8x32xf32>
    %371 = vector.extract_strided_slice %73 {offsets = [4, 0, 0], sizes = [1, 8, 32], strides = [1, 1, 1]} : vector<8x8x32xf32> to vector<1x8x32xf32>
    %372 = vector.shape_cast %371 : vector<1x8x32xf32> to vector<8x32xf32>
    %cst_153 = arith.constant dense<0.000000e+00> : vector<8x32xf32>
    %373 = tpu.matmul %314, %11, %cst_153 {dimension_numbers = #tpu.dot_dimension_numbers<[1], [0], [0], [1], [0, 0, 1, 1], [], []>} : vector<8x32xf32>, vector<32x32xf32>, vector<8x32xf32> -> vector<8x32xf32>
    %374 = vector.broadcast %37 : vector<1x32xf32> to vector<8x32xf32>
    %375 = arith.addf %373, %374 : vector<8x32xf32>
    %376 = arith.mulf %361, %375 : vector<8x32xf32>
    %377 = arith.addf %372, %376 : vector<8x32xf32>
    %378 = math.tanh %377 : vector<8x32xf32>
    %cst_154 = arith.constant 1.000000e+00 : f32
    %379 = vector.broadcast %cst_154 : f32 to vector<8x32xf32>
    %380 = arith.subf %379, %370 : vector<8x32xf32>
    %381 = arith.mulf %380, %378 : vector<8x32xf32>
    %382 = arith.mulf %370, %314 : vector<8x32xf32>
    %383 = arith.addf %381, %382 : vector<8x32xf32>
    %cst_155 = arith.constant dense<0.000000e+00> : vector<8x32xf32>
    %384 = tpu.matmul %383, %13, %cst_155 {dimension_numbers = #tpu.dot_dimension_numbers<[1], [0], [0], [1], [0, 0, 1, 1], [], []>} : vector<8x32xf32>, vector<32x32xf32>, vector<8x32xf32> -> vector<8x32xf32>
    %cst_156 = arith.constant dense<0.000000e+00> : vector<8x32xf32>
    %385 = tpu.matmul %348, %19, %cst_156 {dimension_numbers = #tpu.dot_dimension_numbers<[1], [0], [0], [1], [0, 0, 1, 1], [], []>} : vector<8x32xf32>, vector<32x32xf32>, vector<8x32xf32> -> vector<8x32xf32>
    %386 = arith.addf %384, %385 : vector<8x32xf32>
    %387 = vector.broadcast %42 : vector<1x32xf32> to vector<8x32xf32>
    %388 = arith.addf %386, %387 : vector<8x32xf32>
    %389 = arith.negf %388 : vector<8x32xf32>
    %390 = math.exp %389 : vector<8x32xf32>
    %cst_157 = arith.constant 1.000000e+00 : f32
    %391 = vector.broadcast %cst_157 : f32 to vector<8x32xf32>
    %392 = arith.addf %391, %390 : vector<8x32xf32>
    %393 = arith.divf %391, %392 : vector<8x32xf32>
    %cst_158 = arith.constant dense<0.000000e+00> : vector<8x32xf32>
    %394 = tpu.matmul %383, %15, %cst_158 {dimension_numbers = #tpu.dot_dimension_numbers<[1], [0], [0], [1], [0, 0, 1, 1], [], []>} : vector<8x32xf32>, vector<32x32xf32>, vector<8x32xf32> -> vector<8x32xf32>
    %cst_159 = arith.constant dense<0.000000e+00> : vector<8x32xf32>
    %395 = tpu.matmul %348, %21, %cst_159 {dimension_numbers = #tpu.dot_dimension_numbers<[1], [0], [0], [1], [0, 0, 1, 1], [], []>} : vector<8x32xf32>, vector<32x32xf32>, vector<8x32xf32> -> vector<8x32xf32>
    %396 = arith.addf %394, %395 : vector<8x32xf32>
    %397 = vector.broadcast %47 : vector<1x32xf32> to vector<8x32xf32>
    %398 = arith.addf %396, %397 : vector<8x32xf32>
    %399 = arith.negf %398 : vector<8x32xf32>
    %400 = math.exp %399 : vector<8x32xf32>
    %cst_160 = arith.constant 1.000000e+00 : f32
    %401 = vector.broadcast %cst_160 : f32 to vector<8x32xf32>
    %402 = arith.addf %401, %400 : vector<8x32xf32>
    %403 = arith.divf %401, %402 : vector<8x32xf32>
    %cst_161 = arith.constant dense<0.000000e+00> : vector<8x32xf32>
    %404 = tpu.matmul %383, %17, %cst_161 {dimension_numbers = #tpu.dot_dimension_numbers<[1], [0], [0], [1], [0, 0, 1, 1], [], []>} : vector<8x32xf32>, vector<32x32xf32>, vector<8x32xf32> -> vector<8x32xf32>
    %405 = vector.broadcast %49 : vector<1x32xf32> to vector<8x32xf32>
    %406 = arith.addf %404, %405 : vector<8x32xf32>
    %cst_162 = arith.constant dense<0.000000e+00> : vector<8x32xf32>
    %407 = tpu.matmul %348, %23, %cst_162 {dimension_numbers = #tpu.dot_dimension_numbers<[1], [0], [0], [1], [0, 0, 1, 1], [], []>} : vector<8x32xf32>, vector<32x32xf32>, vector<8x32xf32> -> vector<8x32xf32>
    %408 = vector.broadcast %51 : vector<1x32xf32> to vector<8x32xf32>
    %409 = arith.addf %407, %408 : vector<8x32xf32>
    %410 = arith.mulf %393, %409 : vector<8x32xf32>
    %411 = arith.addf %406, %410 : vector<8x32xf32>
    %412 = math.tanh %411 : vector<8x32xf32>
    %cst_163 = arith.constant 1.000000e+00 : f32
    %413 = vector.broadcast %cst_163 : f32 to vector<8x32xf32>
    %414 = arith.subf %413, %403 : vector<8x32xf32>
    %415 = arith.mulf %414, %412 : vector<8x32xf32>
    %416 = arith.mulf %403, %348 : vector<8x32xf32>
    %417 = arith.addf %415, %416 : vector<8x32xf32>
    %c4 = arith.constant 4 : index
    %c0_164 = arith.constant 0 : index
    %c0_165 = arith.constant 0 : index
    %418 = vector.load %arg9[%c4, %c0_164, %c0_165] : memref<8x32x1xf32, #tpu.memory_space<vmem>>, vector<1x32x1xf32>
    %419 = vector.shape_cast %418 : vector<1x32x1xf32> to vector<32x1xf32>
    %cst_166 = arith.constant dense<0.000000e+00> : vector<8x1xf32>
    %420 = tpu.matmul %417, %419, %cst_166 {dimension_numbers = #tpu.dot_dimension_numbers<[1], [0], [0], [1], [0, 0, 1, 1], [], []>} : vector<8x32xf32>, vector<32x1xf32>, vector<8x1xf32> -> vector<8x1xf32>
    %421 = arith.addf %352, %420 : vector<8x1xf32>
    %422 = vector.extract_strided_slice %59 {offsets = [5, 0, 0], sizes = [1, 8, 32], strides = [1, 1, 1]} : vector<8x8x32xf32> to vector<1x8x32xf32>
    %423 = vector.shape_cast %422 : vector<1x8x32xf32> to vector<8x32xf32>
    %cst_167 = arith.constant dense<0.000000e+00> : vector<8x32xf32>
    %424 = tpu.matmul %383, %7, %cst_167 {dimension_numbers = #tpu.dot_dimension_numbers<[1], [0], [0], [1], [0, 0, 1, 1], [], []>} : vector<8x32xf32>, vector<32x32xf32>, vector<8x32xf32> -> vector<8x32xf32>
    %425 = arith.addf %423, %424 : vector<8x32xf32>
    %426 = arith.negf %425 : vector<8x32xf32>
    %427 = math.exp %426 : vector<8x32xf32>
    %cst_168 = arith.constant 1.000000e+00 : f32
    %428 = vector.broadcast %cst_168 : f32 to vector<8x32xf32>
    %429 = arith.addf %428, %427 : vector<8x32xf32>
    %430 = arith.divf %428, %429 : vector<8x32xf32>
    %431 = vector.extract_strided_slice %66 {offsets = [5, 0, 0], sizes = [1, 8, 32], strides = [1, 1, 1]} : vector<8x8x32xf32> to vector<1x8x32xf32>
    %432 = vector.shape_cast %431 : vector<1x8x32xf32> to vector<8x32xf32>
    %cst_169 = arith.constant dense<0.000000e+00> : vector<8x32xf32>
    %433 = tpu.matmul %383, %9, %cst_169 {dimension_numbers = #tpu.dot_dimension_numbers<[1], [0], [0], [1], [0, 0, 1, 1], [], []>} : vector<8x32xf32>, vector<32x32xf32>, vector<8x32xf32> -> vector<8x32xf32>
    %434 = arith.addf %432, %433 : vector<8x32xf32>
    %435 = arith.negf %434 : vector<8x32xf32>
    %436 = math.exp %435 : vector<8x32xf32>
    %cst_170 = arith.constant 1.000000e+00 : f32
    %437 = vector.broadcast %cst_170 : f32 to vector<8x32xf32>
    %438 = arith.addf %437, %436 : vector<8x32xf32>
    %439 = arith.divf %437, %438 : vector<8x32xf32>
    %440 = vector.extract_strided_slice %73 {offsets = [5, 0, 0], sizes = [1, 8, 32], strides = [1, 1, 1]} : vector<8x8x32xf32> to vector<1x8x32xf32>
    %441 = vector.shape_cast %440 : vector<1x8x32xf32> to vector<8x32xf32>
    %cst_171 = arith.constant dense<0.000000e+00> : vector<8x32xf32>
    %442 = tpu.matmul %383, %11, %cst_171 {dimension_numbers = #tpu.dot_dimension_numbers<[1], [0], [0], [1], [0, 0, 1, 1], [], []>} : vector<8x32xf32>, vector<32x32xf32>, vector<8x32xf32> -> vector<8x32xf32>
    %443 = vector.broadcast %37 : vector<1x32xf32> to vector<8x32xf32>
    %444 = arith.addf %442, %443 : vector<8x32xf32>
    %445 = arith.mulf %430, %444 : vector<8x32xf32>
    %446 = arith.addf %441, %445 : vector<8x32xf32>
    %447 = math.tanh %446 : vector<8x32xf32>
    %cst_172 = arith.constant 1.000000e+00 : f32
    %448 = vector.broadcast %cst_172 : f32 to vector<8x32xf32>
    %449 = arith.subf %448, %439 : vector<8x32xf32>
    %450 = arith.mulf %449, %447 : vector<8x32xf32>
    %451 = arith.mulf %439, %383 : vector<8x32xf32>
    %452 = arith.addf %450, %451 : vector<8x32xf32>
    %cst_173 = arith.constant dense<0.000000e+00> : vector<8x32xf32>
    %453 = tpu.matmul %452, %13, %cst_173 {dimension_numbers = #tpu.dot_dimension_numbers<[1], [0], [0], [1], [0, 0, 1, 1], [], []>} : vector<8x32xf32>, vector<32x32xf32>, vector<8x32xf32> -> vector<8x32xf32>
    %cst_174 = arith.constant dense<0.000000e+00> : vector<8x32xf32>
    %454 = tpu.matmul %417, %19, %cst_174 {dimension_numbers = #tpu.dot_dimension_numbers<[1], [0], [0], [1], [0, 0, 1, 1], [], []>} : vector<8x32xf32>, vector<32x32xf32>, vector<8x32xf32> -> vector<8x32xf32>
    %455 = arith.addf %453, %454 : vector<8x32xf32>
    %456 = vector.broadcast %42 : vector<1x32xf32> to vector<8x32xf32>
    %457 = arith.addf %455, %456 : vector<8x32xf32>
    %458 = arith.negf %457 : vector<8x32xf32>
    %459 = math.exp %458 : vector<8x32xf32>
    %cst_175 = arith.constant 1.000000e+00 : f32
    %460 = vector.broadcast %cst_175 : f32 to vector<8x32xf32>
    %461 = arith.addf %460, %459 : vector<8x32xf32>
    %462 = arith.divf %460, %461 : vector<8x32xf32>
    %cst_176 = arith.constant dense<0.000000e+00> : vector<8x32xf32>
    %463 = tpu.matmul %452, %15, %cst_176 {dimension_numbers = #tpu.dot_dimension_numbers<[1], [0], [0], [1], [0, 0, 1, 1], [], []>} : vector<8x32xf32>, vector<32x32xf32>, vector<8x32xf32> -> vector<8x32xf32>
    %cst_177 = arith.constant dense<0.000000e+00> : vector<8x32xf32>
    %464 = tpu.matmul %417, %21, %cst_177 {dimension_numbers = #tpu.dot_dimension_numbers<[1], [0], [0], [1], [0, 0, 1, 1], [], []>} : vector<8x32xf32>, vector<32x32xf32>, vector<8x32xf32> -> vector<8x32xf32>
    %465 = arith.addf %463, %464 : vector<8x32xf32>
    %466 = vector.broadcast %47 : vector<1x32xf32> to vector<8x32xf32>
    %467 = arith.addf %465, %466 : vector<8x32xf32>
    %468 = arith.negf %467 : vector<8x32xf32>
    %469 = math.exp %468 : vector<8x32xf32>
    %cst_178 = arith.constant 1.000000e+00 : f32
    %470 = vector.broadcast %cst_178 : f32 to vector<8x32xf32>
    %471 = arith.addf %470, %469 : vector<8x32xf32>
    %472 = arith.divf %470, %471 : vector<8x32xf32>
    %cst_179 = arith.constant dense<0.000000e+00> : vector<8x32xf32>
    %473 = tpu.matmul %452, %17, %cst_179 {dimension_numbers = #tpu.dot_dimension_numbers<[1], [0], [0], [1], [0, 0, 1, 1], [], []>} : vector<8x32xf32>, vector<32x32xf32>, vector<8x32xf32> -> vector<8x32xf32>
    %474 = vector.broadcast %49 : vector<1x32xf32> to vector<8x32xf32>
    %475 = arith.addf %473, %474 : vector<8x32xf32>
    %cst_180 = arith.constant dense<0.000000e+00> : vector<8x32xf32>
    %476 = tpu.matmul %417, %23, %cst_180 {dimension_numbers = #tpu.dot_dimension_numbers<[1], [0], [0], [1], [0, 0, 1, 1], [], []>} : vector<8x32xf32>, vector<32x32xf32>, vector<8x32xf32> -> vector<8x32xf32>
    %477 = vector.broadcast %51 : vector<1x32xf32> to vector<8x32xf32>
    %478 = arith.addf %476, %477 : vector<8x32xf32>
    %479 = arith.mulf %462, %478 : vector<8x32xf32>
    %480 = arith.addf %475, %479 : vector<8x32xf32>
    %481 = math.tanh %480 : vector<8x32xf32>
    %cst_181 = arith.constant 1.000000e+00 : f32
    %482 = vector.broadcast %cst_181 : f32 to vector<8x32xf32>
    %483 = arith.subf %482, %472 : vector<8x32xf32>
    %484 = arith.mulf %483, %481 : vector<8x32xf32>
    %485 = arith.mulf %472, %417 : vector<8x32xf32>
    %486 = arith.addf %484, %485 : vector<8x32xf32>
    %c5 = arith.constant 5 : index
    %c0_182 = arith.constant 0 : index
    %c0_183 = arith.constant 0 : index
    %487 = vector.load %arg9[%c5, %c0_182, %c0_183] : memref<8x32x1xf32, #tpu.memory_space<vmem>>, vector<1x32x1xf32>
    %488 = vector.shape_cast %487 : vector<1x32x1xf32> to vector<32x1xf32>
    %cst_184 = arith.constant dense<0.000000e+00> : vector<8x1xf32>
    %489 = tpu.matmul %486, %488, %cst_184 {dimension_numbers = #tpu.dot_dimension_numbers<[1], [0], [0], [1], [0, 0, 1, 1], [], []>} : vector<8x32xf32>, vector<32x1xf32>, vector<8x1xf32> -> vector<8x1xf32>
    %490 = arith.addf %421, %489 : vector<8x1xf32>
    %491 = vector.extract_strided_slice %59 {offsets = [6, 0, 0], sizes = [1, 8, 32], strides = [1, 1, 1]} : vector<8x8x32xf32> to vector<1x8x32xf32>
    %492 = vector.shape_cast %491 : vector<1x8x32xf32> to vector<8x32xf32>
    %cst_185 = arith.constant dense<0.000000e+00> : vector<8x32xf32>
    %493 = tpu.matmul %452, %7, %cst_185 {dimension_numbers = #tpu.dot_dimension_numbers<[1], [0], [0], [1], [0, 0, 1, 1], [], []>} : vector<8x32xf32>, vector<32x32xf32>, vector<8x32xf32> -> vector<8x32xf32>
    %494 = arith.addf %492, %493 : vector<8x32xf32>
    %495 = arith.negf %494 : vector<8x32xf32>
    %496 = math.exp %495 : vector<8x32xf32>
    %cst_186 = arith.constant 1.000000e+00 : f32
    %497 = vector.broadcast %cst_186 : f32 to vector<8x32xf32>
    %498 = arith.addf %497, %496 : vector<8x32xf32>
    %499 = arith.divf %497, %498 : vector<8x32xf32>
    %500 = vector.extract_strided_slice %66 {offsets = [6, 0, 0], sizes = [1, 8, 32], strides = [1, 1, 1]} : vector<8x8x32xf32> to vector<1x8x32xf32>
    %501 = vector.shape_cast %500 : vector<1x8x32xf32> to vector<8x32xf32>
    %cst_187 = arith.constant dense<0.000000e+00> : vector<8x32xf32>
    %502 = tpu.matmul %452, %9, %cst_187 {dimension_numbers = #tpu.dot_dimension_numbers<[1], [0], [0], [1], [0, 0, 1, 1], [], []>} : vector<8x32xf32>, vector<32x32xf32>, vector<8x32xf32> -> vector<8x32xf32>
    %503 = arith.addf %501, %502 : vector<8x32xf32>
    %504 = arith.negf %503 : vector<8x32xf32>
    %505 = math.exp %504 : vector<8x32xf32>
    %cst_188 = arith.constant 1.000000e+00 : f32
    %506 = vector.broadcast %cst_188 : f32 to vector<8x32xf32>
    %507 = arith.addf %506, %505 : vector<8x32xf32>
    %508 = arith.divf %506, %507 : vector<8x32xf32>
    %509 = vector.extract_strided_slice %73 {offsets = [6, 0, 0], sizes = [1, 8, 32], strides = [1, 1, 1]} : vector<8x8x32xf32> to vector<1x8x32xf32>
    %510 = vector.shape_cast %509 : vector<1x8x32xf32> to vector<8x32xf32>
    %cst_189 = arith.constant dense<0.000000e+00> : vector<8x32xf32>
    %511 = tpu.matmul %452, %11, %cst_189 {dimension_numbers = #tpu.dot_dimension_numbers<[1], [0], [0], [1], [0, 0, 1, 1], [], []>} : vector<8x32xf32>, vector<32x32xf32>, vector<8x32xf32> -> vector<8x32xf32>
    %512 = vector.broadcast %37 : vector<1x32xf32> to vector<8x32xf32>
    %513 = arith.addf %511, %512 : vector<8x32xf32>
    %514 = arith.mulf %499, %513 : vector<8x32xf32>
    %515 = arith.addf %510, %514 : vector<8x32xf32>
    %516 = math.tanh %515 : vector<8x32xf32>
    %cst_190 = arith.constant 1.000000e+00 : f32
    %517 = vector.broadcast %cst_190 : f32 to vector<8x32xf32>
    %518 = arith.subf %517, %508 : vector<8x32xf32>
    %519 = arith.mulf %518, %516 : vector<8x32xf32>
    %520 = arith.mulf %508, %452 : vector<8x32xf32>
    %521 = arith.addf %519, %520 : vector<8x32xf32>
    %cst_191 = arith.constant dense<0.000000e+00> : vector<8x32xf32>
    %522 = tpu.matmul %521, %13, %cst_191 {dimension_numbers = #tpu.dot_dimension_numbers<[1], [0], [0], [1], [0, 0, 1, 1], [], []>} : vector<8x32xf32>, vector<32x32xf32>, vector<8x32xf32> -> vector<8x32xf32>
    %cst_192 = arith.constant dense<0.000000e+00> : vector<8x32xf32>
    %523 = tpu.matmul %486, %19, %cst_192 {dimension_numbers = #tpu.dot_dimension_numbers<[1], [0], [0], [1], [0, 0, 1, 1], [], []>} : vector<8x32xf32>, vector<32x32xf32>, vector<8x32xf32> -> vector<8x32xf32>
    %524 = arith.addf %522, %523 : vector<8x32xf32>
    %525 = vector.broadcast %42 : vector<1x32xf32> to vector<8x32xf32>
    %526 = arith.addf %524, %525 : vector<8x32xf32>
    %527 = arith.negf %526 : vector<8x32xf32>
    %528 = math.exp %527 : vector<8x32xf32>
    %cst_193 = arith.constant 1.000000e+00 : f32
    %529 = vector.broadcast %cst_193 : f32 to vector<8x32xf32>
    %530 = arith.addf %529, %528 : vector<8x32xf32>
    %531 = arith.divf %529, %530 : vector<8x32xf32>
    %cst_194 = arith.constant dense<0.000000e+00> : vector<8x32xf32>
    %532 = tpu.matmul %521, %15, %cst_194 {dimension_numbers = #tpu.dot_dimension_numbers<[1], [0], [0], [1], [0, 0, 1, 1], [], []>} : vector<8x32xf32>, vector<32x32xf32>, vector<8x32xf32> -> vector<8x32xf32>
    %cst_195 = arith.constant dense<0.000000e+00> : vector<8x32xf32>
    %533 = tpu.matmul %486, %21, %cst_195 {dimension_numbers = #tpu.dot_dimension_numbers<[1], [0], [0], [1], [0, 0, 1, 1], [], []>} : vector<8x32xf32>, vector<32x32xf32>, vector<8x32xf32> -> vector<8x32xf32>
    %534 = arith.addf %532, %533 : vector<8x32xf32>
    %535 = vector.broadcast %47 : vector<1x32xf32> to vector<8x32xf32>
    %536 = arith.addf %534, %535 : vector<8x32xf32>
    %537 = arith.negf %536 : vector<8x32xf32>
    %538 = math.exp %537 : vector<8x32xf32>
    %cst_196 = arith.constant 1.000000e+00 : f32
    %539 = vector.broadcast %cst_196 : f32 to vector<8x32xf32>
    %540 = arith.addf %539, %538 : vector<8x32xf32>
    %541 = arith.divf %539, %540 : vector<8x32xf32>
    %cst_197 = arith.constant dense<0.000000e+00> : vector<8x32xf32>
    %542 = tpu.matmul %521, %17, %cst_197 {dimension_numbers = #tpu.dot_dimension_numbers<[1], [0], [0], [1], [0, 0, 1, 1], [], []>} : vector<8x32xf32>, vector<32x32xf32>, vector<8x32xf32> -> vector<8x32xf32>
    %543 = vector.broadcast %49 : vector<1x32xf32> to vector<8x32xf32>
    %544 = arith.addf %542, %543 : vector<8x32xf32>
    %cst_198 = arith.constant dense<0.000000e+00> : vector<8x32xf32>
    %545 = tpu.matmul %486, %23, %cst_198 {dimension_numbers = #tpu.dot_dimension_numbers<[1], [0], [0], [1], [0, 0, 1, 1], [], []>} : vector<8x32xf32>, vector<32x32xf32>, vector<8x32xf32> -> vector<8x32xf32>
    %546 = vector.broadcast %51 : vector<1x32xf32> to vector<8x32xf32>
    %547 = arith.addf %545, %546 : vector<8x32xf32>
    %548 = arith.mulf %531, %547 : vector<8x32xf32>
    %549 = arith.addf %544, %548 : vector<8x32xf32>
    %550 = math.tanh %549 : vector<8x32xf32>
    %cst_199 = arith.constant 1.000000e+00 : f32
    %551 = vector.broadcast %cst_199 : f32 to vector<8x32xf32>
    %552 = arith.subf %551, %541 : vector<8x32xf32>
    %553 = arith.mulf %552, %550 : vector<8x32xf32>
    %554 = arith.mulf %541, %486 : vector<8x32xf32>
    %555 = arith.addf %553, %554 : vector<8x32xf32>
    %c6 = arith.constant 6 : index
    %c0_200 = arith.constant 0 : index
    %c0_201 = arith.constant 0 : index
    %556 = vector.load %arg9[%c6, %c0_200, %c0_201] : memref<8x32x1xf32, #tpu.memory_space<vmem>>, vector<1x32x1xf32>
    %557 = vector.shape_cast %556 : vector<1x32x1xf32> to vector<32x1xf32>
    %cst_202 = arith.constant dense<0.000000e+00> : vector<8x1xf32>
    %558 = tpu.matmul %555, %557, %cst_202 {dimension_numbers = #tpu.dot_dimension_numbers<[1], [0], [0], [1], [0, 0, 1, 1], [], []>} : vector<8x32xf32>, vector<32x1xf32>, vector<8x1xf32> -> vector<8x1xf32>
    %559 = arith.addf %490, %558 : vector<8x1xf32>
    %560 = vector.extract_strided_slice %59 {offsets = [7, 0, 0], sizes = [1, 8, 32], strides = [1, 1, 1]} : vector<8x8x32xf32> to vector<1x8x32xf32>
    %561 = vector.shape_cast %560 : vector<1x8x32xf32> to vector<8x32xf32>
    %cst_203 = arith.constant dense<0.000000e+00> : vector<8x32xf32>
    %562 = tpu.matmul %521, %7, %cst_203 {dimension_numbers = #tpu.dot_dimension_numbers<[1], [0], [0], [1], [0, 0, 1, 1], [], []>} : vector<8x32xf32>, vector<32x32xf32>, vector<8x32xf32> -> vector<8x32xf32>
    %563 = arith.addf %561, %562 : vector<8x32xf32>
    %564 = arith.negf %563 : vector<8x32xf32>
    %565 = math.exp %564 : vector<8x32xf32>
    %cst_204 = arith.constant 1.000000e+00 : f32
    %566 = vector.broadcast %cst_204 : f32 to vector<8x32xf32>
    %567 = arith.addf %566, %565 : vector<8x32xf32>
    %568 = arith.divf %566, %567 : vector<8x32xf32>
    %569 = vector.extract_strided_slice %66 {offsets = [7, 0, 0], sizes = [1, 8, 32], strides = [1, 1, 1]} : vector<8x8x32xf32> to vector<1x8x32xf32>
    %570 = vector.shape_cast %569 : vector<1x8x32xf32> to vector<8x32xf32>
    %cst_205 = arith.constant dense<0.000000e+00> : vector<8x32xf32>
    %571 = tpu.matmul %521, %9, %cst_205 {dimension_numbers = #tpu.dot_dimension_numbers<[1], [0], [0], [1], [0, 0, 1, 1], [], []>} : vector<8x32xf32>, vector<32x32xf32>, vector<8x32xf32> -> vector<8x32xf32>
    %572 = arith.addf %570, %571 : vector<8x32xf32>
    %573 = arith.negf %572 : vector<8x32xf32>
    %574 = math.exp %573 : vector<8x32xf32>
    %cst_206 = arith.constant 1.000000e+00 : f32
    %575 = vector.broadcast %cst_206 : f32 to vector<8x32xf32>
    %576 = arith.addf %575, %574 : vector<8x32xf32>
    %577 = arith.divf %575, %576 : vector<8x32xf32>
    %578 = vector.extract_strided_slice %73 {offsets = [7, 0, 0], sizes = [1, 8, 32], strides = [1, 1, 1]} : vector<8x8x32xf32> to vector<1x8x32xf32>
    %579 = vector.shape_cast %578 : vector<1x8x32xf32> to vector<8x32xf32>
    %cst_207 = arith.constant dense<0.000000e+00> : vector<8x32xf32>
    %580 = tpu.matmul %521, %11, %cst_207 {dimension_numbers = #tpu.dot_dimension_numbers<[1], [0], [0], [1], [0, 0, 1, 1], [], []>} : vector<8x32xf32>, vector<32x32xf32>, vector<8x32xf32> -> vector<8x32xf32>
    %581 = vector.broadcast %37 : vector<1x32xf32> to vector<8x32xf32>
    %582 = arith.addf %580, %581 : vector<8x32xf32>
    %583 = arith.mulf %568, %582 : vector<8x32xf32>
    %584 = arith.addf %579, %583 : vector<8x32xf32>
    %585 = math.tanh %584 : vector<8x32xf32>
    %cst_208 = arith.constant 1.000000e+00 : f32
    %586 = vector.broadcast %cst_208 : f32 to vector<8x32xf32>
    %587 = arith.subf %586, %577 : vector<8x32xf32>
    %588 = arith.mulf %587, %585 : vector<8x32xf32>
    %589 = arith.mulf %577, %521 : vector<8x32xf32>
    %590 = arith.addf %588, %589 : vector<8x32xf32>
    %cst_209 = arith.constant dense<0.000000e+00> : vector<8x32xf32>
    %591 = tpu.matmul %590, %13, %cst_209 {dimension_numbers = #tpu.dot_dimension_numbers<[1], [0], [0], [1], [0, 0, 1, 1], [], []>} : vector<8x32xf32>, vector<32x32xf32>, vector<8x32xf32> -> vector<8x32xf32>
    %cst_210 = arith.constant dense<0.000000e+00> : vector<8x32xf32>
    %592 = tpu.matmul %555, %19, %cst_210 {dimension_numbers = #tpu.dot_dimension_numbers<[1], [0], [0], [1], [0, 0, 1, 1], [], []>} : vector<8x32xf32>, vector<32x32xf32>, vector<8x32xf32> -> vector<8x32xf32>
    %593 = arith.addf %591, %592 : vector<8x32xf32>
    %594 = vector.broadcast %42 : vector<1x32xf32> to vector<8x32xf32>
    %595 = arith.addf %593, %594 : vector<8x32xf32>
    %596 = arith.negf %595 : vector<8x32xf32>
    %597 = math.exp %596 : vector<8x32xf32>
    %cst_211 = arith.constant 1.000000e+00 : f32
    %598 = vector.broadcast %cst_211 : f32 to vector<8x32xf32>
    %599 = arith.addf %598, %597 : vector<8x32xf32>
    %600 = arith.divf %598, %599 : vector<8x32xf32>
    %cst_212 = arith.constant dense<0.000000e+00> : vector<8x32xf32>
    %601 = tpu.matmul %590, %15, %cst_212 {dimension_numbers = #tpu.dot_dimension_numbers<[1], [0], [0], [1], [0, 0, 1, 1], [], []>} : vector<8x32xf32>, vector<32x32xf32>, vector<8x32xf32> -> vector<8x32xf32>
    %cst_213 = arith.constant dense<0.000000e+00> : vector<8x32xf32>
    %602 = tpu.matmul %555, %21, %cst_213 {dimension_numbers = #tpu.dot_dimension_numbers<[1], [0], [0], [1], [0, 0, 1, 1], [], []>} : vector<8x32xf32>, vector<32x32xf32>, vector<8x32xf32> -> vector<8x32xf32>
    %603 = arith.addf %601, %602 : vector<8x32xf32>
    %604 = vector.broadcast %47 : vector<1x32xf32> to vector<8x32xf32>
    %605 = arith.addf %603, %604 : vector<8x32xf32>
    %606 = arith.negf %605 : vector<8x32xf32>
    %607 = math.exp %606 : vector<8x32xf32>
    %cst_214 = arith.constant 1.000000e+00 : f32
    %608 = vector.broadcast %cst_214 : f32 to vector<8x32xf32>
    %609 = arith.addf %608, %607 : vector<8x32xf32>
    %610 = arith.divf %608, %609 : vector<8x32xf32>
    %cst_215 = arith.constant dense<0.000000e+00> : vector<8x32xf32>
    %611 = tpu.matmul %590, %17, %cst_215 {dimension_numbers = #tpu.dot_dimension_numbers<[1], [0], [0], [1], [0, 0, 1, 1], [], []>} : vector<8x32xf32>, vector<32x32xf32>, vector<8x32xf32> -> vector<8x32xf32>
    %612 = vector.broadcast %49 : vector<1x32xf32> to vector<8x32xf32>
    %613 = arith.addf %611, %612 : vector<8x32xf32>
    %cst_216 = arith.constant dense<0.000000e+00> : vector<8x32xf32>
    %614 = tpu.matmul %555, %23, %cst_216 {dimension_numbers = #tpu.dot_dimension_numbers<[1], [0], [0], [1], [0, 0, 1, 1], [], []>} : vector<8x32xf32>, vector<32x32xf32>, vector<8x32xf32> -> vector<8x32xf32>
    %615 = vector.broadcast %51 : vector<1x32xf32> to vector<8x32xf32>
    %616 = arith.addf %614, %615 : vector<8x32xf32>
    %617 = arith.mulf %600, %616 : vector<8x32xf32>
    %618 = arith.addf %613, %617 : vector<8x32xf32>
    %619 = math.tanh %618 : vector<8x32xf32>
    %cst_217 = arith.constant 1.000000e+00 : f32
    %620 = vector.broadcast %cst_217 : f32 to vector<8x32xf32>
    %621 = arith.subf %620, %610 : vector<8x32xf32>
    %622 = arith.mulf %621, %619 : vector<8x32xf32>
    %623 = arith.mulf %610, %555 : vector<8x32xf32>
    %624 = arith.addf %622, %623 : vector<8x32xf32>
    %c7 = arith.constant 7 : index
    %c0_218 = arith.constant 0 : index
    %c0_219 = arith.constant 0 : index
    %625 = vector.load %arg9[%c7, %c0_218, %c0_219] : memref<8x32x1xf32, #tpu.memory_space<vmem>>, vector<1x32x1xf32>
    %626 = vector.shape_cast %625 : vector<1x32x1xf32> to vector<32x1xf32>
    %cst_220 = arith.constant dense<0.000000e+00> : vector<8x1xf32>
    %627 = tpu.matmul %624, %626, %cst_220 {dimension_numbers = #tpu.dot_dimension_numbers<[1], [0], [0], [1], [0, 0, 1, 1], [], []>} : vector<8x32xf32>, vector<32x1xf32>, vector<8x1xf32> -> vector<8x1xf32>
    %628 = arith.addf %559, %627 : vector<8x1xf32>
    %c0_221 = arith.constant 0 : index
    %c0_222 = arith.constant 0 : index
    %629 = vector.load %arg10[%c0_221, %c0_222] : memref<1x1xf32, #tpu.memory_space<vmem>>, vector<1x1xf32>
    %630 = vector.broadcast %629 : vector<1x1xf32> to vector<8x1xf32>
    %631 = arith.addf %628, %630 : vector<8x1xf32>
    %c0_223 = arith.constant 0 : index
    %c0_224 = arith.constant 0 : index
    %632 = vector.load %arg11[%c0_223, %c0_224] : memref<8x1xf32, #tpu.memory_space<vmem>>, vector<8x1xf32>
    tpu.vector_store %arg11[%c0_223, %c0_224], %631 {strides = array<i32>} : memref<8x1xf32, #tpu.memory_space<vmem>>, vector<8x1xf32>,
    return
  }
}

</mosaic_0001>

<llo_original>
// kernel: tpu_custom_call.1
$region0: #{tpu_custom_call.1}
  #allocation0 [shape = 'u32[]', space=smem, size = 0x4, offset = 0x4, fixed_abs, tag = 'smem constant byte address 0x4 - core index']
  #allocation1 [shape = 'u32[144,128]{1,0:T(1,128)}', space=vmem, size = 0x12000, scoped, tag = 'internal scratch']
  #allocation2 [shape = 'f32[1,1]{1,0:T(1,128)S(1)}', space=vmem, size = 0x200, scoped, tag = 'scoped memory for tpu_custom_call.1']
  %s0 = inlined_call_operand.vmem [shape: f32[8,8,1], index: 0, kind: input, shape index: {}]
  %s1 = inlined_call_operand.vmem [shape: f32[3,1,32], index: 1, kind: input, shape index: {}]
  %s2 = inlined_call_operand.vmem [shape: f32[3,32,32], index: 2, kind: input, shape index: {}]
  %s3 = inlined_call_operand.vmem [shape: f32[3,1,32], index: 3, kind: input, shape index: {}]
  %s4 = inlined_call_operand.vmem [shape: f32[3,1,32], index: 4, kind: input, shape index: {}]
  %s5 = inlined_call_operand.vmem [shape: f32[3,32,32], index: 5, kind: input, shape index: {}]
  %s6 = inlined_call_operand.vmem [shape: f32[3,32,32], index: 6, kind: input, shape index: {}]
  %s7 = inlined_call_operand.vmem [shape: f32[3,1,32], index: 7, kind: input, shape index: {}]
  %s8 = inlined_call_operand.vmem [shape: f32[3,1,32], index: 8, kind: input, shape index: {}]
  %s9 = inlined_call_operand.vmem [shape: f32[8,32,1], index: 9, kind: input, shape index: {}]
  %s10 = inlined_call_operand.<no memory space> [shape: f32[1,1], index: 10, kind: input, shape index: {}]
  %s11 = inlined_call_operand.vmem [shape: f32[8,1], index: 11, kind: output, shape index: {}]
  %s12 = sld [smem:[#allocation0]]
  $region54: #{tpu_custom_call.1} parent=0
    _
  %s14 = ssub.s32 1, %s12
  %s15 = scalar_select 0, %s14, %s12
  %v16 = vstv %s10
  %17 = vst [vmem:[#allocation2] sm:$0x1] %v16
  // Predicated region
  $region2: #{tpu_custom_call.1} parent=0 // pred_check
    _
  $region3: #{tpu_custom_call.1} parent=0 // pred_check_branch
    %19 = sbr.rel (0) target = $region5
  $region4: #{tpu_custom_call.1} parent=0 // pred_region
    _
  $region5: #{tpu_custom_call.1} parent=0 // pred_fallthru
    _
  // Predicated region
  $region6: #{tpu_custom_call.1} parent=0 // pred_check
    _
  $region7: #{tpu_custom_call.1} parent=0 // pred_check_branch
    %21 = sbr.rel (0) target = $region9
  $region8: #{tpu_custom_call.1} parent=0 // pred_region
    _
  $region9: #{tpu_custom_call.1} parent=0 // pred_fallthru
    _
  // Predicated region
  $region10: #{tpu_custom_call.1} parent=0 // pred_check
    _
  $region11: #{tpu_custom_call.1} parent=0 // pred_check_branch
    %23 = sbr.rel (0) target = $region13
  $region12: #{tpu_custom_call.1} parent=0 // pred_region
    _
  $region13: #{tpu_custom_call.1} parent=0 // pred_fallthru
    _
  // Predicated region
  $region14: #{tpu_custom_call.1} parent=0 // pred_check
    _
  $region15: #{tpu_custom_call.1} parent=0 // pred_check_branch
    %25 = sbr.rel (0) target = $region17
  $region16: #{tpu_custom_call.1} parent=0 // pred_region
    _
  $region17: #{tpu_custom_call.1} parent=0 // pred_fallthru
    _
  // Predicated region
  $region18: #{tpu_custom_call.1} parent=0 // pred_check
    _
  $region19: #{tpu_custom_call.1} parent=0 // pred_check_branch
    %27 = sbr.rel (0) target = $region21
  $region20: #{tpu_custom_call.1} parent=0 // pred_region
    _
  $region21: #{tpu_custom_call.1} parent=0 // pred_fallthru
    _
  // Predicated region
  $region22: #{tpu_custom_call.1} parent=0 // pred_check
    _
  $region23: #{tpu_custom_call.1} parent=0 // pred_check_branch
    %29 = sbr.rel (0) target = $region25
  $region24: #{tpu_custom_call.1} parent=0 // pred_region
    _
  $region25: #{tpu_custom_call.1} parent=0 // pred_fallthru
    _
  // Predicated region
  $region26: #{tpu_custom_call.1} parent=0 // pred_check
    _
  $region27: #{tpu_custom_call.1} parent=0 // pred_check_branch
    %31 = sbr.rel (0) target = $region29
  $region28: #{tpu_custom_call.1} parent=0 // pred_region
    _
  $region29: #{tpu_custom_call.1} parent=0 // pred_fallthru
    _
  // Predicated region
  $region30: #{tpu_custom_call.1} parent=0 // pred_check
    _
  $region31: #{tpu_custom_call.1} parent=0 // pred_check_branch
    %33 = sbr.rel (0) target = $region33
  $region32: #{tpu_custom_call.1} parent=0 // pred_region
    _
  $region33: #{tpu_custom_call.1} parent=0 // pred_fallthru
    _
  // Predicated region
  $region34: #{tpu_custom_call.1} parent=0 // pred_check
    _
  $region35: #{tpu_custom_call.1} parent=0 // pred_check_branch
    %35 = sbr.rel (0) target = $region37
  $region36: #{tpu_custom_call.1} parent=0 // pred_region
    _
  $region37: #{tpu_custom_call.1} parent=0 // pred_fallthru
    _
  // Predicated region
  $region38: #{tpu_custom_call.1} parent=0 // pred_check
    _
  $region39: #{tpu_custom_call.1} parent=0 // pred_check_branch
    %37 = sbr.rel (0) target = $region41
  $region40: #{tpu_custom_call.1} parent=0 // pred_region
    _
  $region41: #{tpu_custom_call.1} parent=0 // pred_fallthru
    _
  // Predicated region
  $region42: #{tpu_custom_call.1} parent=0 // pred_check
    _
  $region43: #{tpu_custom_call.1} parent=0 // pred_check_branch
    %39 = sbr.rel (0) target = $region45
  $region44: #{tpu_custom_call.1} parent=0 // pred_region
    _
  $region45: #{tpu_custom_call.1} parent=0 // pred_fallthru
    _
  %v40 = vld [vmem:[%s1] sm:$0x1]
  %s41 = scalar_lea.vmem %s1, 1
  %v42 = vld [vmem:[%s41] sm:$0x1]
  %s43 = scalar_lea.vmem %s1, 2
  %v44 = vld [vmem:[%s43] sm:$0x1]
  %v45 = vld [vmem:[%s2] sm:$0xff]
  %v46 = vld [vmem:[%s2 + $0x8] sm:$0xff]
  %v47 = vld [vmem:[%s2 + $0x10] sm:$0xff]
  %v48 = vld [vmem:[%s2 + $0x18] sm:$0xff]
  %s49 = scalar_lea.vmem %s2, 32
  %v50 = vld [vmem:[%s49] sm:$0xff]
  %v51 = vld [vmem:[%s49 + $0x8] sm:$0xff]
  %v52 = vld [vmem:[%s49 + $0x10] sm:$0xff]
  %v53 = vld [vmem:[%s49 + $0x18] sm:$0xff]
  %s54 = scalar_lea.vmem %s2, 64
  %v55 = vld [vmem:[%s54] sm:$0xff]
  %v56 = vld [vmem:[%s54 + $0x8] sm:$0xff]
  %v57 = vld [vmem:[%s54 + $0x10] sm:$0xff]
  %v58 = vld [vmem:[%s54 + $0x18] sm:$0xff]
  %v59 = vld [vmem:[%s5] sm:$0xff]
  %v60 = vld [vmem:[%s5 + $0x8] sm:$0xff]
  %v61 = vld [vmem:[%s5 + $0x10] sm:$0xff]
  %v62 = vld [vmem:[%s5 + $0x18] sm:$0xff]
  %s63 = scalar_lea.vmem %s5, 32
  %v64 = vld [vmem:[%s63] sm:$0xff]
  %v65 = vld [vmem:[%s63 + $0x8] sm:$0xff]
  %v66 = vld [vmem:[%s63 + $0x10] sm:$0xff]
  %v67 = vld [vmem:[%s63 + $0x18] sm:$0xff]
  %s68 = scalar_lea.vmem %s5, 64
  %v69 = vld [vmem:[%s68] sm:$0xff]
  %v70 = vld [vmem:[%s68 + $0x8] sm:$0xff]
  %v71 = vld [vmem:[%s68 + $0x10] sm:$0xff]
  %v72 = vld [vmem:[%s68 + $0x18] sm:$0xff]
  %v73 = vld [vmem:[%s6] sm:$0xff]
  %v74 = vld [vmem:[%s6 + $0x8] sm:$0xff]
  %v75 = vld [vmem:[%s6 + $0x10] sm:$0xff]
  %v76 = vld [vmem:[%s6 + $0x18] sm:$0xff]
  %s77 = scalar_lea.vmem %s6, 32
  %v78 = vld [vmem:[%s77] sm:$0xff]
  %v79 = vld [vmem:[%s77 + $0x8] sm:$0xff]
  %v80 = vld [vmem:[%s77 + $0x10] sm:$0xff]
  %v81 = vld [vmem:[%s77 + $0x18] sm:$0xff]
  %s82 = scalar_lea.vmem %s6, 64
  %v83 = vld [vmem:[%s82] sm:$0xff]
  %v84 = vld [vmem:[%s82 + $0x8] sm:$0xff]
  %v85 = vld [vmem:[%s82 + $0x10] sm:$0xff]
  %v86 = vld [vmem:[%s82 + $0x18] sm:$0xff]
  %v87 = vld [vmem:[%s3] sm:$0x1]
  %v88 = vld [vmem:[%s4] sm:$0x1]
  %v89 = vadd.f32 %v87, %v88
  %s90 = scalar_lea.vmem %s3, 1
  %v91 = vld [vmem:[%s90] sm:$0x1]
  %s92 = scalar_lea.vmem %s4, 1
  %v93 = vld [vmem:[%s92] sm:$0x1]
  %v94 = vadd.f32 %v91, %v93
  %s95 = scalar_lea.vmem %s3, 2
  %v96 = vld [vmem:[%s95] sm:$0x1]
  %s97 = scalar_lea.vmem %s4, 2
  %v98 = vld [vmem:[%s97] sm:$0x1]
  %v99 = vld [vmem:[%s7] sm:$0x1]
  %v100 = vld [vmem:[%s8] sm:$0x1]
  %v101 = vadd.f32 %v99, %v100
  %s102 = scalar_lea.vmem %s7, 1
  %v103 = vld [vmem:[%s102] sm:$0x1]
  %s104 = scalar_lea.vmem %s8, 1
  %v105 = vld [vmem:[%s104] sm:$0x1]
  %v106 = vadd.f32 %v103, %v105
  %s107 = scalar_lea.vmem %s7, 2
  %v108 = vld [vmem:[%s107] sm:$0x1]
  %s109 = scalar_lea.vmem %s8, 2
  %v110 = vld [vmem:[%s109] sm:$0x1]
  %v111 = vld [vmem:[%s0] sm:$0xff]
  %v112 = vld [vmem:[%s0 + $0x8] sm:$0xff]
  %v113 = vld [vmem:[%s0 + $0x10] sm:$0xff]
  %v114 = vld [vmem:[%s0 + $0x18] sm:$0xff]
  %v115 = vld [vmem:[%s0 + $0x20] sm:$0xff]
  %v116 = vld [vmem:[%s0 + $0x28] sm:$0xff]
  %v117 = vld [vmem:[%s0 + $0x30] sm:$0xff]
  %v118 = vld [vmem:[%s0 + $0x38] sm:$0xff]
  %120 = vset.pattern.permute.xlu0 0
  %121 = vperm.xlu0 %120, %v111
  %v122 = vpop.permute.xlu0 %121
  %125 = vset.pattern.permute.xlu0 0
  %126 = vperm.xlu0 %125, %v112
  %v127 = vpop.permute.xlu0 %126
  %130 = vset.pattern.permute.xlu0 0
  %131 = vperm.xlu0 %130, %v113
  %v132 = vpop.permute.xlu0 %131
  %135 = vset.pattern.permute.xlu0 0
  %136 = vperm.xlu0 %135, %v114
  %v137 = vpop.permute.xlu0 %136
  %140 = vset.pattern.permute.xlu0 0
  %141 = vperm.xlu0 %140, %v115
  %v142 = vpop.permute.xlu0 %141
  %145 = vset.pattern.permute.xlu0 0
  %146 = vperm.xlu0 %145, %v116
  %v147 = vpop.permute.xlu0 %146
  %150 = vset.pattern.permute.xlu0 0
  %151 = vperm.xlu0 %150, %v117
  %v152 = vpop.permute.xlu0 %151
  %155 = vset.pattern.permute.xlu0 0
  %156 = vperm.xlu0 %155, %v118
  %v157 = vpop.permute.xlu0 %156
  %v160 = vlaneseq
  %v161 = vshrl.u32 %v160, 7
  %v162 = vsub.s32 0, %v161
  %v163 = vrot.slane %v40, %v162
  %v165 = vmul.f32 %v122, %v163
  %v166 = vmul.f32 %v127, %v163
  %v167 = vmul.f32 %v132, %v163
  %v168 = vmul.f32 %v137, %v163
  %v169 = vmul.f32 %v142, %v163
  %v170 = vmul.f32 %v147, %v163
  %v171 = vmul.f32 %v152, %v163
  %v172 = vmul.f32 %v157, %v163
  %v174 = vlaneseq
  %v175 = vshrl.u32 %v174, 7
  %v176 = vsub.s32 0, %v175
  %v177 = vrot.slane %v89, %v176
  %v179 = vadd.f32 %v165, %v177
  %v180 = vadd.f32 %v166, %v177
  %v181 = vadd.f32 %v167, %v177
  %v182 = vadd.f32 %v168, %v177
  %v183 = vadd.f32 %v169, %v177
  %v184 = vadd.f32 %v170, %v177
  %v185 = vadd.f32 %v171, %v177
  %v186 = vadd.f32 %v172, %v177
  %v188 = vlaneseq
  %v189 = vshrl.u32 %v188, 7
  %v190 = vsub.s32 0, %v189
  %v191 = vrot.slane %v42, %v190
  %v193 = vmul.f32 %v122, %v191
  %v194 = vmul.f32 %v127, %v191
  %v195 = vmul.f32 %v132, %v191
  %v196 = vmul.f32 %v137, %v191
  %v197 = vmul.f32 %v142, %v191
  %v198 = vmul.f32 %v147, %v191
  %v199 = vmul.f32 %v152, %v191
  %v200 = vmul.f32 %v157, %v191
  %v202 = vlaneseq
  %v203 = vshrl.u32 %v202, 7
  %v204 = vsub.s32 0, %v203
  %v205 = vrot.slane %v94, %v204
  %v207 = vadd.f32 %v193, %v205
  %v208 = vadd.f32 %v194, %v205
  %v209 = vadd.f32 %v195, %v205
  %v210 = vadd.f32 %v196, %v205
  %v211 = vadd.f32 %v197, %v205
  %v212 = vadd.f32 %v198, %v205
  %v213 = vadd.f32 %v199, %v205
  %v214 = vadd.f32 %v200, %v205
  %v216 = vlaneseq
  %v217 = vshrl.u32 %v216, 7
  %v218 = vsub.s32 0, %v217
  %v219 = vrot.slane %v44, %v218
  %v221 = vmul.f32 %v122, %v219
  %v222 = vmul.f32 %v127, %v219
  %v223 = vmul.f32 %v132, %v219
  %v224 = vmul.f32 %v137, %v219
  %v225 = vmul.f32 %v142, %v219
  %v226 = vmul.f32 %v147, %v219
  %v227 = vmul.f32 %v152, %v219
  %v228 = vmul.f32 %v157, %v219
  %v230 = vlaneseq
  %v231 = vshrl.u32 %v230, 7
  %v232 = vsub.s32 0, %v231
  %v233 = vrot.slane %v96, %v232
  %v235 = vadd.f32 %v221, %v233
  %v236 = vadd.f32 %v222, %v233
  %v237 = vadd.f32 %v223, %v233
  %v238 = vadd.f32 %v224, %v233
  %v239 = vadd.f32 %v225, %v233
  %v240 = vadd.f32 %v226, %v233
  %v241 = vadd.f32 %v227, %v233
  %v242 = vadd.f32 %v228, %v233
  %vm243 = vcmask 261120
  %v245 = vsel %vm243, 0.0, 0
  %247 = vmatprep.subr.mxu0 0.0
  %248 = vmatpush1.msra.mxu0 0.0
  %249 = vmatprep.subr.mxu0 0.0
  %250 = vmatpush1.msra.mxu0 0.0
  %251 = vmatprep.subr.mxu0 0.0
  %252 = vmatpush1.msra.mxu0 0.0
  %253 = vmatprep.subr.mxu0 0.0
  %254 = vmatpush1.msra.mxu0 0.0
  %255 = vmatprep.subr.mxu0 0.0
  %256 = vmatpush1.msra.mxu0 0.0
  %257 = vmatprep.subr.mxu0 0.0
  %258 = vmatpush1.msra.mxu0 0.0
  %259 = vmatprep.subr.mxu0 0.0
  %260 = vmatpush1.msra.mxu0 0.0
  %261 = vmatprep.subr.mxu0 0.0
  %262 = vmatpush1.msra.mxu0 0.0
  %263 = vmatprep.subr.mxu0 0.0
  %264 = vmatpush1.msra.mxu0 0.0
  %265 = vmatprep.subr.mxu0 0.0
  %266 = vmatpush1.msra.mxu0 0.0
  %267 = vmatprep.subr.mxu0 0.0
  %268 = vmatpush1.msra.mxu0 0.0
  %269 = vmatprep.subr.mxu0 0.0
  %270 = vmatpush1.msra.mxu0 0.0
  %271 = vmatprep.subr.mxu0 0.0
  %272 = vmatpush1.msra.mxu0 %v48
  %273 = vmatprep.subr.mxu0 0.0
  %274 = vmatpush1.msra.mxu0 %v47
  %275 = vmatprep.subr.mxu0 0.0
  %276 = vmatpush1.msra.mxu0 %v46
  %277 = vmatprep.subr.mxu0 0.0
  %278 = vmatpush1.msra.mxu0 %v45
  %279 = vmatprep.subr.mxu0 0.0
  %280 = vmatpush2.msra.mxu0 0.0
  %281 = vmatprep.subr.mxu0 0.0
  %282 = vmatpush2.msra.mxu0 0.0
  %283 = vmatprep.subr.mxu0 0.0
  %284 = vmatpush2.msra.mxu0 0.0
  %285 = vmatprep.subr.mxu0 0.0
  %286 = vmatpush2.msra.mxu0 0.0
  %287 = vmatprep.subr.mxu0 0.0
  %288 = vmatpush2.msra.mxu0 0.0
  %289 = vmatprep.subr.mxu0 0.0
  %290 = vmatpush2.msra.mxu0 0.0
  %291 = vmatprep.subr.mxu0 0.0
  %292 = vmatpush2.msra.mxu0 0.0
  %293 = vmatprep.subr.mxu0 0.0
  %294 = vmatpush2.msra.mxu0 0.0
  %295 = vmatprep.subr.mxu0 0.0
  %296 = vmatpush2.msra.mxu0 0.0
  %297 = vmatprep.subr.mxu0 0.0
  %298 = vmatpush2.msra.mxu0 0.0
  %299 = vmatprep.subr.mxu0 0.0
  %300 = vmatpush2.msra.mxu0 0.0
  %301 = vmatprep.subr.mxu0 0.0
  %302 = vmatpush2.msra.mxu0 0.0
  %303 = vmatprep.subr.mxu0 0.0
  %304 = vmatpush2.msra.mxu0 0.0
  %305 = vmatprep.subr.mxu0 0.0
  %306 = vmatpush2.msra.mxu0 0.0
  %307 = vmatprep.subr.mxu0 0.0
  %308 = vmatpush2.msra.mxu0 0.0
  %309 = vmatprep.subr.mxu0 0.0
  %310 = vmatpush2.msra.mxu0 0.0
  %311 = vmatprep.mubr.f32.mxu0 0.0
  %312 = vmatmul.mubr.f32.gmra.mxu0 %v245
  %v313 = vpop.f32.mrf.mxu0
  %v314 = vadd.f32 0.0, %v313
  %v315 = vpop.f32.mrf.mxu0
  %316 = vdwg.mxu0
  %v317 = vadd.f32 %v179, %v314
  %v318 = vxor.u32 %v317, 2147483648
  %v319 = vmul.f32 %v318, 1.442695
  %v320 = vpow.pop %v319
  %v321 = vadd.f32 %v320, 1.0
  %v322 = vrcp.pop %v321
  %v323 = vmul.f32 1.0, %v322
  %324 = vmatprep.subr.mxu0 0.0
  %325 = vmatpush1.msra.mxu0 0.0
  %326 = vmatprep.subr.mxu0 0.0
  %327 = vmatpush1.msra.mxu0 0.0
  %328 = vmatprep.subr.mxu0 0.0
  %329 = vmatpush1.msra.mxu0 0.0
  %330 = vmatprep.subr.mxu0 0.0
  %331 = vmatpush1.msra.mxu0 0.0
  %332 = vmatprep.subr.mxu0 0.0
  %333 = vmatpush1.msra.mxu0 0.0
  %334 = vmatprep.subr.mxu0 0.0
  %335 = vmatpush1.msra.mxu0 0.0
  %336 = vmatprep.subr.mxu0 0.0
  %337 = vmatpush1.msra.mxu0 0.0
  %338 = vmatprep.subr.mxu0 0.0
  %339 = vmatpush1.msra.mxu0 0.0
  %340 = vmatprep.subr.mxu0 0.0
  %341 = vmatpush1.msra.mxu0 0.0
  %342 = vmatprep.subr.mxu0 0.0
  %343 = vmatpush1.msra.mxu0 0.0
  %344 = vmatprep.subr.mxu0 0.0
  %345 = vmatpush1.msra.mxu0 0.0
  %346 = vmatprep.subr.mxu0 0.0
  %347 = vmatpush1.msra.mxu0 0.0
  %348 = vmatprep.subr.mxu0 0.0
  %349 = vmatpush1.msra.mxu0 %v53
  %350 = vmatprep.subr.mxu0 0.0
  %351 = vmatpush1.msra.mxu0 %v52
  %352 = vmatprep.subr.mxu0 0.0
  %353 = vmatpush1.msra.mxu0 %v51
  %354 = vmatprep.subr.mxu0 0.0
  %355 = vmatpush1.msra.mxu0 %v50
  %356 = vmatprep.subr.mxu0 0.0
  %357 = vmatpush2.msra.mxu0 0.0
  %358 = vmatprep.subr.mxu0 0.0
  %359 = vmatpush2.msra.mxu0 0.0
  %360 = vmatprep.subr.mxu0 0.0
  %361 = vmatpush2.msra.mxu0 0.0
  %362 = vmatprep.subr.mxu0 0.0
  %363 = vmatpush2.msra.mxu0 0.0
  %364 = vmatprep.subr.mxu0 0.0
  %365 = vmatpush2.msra.mxu0 0.0
  %366 = vmatprep.subr.mxu0 0.0
  %367 = vmatpush2.msra.mxu0 0.0
  %368 = vmatprep.subr.mxu0 0.0
  %369 = vmatpush2.msra.mxu0 0.0
  %370 = vmatprep.subr.mxu0 0.0
  %371 = vmatpush2.msra.mxu0 0.0
  %372 = vmatprep.subr.mxu0 0.0
  %373 = vmatpush2.msra.mxu0 0.0
  %374 = vmatprep.subr.mxu0 0.0
  %375 = vmatpush2.msra.mxu0 0.0
  %376 = vmatprep.subr.mxu0 0.0
  %377 = vmatpush2.msra.mxu0 0.0
  %378 = vmatprep.subr.mxu0 0.0
  %379 = vmatpush2.msra.mxu0 0.0
  %380 = vmatprep.subr.mxu0 0.0
  %381 = vmatpush2.msra.mxu0 0.0
  %382 = vmatprep.subr.mxu0 0.0
  %383 = vmatpush2.msra.mxu0 0.0
  %384 = vmatprep.subr.mxu0 0.0
  %385 = vmatpush2.msra.mxu0 0.0
  %386 = vmatprep.subr.mxu0 0.0
  %387 = vmatpush2.msra.mxu0 0.0
  %388 = vmatprep.mubr.f32.mxu0 0.0
  %389 = vmatmul.mubr.f32.gmra.mxu0 %v245
  %v390 = vpop.f32.mrf.mxu0
  %v391 = vadd.f32 0.0, %v390
  %v392 = vpop.f32.mrf.mxu0
  %393 = vdwg.mxu0
  %v394 = vadd.f32 %v207, %v391
  %v395 = vxor.u32 %v394, 2147483648
  %v396 = vmul.f32 %v395, 1.442695
  %v397 = vpow.pop %v396
  %v398 = vadd.f32 %v397, 1.0
  %v399 = vrcp.pop %v398
  %v400 = vmul.f32 1.0, %v399
  %v402 = vlaneseq
  %v403 = vshrl.u32 %v402, 7
  %v404 = vsub.s32 0, %v403
  %v405 = vrot.slane %v98, %v404
  %407 = vmatprep.subr.mxu0 0.0
  %408 = vmatpush1.msra.mxu0 0.0
  %409 = vmatprep.subr.mxu0 0.0
  %410 = vmatpush1.msra.mxu0 0.0
  %411 = vmatprep.subr.mxu0 0.0
  %412 = vmatpush1.msra.mxu0 0.0
  %413 = vmatprep.subr.mxu0 0.0
  %414 = vmatpush1.msra.mxu0 0.0
  %415 = vmatprep.subr.mxu0 0.0
  %416 = vmatpush1.msra.mxu0 0.0
  %417 = vmatprep.subr.mxu0 0.0
  %418 = vmatpush1.msra.mxu0 0.0
  %419 = vmatprep.subr.mxu0 0.0
  %420 = vmatpush1.msra.mxu0 0.0
  %421 = vmatprep.subr.mxu0 0.0
  %422 = vmatpush1.msra.mxu0 0.0
  %423 = vmatprep.subr.mxu0 0.0
  %424 = vmatpush1.msra.mxu0 0.0
  %425 = vmatprep.subr.mxu0 0.0
  %426 = vmatpush1.msra.mxu0 0.0
  %427 = vmatprep.subr.mxu0 0.0
  %428 = vmatpush1.msra.mxu0 0.0
  %429 = vmatprep.subr.mxu0 0.0
  %430 = vmatpush1.msra.mxu0 0.0
  %431 = vmatprep.subr.mxu0 0.0
  %432 = vmatpush1.msra.mxu0 %v58
  %433 = vmatprep.subr.mxu0 0.0
  %434 = vmatpush1.msra.mxu0 %v57
  %435 = vmatprep.subr.mxu0 0.0
  %436 = vmatpush1.msra.mxu0 %v56
  %437 = vmatprep.subr.mxu0 0.0
  %438 = vmatpush1.msra.mxu0 %v55
  %439 = vmatprep.subr.mxu0 0.0
  %440 = vmatpush2.msra.mxu0 0.0
  %441 = vmatprep.subr.mxu0 0.0
  %442 = vmatpush2.msra.mxu0 0.0
  %443 = vmatprep.subr.mxu0 0.0
  %444 = vmatpush2.msra.mxu0 0.0
  %445 = vmatprep.subr.mxu0 0.0
  %446 = vmatpush2.msra.mxu0 0.0
  %447 = vmatprep.subr.mxu0 0.0
  %448 = vmatpush2.msra.mxu0 0.0
  %449 = vmatprep.subr.mxu0 0.0
  %450 = vmatpush2.msra.mxu0 0.0
  %451 = vmatprep.subr.mxu0 0.0
  %452 = vmatpush2.msra.mxu0 0.0
  %453 = vmatprep.subr.mxu0 0.0
  %454 = vmatpush2.msra.mxu0 0.0
  %455 = vmatprep.subr.mxu0 0.0
  %456 = vmatpush2.msra.mxu0 0.0
  %457 = vmatprep.subr.mxu0 0.0
  %458 = vmatpush2.msra.mxu0 0.0
  %459 = vmatprep.subr.mxu0 0.0
  %460 = vmatpush2.msra.mxu0 0.0
  %461 = vmatprep.subr.mxu0 0.0
  %462 = vmatpush2.msra.mxu0 0.0
  %463 = vmatprep.subr.mxu0 0.0
  %464 = vmatpush2.msra.mxu0 0.0
  %465 = vmatprep.subr.mxu0 0.0
  %466 = vmatpush2.msra.mxu0 0.0
  %467 = vmatprep.subr.mxu0 0.0
  %468 = vmatpush2.msra.mxu0 0.0
  %469 = vmatprep.subr.mxu0 0.0
  %470 = vmatpush2.msra.mxu0 0.0
  %471 = vmatprep.mubr.f32.mxu0 0.0
  %472 = vmatmul.mubr.f32.gmra.mxu0 %v245
  %v473 = vpop.f32.mrf.mxu0
  %v474 = vadd.f32 %v405, %v473
  %v475 = vpop.f32.mrf.mxu0
  %476 = vdwg.mxu0
  %v477 = vmul.f32 %v323, %v474
  %v478 = vadd.f32 %v235, %v477
  %v479 = vtanh.pop %v478
  %v480 = vsub.f32 1.0, %v400
  %v481 = vmul.f32 %v480, %v479
  %v482 = vmul.f32 %v400, 0.0
  %v483 = vadd.f32 %v481, %v482
  %484 = vmatprep.subr.mxu0 0.0
  %485 = vmatpush1.msra.mxu0 0.0
  %486 = vmatprep.subr.mxu0 0.0
  %487 = vmatpush1.msra.mxu0 0.0
  %488 = vmatprep.subr.mxu0 0.0
  %489 = vmatpush1.msra.mxu0 0.0
  %490 = vmatprep.subr.mxu0 0.0
  %491 = vmatpush1.msra.mxu0 0.0
  %492 = vmatprep.subr.mxu0 0.0
  %493 = vmatpush1.msra.mxu0 0.0
  %494 = vmatprep.subr.mxu0 0.0
  %495 = vmatpush1.msra.mxu0 0.0
  %496 = vmatprep.subr.mxu0 0.0
  %497 = vmatpush1.msra.mxu0 0.0
  %498 = vmatprep.subr.mxu0 0.0
  %499 = vmatpush1.msra.mxu0 0.0
  %500 = vmatprep.subr.mxu0 0.0
  %501 = vmatpush1.msra.mxu0 0.0
  %502 = vmatprep.subr.mxu0 0.0
  %503 = vmatpush1.msra.mxu0 0.0
  %504 = vmatprep.subr.mxu0 0.0
  %505 = vmatpush1.msra.mxu0 0.0
  %506 = vmatprep.subr.mxu0 0.0
  %507 = vmatpush1.msra.mxu0 0.0
  %508 = vmatprep.subr.mxu0 0.0
  %509 = vmatpush1.msra.mxu0 %v76
  %510 = vmatprep.subr.mxu0 0.0
  %511 = vmatpush1.msra.mxu0 %v75
  %512 = vmatprep.subr.mxu0 0.0
  %513 = vmatpush1.msra.mxu0 %v74
  %514 = vmatprep.subr.mxu0 0.0
  %515 = vmatpush1.msra.mxu0 %v73
  %516 = vmatprep.subr.mxu0 0.0
  %517 = vmatpush2.msra.mxu0 0.0
  %518 = vmatprep.subr.mxu0 0.0
  %519 = vmatpush2.msra.mxu0 0.0
  %520 = vmatprep.subr.mxu0 0.0
  %521 = vmatpush2.msra.mxu0 0.0
  %522 = vmatprep.subr.mxu0 0.0
  %523 = vmatpush2.msra.mxu0 0.0
  %524 = vmatprep.subr.mxu0 0.0
  %525 = vmatpush2.msra.mxu0 0.0
  %526 = vmatprep.subr.mxu0 0.0
  %527 = vmatpush2.msra.mxu0 0.0
  %528 = vmatprep.subr.mxu0 0.0
  %529 = vmatpush2.msra.mxu0 0.0
  %530 = vmatprep.subr.mxu0 0.0
  %531 = vmatpush2.msra.mxu0 0.0
  %532 = vmatprep.subr.mxu0 0.0
  %533 = vmatpush2.msra.mxu0 0.0
  %534 = vmatprep.subr.mxu0 0.0
  %535 = vmatpush2.msra.mxu0 0.0
  %536 = vmatprep.subr.mxu0 0.0
  %537 = vmatpush2.msra.mxu0 0.0
  %538 = vmatprep.subr.mxu0 0.0
  %539 = vmatpush2.msra.mxu0 0.0
  %540 = vmatprep.subr.mxu0 0.0
  %541 = vmatpush2.msra.mxu0 0.0
  %542 = vmatprep.subr.mxu0 0.0
  %543 = vmatpush2.msra.mxu0 0.0
  %544 = vmatprep.subr.mxu0 0.0
  %545 = vmatpush2.msra.mxu0 0.0
  %546 = vmatprep.subr.mxu0 0.0
  %547 = vmatpush2.msra.mxu0 0.0
  %548 = vmatprep.mubr.f32.mxu0 0.0
  %549 = vmatmul.mubr.f32.gmra.mxu0 %v245
  %v550 = vpop.f32.mrf.mxu0
  %v551 = vadd.f32 0.0, %v550
  %v552 = vpop.f32.mrf.mxu0
  %553 = vdwg.mxu0
  %v555 = vsel %vm243, %v483, 0
  %557 = vmatprep.subr.mxu0 0.0
  %558 = vmatpush1.msra.mxu0 0.0
  %559 = vmatprep.subr.mxu0 0.0
  %560 = vmatpush1.msra.mxu0 0.0
  %561 = vmatprep.subr.mxu0 0.0
  %562 = vmatpush1.msra.mxu0 0.0
  %563 = vmatprep.subr.mxu0 0.0
  %564 = vmatpush1.msra.mxu0 0.0
  %565 = vmatprep.subr.mxu0 0.0
  %566 = vmatpush1.msra.mxu0 0.0
  %567 = vmatprep.subr.mxu0 0.0
  %568 = vmatpush1.msra.mxu0 0.0
  %569 = vmatprep.subr.mxu0 0.0
  %570 = vmatpush1.msra.mxu0 0.0
  %571 = vmatprep.subr.mxu0 0.0
  %572 = vmatpush1.msra.mxu0 0.0
  %573 = vmatprep.subr.mxu0 0.0
  %574 = vmatpush1.msra.mxu0 0.0
  %575 = vmatprep.subr.mxu0 0.0
  %576 = vmatpush1.msra.mxu0 0.0
  %577 = vmatprep.subr.mxu0 0.0
  %578 = vmatpush1.msra.mxu0 0.0
  %579 = vmatprep.subr.mxu0 0.0
  %580 = vmatpush1.msra.mxu0 0.0
  %581 = vmatprep.subr.mxu0 0.0
  %582 = vmatpush1.msra.mxu0 %v62
  %583 = vmatprep.subr.mxu0 0.0
  %584 = vmatpush1.msra.mxu0 %v61
  %585 = vmatprep.subr.mxu0 0.0
  %586 = vmatpush1.msra.mxu0 %v60
  %587 = vmatprep.subr.mxu0 0.0
  %588 = vmatpush1.msra.mxu0 %v59
  %589 = vmatprep.subr.mxu0 0.0
  %590 = vmatpush2.msra.mxu0 0.0
  %591 = vmatprep.subr.mxu0 0.0
  %592 = vmatpush2.msra.mxu0 0.0
  %593 = vmatprep.subr.mxu0 0.0
  %594 = vmatpush2.msra.mxu0 0.0
  %595 = vmatprep.subr.mxu0 0.0
  %596 = vmatpush2.msra.mxu0 0.0
  %597 = vmatprep.subr.mxu0 0.0
  %598 = vmatpush2.msra.mxu0 0.0
  %599 = vmatprep.subr.mxu0 0.0
  %600 = vmatpush2.msra.mxu0 0.0
  %601 = vmatprep.subr.mxu0 0.0
  %602 = vmatpush2.msra.mxu0 0.0
  %603 = vmatprep.subr.mxu0 0.0
  %604 = vmatpush2.msra.mxu0 0.0
  %605 = vmatprep.subr.mxu0 0.0
  %606 = vmatpush2.msra.mxu0 0.0
  %607 = vmatprep.subr.mxu0 0.0
  %608 = vmatpush2.msra.mxu0 0.0
  %609 = vmatprep.subr.mxu0 0.0
  %610 = vmatpush2.msra.mxu0 0.0
  %611 = vmatprep.subr.mxu0 0.0
  %612 = vmatpush2.msra.mxu0 0.0
  %613 = vmatprep.subr.mxu0 0.0
  %614 = vmatpush2.msra.mxu0 0.0
  %615 = vmatprep.subr.mxu0 0.0
  %616 = vmatpush2.msra.mxu0 0.0
  %617 = vmatprep.subr.mxu0 0.0
  %618 = vmatpush2.msra.mxu0 0.0
  %619 = vmatprep.subr.mxu0 0.0
  %620 = vmatpush2.msra.mxu0 0.0
  %621 = vmatprep.mubr.f32.mxu0 0.0
  %622 = vmatmul.mubr.f32.gmra.mxu0 %v555
  %v623 = vpop.f32.mrf.mxu0
  %v624 = vadd.f32 %v551, %v623
  %v625 = vpop.f32.mrf.mxu0
  %626 = vdwg.mxu0
  %v628 = vlaneseq
  %v629 = vshrl.u32 %v628, 7
  %v630 = vsub.s32 0, %v629
  %v631 = vrot.slane %v101, %v630
  %v633 = vadd.f32 %v624, %v631
  %v634 = vxor.u32 %v633, 2147483648
  %v635 = vmul.f32 %v634, 1.442695
  %v636 = vpow.pop %v635
  %v637 = vadd.f32 %v636, 1.0
  %v638 = vrcp.pop %v637
  %v639 = vmul.f32 1.0, %v638
  %640 = vmatprep.subr.mxu0 0.0
  %641 = vmatpush1.msra.mxu0 0.0
  %642 = vmatprep.subr.mxu0 0.0
  %643 = vmatpush1.msra.mxu0 0.0
  %644 = vmatprep.subr.mxu0 0.0
  %645 = vmatpush1.msra.mxu0 0.0
  %646 = vmatprep.subr.mxu0 0.0
  %647 = vmatpush1.msra.mxu0 0.0
  %648 = vmatprep.subr.mxu0 0.0
  %649 = vmatpush1.msra.mxu0 0.0
  %650 = vmatprep.subr.mxu0 0.0
  %651 = vmatpush1.msra.mxu0 0.0
  %652 = vmatprep.subr.mxu0 0.0
  %653 = vmatpush1.msra.mxu0 0.0
  %654 = vmatprep.subr.mxu0 0.0
  %655 = vmatpush1.msra.mxu0 0.0
  %656 = vmatprep.subr.mxu0 0.0
  %657 = vmatpush1.msra.mxu0 0.0
  %658 = vmatprep.subr.mxu0 0.0
  %659 = vmatpush1.msra.mxu0 0.0
  %660 = vmatprep.subr.mxu0 0.0
  %661 = vmatpush1.msra.mxu0 0.0
  %662 = vmatprep.subr.mxu0 0.0
  %663 = vmatpush1.msra.mxu0 0.0
  %664 = vmatprep.subr.mxu0 0.0
  %665 = vmatpush1.msra.mxu0 %v81
  %666 = vmatprep.subr.mxu0 0.0
  %667 = vmatpush1.msra.mxu0 %v80
  %668 = vmatprep.subr.mxu0 0.0
  %669 = vmatpush1.msra.mxu0 %v79
  %670 = vmatprep.subr.mxu0 0.0
  %671 = vmatpush1.msra.mxu0 %v78
  %672 = vmatprep.subr.mxu0 0.0
  %673 = vmatpush2.msra.mxu0 0.0
  %674 = vmatprep.subr.mxu0 0.0
  %675 = vmatpush2.msra.mxu0 0.0
  %676 = vmatprep.subr.mxu0 0.0
  %677 = vmatpush2.msra.mxu0 0.0
  %678 = vmatprep.subr.mxu0 0.0
  %679 = vmatpush2.msra.mxu0 0.0
  %680 = vmatprep.subr.mxu0 0.0
  %681 = vmatpush2.msra.mxu0 0.0
  %682 = vmatprep.subr.mxu0 0.0
  %683 = vmatpush2.msra.mxu0 0.0
  %684 = vmatprep.subr.mxu0 0.0
  %685 = vmatpush2.msra.mxu0 0.0
  %686 = vmatprep.subr.mxu0 0.0
  %687 = vmatpush2.msra.mxu0 0.0
  %688 = vmatprep.subr.mxu0 0.0
  %689 = vmatpush2.msra.mxu0 0.0
  %690 = vmatprep.subr.mxu0 0.0
  %691 = vmatpush2.msra.mxu0 0.0
  %692 = vmatprep.subr.mxu0 0.0
  %693 = vmatpush2.msra.mxu0 0.0
  %694 = vmatprep.subr.mxu0 0.0
  %695 = vmatpush2.msra.mxu0 0.0
  %696 = vmatprep.subr.mxu0 0.0
  %697 = vmatpush2.msra.mxu0 0.0
  %698 = vmatprep.subr.mxu0 0.0
  %699 = vmatpush2.msra.mxu0 0.0
  %700 = vmatprep.subr.mxu0 0.0
  %701 = vmatpush2.msra.mxu0 0.0
  %702 = vmatprep.subr.mxu0 0.0
  %703 = vmatpush2.msra.mxu0 0.0
  %704 = vmatprep.mubr.f32.mxu0 0.0
  %705 = vmatmul.mubr.f32.gmra.mxu0 %v245
  %v706 = vpop.f32.mrf.mxu0
  %v707 = vadd.f32 0.0, %v706
  %v708 = vpop.f32.mrf.mxu0
  %709 = vdwg.mxu0
  %710 = vmatprep.subr.mxu0 0.0
  %711 = vmatpush1.msra.mxu0 0.0
  %712 = vmatprep.subr.mxu0 0.0
  %713 = vmatpush1.msra.mxu0 0.0
  %714 = vmatprep.subr.mxu0 0.0
  %715 = vmatpush1.msra.mxu0 0.0
  %716 = vmatprep.subr.mxu0 0.0
  %717 = vmatpush1.msra.mxu0 0.0
  %718 = vmatprep.subr.mxu0 0.0
  %719 = vmatpush1.msra.mxu0 0.0
  %720 = vmatprep.subr.mxu0 0.0
  %721 = vmatpush1.msra.mxu0 0.0
  %722 = vmatprep.subr.mxu0 0.0
  %723 = vmatpush1.msra.mxu0 0.0
  %724 = vmatprep.subr.mxu0 0.0
  %725 = vmatpush1.msra.mxu0 0.0
  %726 = vmatprep.subr.mxu0 0.0
  %727 = vmatpush1.msra.mxu0 0.0
  %728 = vmatprep.subr.mxu0 0.0
  %729 = vmatpush1.msra.mxu0 0.0
  %730 = vmatprep.subr.mxu0 0.0
  %731 = vmatpush1.msra.mxu0 0.0
  %732 = vmatprep.subr.mxu0 0.0
  %733 = vmatpush1.msra.mxu0 0.0
  %734 = vmatprep.subr.mxu0 0.0
  %735 = vmatpush1.msra.mxu0 %v67
  %736 = vmatprep.subr.mxu0 0.0
  %737 = vmatpush1.msra.mxu0 %v66
  %738 = vmatprep.subr.mxu0 0.0
  %739 = vmatpush1.msra.mxu0 %v65
  %740 = vmatprep.subr.mxu0 0.0
  %741 = vmatpush1.msra.mxu0 %v64
  %742 = vmatprep.subr.mxu0 0.0
  %743 = vmatpush2.msra.mxu0 0.0
  %744 = vmatprep.subr.mxu0 0.0
  %745 = vmatpush2.msra.mxu0 0.0
  %746 = vmatprep.subr.mxu0 0.0
  %747 = vmatpush2.msra.mxu0 0.0
  %748 = vmatprep.subr.mxu0 0.0
  %749 = vmatpush2.msra.mxu0 0.0
  %750 = vmatprep.subr.mxu0 0.0
  %751 = vmatpush2.msra.mxu0 0.0
  %752 = vmatprep.subr.mxu0 0.0
  %753 = vmatpush2.msra.mxu0 0.0
  %754 = vmatprep.subr.mxu0 0.0
  %755 = vmatpush2.msra.mxu0 0.0
  %756 = vmatprep.subr.mxu0 0.0
  %757 = vmatpush2.msra.mxu0 0.0
  %758 = vmatprep.subr.mxu0 0.0
  %759 = vmatpush2.msra.mxu0 0.0
  %760 = vmatprep.subr.mxu0 0.0
  %761 = vmatpush2.msra.mxu0 0.0
  %762 = vmatprep.subr.mxu0 0.0
  %763 = vmatpush2.msra.mxu0 0.0
  %764 = vmatprep.subr.mxu0 0.0
  %765 = vmatpush2.msra.mxu0 0.0
  %766 = vmatprep.subr.mxu0 0.0
  %767 = vmatpush2.msra.mxu0 0.0
  %768 = vmatprep.subr.mxu0 0.0
  %769 = vmatpush2.msra.mxu0 0.0
  %770 = vmatprep.subr.mxu0 0.0
  %771 = vmatpush2.msra.mxu0 0.0
  %772 = vmatprep.subr.mxu0 0.0
  %773 = vmatpush2.msra.mxu0 0.0
  %774 = vmatprep.mubr.f32.mxu0 0.0
  %775 = vmatmul.mubr.f32.gmra.mxu0 %v555
  %v776 = vpop.f32.mrf.mxu0
  %v777 = vadd.f32 %v707, %v776
  %v778 = vpop.f32.mrf.mxu0
  %779 = vdwg.mxu0
  %v781 = vlaneseq
  %v782 = vshrl.u32 %v781, 7
  %v783 = vsub.s32 0, %v782
  %v784 = vrot.slane %v106, %v783
  %v786 = vadd.f32 %v777, %v784
  %v787 = vxor.u32 %v786, 2147483648
  %v788 = vmul.f32 %v787, 1.442695
  %v789 = vpow.pop %v788
  %v790 = vadd.f32 %v789, 1.0
  %v791 = vrcp.pop %v790
  %v792 = vmul.f32 1.0, %v791
  %v794 = vlaneseq
  %v795 = vshrl.u32 %v794, 7
  %v796 = vsub.s32 0, %v795
  %v797 = vrot.slane %v108, %v796
  %799 = vmatprep.subr.mxu0 0.0
  %800 = vmatpush1.msra.mxu0 0.0
  %801 = vmatprep.subr.mxu0 0.0
  %802 = vmatpush1.msra.mxu0 0.0
  %803 = vmatprep.subr.mxu0 0.0
  %804 = vmatpush1.msra.mxu0 0.0
  %805 = vmatprep.subr.mxu0 0.0
  %806 = vmatpush1.msra.mxu0 0.0
  %807 = vmatprep.subr.mxu0 0.0
  %808 = vmatpush1.msra.mxu0 0.0
  %809 = vmatprep.subr.mxu0 0.0
  %810 = vmatpush1.msra.mxu0 0.0
  %811 = vmatprep.subr.mxu0 0.0
  %812 = vmatpush1.msra.mxu0 0.0
  %813 = vmatprep.subr.mxu0 0.0
  %814 = vmatpush1.msra.mxu0 0.0
  %815 = vmatprep.subr.mxu0 0.0
  %816 = vmatpush1.msra.mxu0 0.0
  %817 = vmatprep.subr.mxu0 0.0
  %818 = vmatpush1.msra.mxu0 0.0
  %819 = vmatprep.subr.mxu0 0.0
  %820 = vmatpush1.msra.mxu0 0.0
  %821 = vmatprep.subr.mxu0 0.0
  %822 = vmatpush1.msra.mxu0 0.0
  %823 = vmatprep.subr.mxu0 0.0
  %824 = vmatpush1.msra.mxu0 %v72
  %825 = vmatprep.subr.mxu0 0.0
  %826 = vmatpush1.msra.mxu0 %v71
  %827 = vmatprep.subr.mxu0 0.0
  %828 = vmatpush1.msra.mxu0 %v70
  %829 = vmatprep.subr.mxu0 0.0
  %830 = vmatpush1.msra.mxu0 %v69
  %831 = vmatprep.subr.mxu0 0.0
  %832 = vmatpush2.msra.mxu0 0.0
  %833 = vmatprep.subr.mxu0 0.0
  %834 = vmatpush2.msra.mxu0 0.0
  %835 = vmatprep.subr.mxu0 0.0
  %836 = vmatpush2.msra.mxu0 0.0
  %837 = vmatprep.subr.mxu0 0.0
  %838 = vmatpush2.msra.mxu0 0.0
  %839 = vmatprep.subr.mxu0 0.0
  %840 = vmatpush2.msra.mxu0 0.0
  %841 = vmatprep.subr.mxu0 0.0
  %842 = vmatpush2.msra.mxu0 0.0
  %843 = vmatprep.subr.mxu0 0.0
  %844 = vmatpush2.msra.mxu0 0.0
  %845 = vmatprep.subr.mxu0 0.0
  %846 = vmatpush2.msra.mxu0 0.0
  %847 = vmatprep.subr.mxu0 0.0
  %848 = vmatpush2.msra.mxu0 0.0
  %849 = vmatprep.subr.mxu0 0.0
  %850 = vmatpush2.msra.mxu0 0.0
  %851 = vmatprep.subr.mxu0 0.0
  %852 = vmatpush2.msra.mxu0 0.0
  %853 = vmatprep.subr.mxu0 0.0
  %854 = vmatpush2.msra.mxu0 0.0
  %855 = vmatprep.subr.mxu0 0.0
  %856 = vmatpush2.msra.mxu0 0.0
  %857 = vmatprep.subr.mxu0 0.0
  %858 = vmatpush2.msra.mxu0 0.0
  %859 = vmatprep.subr.mxu0 0.0
  %860 = vmatpush2.msra.mxu0 0.0
  %861 = vmatprep.subr.mxu0 0.0
  %862 = vmatpush2.msra.mxu0 0.0
  %863 = vmatprep.mubr.f32.mxu0 0.0
  %864 = vmatmul.mubr.f32.gmra.mxu0 %v555
  %v865 = vpop.f32.mrf.mxu0
  %v866 = vadd.f32 %v797, %v865
  %v867 = vpop.f32.mrf.mxu0
  %868 = vdwg.mxu0
  %v870 = vlaneseq
  %v871 = vshrl.u32 %v870, 7
  %v872 = vsub.s32 0, %v871
  %v873 = vrot.slane %v110, %v872
  %875 = vmatprep.subr.mxu0 0.0
  %876 = vmatpush1.msra.mxu0 0.0
  %877 = vmatprep.subr.mxu0 0.0
  %878 = vmatpush1.msra.mxu0 0.0
  %879 = vmatprep.subr.mxu0 0.0
  %880 = vmatpush1.msra.mxu0 0.0
  %881 = vmatprep.subr.mxu0 0.0
  %882 = vmatpush1.msra.mxu0 0.0
  %883 = vmatprep.subr.mxu0 0.0
  %884 = vmatpush1.msra.mxu0 0.0
  %885 = vmatprep.subr.mxu0 0.0
  %886 = vmatpush1.msra.mxu0 0.0
  %887 = vmatprep.subr.mxu0 0.0
  %888 = vmatpush1.msra.mxu0 0.0
  %889 = vmatprep.subr.mxu0 0.0
  %890 = vmatpush1.msra.mxu0 0.0
  %891 = vmatprep.subr.mxu0 0.0
  %892 = vmatpush1.msra.mxu0 0.0
  %893 = vmatprep.subr.mxu0 0.0
  %894 = vmatpush1.msra.mxu0 0.0
  %895 = vmatprep.subr.mxu0 0.0
  %896 = vmatpush1.msra.mxu0 0.0
  %897 = vmatprep.subr.mxu0 0.0
  %898 = vmatpush1.msra.mxu0 0.0
  %899 = vmatprep.subr.mxu0 0.0
  %900 = vmatpush1.msra.mxu0 %v86
  %901 = vmatprep.subr.mxu0 0.0
  %902 = vmatpush1.msra.mxu0 %v85
  %903 = vmatprep.subr.mxu0 0.0
  %904 = vmatpush1.msra.mxu0 %v84
  %905 = vmatprep.subr.mxu0 0.0
  %906 = vmatpush1.msra.mxu0 %v83
  %907 = vmatprep.subr.mxu0 0.0
  %908 = vmatpush2.msra.mxu0 0.0
  %909 = vmatprep.subr.mxu0 0.0
  %910 = vmatpush2.msra.mxu0 0.0
  %911 = vmatprep.subr.mxu0 0.0
  %912 = vmatpush2.msra.mxu0 0.0
  %913 = vmatprep.subr.mxu0 0.0
  %914 = vmatpush2.msra.mxu0 0.0
  %915 = vmatprep.subr.mxu0 0.0
  %916 = vmatpush2.msra.mxu0 0.0
  %917 = vmatprep.subr.mxu0 0.0
  %918 = vmatpush2.msra.mxu0 0.0
  %919 = vmatprep.subr.mxu0 0.0
  %920 = vmatpush2.msra.mxu0 0.0
  %921 = vmatprep.subr.mxu0 0.0
  %922 = vmatpush2.msra.mxu0 0.0
  %923 = vmatprep.subr.mxu0 0.0
  %924 = vmatpush2.msra.mxu0 0.0
  %925 = vmatprep.subr.mxu0 0.0
  %926 = vmatpush2.msra.mxu0 0.0
  %927 = vmatprep.subr.mxu0 0.0
  %928 = vmatpush2.msra.mxu0 0.0
  %929 = vmatprep.subr.mxu0 0.0
  %930 = vmatpush2.msra.mxu0 0.0
  %931 = vmatprep.subr.mxu0 0.0
  %932 = vmatpush2.msra.mxu0 0.0
  %933 = vmatprep.subr.mxu0 0.0
  %934 = vmatpush2.msra.mxu0 0.0
  %935 = vmatprep.subr.mxu0 0.0
  %936 = vmatpush2.msra.mxu0 0.0
  %937 = vmatprep.subr.mxu0 0.0
  %938 = vmatpush2.msra.mxu0 0.0
  %939 = vmatprep.mubr.f32.mxu0 0.0
  %940 = vmatmul.mubr.f32.gmra.mxu0 %v245
  %v941 = vpop.f32.mrf.mxu0
  %v942 = vadd.f32 %v873, %v941
  %v943 = vpop.f32.mrf.mxu0
  %944 = vdwg.mxu0
  %v945 = vmul.f32 %v639, %v942
  %v946 = vadd.f32 %v866, %v945
  %v947 = vtanh.pop %v946
  %v948 = vsub.f32 1.0, %v792
  %v949 = vmul.f32 %v948, %v947
  %v950 = vmul.f32 %v792, 0.0
  %v951 = vadd.f32 %v949, %v950
  %v952 = vld [vmem:[%s9] sm:$0xff]
  %v953 = vld [vmem:[%s9 + $0x8] sm:$0xff]
  %v954 = vld [vmem:[%s9 + $0x10] sm:$0xff]
  %v955 = vld [vmem:[%s9 + $0x18] sm:$0xff]
  %956 = vmatprep.subr.mxu0 0.0
  %957 = vmatpush1.msra.mxu0 0.0
  %958 = vmatprep.subr.mxu0 0.0
  %959 = vmatpush1.msra.mxu0 0.0
  %960 = vmatprep.subr.mxu0 0.0
  %961 = vmatpush1.msra.mxu0 0.0
  %962 = vmatprep.subr.mxu0 0.0
  %963 = vmatpush1.msra.mxu0 0.0
  %964 = vmatprep.subr.mxu0 0.0
  %965 = vmatpush1.msra.mxu0 0.0
  %966 = vmatprep.subr.mxu0 0.0
  %967 = vmatpush1.msra.mxu0 0.0
  %968 = vmatprep.subr.mxu0 0.0
  %969 = vmatpush1.msra.mxu0 0.0
  %970 = vmatprep.subr.mxu0 0.0
  %971 = vmatpush1.msra.mxu0 0.0
  %972 = vmatprep.subr.mxu0 0.0
  %973 = vmatpush1.msra.mxu0 0.0
  %974 = vmatprep.subr.mxu0 0.0
  %975 = vmatpush1.msra.mxu0 0.0
  %976 = vmatprep.subr.mxu0 0.0
  %977 = vmatpush1.msra.mxu0 0.0
  %978 = vmatprep.subr.mxu0 0.0
  %979 = vmatpush1.msra.mxu0 0.0
  %980 = vmatprep.subr.mxu0 0.0
  %981 = vmatpush1.msra.mxu0 %v48
  %982 = vmatprep.subr.mxu0 0.0
  %983 = vmatpush1.msra.mxu0 %v47
  %984 = vmatprep.subr.mxu0 0.0
  %985 = vmatpush1.msra.mxu0 %v46
  %986 = vmatprep.subr.mxu0 0.0
  %987 = vmatpush1.msra.mxu0 %v45
  %988 = vmatprep.subr.mxu0 0.0
  %989 = vmatpush2.msra.mxu0 0.0
  %990 = vmatprep.subr.mxu0 0.0
  %991 = vmatpush2.msra.mxu0 0.0
  %992 = vmatprep.subr.mxu0 0.0
  %993 = vmatpush2.msra.mxu0 0.0
  %994 = vmatprep.subr.mxu0 0.0
  %995 = vmatpush2.msra.mxu0 0.0
  %996 = vmatprep.subr.mxu0 0.0
  %997 = vmatpush2.msra.mxu0 0.0
  %998 = vmatprep.subr.mxu0 0.0
  %999 = vmatpush2.msra.mxu0 0.0
  %1000 = vmatprep.subr.mxu0 0.0
  %1001 = vmatpush2.msra.mxu0 0.0
  %1002 = vmatprep.subr.mxu0 0.0
  %1003 = vmatpush2.msra.mxu0 0.0
  %1004 = vmatprep.subr.mxu0 0.0
  %1005 = vmatpush2.msra.mxu0 0.0
  %1006 = vmatprep.subr.mxu0 0.0
  %1007 = vmatpush2.msra.mxu0 0.0
  %1008 = vmatprep.subr.mxu0 0.0
  %1009 = vmatpush2.msra.mxu0 0.0
  %1010 = vmatprep.subr.mxu0 0.0
  %1011 = vmatpush2.msra.mxu0 0.0
  %1012 = vmatprep.subr.mxu0 0.0
  %1013 = vmatpush2.msra.mxu0 0.0
  %1014 = vmatprep.subr.mxu0 0.0
  %1015 = vmatpush2.msra.mxu0 0.0
  %1016 = vmatprep.subr.mxu0 0.0
  %1017 = vmatpush2.msra.mxu0 0.0
  %1018 = vmatprep.subr.mxu0 0.0
  %1019 = vmatpush2.msra.mxu0 0.0
  %1020 = vmatprep.mubr.f32.mxu0 0.0
  %1021 = vmatmul.mubr.f32.gmra.mxu0 %v555
  %v1022 = vpop.f32.mrf.mxu0
  %v1023 = vadd.f32 0.0, %v1022
  %v1024 = vpop.f32.mrf.mxu0
  %1025 = vdwg.mxu0
  %v1026 = vadd.f32 %v180, %v1023
  %v1027 = vxor.u32 %v1026, 2147483648
  %v1028 = vmul.f32 %v1027, 1.442695
  %v1029 = vpow.pop %v1028
  %v1030 = vadd.f32 %v1029, 1.0
  %v1031 = vrcp.pop %v1030
  %v1032 = vmul.f32 1.0, %v1031
  %1033 = vmatprep.subr.mxu0 0.0
  %1034 = vmatpush1.msra.mxu0 0.0
  %1035 = vmatprep.subr.mxu0 0.0
  %1036 = vmatpush1.msra.mxu0 0.0
  %1037 = vmatprep.subr.mxu0 0.0
  %1038 = vmatpush1.msra.mxu0 0.0
  %1039 = vmatprep.subr.mxu0 0.0
  %1040 = vmatpush1.msra.mxu0 0.0
  %1041 = vmatprep.subr.mxu0 0.0
  %1042 = vmatpush1.msra.mxu0 0.0
  %1043 = vmatprep.subr.mxu0 0.0
  %1044 = vmatpush1.msra.mxu0 0.0
  %1045 = vmatprep.subr.mxu0 0.0
  %1046 = vmatpush1.msra.mxu0 0.0
  %1047 = vmatprep.subr.mxu0 0.0
  %1048 = vmatpush1.msra.mxu0 0.0
  %1049 = vmatprep.subr.mxu0 0.0
  %1050 = vmatpush1.msra.mxu0 0.0
  %1051 = vmatprep.subr.mxu0 0.0
  %1052 = vmatpush1.msra.mxu0 0.0
  %1053 = vmatprep.subr.mxu0 0.0
  %1054 = vmatpush1.msra.mxu0 0.0
  %1055 = vmatprep.subr.mxu0 0.0
  %1056 = vmatpush1.msra.mxu0 0.0
  %1057 = vmatprep.subr.mxu0 0.0
  %1058 = vmatpush1.msra.mxu0 %v53
  %1059 = vmatprep.subr.mxu0 0.0
  %1060 = vmatpush1.msra.mxu0 %v52
  %1061 = vmatprep.subr.mxu0 0.0
  %1062 = vmatpush1.msra.mxu0 %v51
  %1063 = vmatprep.subr.mxu0 0.0
  %1064 = vmatpush1.msra.mxu0 %v50
  %1065 = vmatprep.subr.mxu0 0.0
  %1066 = vmatpush2.msra.mxu0 0.0
  %1067 = vmatprep.subr.mxu0 0.0
  %1068 = vmatpush2.msra.mxu0 0.0
  %1069 = vmatprep.subr.mxu0 0.0
  %1070 = vmatpush2.msra.mxu0 0.0
  %1071 = vmatprep.subr.mxu0 0.0
  %1072 = vmatpush2.msra.mxu0 0.0
  %1073 = vmatprep.subr.mxu0 0.0
  %1074 = vmatpush2.msra.mxu0 0.0
  %1075 = vmatprep.subr.mxu0 0.0
  %1076 = vmatpush2.msra.mxu0 0.0
  %1077 = vmatprep.subr.mxu0 0.0
  %1078 = vmatpush2.msra.mxu0 0.0
  %1079 = vmatprep.subr.mxu0 0.0
  %1080 = vmatpush2.msra.mxu0 0.0
  %1081 = vmatprep.subr.mxu0 0.0
  %1082 = vmatpush2.msra.mxu0 0.0
  %1083 = vmatprep.subr.mxu0 0.0
  %1084 = vmatpush2.msra.mxu0 0.0
  %1085 = vmatprep.subr.mxu0 0.0
  %1086 = vmatpush2.msra.mxu0 0.0
  %1087 = vmatprep.subr.mxu0 0.0
  %1088 = vmatpush2.msra.mxu0 0.0
  %1089 = vmatprep.subr.mxu0 0.0
  %1090 = vmatpush2.msra.mxu0 0.0
  %1091 = vmatprep.subr.mxu0 0.0
  %1092 = vmatpush2.msra.mxu0 0.0
  %1093 = vmatprep.subr.mxu0 0.0
  %1094 = vmatpush2.msra.mxu0 0.0
  %1095 = vmatprep.subr.mxu0 0.0
  %1096 = vmatpush2.msra.mxu0 0.0
  %1097 = vmatprep.mubr.f32.mxu0 0.0
  %1098 = vmatmul.mubr.f32.gmra.mxu0 %v555
  %v1099 = vpop.f32.mrf.mxu0
  %v1100 = vadd.f32 0.0, %v1099
  %v1101 = vpop.f32.mrf.mxu0
  %1102 = vdwg.mxu0
  %v1103 = vadd.f32 %v208, %v1100
  %v1104 = vxor.u32 %v1103, 2147483648
  %v1105 = vmul.f32 %v1104, 1.442695
  %v1106 = vpow.pop %v1105
  %v1107 = vadd.f32 %v1106, 1.0
  %v1108 = vrcp.pop %v1107
  %v1109 = vmul.f32 1.0, %v1108
  %1110 = vmatprep.subr.mxu0 0.0
  %1111 = vmatpush1.msra.mxu0 0.0
  %1112 = vmatprep.subr.mxu0 0.0
  %1113 = vmatpush1.msra.mxu0 0.0
  %1114 = vmatprep.subr.mxu0 0.0
  %1115 = vmatpush1.msra.mxu0 0.0
  %1116 = vmatprep.subr.mxu0 0.0
  %1117 = vmatpush1.msra.mxu0 0.0
  %1118 = vmatprep.subr.mxu0 0.0
  %1119 = vmatpush1.msra.mxu0 0.0
  %1120 = vmatprep.subr.mxu0 0.0
  %1121 = vmatpush1.msra.mxu0 0.0
  %1122 = vmatprep.subr.mxu0 0.0
  %1123 = vmatpush1.msra.mxu0 0.0
  %1124 = vmatprep.subr.mxu0 0.0
  %1125 = vmatpush1.msra.mxu0 0.0
  %1126 = vmatprep.subr.mxu0 0.0
  %1127 = vmatpush1.msra.mxu0 0.0
  %1128 = vmatprep.subr.mxu0 0.0
  %1129 = vmatpush1.msra.mxu0 0.0
  %1130 = vmatprep.subr.mxu0 0.0
  %1131 = vmatpush1.msra.mxu0 0.0
  %1132 = vmatprep.subr.mxu0 0.0
  %1133 = vmatpush1.msra.mxu0 0.0
  %1134 = vmatprep.subr.mxu0 0.0
  %1135 = vmatpush1.msra.mxu0 %v58
  %1136 = vmatprep.subr.mxu0 0.0
  %1137 = vmatpush1.msra.mxu0 %v57
  %1138 = vmatprep.subr.mxu0 0.0
  %1139 = vmatpush1.msra.mxu0 %v56
  %1140 = vmatprep.subr.mxu0 0.0
  %1141 = vmatpush1.msra.mxu0 %v55
  %1142 = vmatprep.subr.mxu0 0.0
  %1143 = vmatpush2.msra.mxu0 0.0
  %1144 = vmatprep.subr.mxu0 0.0
  %1145 = vmatpush2.msra.mxu0 0.0
  %1146 = vmatprep.subr.mxu0 0.0
  %1147 = vmatpush2.msra.mxu0 0.0
  %1148 = vmatprep.subr.mxu0 0.0
  %1149 = vmatpush2.msra.mxu0 0.0
  %1150 = vmatprep.subr.mxu0 0.0
  %1151 = vmatpush2.msra.mxu0 0.0
  %1152 = vmatprep.subr.mxu0 0.0
  %1153 = vmatpush2.msra.mxu0 0.0
  %1154 = vmatprep.subr.mxu0 0.0
  %1155 = vmatpush2.msra.mxu0 0.0
  %1156 = vmatprep.subr.mxu0 0.0
  %1157 = vmatpush2.msra.mxu0 0.0
  %1158 = vmatprep.subr.mxu0 0.0
  %1159 = vmatpush2.msra.mxu0 0.0
  %1160 = vmatprep.subr.mxu0 0.0
  %1161 = vmatpush2.msra.mxu0 0.0
  %1162 = vmatprep.subr.mxu0 0.0
  %1163 = vmatpush2.msra.mxu0 0.0
  %1164 = vmatprep.subr.mxu0 0.0
  %1165 = vmatpush2.msra.mxu0 0.0
  %1166 = vmatprep.subr.mxu0 0.0
  %1167 = vmatpush2.msra.mxu0 0.0
  %1168 = vmatprep.subr.mxu0 0.0
  %1169 = vmatpush2.msra.mxu0 0.0
  %1170 = vmatprep.subr.mxu0 0.0
  %1171 = vmatpush2.msra.mxu0 0.0
  %1172 = vmatprep.subr.mxu0 0.0
  %1173 = vmatpush2.msra.mxu0 0.0
  %1174 = vmatprep.mubr.f32.mxu0 0.0
  %1175 = vmatmul.mubr.f32.gmra.mxu0 %v555
  %v1176 = vpop.f32.mrf.mxu0
  %v1177 = vadd.f32 %v405, %v1176
  %v1178 = vpop.f32.mrf.mxu0
  %1179 = vdwg.mxu0
  %v1180 = vmul.f32 %v1032, %v1177
  %v1181 = vadd.f32 %v236, %v1180
  %v1182 = vtanh.pop %v1181
  %v1183 = vsub.f32 1.0, %v1109
  %v1184 = vmul.f32 %v1183, %v1182
  %v1185 = vmul.f32 %v1109, %v483
  %v1186 = vadd.f32 %v1184, %v1185
  %v1188 = vsel %vm243, %v951, 0
  %1190 = vmatprep.subr.mxu0 0.0
  %1191 = vmatpush1.msra.mxu0 0.0
  %1192 = vmatprep.subr.mxu0 0.0
  %1193 = vmatpush1.msra.mxu0 0.0
  %1194 = vmatprep.subr.mxu0 0.0
  %1195 = vmatpush1.msra.mxu0 0.0
  %1196 = vmatprep.subr.mxu0 0.0
  %1197 = vmatpush1.msra.mxu0 0.0
  %1198 = vmatprep.subr.mxu0 0.0
  %1199 = vmatpush1.msra.mxu0 0.0
  %1200 = vmatprep.subr.mxu0 0.0
  %1201 = vmatpush1.msra.mxu0 0.0
  %1202 = vmatprep.subr.mxu0 0.0
  %1203 = vmatpush1.msra.mxu0 0.0
  %1204 = vmatprep.subr.mxu0 0.0
  %1205 = vmatpush1.msra.mxu0 0.0
  %1206 = vmatprep.subr.mxu0 0.0
  %1207 = vmatpush1.msra.mxu0 0.0
  %1208 = vmatprep.subr.mxu0 0.0
  %1209 = vmatpush1.msra.mxu0 0.0
  %1210 = vmatprep.subr.mxu0 0.0
  %1211 = vmatpush1.msra.mxu0 0.0
  %1212 = vmatprep.subr.mxu0 0.0
  %1213 = vmatpush1.msra.mxu0 0.0
  %1214 = vmatprep.subr.mxu0 0.0
  %1215 = vmatpush1.msra.mxu0 %v76
  %1216 = vmatprep.subr.mxu0 0.0
  %1217 = vmatpush1.msra.mxu0 %v75
  %1218 = vmatprep.subr.mxu0 0.0
  %1219 = vmatpush1.msra.mxu0 %v74
  %1220 = vmatprep.subr.mxu0 0.0
  %1221 = vmatpush1.msra.mxu0 %v73
  %1222 = vmatprep.subr.mxu0 0.0
  %1223 = vmatpush2.msra.mxu0 0.0
  %1224 = vmatprep.subr.mxu0 0.0
  %1225 = vmatpush2.msra.mxu0 0.0
  %1226 = vmatprep.subr.mxu0 0.0
  %1227 = vmatpush2.msra.mxu0 0.0
  %1228 = vmatprep.subr.mxu0 0.0
  %1229 = vmatpush2.msra.mxu0 0.0
  %1230 = vmatprep.subr.mxu0 0.0
  %1231 = vmatpush2.msra.mxu0 0.0
  %1232 = vmatprep.subr.mxu0 0.0
  %1233 = vmatpush2.msra.mxu0 0.0
  %1234 = vmatprep.subr.mxu0 0.0
  %1235 = vmatpush2.msra.mxu0 0.0
  %1236 = vmatprep.subr.mxu0 0.0
  %1237 = vmatpush2.msra.mxu0 0.0
  %1238 = vmatprep.subr.mxu0 0.0
  %1239 = vmatpush2.msra.mxu0 0.0
  %1240 = vmatprep.subr.mxu0 0.0
  %1241 = vmatpush2.msra.mxu0 0.0
  %1242 = vmatprep.subr.mxu0 0.0
  %1243 = vmatpush2.msra.mxu0 0.0
  %1244 = vmatprep.subr.mxu0 0.0
  %1245 = vmatpush2.msra.mxu0 0.0
  %1246 = vmatprep.subr.mxu0 0.0
  %1247 = vmatpush2.msra.mxu0 0.0
  %1248 = vmatprep.subr.mxu0 0.0
  %1249 = vmatpush2.msra.mxu0 0.0
  %1250 = vmatprep.subr.mxu0 0.0
  %1251 = vmatpush2.msra.mxu0 0.0
  %1252 = vmatprep.subr.mxu0 0.0
  %1253 = vmatpush2.msra.mxu0 0.0
  %1254 = vmatprep.mubr.f32.mxu0 0.0
  %1255 = vmatmul.mubr.f32.gmra.mxu0 %v1188
  %v1256 = vpop.f32.mrf.mxu0
  %v1257 = vadd.f32 0.0, %v1256
  %v1258 = vpop.f32.mrf.mxu0
  %1259 = vdwg.mxu0
  %v1261 = vsel %vm243, %v1186, 0
  %1263 = vmatprep.subr.mxu0 0.0
  %1264 = vmatpush1.msra.mxu0 0.0
  %1265 = vmatprep.subr.mxu0 0.0
  %1266 = vmatpush1.msra.mxu0 0.0
  %1267 = vmatprep.subr.mxu0 0.0
  %1268 = vmatpush1.msra.mxu0 0.0
  %1269 = vmatprep.subr.mxu0 0.0
  %1270 = vmatpush1.msra.mxu0 0.0
  %1271 = vmatprep.subr.mxu0 0.0
  %1272 = vmatpush1.msra.mxu0 0.0
  %1273 = vmatprep.subr.mxu0 0.0
  %1274 = vmatpush1.msra.mxu0 0.0
  %1275 = vmatprep.subr.mxu0 0.0
  %1276 = vmatpush1.msra.mxu0 0.0
  %1277 = vmatprep.subr.mxu0 0.0
  %1278 = vmatpush1.msra.mxu0 0.0
  %1279 = vmatprep.subr.mxu0 0.0
  %1280 = vmatpush1.msra.mxu0 0.0
  %1281 = vmatprep.subr.mxu0 0.0
  %1282 = vmatpush1.msra.mxu0 0.0
  %1283 = vmatprep.subr.mxu0 0.0
  %1284 = vmatpush1.msra.mxu0 0.0
  %1285 = vmatprep.subr.mxu0 0.0
  %1286 = vmatpush1.msra.mxu0 0.0
  %1287 = vmatprep.subr.mxu0 0.0
  %1288 = vmatpush1.msra.mxu0 %v62
  %1289 = vmatprep.subr.mxu0 0.0
  %1290 = vmatpush1.msra.mxu0 %v61
  %1291 = vmatprep.subr.mxu0 0.0
  %1292 = vmatpush1.msra.mxu0 %v60
  %1293 = vmatprep.subr.mxu0 0.0
  %1294 = vmatpush1.msra.mxu0 %v59
  %1295 = vmatprep.subr.mxu0 0.0
  %1296 = vmatpush2.msra.mxu0 0.0
  %1297 = vmatprep.subr.mxu0 0.0
  %1298 = vmatpush2.msra.mxu0 0.0
  %1299 = vmatprep.subr.mxu0 0.0
  %1300 = vmatpush2.msra.mxu0 0.0
  %1301 = vmatprep.subr.mxu0 0.0
  %1302 = vmatpush2.msra.mxu0 0.0
  %1303 = vmatprep.subr.mxu0 0.0
  %1304 = vmatpush2.msra.mxu0 0.0
  %1305 = vmatprep.subr.mxu0 0.0
  %1306 = vmatpush2.msra.mxu0 0.0
  %1307 = vmatprep.subr.mxu0 0.0
  %1308 = vmatpush2.msra.mxu0 0.0
  %1309 = vmatprep.subr.mxu0 0.0
  %1310 = vmatpush2.msra.mxu0 0.0
  %1311 = vmatprep.subr.mxu0 0.0
  %1312 = vmatpush2.msra.mxu0 0.0
  %1313 = vmatprep.subr.mxu0 0.0
  %1314 = vmatpush2.msra.mxu0 0.0
  %1315 = vmatprep.subr.mxu0 0.0
  %1316 = vmatpush2.msra.mxu0 0.0
  %1317 = vmatprep.subr.mxu0 0.0
  %1318 = vmatpush2.msra.mxu0 0.0
  %1319 = vmatprep.subr.mxu0 0.0
  %1320 = vmatpush2.msra.mxu0 0.0
  %1321 = vmatprep.subr.mxu0 0.0
  %1322 = vmatpush2.msra.mxu0 0.0
  %1323 = vmatprep.subr.mxu0 0.0
  %1324 = vmatpush2.msra.mxu0 0.0
  %1325 = vmatprep.subr.mxu0 0.0
  %1326 = vmatpush2.msra.mxu0 0.0
  %1327 = vmatprep.mubr.f32.mxu0 0.0
  %1328 = vmatmul.mubr.f32.gmra.mxu0 %v1261
  %v1329 = vpop.f32.mrf.mxu0
  %v1330 = vadd.f32 %v1257, %v1329
  %v1331 = vpop.f32.mrf.mxu0
  %1332 = vdwg.mxu0
  %v1333 = vadd.f32 %v1330, %v631
  %v1334 = vxor.u32 %v1333, 2147483648
  %v1335 = vmul.f32 %v1334, 1.442695
  %v1336 = vpow.pop %v1335
  %v1337 = vadd.f32 %v1336, 1.0
  %v1338 = vrcp.pop %v1337
  %v1339 = vmul.f32 1.0, %v1338
  %1340 = vmatprep.subr.mxu0 0.0
  %1341 = vmatpush1.msra.mxu0 0.0
  %1342 = vmatprep.subr.mxu0 0.0
  %1343 = vmatpush1.msra.mxu0 0.0
  %1344 = vmatprep.subr.mxu0 0.0
  %1345 = vmatpush1.msra.mxu0 0.0
  %1346 = vmatprep.subr.mxu0 0.0
  %1347 = vmatpush1.msra.mxu0 0.0
  %1348 = vmatprep.subr.mxu0 0.0
  %1349 = vmatpush1.msra.mxu0 0.0
  %1350 = vmatprep.subr.mxu0 0.0
  %1351 = vmatpush1.msra.mxu0 0.0
  %1352 = vmatprep.subr.mxu0 0.0
  %1353 = vmatpush1.msra.mxu0 0.0
  %1354 = vmatprep.subr.mxu0 0.0
  %1355 = vmatpush1.msra.mxu0 0.0
  %1356 = vmatprep.subr.mxu0 0.0
  %1357 = vmatpush1.msra.mxu0 0.0
  %1358 = vmatprep.subr.mxu0 0.0
  %1359 = vmatpush1.msra.mxu0 0.0
  %1360 = vmatprep.subr.mxu0 0.0
  %1361 = vmatpush1.msra.mxu0 0.0
  %1362 = vmatprep.subr.mxu0 0.0
  %1363 = vmatpush1.msra.mxu0 0.0
  %1364 = vmatprep.subr.mxu0 0.0
  %1365 = vmatpush1.msra.mxu0 %v81
  %1366 = vmatprep.subr.mxu0 0.0
  %1367 = vmatpush1.msra.mxu0 %v80
  %1368 = vmatprep.subr.mxu0 0.0
  %1369 = vmatpush1.msra.mxu0 %v79
  %1370 = vmatprep.subr.mxu0 0.0
  %1371 = vmatpush1.msra.mxu0 %v78
  %1372 = vmatprep.subr.mxu0 0.0
  %1373 = vmatpush2.msra.mxu0 0.0
  %1374 = vmatprep.subr.mxu0 0.0
  %1375 = vmatpush2.msra.mxu0 0.0
  %1376 = vmatprep.subr.mxu0 0.0
  %1377 = vmatpush2.msra.mxu0 0.0
  %1378 = vmatprep.subr.mxu0 0.0
  %1379 = vmatpush2.msra.mxu0 0.0
  %1380 = vmatprep.subr.mxu0 0.0
  %1381 = vmatpush2.msra.mxu0 0.0
  %1382 = vmatprep.subr.mxu0 0.0
  %1383 = vmatpush2.msra.mxu0 0.0
  %1384 = vmatprep.subr.mxu0 0.0
  %1385 = vmatpush2.msra.mxu0 0.0
  %1386 = vmatprep.subr.mxu0 0.0
  %1387 = vmatpush2.msra.mxu0 0.0
  %1388 = vmatprep.subr.mxu0 0.0
  %1389 = vmatpush2.msra.mxu0 0.0
  %1390 = vmatprep.subr.mxu0 0.0
  %1391 = vmatpush2.msra.mxu0 0.0
  %1392 = vmatprep.subr.mxu0 0.0
  %1393 = vmatpush2.msra.mxu0 0.0
  %1394 = vmatprep.subr.mxu0 0.0
  %1395 = vmatpush2.msra.mxu0 0.0
  %1396 = vmatprep.subr.mxu0 0.0
  %1397 = vmatpush2.msra.mxu0 0.0
  %1398 = vmatprep.subr.mxu0 0.0
  %1399 = vmatpush2.msra.mxu0 0.0
  %1400 = vmatprep.subr.mxu0 0.0
  %1401 = vmatpush2.msra.mxu0 0.0
  %1402 = vmatprep.subr.mxu0 0.0
  %1403 = vmatpush2.msra.mxu0 0.0
  %1404 = vmatprep.mubr.f32.mxu0 0.0
  %1405 = vmatmul.mubr.f32.gmra.mxu0 %v1188
  %v1406 = vpop.f32.mrf.mxu0
  %v1407 = vadd.f32 0.0, %v1406
  %v1408 = vpop.f32.mrf.mxu0
  %1409 = vdwg.mxu0
  %1410 = vmatprep.subr.mxu0 0.0
  %1411 = vmatpush1.msra.mxu0 0.0
  %1412 = vmatprep.subr.mxu0 0.0
  %1413 = vmatpush1.msra.mxu0 0.0
  %1414 = vmatprep.subr.mxu0 0.0
  %1415 = vmatpush1.msra.mxu0 0.0
  %1416 = vmatprep.subr.mxu0 0.0
  %1417 = vmatpush1.msra.mxu0 0.0
  %1418 = vmatprep.subr.mxu0 0.0
  %1419 = vmatpush1.msra.mxu0 0.0
  %1420 = vmatprep.subr.mxu0 0.0
  %1421 = vmatpush1.msra.mxu0 0.0
  %1422 = vmatprep.subr.mxu0 0.0
  %1423 = vmatpush1.msra.mxu0 0.0
  %1424 = vmatprep.subr.mxu0 0.0
  %1425 = vmatpush1.msra.mxu0 0.0
  %1426 = vmatprep.subr.mxu0 0.0
  %1427 = vmatpush1.msra.mxu0 0.0
  %1428 = vmatprep.subr.mxu0 0.0
  %1429 = vmatpush1.msra.mxu0 0.0
  %1430 = vmatprep.subr.mxu0 0.0
  %1431 = vmatpush1.msra.mxu0 0.0
  %1432 = vmatprep.subr.mxu0 0.0
  %1433 = vmatpush1.msra.mxu0 0.0
  %1434 = vmatprep.subr.mxu0 0.0
  %1435 = vmatpush1.msra.mxu0 %v67
  %1436 = vmatprep.subr.mxu0 0.0
  %1437 = vmatpush1.msra.mxu0 %v66
  %1438 = vmatprep.subr.mxu0 0.0
  %1439 = vmatpush1.msra.mxu0 %v65
  %1440 = vmatprep.subr.mxu0 0.0
  %1441 = vmatpush1.msra.mxu0 %v64
  %1442 = vmatprep.subr.mxu0 0.0
  %1443 = vmatpush2.msra.mxu0 0.0
  %1444 = vmatprep.subr.mxu0 0.0
  %1445 = vmatpush2.msra.mxu0 0.0
  %1446 = vmatprep.subr.mxu0 0.0
  %1447 = vmatpush2.msra.mxu0 0.0
  %1448 = vmatprep.subr.mxu0 0.0
  %1449 = vmatpush2.msra.mxu0 0.0
  %1450 = vmatprep.subr.mxu0 0.0
  %1451 = vmatpush2.msra.mxu0 0.0
  %1452 = vmatprep.subr.mxu0 0.0
  %1453 = vmatpush2.msra.mxu0 0.0
  %1454 = vmatprep.subr.mxu0 0.0
  %1455 = vmatpush2.msra.mxu0 0.0
  %1456 = vmatprep.subr.mxu0 0.0
  %1457 = vmatpush2.msra.mxu0 0.0
  %1458 = vmatprep.subr.mxu0 0.0
  %1459 = vmatpush2.msra.mxu0 0.0
  %1460 = vmatprep.subr.mxu0 0.0
  %1461 = vmatpush2.msra.mxu0 0.0
  %1462 = vmatprep.subr.mxu0 0.0
  %1463 = vmatpush2.msra.mxu0 0.0
  %1464 = vmatprep.subr.mxu0 0.0
  %1465 = vmatpush2.msra.mxu0 0.0
  %1466 = vmatprep.subr.mxu0 0.0
  %1467 = vmatpush2.msra.mxu0 0.0
  %1468 = vmatprep.subr.mxu0 0.0
  %1469 = vmatpush2.msra.mxu0 0.0
  %1470 = vmatprep.subr.mxu0 0.0
  %1471 = vmatpush2.msra.mxu0 0.0
  %1472 = vmatprep.subr.mxu0 0.0
  %1473 = vmatpush2.msra.mxu0 0.0
  %1474 = vmatprep.mubr.f32.mxu0 0.0
  %1475 = vmatmul.mubr.f32.gmra.mxu0 %v1261
  %v1476 = vpop.f32.mrf.mxu0
  %v1477 = vadd.f32 %v1407, %v1476
  %v1478 = vpop.f32.mrf.mxu0
  %1479 = vdwg.mxu0
  %v1480 = vadd.f32 %v1477, %v784
  %v1481 = vxor.u32 %v1480, 2147483648
  %v1482 = vmul.f32 %v1481, 1.442695
  %v1483 = vpow.pop %v1482
  %v1484 = vadd.f32 %v1483, 1.0
  %v1485 = vrcp.pop %v1484
  %v1486 = vmul.f32 1.0, %v1485
  %1487 = vmatprep.subr.mxu0 0.0
  %1488 = vmatpush1.msra.mxu0 0.0
  %1489 = vmatprep.subr.mxu0 0.0
  %1490 = vmatpush1.msra.mxu0 0.0
  %1491 = vmatprep.subr.mxu0 0.0
  %1492 = vmatpush1.msra.mxu0 0.0
  %1493 = vmatprep.subr.mxu0 0.0
  %1494 = vmatpush1.msra.mxu0 0.0
  %1495 = vmatprep.subr.mxu0 0.0
  %1496 = vmatpush1.msra.mxu0 0.0
  %1497 = vmatprep.subr.mxu0 0.0
  %1498 = vmatpush1.msra.mxu0 0.0
  %1499 = vmatprep.subr.mxu0 0.0
  %1500 = vmatpush1.msra.mxu0 0.0
  %1501 = vmatprep.subr.mxu0 0.0
  %1502 = vmatpush1.msra.mxu0 0.0
  %1503 = vmatprep.subr.mxu0 0.0
  %1504 = vmatpush1.msra.mxu0 0.0
  %1505 = vmatprep.subr.mxu0 0.0
  %1506 = vmatpush1.msra.mxu0 0.0
  %1507 = vmatprep.subr.mxu0 0.0
  %1508 = vmatpush1.msra.mxu0 0.0
  %1509 = vmatprep.subr.mxu0 0.0
  %1510 = vmatpush1.msra.mxu0 0.0
  %1511 = vmatprep.subr.mxu0 0.0
  %1512 = vmatpush1.msra.mxu0 %v72
  %1513 = vmatprep.subr.mxu0 0.0
  %1514 = vmatpush1.msra.mxu0 %v71
  %1515 = vmatprep.subr.mxu0 0.0
  %1516 = vmatpush1.msra.mxu0 %v70
  %1517 = vmatprep.subr.mxu0 0.0
  %1518 = vmatpush1.msra.mxu0 %v69
  %1519 = vmatprep.subr.mxu0 0.0
  %1520 = vmatpush2.msra.mxu0 0.0
  %1521 = vmatprep.subr.mxu0 0.0
  %1522 = vmatpush2.msra.mxu0 0.0
  %1523 = vmatprep.subr.mxu0 0.0
  %1524 = vmatpush2.msra.mxu0 0.0
  %1525 = vmatprep.subr.mxu0 0.0
  %1526 = vmatpush2.msra.mxu0 0.0
  %1527 = vmatprep.subr.mxu0 0.0
  %1528 = vmatpush2.msra.mxu0 0.0
  %1529 = vmatprep.subr.mxu0 0.0
  %1530 = vmatpush2.msra.mxu0 0.0
  %1531 = vmatprep.subr.mxu0 0.0
  %1532 = vmatpush2.msra.mxu0 0.0
  %1533 = vmatprep.subr.mxu0 0.0
  %1534 = vmatpush2.msra.mxu0 0.0
  %1535 = vmatprep.subr.mxu0 0.0
  %1536 = vmatpush2.msra.mxu0 0.0
  %1537 = vmatprep.subr.mxu0 0.0
  %1538 = vmatpush2.msra.mxu0 0.0
  %1539 = vmatprep.subr.mxu0 0.0
  %1540 = vmatpush2.msra.mxu0 0.0
  %1541 = vmatprep.subr.mxu0 0.0
  %1542 = vmatpush2.msra.mxu0 0.0
  %1543 = vmatprep.subr.mxu0 0.0
  %1544 = vmatpush2.msra.mxu0 0.0
  %1545 = vmatprep.subr.mxu0 0.0
  %1546 = vmatpush2.msra.mxu0 0.0
  %1547 = vmatprep.subr.mxu0 0.0
  %1548 = vmatpush2.msra.mxu0 0.0
  %1549 = vmatprep.subr.mxu0 0.0
  %1550 = vmatpush2.msra.mxu0 0.0
  %1551 = vmatprep.mubr.f32.mxu0 0.0
  %1552 = vmatmul.mubr.f32.gmra.mxu0 %v1261
  %v1553 = vpop.f32.mrf.mxu0
  %v1554 = vadd.f32 %v797, %v1553
  %v1555 = vpop.f32.mrf.mxu0
  %1556 = vdwg.mxu0
  %1557 = vmatprep.subr.mxu0 0.0
  %1558 = vmatpush1.msra.mxu0 0.0
  %1559 = vmatprep.subr.mxu0 0.0
  %1560 = vmatpush1.msra.mxu0 0.0
  %1561 = vmatprep.subr.mxu0 0.0
  %1562 = vmatpush1.msra.mxu0 0.0
  %1563 = vmatprep.subr.mxu0 0.0
  %1564 = vmatpush1.msra.mxu0 0.0
  %1565 = vmatprep.subr.mxu0 0.0
  %1566 = vmatpush1.msra.mxu0 0.0
  %1567 = vmatprep.subr.mxu0 0.0
  %1568 = vmatpush1.msra.mxu0 0.0
  %1569 = vmatprep.subr.mxu0 0.0
  %1570 = vmatpush1.msra.mxu0 0.0
  %1571 = vmatprep.subr.mxu0 0.0
  %1572 = vmatpush1.msra.mxu0 0.0
  %1573 = vmatprep.subr.mxu0 0.0
  %1574 = vmatpush1.msra.mxu0 0.0
  %1575 = vmatprep.subr.mxu0 0.0
  %1576 = vmatpush1.msra.mxu0 0.0
  %1577 = vmatprep.subr.mxu0 0.0
  %1578 = vmatpush1.msra.mxu0 0.0
  %1579 = vmatprep.subr.mxu0 0.0
  %1580 = vmatpush1.msra.mxu0 0.0
  %1581 = vmatprep.subr.mxu0 0.0
  %1582 = vmatpush1.msra.mxu0 %v86
  %1583 = vmatprep.subr.mxu0 0.0
  %1584 = vmatpush1.msra.mxu0 %v85
  %1585 = vmatprep.subr.mxu0 0.0
  %1586 = vmatpush1.msra.mxu0 %v84
  %1587 = vmatprep.subr.mxu0 0.0
  %1588 = vmatpush1.msra.mxu0 %v83
  %1589 = vmatprep.subr.mxu0 0.0
  %1590 = vmatpush2.msra.mxu0 0.0
  %1591 = vmatprep.subr.mxu0 0.0
  %1592 = vmatpush2.msra.mxu0 0.0
  %1593 = vmatprep.subr.mxu0 0.0
  %1594 = vmatpush2.msra.mxu0 0.0
  %1595 = vmatprep.subr.mxu0 0.0
  %1596 = vmatpush2.msra.mxu0 0.0
  %1597 = vmatprep.subr.mxu0 0.0
  %1598 = vmatpush2.msra.mxu0 0.0
  %1599 = vmatprep.subr.mxu0 0.0
  %1600 = vmatpush2.msra.mxu0 0.0
  %1601 = vmatprep.subr.mxu0 0.0
  %1602 = vmatpush2.msra.mxu0 0.0
  %1603 = vmatprep.subr.mxu0 0.0
  %1604 = vmatpush2.msra.mxu0 0.0
  %1605 = vmatprep.subr.mxu0 0.0
  %1606 = vmatpush2.msra.mxu0 0.0
  %1607 = vmatprep.subr.mxu0 0.0
  %1608 = vmatpush2.msra.mxu0 0.0
  %1609 = vmatprep.subr.mxu0 0.0
  %1610 = vmatpush2.msra.mxu0 0.0
  %1611 = vmatprep.subr.mxu0 0.0
  %1612 = vmatpush2.msra.mxu0 0.0
  %1613 = vmatprep.subr.mxu0 0.0
  %1614 = vmatpush2.msra.mxu0 0.0
  %1615 = vmatprep.subr.mxu0 0.0
  %1616 = vmatpush2.msra.mxu0 0.0
  %1617 = vmatprep.subr.mxu0 0.0
  %1618 = vmatpush2.msra.mxu0 0.0
  %1619 = vmatprep.subr.mxu0 0.0
  %1620 = vmatpush2.msra.mxu0 0.0
  %1621 = vmatprep.mubr.f32.mxu0 0.0
  %1622 = vmatmul.mubr.f32.gmra.mxu0 %v1188
  %v1623 = vpop.f32.mrf.mxu0
  %v1624 = vadd.f32 %v873, %v1623
  %v1625 = vpop.f32.mrf.mxu0
  %1626 = vdwg.mxu0
  %v1627 = vmul.f32 %v1339, %v1624
  %v1628 = vadd.f32 %v1554, %v1627
  %v1629 = vtanh.pop %v1628
  %v1630 = vsub.f32 1.0, %v1486
  %v1631 = vmul.f32 %v1630, %v1629
  %v1632 = vmul.f32 %v1486, %v951
  %v1633 = vadd.f32 %v1631, %v1632
  %s1634 = scalar_lea.vmem %s9, 32
  %v1635 = vld [vmem:[%s1634] sm:$0xff]
  %v1636 = vld [vmem:[%s1634 + $0x8] sm:$0xff]
  %v1637 = vld [vmem:[%s1634 + $0x10] sm:$0xff]
  %v1638 = vld [vmem:[%s1634 + $0x18] sm:$0xff]
  %v1640 = vsel %vm243, %v1633, 0
  %1642 = vmatprep.subr.mxu0 0.0
  %1643 = vmatpush1.msra.mxu0 0.0
  %1644 = vmatprep.subr.mxu0 0.0
  %1645 = vmatpush1.msra.mxu0 0.0
  %1646 = vmatprep.subr.mxu0 0.0
  %1647 = vmatpush1.msra.mxu0 0.0
  %1648 = vmatprep.subr.mxu0 0.0
  %1649 = vmatpush1.msra.mxu0 0.0
  %1650 = vmatprep.subr.mxu0 0.0
  %1651 = vmatpush1.msra.mxu0 0.0
  %1652 = vmatprep.subr.mxu0 0.0
  %1653 = vmatpush1.msra.mxu0 0.0
  %1654 = vmatprep.subr.mxu0 0.0
  %1655 = vmatpush1.msra.mxu0 0.0
  %1656 = vmatprep.subr.mxu0 0.0
  %1657 = vmatpush1.msra.mxu0 0.0
  %1658 = vmatprep.subr.mxu0 0.0
  %1659 = vmatpush1.msra.mxu0 0.0
  %1660 = vmatprep.subr.mxu0 0.0
  %1661 = vmatpush1.msra.mxu0 0.0
  %1662 = vmatprep.subr.mxu0 0.0
  %1663 = vmatpush1.msra.mxu0 0.0
  %1664 = vmatprep.subr.mxu0 0.0
  %1665 = vmatpush1.msra.mxu0 0.0
  %1666 = vmatprep.subr.mxu0 0.0
  %1667 = vmatpush1.msra.mxu0 %v1638
  %1668 = vmatprep.subr.mxu0 0.0
  %1669 = vmatpush1.msra.mxu0 %v1637
  %1670 = vmatprep.subr.mxu0 0.0
  %1671 = vmatpush1.msra.mxu0 %v1636
  %1672 = vmatprep.subr.mxu0 0.0
  %1673 = vmatpush1.msra.mxu0 %v1635
  %1674 = vmatprep.subr.mxu0 0.0
  %1675 = vmatpush2.msra.mxu0 0.0
  %1676 = vmatprep.subr.mxu0 0.0
  %1677 = vmatpush2.msra.mxu0 0.0
  %1678 = vmatprep.subr.mxu0 0.0
  %1679 = vmatpush2.msra.mxu0 0.0
  %1680 = vmatprep.subr.mxu0 0.0
  %1681 = vmatpush2.msra.mxu0 0.0
  %1682 = vmatprep.subr.mxu0 0.0
  %1683 = vmatpush2.msra.mxu0 0.0
  %1684 = vmatprep.subr.mxu0 0.0
  %1685 = vmatpush2.msra.mxu0 0.0
  %1686 = vmatprep.subr.mxu0 0.0
  %1687 = vmatpush2.msra.mxu0 0.0
  %1688 = vmatprep.subr.mxu0 0.0
  %1689 = vmatpush2.msra.mxu0 0.0
  %1690 = vmatprep.subr.mxu0 0.0
  %1691 = vmatpush2.msra.mxu0 0.0
  %1692 = vmatprep.subr.mxu0 0.0
  %1693 = vmatpush2.msra.mxu0 0.0
  %1694 = vmatprep.subr.mxu0 0.0
  %1695 = vmatpush2.msra.mxu0 0.0
  %1696 = vmatprep.subr.mxu0 0.0
  %1697 = vmatpush2.msra.mxu0 0.0
  %1698 = vmatprep.subr.mxu0 0.0
  %1699 = vmatpush2.msra.mxu0 0.0
  %1700 = vmatprep.subr.mxu0 0.0
  %1701 = vmatpush2.msra.mxu0 0.0
  %1702 = vmatprep.subr.mxu0 0.0
  %1703 = vmatpush2.msra.mxu0 0.0
  %1704 = vmatprep.subr.mxu0 0.0
  %1705 = vmatpush2.msra.mxu0 0.0
  %1706 = vmatprep.mubr.f32.mxu0 0.0
  %1707 = vmatmul.mubr.f32.gmra.mxu0 %v1640
  %v1708 = vpop.f32.mrf.mxu0
  %v1709 = vadd.f32 0.0, %v1708
  %v1710 = vpop.f32.mrf.mxu0
  %1711 = vdwg.mxu0
  %1712 = vmatprep.subr.mxu0 0.0
  %1713 = vmatpush1.msra.mxu0 0.0
  %1714 = vmatprep.subr.mxu0 0.0
  %1715 = vmatpush1.msra.mxu0 0.0
  %1716 = vmatprep.subr.mxu0 0.0
  %1717 = vmatpush1.msra.mxu0 0.0
  %1718 = vmatprep.subr.mxu0 0.0
  %1719 = vmatpush1.msra.mxu0 0.0
  %1720 = vmatprep.subr.mxu0 0.0
  %1721 = vmatpush1.msra.mxu0 0.0
  %1722 = vmatprep.subr.mxu0 0.0
  %1723 = vmatpush1.msra.mxu0 0.0
  %1724 = vmatprep.subr.mxu0 0.0
  %1725 = vmatpush1.msra.mxu0 0.0
  %1726 = vmatprep.subr.mxu0 0.0
  %1727 = vmatpush1.msra.mxu0 0.0
  %1728 = vmatprep.subr.mxu0 0.0
  %1729 = vmatpush1.msra.mxu0 0.0
  %1730 = vmatprep.subr.mxu0 0.0
  %1731 = vmatpush1.msra.mxu0 0.0
  %1732 = vmatprep.subr.mxu0 0.0
  %1733 = vmatpush1.msra.mxu0 0.0
  %1734 = vmatprep.subr.mxu0 0.0
  %1735 = vmatpush1.msra.mxu0 0.0
  %1736 = vmatprep.subr.mxu0 0.0
  %1737 = vmatpush1.msra.mxu0 %v955
  %1738 = vmatprep.subr.mxu0 0.0
  %1739 = vmatpush1.msra.mxu0 %v954
  %1740 = vmatprep.subr.mxu0 0.0
  %1741 = vmatpush1.msra.mxu0 %v953
  %1742 = vmatprep.subr.mxu0 0.0
  %1743 = vmatpush1.msra.mxu0 %v952
  %1744 = vmatprep.subr.mxu0 0.0
  %1745 = vmatpush2.msra.mxu0 0.0
  %1746 = vmatprep.subr.mxu0 0.0
  %1747 = vmatpush2.msra.mxu0 0.0
  %1748 = vmatprep.subr.mxu0 0.0
  %1749 = vmatpush2.msra.mxu0 0.0
  %1750 = vmatprep.subr.mxu0 0.0
  %1751 = vmatpush2.msra.mxu0 0.0
  %1752 = vmatprep.subr.mxu0 0.0
  %1753 = vmatpush2.msra.mxu0 0.0
  %1754 = vmatprep.subr.mxu0 0.0
  %1755 = vmatpush2.msra.mxu0 0.0
  %1756 = vmatprep.subr.mxu0 0.0
  %1757 = vmatpush2.msra.mxu0 0.0
  %1758 = vmatprep.subr.mxu0 0.0
  %1759 = vmatpush2.msra.mxu0 0.0
  %1760 = vmatprep.subr.mxu0 0.0
  %1761 = vmatpush2.msra.mxu0 0.0
  %1762 = vmatprep.subr.mxu0 0.0
  %1763 = vmatpush2.msra.mxu0 0.0
  %1764 = vmatprep.subr.mxu0 0.0
  %1765 = vmatpush2.msra.mxu0 0.0
  %1766 = vmatprep.subr.mxu0 0.0
  %1767 = vmatpush2.msra.mxu0 0.0
  %1768 = vmatprep.subr.mxu0 0.0
  %1769 = vmatpush2.msra.mxu0 0.0
  %1770 = vmatprep.subr.mxu0 0.0
  %1771 = vmatpush2.msra.mxu0 0.0
  %1772 = vmatprep.subr.mxu0 0.0
  %1773 = vmatpush2.msra.mxu0 0.0
  %1774 = vmatprep.subr.mxu0 0.0
  %1775 = vmatpush2.msra.mxu0 0.0
  %1776 = vmatprep.mubr.f32.mxu0 0.0
  %1777 = vmatmul.mubr.f32.gmra.mxu0 %v1188
  %v1778 = vpop.f32.mrf.mxu0
  %v1779 = vadd.f32 %v1709, %v1778
  %v1780 = vpop.f32.mrf.mxu0
  %1781 = vdwg.mxu0
  %1782 = vmatprep.subr.mxu0 0.0
  %1783 = vmatpush1.msra.mxu0 0.0
  %1784 = vmatprep.subr.mxu0 0.0
  %1785 = vmatpush1.msra.mxu0 0.0
  %1786 = vmatprep.subr.mxu0 0.0
  %1787 = vmatpush1.msra.mxu0 0.0
  %1788 = vmatprep.subr.mxu0 0.0
  %1789 = vmatpush1.msra.mxu0 0.0
  %1790 = vmatprep.subr.mxu0 0.0
  %1791 = vmatpush1.msra.mxu0 0.0
  %1792 = vmatprep.subr.mxu0 0.0
  %1793 = vmatpush1.msra.mxu0 0.0
  %1794 = vmatprep.subr.mxu0 0.0
  %1795 = vmatpush1.msra.mxu0 0.0
  %1796 = vmatprep.subr.mxu0 0.0
  %1797 = vmatpush1.msra.mxu0 0.0
  %1798 = vmatprep.subr.mxu0 0.0
  %1799 = vmatpush1.msra.mxu0 0.0
  %1800 = vmatprep.subr.mxu0 0.0
  %1801 = vmatpush1.msra.mxu0 0.0
  %1802 = vmatprep.subr.mxu0 0.0
  %1803 = vmatpush1.msra.mxu0 0.0
  %1804 = vmatprep.subr.mxu0 0.0
  %1805 = vmatpush1.msra.mxu0 0.0
  %1806 = vmatprep.subr.mxu0 0.0
  %1807 = vmatpush1.msra.mxu0 %v48
  %1808 = vmatprep.subr.mxu0 0.0
  %1809 = vmatpush1.msra.mxu0 %v47
  %1810 = vmatprep.subr.mxu0 0.0
  %1811 = vmatpush1.msra.mxu0 %v46
  %1812 = vmatprep.subr.mxu0 0.0
  %1813 = vmatpush1.msra.mxu0 %v45
  %1814 = vmatprep.subr.mxu0 0.0
  %1815 = vmatpush2.msra.mxu0 0.0
  %1816 = vmatprep.subr.mxu0 0.0
  %1817 = vmatpush2.msra.mxu0 0.0
  %1818 = vmatprep.subr.mxu0 0.0
  %1819 = vmatpush2.msra.mxu0 0.0
  %1820 = vmatprep.subr.mxu0 0.0
  %1821 = vmatpush2.msra.mxu0 0.0
  %1822 = vmatprep.subr.mxu0 0.0
  %1823 = vmatpush2.msra.mxu0 0.0
  %1824 = vmatprep.subr.mxu0 0.0
  %1825 = vmatpush2.msra.mxu0 0.0
  %1826 = vmatprep.subr.mxu0 0.0
  %1827 = vmatpush2.msra.mxu0 0.0
  %1828 = vmatprep.subr.mxu0 0.0
  %1829 = vmatpush2.msra.mxu0 0.0
  %1830 = vmatprep.subr.mxu0 0.0
  %1831 = vmatpush2.msra.mxu0 0.0
  %1832 = vmatprep.subr.mxu0 0.0
  %1833 = vmatpush2.msra.mxu0 0.0
  %1834 = vmatprep.subr.mxu0 0.0
  %1835 = vmatpush2.msra.mxu0 0.0
  %1836 = vmatprep.subr.mxu0 0.0
  %1837 = vmatpush2.msra.mxu0 0.0
  %1838 = vmatprep.subr.mxu0 0.0
  %1839 = vmatpush2.msra.mxu0 0.0
  %1840 = vmatprep.subr.mxu0 0.0
  %1841 = vmatpush2.msra.mxu0 0.0
  %1842 = vmatprep.subr.mxu0 0.0
  %1843 = vmatpush2.msra.mxu0 0.0
  %1844 = vmatprep.subr.mxu0 0.0
  %1845 = vmatpush2.msra.mxu0 0.0
  %1846 = vmatprep.mubr.f32.mxu0 0.0
  %1847 = vmatmul.mubr.f32.gmra.mxu0 %v1261
  %v1848 = vpop.f32.mrf.mxu0
  %v1849 = vadd.f32 0.0, %v1848
  %v1850 = vpop.f32.mrf.mxu0
  %1851 = vdwg.mxu0
  %v1852 = vadd.f32 %v181, %v1849
  %v1853 = vxor.u32 %v1852, 2147483648
  %v1854 = vmul.f32 %v1853, 1.442695
  %v1855 = vpow.pop %v1854
  %v1856 = vadd.f32 %v1855, 1.0
  %v1857 = vrcp.pop %v1856
  %v1858 = vmul.f32 1.0, %v1857
  %1859 = vmatprep.subr.mxu0 0.0
  %1860 = vmatpush1.msra.mxu0 0.0
  %1861 = vmatprep.subr.mxu0 0.0
  %1862 = vmatpush1.msra.mxu0 0.0
  %1863 = vmatprep.subr.mxu0 0.0
  %1864 = vmatpush1.msra.mxu0 0.0
  %1865 = vmatprep.subr.mxu0 0.0
  %1866 = vmatpush1.msra.mxu0 0.0
  %1867 = vmatprep.subr.mxu0 0.0
  %1868 = vmatpush1.msra.mxu0 0.0
  %1869 = vmatprep.subr.mxu0 0.0
  %1870 = vmatpush1.msra.mxu0 0.0
  %1871 = vmatprep.subr.mxu0 0.0
  %1872 = vmatpush1.msra.mxu0 0.0
  %1873 = vmatprep.subr.mxu0 0.0
  %1874 = vmatpush1.msra.mxu0 0.0
  %1875 = vmatprep.subr.mxu0 0.0
  %1876 = vmatpush1.msra.mxu0 0.0
  %1877 = vmatprep.subr.mxu0 0.0
  %1878 = vmatpush1.msra.mxu0 0.0
  %1879 = vmatprep.subr.mxu0 0.0
  %1880 = vmatpush1.msra.mxu0 0.0
  %1881 = vmatprep.subr.mxu0 0.0
  %1882 = vmatpush1.msra.mxu0 0.0
  %1883 = vmatprep.subr.mxu0 0.0
  %1884 = vmatpush1.msra.mxu0 %v53
  %1885 = vmatprep.subr.mxu0 0.0
  %1886 = vmatpush1.msra.mxu0 %v52
  %1887 = vmatprep.subr.mxu0 0.0
  %1888 = vmatpush1.msra.mxu0 %v51
  %1889 = vmatprep.subr.mxu0 0.0
  %1890 = vmatpush1.msra.mxu0 %v50
  %1891 = vmatprep.subr.mxu0 0.0
  %1892 = vmatpush2.msra.mxu0 0.0
  %1893 = vmatprep.subr.mxu0 0.0
  %1894 = vmatpush2.msra.mxu0 0.0
  %1895 = vmatprep.subr.mxu0 0.0
  %1896 = vmatpush2.msra.mxu0 0.0
  %1897 = vmatprep.subr.mxu0 0.0
  %1898 = vmatpush2.msra.mxu0 0.0
  %1899 = vmatprep.subr.mxu0 0.0
  %1900 = vmatpush2.msra.mxu0 0.0
  %1901 = vmatprep.subr.mxu0 0.0
  %1902 = vmatpush2.msra.mxu0 0.0
  %1903 = vmatprep.subr.mxu0 0.0
  %1904 = vmatpush2.msra.mxu0 0.0
  %1905 = vmatprep.subr.mxu0 0.0
  %1906 = vmatpush2.msra.mxu0 0.0
  %1907 = vmatprep.subr.mxu0 0.0
  %1908 = vmatpush2.msra.mxu0 0.0
  %1909 = vmatprep.subr.mxu0 0.0
  %1910 = vmatpush2.msra.mxu0 0.0
  %1911 = vmatprep.subr.mxu0 0.0
  %1912 = vmatpush2.msra.mxu0 0.0
  %1913 = vmatprep.subr.mxu0 0.0
  %1914 = vmatpush2.msra.mxu0 0.0
  %1915 = vmatprep.subr.mxu0 0.0
  %1916 = vmatpush2.msra.mxu0 0.0
  %1917 = vmatprep.subr.mxu0 0.0
  %1918 = vmatpush2.msra.mxu0 0.0
  %1919 = vmatprep.subr.mxu0 0.0
  %1920 = vmatpush2.msra.mxu0 0.0
  %1921 = vmatprep.subr.mxu0 0.0
  %1922 = vmatpush2.msra.mxu0 0.0
  %1923 = vmatprep.mubr.f32.mxu0 0.0
  %1924 = vmatmul.mubr.f32.gmra.mxu0 %v1261
  %v1925 = vpop.f32.mrf.mxu0
  %v1926 = vadd.f32 0.0, %v1925
  %v1927 = vpop.f32.mrf.mxu0
  %1928 = vdwg.mxu0
  %v1929 = vadd.f32 %v209, %v1926
  %v1930 = vxor.u32 %v1929, 2147483648
  %v1931 = vmul.f32 %v1930, 1.442695
  %v1932 = vpow.pop %v1931
  %v1933 = vadd.f32 %v1932, 1.0
  %v1934 = vrcp.pop %v1933
  %v1935 = vmul.f32 1.0, %v1934
  %1936 = vmatprep.subr.mxu0 0.0
  %1937 = vmatpush1.msra.mxu0 0.0
  %1938 = vmatprep.subr.mxu0 0.0
  %1939 = vmatpush1.msra.mxu0 0.0
  %1940 = vmatprep.subr.mxu0 0.0
  %1941 = vmatpush1.msra.mxu0 0.0
  %1942 = vmatprep.subr.mxu0 0.0
  %1943 = vmatpush1.msra.mxu0 0.0
  %1944 = vmatprep.subr.mxu0 0.0
  %1945 = vmatpush1.msra.mxu0 0.0
  %1946 = vmatprep.subr.mxu0 0.0
  %1947 = vmatpush1.msra.mxu0 0.0
  %1948 = vmatprep.subr.mxu0 0.0
  %1949 = vmatpush1.msra.mxu0 0.0
  %1950 = vmatprep.subr.mxu0 0.0
  %1951 = vmatpush1.msra.mxu0 0.0
  %1952 = vmatprep.subr.mxu0 0.0
  %1953 = vmatpush1.msra.mxu0 0.0
  %1954 = vmatprep.subr.mxu0 0.0
  %1955 = vmatpush1.msra.mxu0 0.0
  %1956 = vmatprep.subr.mxu0 0.0
  %1957 = vmatpush1.msra.mxu0 0.0
  %1958 = vmatprep.subr.mxu0 0.0
  %1959 = vmatpush1.msra.mxu0 0.0
  %1960 = vmatprep.subr.mxu0 0.0
  %1961 = vmatpush1.msra.mxu0 %v58
  %1962 = vmatprep.subr.mxu0 0.0
  %1963 = vmatpush1.msra.mxu0 %v57
  %1964 = vmatprep.subr.mxu0 0.0
  %1965 = vmatpush1.msra.mxu0 %v56
  %1966 = vmatprep.subr.mxu0 0.0
  %1967 = vmatpush1.msra.mxu0 %v55
  %1968 = vmatprep.subr.mxu0 0.0
  %1969 = vmatpush2.msra.mxu0 0.0
  %1970 = vmatprep.subr.mxu0 0.0
  %1971 = vmatpush2.msra.mxu0 0.0
  %1972 = vmatprep.subr.mxu0 0.0
  %1973 = vmatpush2.msra.mxu0 0.0
  %1974 = vmatprep.subr.mxu0 0.0
  %1975 = vmatpush2.msra.mxu0 0.0
  %1976 = vmatprep.subr.mxu0 0.0
  %1977 = vmatpush2.msra.mxu0 0.0
  %1978 = vmatprep.subr.mxu0 0.0
  %1979 = vmatpush2.msra.mxu0 0.0
  %1980 = vmatprep.subr.mxu0 0.0
  %1981 = vmatpush2.msra.mxu0 0.0
  %1982 = vmatprep.subr.mxu0 0.0
  %1983 = vmatpush2.msra.mxu0 0.0
  %1984 = vmatprep.subr.mxu0 0.0
  %1985 = vmatpush2.msra.mxu0 0.0
  %1986 = vmatprep.subr.mxu0 0.0
  %1987 = vmatpush2.msra.mxu0 0.0
  %1988 = vmatprep.subr.mxu0 0.0
  %1989 = vmatpush2.msra.mxu0 0.0
  %1990 = vmatprep.subr.mxu0 0.0
  %1991 = vmatpush2.msra.mxu0 0.0
  %1992 = vmatprep.subr.mxu0 0.0
  %1993 = vmatpush2.msra.mxu0 0.0
  %1994 = vmatprep.subr.mxu0 0.0
  %1995 = vmatpush2.msra.mxu0 0.0
  %1996 = vmatprep.subr.mxu0 0.0
  %1997 = vmatpush2.msra.mxu0 0.0
  %1998 = vmatprep.subr.mxu0 0.0
  %1999 = vmatpush2.msra.mxu0 0.0
  %2000 = vmatprep.mubr.f32.mxu0 0.0
  %2001 = vmatmul.mubr.f32.gmra.mxu0 %v1261
  %v2002 = vpop.f32.mrf.mxu0
  %v2003 = vadd.f32 %v405, %v2002
  %v2004 = vpop.f32.mrf.mxu0
  %2005 = vdwg.mxu0
  %v2006 = vmul.f32 %v1858, %v2003
  %v2007 = vadd.f32 %v237, %v2006
  %v2008 = vtanh.pop %v2007
  %v2009 = vsub.f32 1.0, %v1935
  %v2010 = vmul.f32 %v2009, %v2008
  %v2011 = vmul.f32 %v1935, %v1186
  %v2012 = vadd.f32 %v2010, %v2011
  %2013 = vmatprep.subr.mxu0 0.0
  %2014 = vmatpush1.msra.mxu0 0.0
  %2015 = vmatprep.subr.mxu0 0.0
  %2016 = vmatpush1.msra.mxu0 0.0
  %2017 = vmatprep.subr.mxu0 0.0
  %2018 = vmatpush1.msra.mxu0 0.0
  %2019 = vmatprep.subr.mxu0 0.0
  %2020 = vmatpush1.msra.mxu0 0.0
  %2021 = vmatprep.subr.mxu0 0.0
  %2022 = vmatpush1.msra.mxu0 0.0
  %2023 = vmatprep.subr.mxu0 0.0
  %2024 = vmatpush1.msra.mxu0 0.0
  %2025 = vmatprep.subr.mxu0 0.0
  %2026 = vmatpush1.msra.mxu0 0.0
  %2027 = vmatprep.subr.mxu0 0.0
  %2028 = vmatpush1.msra.mxu0 0.0
  %2029 = vmatprep.subr.mxu0 0.0
  %2030 = vmatpush1.msra.mxu0 0.0
  %2031 = vmatprep.subr.mxu0 0.0
  %2032 = vmatpush1.msra.mxu0 0.0
  %2033 = vmatprep.subr.mxu0 0.0
  %2034 = vmatpush1.msra.mxu0 0.0
  %2035 = vmatprep.subr.mxu0 0.0
  %2036 = vmatpush1.msra.mxu0 0.0
  %2037 = vmatprep.subr.mxu0 0.0
  %2038 = vmatpush1.msra.mxu0 %v76
  %2039 = vmatprep.subr.mxu0 0.0
  %2040 = vmatpush1.msra.mxu0 %v75
  %2041 = vmatprep.subr.mxu0 0.0
  %2042 = vmatpush1.msra.mxu0 %v74
  %2043 = vmatprep.subr.mxu0 0.0
  %2044 = vmatpush1.msra.mxu0 %v73
  %2045 = vmatprep.subr.mxu0 0.0
  %2046 = vmatpush2.msra.mxu0 0.0
  %2047 = vmatprep.subr.mxu0 0.0
  %2048 = vmatpush2.msra.mxu0 0.0
  %2049 = vmatprep.subr.mxu0 0.0
  %2050 = vmatpush2.msra.mxu0 0.0
  %2051 = vmatprep.subr.mxu0 0.0
  %2052 = vmatpush2.msra.mxu0 0.0
  %2053 = vmatprep.subr.mxu0 0.0
  %2054 = vmatpush2.msra.mxu0 0.0
  %2055 = vmatprep.subr.mxu0 0.0
  %2056 = vmatpush2.msra.mxu0 0.0
  %2057 = vmatprep.subr.mxu0 0.0
  %2058 = vmatpush2.msra.mxu0 0.0
  %2059 = vmatprep.subr.mxu0 0.0
  %2060 = vmatpush2.msra.mxu0 0.0
  %2061 = vmatprep.subr.mxu0 0.0
  %2062 = vmatpush2.msra.mxu0 0.0
  %2063 = vmatprep.subr.mxu0 0.0
  %2064 = vmatpush2.msra.mxu0 0.0
  %2065 = vmatprep.subr.mxu0 0.0
  %2066 = vmatpush2.msra.mxu0 0.0
  %2067 = vmatprep.subr.mxu0 0.0
  %2068 = vmatpush2.msra.mxu0 0.0
  %2069 = vmatprep.subr.mxu0 0.0
  %2070 = vmatpush2.msra.mxu0 0.0
  %2071 = vmatprep.subr.mxu0 0.0
  %2072 = vmatpush2.msra.mxu0 0.0
  %2073 = vmatprep.subr.mxu0 0.0
  %2074 = vmatpush2.msra.mxu0 0.0
  %2075 = vmatprep.subr.mxu0 0.0
  %2076 = vmatpush2.msra.mxu0 0.0
  %2077 = vmatprep.mubr.f32.mxu0 0.0
  %2078 = vmatmul.mubr.f32.gmra.mxu0 %v1640
  %v2079 = vpop.f32.mrf.mxu0
  %v2080 = vadd.f32 0.0, %v2079
  %v2081 = vpop.f32.mrf.mxu0
  %2082 = vdwg.mxu0
  %v2084 = vsel %vm243, %v2012, 0
  %2086 = vmatprep.subr.mxu0 0.0
  %2087 = vmatpush1.msra.mxu0 0.0
  %2088 = vmatprep.subr.mxu0 0.0
  %2089 = vmatpush1.msra.mxu0 0.0
  %2090 = vmatprep.subr.mxu0 0.0
  %2091 = vmatpush1.msra.mxu0 0.0
  %2092 = vmatprep.subr.mxu0 0.0
  %2093 = vmatpush1.msra.mxu0 0.0
  %2094 = vmatprep.subr.mxu0 0.0
  %2095 = vmatpush1.msra.mxu0 0.0
  %2096 = vmatprep.subr.mxu0 0.0
  %2097 = vmatpush1.msra.mxu0 0.0
  %2098 = vmatprep.subr.mxu0 0.0
  %2099 = vmatpush1.msra.mxu0 0.0
  %2100 = vmatprep.subr.mxu0 0.0
  %2101 = vmatpush1.msra.mxu0 0.0
  %2102 = vmatprep.subr.mxu0 0.0
  %2103 = vmatpush1.msra.mxu0 0.0
  %2104 = vmatprep.subr.mxu0 0.0
  %2105 = vmatpush1.msra.mxu0 0.0
  %2106 = vmatprep.subr.mxu0 0.0
  %2107 = vmatpush1.msra.mxu0 0.0
  %2108 = vmatprep.subr.mxu0 0.0
  %2109 = vmatpush1.msra.mxu0 0.0
  %2110 = vmatprep.subr.mxu0 0.0
  %2111 = vmatpush1.msra.mxu0 %v62
  %2112 = vmatprep.subr.mxu0 0.0
  %2113 = vmatpush1.msra.mxu0 %v61
  %2114 = vmatprep.subr.mxu0 0.0
  %2115 = vmatpush1.msra.mxu0 %v60
  %2116 = vmatprep.subr.mxu0 0.0
  %2117 = vmatpush1.msra.mxu0 %v59
  %2118 = vmatprep.subr.mxu0 0.0
  %2119 = vmatpush2.msra.mxu0 0.0
  %2120 = vmatprep.subr.mxu0 0.0
  %2121 = vmatpush2.msra.mxu0 0.0
  %2122 = vmatprep.subr.mxu0 0.0
  %2123 = vmatpush2.msra.mxu0 0.0
  %2124 = vmatprep.subr.mxu0 0.0
  %2125 = vmatpush2.msra.mxu0 0.0
  %2126 = vmatprep.subr.mxu0 0.0
  %2127 = vmatpush2.msra.mxu0 0.0
  %2128 = vmatprep.subr.mxu0 0.0
  %2129 = vmatpush2.msra.mxu0 0.0
  %2130 = vmatprep.subr.mxu0 0.0
  %2131 = vmatpush2.msra.mxu0 0.0
  %2132 = vmatprep.subr.mxu0 0.0
  %2133 = vmatpush2.msra.mxu0 0.0
  %2134 = vmatprep.subr.mxu0 0.0
  %2135 = vmatpush2.msra.mxu0 0.0
  %2136 = vmatprep.subr.mxu0 0.0
  %2137 = vmatpush2.msra.mxu0 0.0
  %2138 = vmatprep.subr.mxu0 0.0
  %2139 = vmatpush2.msra.mxu0 0.0
  %2140 = vmatprep.subr.mxu0 0.0
  %2141 = vmatpush2.msra.mxu0 0.0
  %2142 = vmatprep.subr.mxu0 0.0
  %2143 = vmatpush2.msra.mxu0 0.0
  %2144 = vmatprep.subr.mxu0 0.0
  %2145 = vmatpush2.msra.mxu0 0.0
  %2146 = vmatprep.subr.mxu0 0.0
  %2147 = vmatpush2.msra.mxu0 0.0
  %2148 = vmatprep.subr.mxu0 0.0
  %2149 = vmatpush2.msra.mxu0 0.0
  %2150 = vmatprep.mubr.f32.mxu0 0.0
  %2151 = vmatmul.mubr.f32.gmra.mxu0 %v2084
  %v2152 = vpop.f32.mrf.mxu0
  %v2153 = vadd.f32 %v2080, %v2152
  %v2154 = vpop.f32.mrf.mxu0
  %2155 = vdwg.mxu0
  %v2156 = vadd.f32 %v2153, %v631
  %v2157 = vxor.u32 %v2156, 2147483648
  %v2158 = vmul.f32 %v2157, 1.442695
  %v2159 = vpow.pop %v2158
  %v2160 = vadd.f32 %v2159, 1.0
  %v2161 = vrcp.pop %v2160
  %v2162 = vmul.f32 1.0, %v2161
  %2163 = vmatprep.subr.mxu0 0.0
  %2164 = vmatpush1.msra.mxu0 0.0
  %2165 = vmatprep.subr.mxu0 0.0
  %2166 = vmatpush1.msra.mxu0 0.0
  %2167 = vmatprep.subr.mxu0 0.0
  %2168 = vmatpush1.msra.mxu0 0.0
  %2169 = vmatprep.subr.mxu0 0.0
  %2170 = vmatpush1.msra.mxu0 0.0
  %2171 = vmatprep.subr.mxu0 0.0
  %2172 = vmatpush1.msra.mxu0 0.0
  %2173 = vmatprep.subr.mxu0 0.0
  %2174 = vmatpush1.msra.mxu0 0.0
  %2175 = vmatprep.subr.mxu0 0.0
  %2176 = vmatpush1.msra.mxu0 0.0
  %2177 = vmatprep.subr.mxu0 0.0
  %2178 = vmatpush1.msra.mxu0 0.0
  %2179 = vmatprep.subr.mxu0 0.0
  %2180 = vmatpush1.msra.mxu0 0.0
  %2181 = vmatprep.subr.mxu0 0.0
  %2182 = vmatpush1.msra.mxu0 0.0
  %2183 = vmatprep.subr.mxu0 0.0
  %2184 = vmatpush1.msra.mxu0 0.0
  %2185 = vmatprep.subr.mxu0 0.0
  %2186 = vmatpush1.msra.mxu0 0.0
  %2187 = vmatprep.subr.mxu0 0.0
  %2188 = vmatpush1.msra.mxu0 %v81
  %2189 = vmatprep.subr.mxu0 0.0
  %2190 = vmatpush1.msra.mxu0 %v80
  %2191 = vmatprep.subr.mxu0 0.0
  %2192 = vmatpush1.msra.mxu0 %v79
  %2193 = vmatprep.subr.mxu0 0.0
  %2194 = vmatpush1.msra.mxu0 %v78
  %2195 = vmatprep.subr.mxu0 0.0
  %2196 = vmatpush2.msra.mxu0 0.0
  %2197 = vmatprep.subr.mxu0 0.0
  %2198 = vmatpush2.msra.mxu0 0.0
  %2199 = vmatprep.subr.mxu0 0.0
  %2200 = vmatpush2.msra.mxu0 0.0
  %2201 = vmatprep.subr.mxu0 0.0
  %2202 = vmatpush2.msra.mxu0 0.0
  %2203 = vmatprep.subr.mxu0 0.0
  %2204 = vmatpush2.msra.mxu0 0.0
  %2205 = vmatprep.subr.mxu0 0.0
  %2206 = vmatpush2.msra.mxu0 0.0
  %2207 = vmatprep.subr.mxu0 0.0
  %2208 = vmatpush2.msra.mxu0 0.0
  %2209 = vmatprep.subr.mxu0 0.0
  %2210 = vmatpush2.msra.mxu0 0.0
  %2211 = vmatprep.subr.mxu0 0.0
  %2212 = vmatpush2.msra.mxu0 0.0
  %2213 = vmatprep.subr.mxu0 0.0
  %2214 = vmatpush2.msra.mxu0 0.0
  %2215 = vmatprep.subr.mxu0 0.0
  %2216 = vmatpush2.msra.mxu0 0.0
  %2217 = vmatprep.subr.mxu0 0.0
  %2218 = vmatpush2.msra.mxu0 0.0
  %2219 = vmatprep.subr.mxu0 0.0
  %2220 = vmatpush2.msra.mxu0 0.0
  %2221 = vmatprep.subr.mxu0 0.0
  %2222 = vmatpush2.msra.mxu0 0.0
  %2223 = vmatprep.subr.mxu0 0.0
  %2224 = vmatpush2.msra.mxu0 0.0
  %2225 = vmatprep.subr.mxu0 0.0
  %2226 = vmatpush2.msra.mxu0 0.0
  %2227 = vmatprep.mubr.f32.mxu0 0.0
  %2228 = vmatmul.mubr.f32.gmra.mxu0 %v1640
  %v2229 = vpop.f32.mrf.mxu0
  %v2230 = vadd.f32 0.0, %v2229
  %v2231 = vpop.f32.mrf.mxu0
  %2232 = vdwg.mxu0
  %2233 = vmatprep.subr.mxu0 0.0
  %2234 = vmatpush1.msra.mxu0 0.0
  %2235 = vmatprep.subr.mxu0 0.0
  %2236 = vmatpush1.msra.mxu0 0.0
  %2237 = vmatprep.subr.mxu0 0.0
  %2238 = vmatpush1.msra.mxu0 0.0
  %2239 = vmatprep.subr.mxu0 0.0
  %2240 = vmatpush1.msra.mxu0 0.0
  %2241 = vmatprep.subr.mxu0 0.0
  %2242 = vmatpush1.msra.mxu0 0.0
  %2243 = vmatprep.subr.mxu0 0.0
  %2244 = vmatpush1.msra.mxu0 0.0
  %2245 = vmatprep.subr.mxu0 0.0
  %2246 = vmatpush1.msra.mxu0 0.0
  %2247 = vmatprep.subr.mxu0 0.0
  %2248 = vmatpush1.msra.mxu0 0.0
  %2249 = vmatprep.subr.mxu0 0.0
  %2250 = vmatpush1.msra.mxu0 0.0
  %2251 = vmatprep.subr.mxu0 0.0
  %2252 = vmatpush1.msra.mxu0 0.0
  %2253 = vmatprep.subr.mxu0 0.0
  %2254 = vmatpush1.msra.mxu0 0.0
  %2255 = vmatprep.subr.mxu0 0.0
  %2256 = vmatpush1.msra.mxu0 0.0
  %2257 = vmatprep.subr.mxu0 0.0
  %2258 = vmatpush1.msra.mxu0 %v67
  %2259 = vmatprep.subr.mxu0 0.0
  %2260 = vmatpush1.msra.mxu0 %v66
  %2261 = vmatprep.subr.mxu0 0.0
  %2262 = vmatpush1.msra.mxu0 %v65
  %2263 = vmatprep.subr.mxu0 0.0
  %2264 = vmatpush1.msra.mxu0 %v64
  %2265 = vmatprep.subr.mxu0 0.0
  %2266 = vmatpush2.msra.mxu0 0.0
  %2267 = vmatprep.subr.mxu0 0.0
  %2268 = vmatpush2.msra.mxu0 0.0
  %2269 = vmatprep.subr.mxu0 0.0
  %2270 = vmatpush2.msra.mxu0 0.0
  %2271 = vmatprep.subr.mxu0 0.0
  %2272 = vmatpush2.msra.mxu0 0.0
  %2273 = vmatprep.subr.mxu0 0.0
  %2274 = vmatpush2.msra.mxu0 0.0
  %2275 = vmatprep.subr.mxu0 0.0
  %2276 = vmatpush2.msra.mxu0 0.0
  %2277 = vmatprep.subr.mxu0 0.0
  %2278 = vmatpush2.msra.mxu0 0.0
  %2279 = vmatprep.subr.mxu0 0.0
  %2280 = vmatpush2.msra.mxu0 0.0
  %2281 = vmatprep.subr.mxu0 0.0
  %2282 = vmatpush2.msra.mxu0 0.0
  %2283 = vmatprep.subr.mxu0 0.0
  %2284 = vmatpush2.msra.mxu0 0.0
  %2285 = vmatprep.subr.mxu0 0.0
  %2286 = vmatpush2.msra.mxu0 0.0
  %2287 = vmatprep.subr.mxu0 0.0
  %2288 = vmatpush2.msra.mxu0 0.0
  %2289 = vmatprep.subr.mxu0 0.0
  %2290 = vmatpush2.msra.mxu0 0.0
  %2291 = vmatprep.subr.mxu0 0.0
  %2292 = vmatpush2.msra.mxu0 0.0
  %2293 = vmatprep.subr.mxu0 0.0
  %2294 = vmatpush2.msra.mxu0 0.0
  %2295 = vmatprep.subr.mxu0 0.0
  %2296 = vmatpush2.msra.mxu0 0.0
  %2297 = vmatprep.mubr.f32.mxu0 0.0
  %2298 = vmatmul.mubr.f32.gmra.mxu0 %v2084
  %v2299 = vpop.f32.mrf.mxu0
  %v2300 = vadd.f32 %v2230, %v2299
  %v2301 = vpop.f32.mrf.mxu0
  %2302 = vdwg.mxu0
  %v2303 = vadd.f32 %v2300, %v784
  %v2304 = vxor.u32 %v2303, 2147483648
  %v2305 = vmul.f32 %v2304, 1.442695
  %v2306 = vpow.pop %v2305
  %v2307 = vadd.f32 %v2306, 1.0
  %v2308 = vrcp.pop %v2307
  %v2309 = vmul.f32 1.0, %v2308
  %2310 = vmatprep.subr.mxu0 0.0
  %2311 = vmatpush1.msra.mxu0 0.0
  %2312 = vmatprep.subr.mxu0 0.0
  %2313 = vmatpush1.msra.mxu0 0.0
  %2314 = vmatprep.subr.mxu0 0.0
  %2315 = vmatpush1.msra.mxu0 0.0
  %2316 = vmatprep.subr.mxu0 0.0
  %2317 = vmatpush1.msra.mxu0 0.0
  %2318 = vmatprep.subr.mxu0 0.0
  %2319 = vmatpush1.msra.mxu0 0.0
  %2320 = vmatprep.subr.mxu0 0.0
  %2321 = vmatpush1.msra.mxu0 0.0
  %2322 = vmatprep.subr.mxu0 0.0
  %2323 = vmatpush1.msra.mxu0 0.0
  %2324 = vmatprep.subr.mxu0 0.0
  %2325 = vmatpush1.msra.mxu0 0.0
  %2326 = vmatprep.subr.mxu0 0.0
  %2327 = vmatpush1.msra.mxu0 0.0
  %2328 = vmatprep.subr.mxu0 0.0
  %2329 = vmatpush1.msra.mxu0 0.0
  %2330 = vmatprep.subr.mxu0 0.0
  %2331 = vmatpush1.msra.mxu0 0.0
  %2332 = vmatprep.subr.mxu0 0.0
  %2333 = vmatpush1.msra.mxu0 0.0
  %2334 = vmatprep.subr.mxu0 0.0
  %2335 = vmatpush1.msra.mxu0 %v72
  %2336 = vmatprep.subr.mxu0 0.0
  %2337 = vmatpush1.msra.mxu0 %v71
  %2338 = vmatprep.subr.mxu0 0.0
  %2339 = vmatpush1.msra.mxu0 %v70
  %2340 = vmatprep.subr.mxu0 0.0
  %2341 = vmatpush1.msra.mxu0 %v69
  %2342 = vmatprep.subr.mxu0 0.0
  %2343 = vmatpush2.msra.mxu0 0.0
  %2344 = vmatprep.subr.mxu0 0.0
  %2345 = vmatpush2.msra.mxu0 0.0
  %2346 = vmatprep.subr.mxu0 0.0
  %2347 = vmatpush2.msra.mxu0 0.0
  %2348 = vmatprep.subr.mxu0 0.0
  %2349 = vmatpush2.msra.mxu0 0.0
  %2350 = vmatprep.subr.mxu0 0.0
  %2351 = vmatpush2.msra.mxu0 0.0
  %2352 = vmatprep.subr.mxu0 0.0
  %2353 = vmatpush2.msra.mxu0 0.0
  %2354 = vmatprep.subr.mxu0 0.0
  %2355 = vmatpush2.msra.mxu0 0.0
  %2356 = vmatprep.subr.mxu0 0.0
  %2357 = vmatpush2.msra.mxu0 0.0
  %2358 = vmatprep.subr.mxu0 0.0
  %2359 = vmatpush2.msra.mxu0 0.0
  %2360 = vmatprep.subr.mxu0 0.0
  %2361 = vmatpush2.msra.mxu0 0.0
  %2362 = vmatprep.subr.mxu0 0.0
  %2363 = vmatpush2.msra.mxu0 0.0
  %2364 = vmatprep.subr.mxu0 0.0
  %2365 = vmatpush2.msra.mxu0 0.0
  %2366 = vmatprep.subr.mxu0 0.0
  %2367 = vmatpush2.msra.mxu0 0.0
  %2368 = vmatprep.subr.mxu0 0.0
  %2369 = vmatpush2.msra.mxu0 0.0
  %2370 = vmatprep.subr.mxu0 0.0
  %2371 = vmatpush2.msra.mxu0 0.0
  %2372 = vmatprep.subr.mxu0 0.0
  %2373 = vmatpush2.msra.mxu0 0.0
  %2374 = vmatprep.mubr.f32.mxu0 0.0
  %2375 = vmatmul.mubr.f32.gmra.mxu0 %v2084
  %v2376 = vpop.f32.mrf.mxu0
  %v2377 = vadd.f32 %v797, %v2376
  %v2378 = vpop.f32.mrf.mxu0
  %2379 = vdwg.mxu0
  %2380 = vmatprep.subr.mxu0 0.0
  %2381 = vmatpush1.msra.mxu0 0.0
  %2382 = vmatprep.subr.mxu0 0.0
  %2383 = vmatpush1.msra.mxu0 0.0
  %2384 = vmatprep.subr.mxu0 0.0
  %2385 = vmatpush1.msra.mxu0 0.0
  %2386 = vmatprep.subr.mxu0 0.0
  %2387 = vmatpush1.msra.mxu0 0.0
  %2388 = vmatprep.subr.mxu0 0.0
  %2389 = vmatpush1.msra.mxu0 0.0
  %2390 = vmatprep.subr.mxu0 0.0
  %2391 = vmatpush1.msra.mxu0 0.0
  %2392 = vmatprep.subr.mxu0 0.0
  %2393 = vmatpush1.msra.mxu0 0.0
  %2394 = vmatprep.subr.mxu0 0.0
  %2395 = vmatpush1.msra.mxu0 0.0
  %2396 = vmatprep.subr.mxu0 0.0
  %2397 = vmatpush1.msra.mxu0 0.0
  %2398 = vmatprep.subr.mxu0 0.0
  %2399 = vmatpush1.msra.mxu0 0.0
  %2400 = vmatprep.subr.mxu0 0.0
  %2401 = vmatpush1.msra.mxu0 0.0
  %2402 = vmatprep.subr.mxu0 0.0
  %2403 = vmatpush1.msra.mxu0 0.0
  %2404 = vmatprep.subr.mxu0 0.0
  %2405 = vmatpush1.msra.mxu0 %v86
  %2406 = vmatprep.subr.mxu0 0.0
  %2407 = vmatpush1.msra.mxu0 %v85
  %2408 = vmatprep.subr.mxu0 0.0
  %2409 = vmatpush1.msra.mxu0 %v84
  %2410 = vmatprep.subr.mxu0 0.0
  %2411 = vmatpush1.msra.mxu0 %v83
  %2412 = vmatprep.subr.mxu0 0.0
  %2413 = vmatpush2.msra.mxu0 0.0
  %2414 = vmatprep.subr.mxu0 0.0
  %2415 = vmatpush2.msra.mxu0 0.0
  %2416 = vmatprep.subr.mxu0 0.0
  %2417 = vmatpush2.msra.mxu0 0.0
  %2418 = vmatprep.subr.mxu0 0.0
  %2419 = vmatpush2.msra.mxu0 0.0
  %2420 = vmatprep.subr.mxu0 0.0
  %2421 = vmatpush2.msra.mxu0 0.0
  %2422 = vmatprep.subr.mxu0 0.0
  %2423 = vmatpush2.msra.mxu0 0.0
  %2424 = vmatprep.subr.mxu0 0.0
  %2425 = vmatpush2.msra.mxu0 0.0
  %2426 = vmatprep.subr.mxu0 0.0
  %2427 = vmatpush2.msra.mxu0 0.0
  %2428 = vmatprep.subr.mxu0 0.0
  %2429 = vmatpush2.msra.mxu0 0.0
  %2430 = vmatprep.subr.mxu0 0.0
  %2431 = vmatpush2.msra.mxu0 0.0
  %2432 = vmatprep.subr.mxu0 0.0
  %2433 = vmatpush2.msra.mxu0 0.0
  %2434 = vmatprep.subr.mxu0 0.0
  %2435 = vmatpush2.msra.mxu0 0.0
  %2436 = vmatprep.subr.mxu0 0.0
  %2437 = vmatpush2.msra.mxu0 0.0
  %2438 = vmatprep.subr.mxu0 0.0
  %2439 = vmatpush2.msra.mxu0 0.0
  %2440 = vmatprep.subr.mxu0 0.0
  %2441 = vmatpush2.msra.mxu0 0.0
  %2442 = vmatprep.subr.mxu0 0.0
  %2443 = vmatpush2.msra.mxu0 0.0
  %2444 = vmatprep.mubr.f32.mxu0 0.0
  %2445 = vmatmul.mubr.f32.gmra.mxu0 %v1640
  %v2446 = vpop.f32.mrf.mxu0
  %v2447 = vadd.f32 %v873, %v2446
  %v2448 = vpop.f32.mrf.mxu0
  %2449 = vdwg.mxu0
  %v2450 = vmul.f32 %v2162, %v2447
  %v2451 = vadd.f32 %v2377, %v2450
  %v2452 = vtanh.pop %v2451
  %v2453 = vsub.f32 1.0, %v2309
  %v2454 = vmul.f32 %v2453, %v2452
  %v2455 = vmul.f32 %v2309, %v1633
  %v2456 = vadd.f32 %v2454, %v2455
  %s2457 = scalar_lea.vmem %s9, 64
  %v2458 = vld [vmem:[%s2457] sm:$0xff]
  %v2459 = vld [vmem:[%s2457 + $0x8] sm:$0xff]
  %v2460 = vld [vmem:[%s2457 + $0x10] sm:$0xff]
  %v2461 = vld [vmem:[%s2457 + $0x18] sm:$0xff]
  %v2463 = vsel %vm243, %v2456, 0
  %2465 = vmatprep.subr.mxu0 0.0
  %2466 = vmatpush1.msra.mxu0 0.0
  %2467 = vmatprep.subr.mxu0 0.0
  %2468 = vmatpush1.msra.mxu0 0.0
  %2469 = vmatprep.subr.mxu0 0.0
  %2470 = vmatpush1.msra.mxu0 0.0
  %2471 = vmatprep.subr.mxu0 0.0
  %2472 = vmatpush1.msra.mxu0 0.0
  %2473 = vmatprep.subr.mxu0 0.0
  %2474 = vmatpush1.msra.mxu0 0.0
  %2475 = vmatprep.subr.mxu0 0.0
  %2476 = vmatpush1.msra.mxu0 0.0
  %2477 = vmatprep.subr.mxu0 0.0
  %2478 = vmatpush1.msra.mxu0 0.0
  %2479 = vmatprep.subr.mxu0 0.0
  %2480 = vmatpush1.msra.mxu0 0.0
  %2481 = vmatprep.subr.mxu0 0.0
  %2482 = vmatpush1.msra.mxu0 0.0
  %2483 = vmatprep.subr.mxu0 0.0
  %2484 = vmatpush1.msra.mxu0 0.0
  %2485 = vmatprep.subr.mxu0 0.0
  %2486 = vmatpush1.msra.mxu0 0.0
  %2487 = vmatprep.subr.mxu0 0.0
  %2488 = vmatpush1.msra.mxu0 0.0
  %2489 = vmatprep.subr.mxu0 0.0
  %2490 = vmatpush1.msra.mxu0 %v2461
  %2491 = vmatprep.subr.mxu0 0.0
  %2492 = vmatpush1.msra.mxu0 %v2460
  %2493 = vmatprep.subr.mxu0 0.0
  %2494 = vmatpush1.msra.mxu0 %v2459
  %2495 = vmatprep.subr.mxu0 0.0
  %2496 = vmatpush1.msra.mxu0 %v2458
  %2497 = vmatprep.subr.mxu0 0.0
  %2498 = vmatpush2.msra.mxu0 0.0
  %2499 = vmatprep.subr.mxu0 0.0
  %2500 = vmatpush2.msra.mxu0 0.0
  %2501 = vmatprep.subr.mxu0 0.0
  %2502 = vmatpush2.msra.mxu0 0.0
  %2503 = vmatprep.subr.mxu0 0.0
  %2504 = vmatpush2.msra.mxu0 0.0
  %2505 = vmatprep.subr.mxu0 0.0
  %2506 = vmatpush2.msra.mxu0 0.0
  %2507 = vmatprep.subr.mxu0 0.0
  %2508 = vmatpush2.msra.mxu0 0.0
  %2509 = vmatprep.subr.mxu0 0.0
  %2510 = vmatpush2.msra.mxu0 0.0
  %2511 = vmatprep.subr.mxu0 0.0
  %2512 = vmatpush2.msra.mxu0 0.0
  %2513 = vmatprep.subr.mxu0 0.0
  %2514 = vmatpush2.msra.mxu0 0.0
  %2515 = vmatprep.subr.mxu0 0.0
  %2516 = vmatpush2.msra.mxu0 0.0
  %2517 = vmatprep.subr.mxu0 0.0
  %2518 = vmatpush2.msra.mxu0 0.0
  %2519 = vmatprep.subr.mxu0 0.0
  %2520 = vmatpush2.msra.mxu0 0.0
  %2521 = vmatprep.subr.mxu0 0.0
  %2522 = vmatpush2.msra.mxu0 0.0
  %2523 = vmatprep.subr.mxu0 0.0
  %2524 = vmatpush2.msra.mxu0 0.0
  %2525 = vmatprep.subr.mxu0 0.0
  %2526 = vmatpush2.msra.mxu0 0.0
  %2527 = vmatprep.subr.mxu0 0.0
  %2528 = vmatpush2.msra.mxu0 0.0
  %2529 = vmatprep.mubr.f32.mxu0 0.0
  %2530 = vmatmul.mubr.f32.gmra.mxu0 %v2463
  %v2531 = vpop.f32.mrf.mxu0
  %v2532 = vadd.f32 0.0, %v2531
  %v2533 = vpop.f32.mrf.mxu0
  %2534 = vdwg.mxu0
  %v2535 = vadd.f32 %v1779, %v2532
  %2536 = vmatprep.subr.mxu0 0.0
  %2537 = vmatpush1.msra.mxu0 0.0
  %2538 = vmatprep.subr.mxu0 0.0
  %2539 = vmatpush1.msra.mxu0 0.0
  %2540 = vmatprep.subr.mxu0 0.0
  %2541 = vmatpush1.msra.mxu0 0.0
  %2542 = vmatprep.subr.mxu0 0.0
  %2543 = vmatpush1.msra.mxu0 0.0
  %2544 = vmatprep.subr.mxu0 0.0
  %2545 = vmatpush1.msra.mxu0 0.0
  %2546 = vmatprep.subr.mxu0 0.0
  %2547 = vmatpush1.msra.mxu0 0.0
  %2548 = vmatprep.subr.mxu0 0.0
  %2549 = vmatpush1.msra.mxu0 0.0
  %2550 = vmatprep.subr.mxu0 0.0
  %2551 = vmatpush1.msra.mxu0 0.0
  %2552 = vmatprep.subr.mxu0 0.0
  %2553 = vmatpush1.msra.mxu0 0.0
  %2554 = vmatprep.subr.mxu0 0.0
  %2555 = vmatpush1.msra.mxu0 0.0
  %2556 = vmatprep.subr.mxu0 0.0
  %2557 = vmatpush1.msra.mxu0 0.0
  %2558 = vmatprep.subr.mxu0 0.0
  %2559 = vmatpush1.msra.mxu0 0.0
  %2560 = vmatprep.subr.mxu0 0.0
  %2561 = vmatpush1.msra.mxu0 %v48
  %2562 = vmatprep.subr.mxu0 0.0
  %2563 = vmatpush1.msra.mxu0 %v47
  %2564 = vmatprep.subr.mxu0 0.0
  %2565 = vmatpush1.msra.mxu0 %v46
  %2566 = vmatprep.subr.mxu0 0.0
  %2567 = vmatpush1.msra.mxu0 %v45
  %2568 = vmatprep.subr.mxu0 0.0
  %2569 = vmatpush2.msra.mxu0 0.0
  %2570 = vmatprep.subr.mxu0 0.0
  %2571 = vmatpush2.msra.mxu0 0.0
  %2572 = vmatprep.subr.mxu0 0.0
  %2573 = vmatpush2.msra.mxu0 0.0
  %2574 = vmatprep.subr.mxu0 0.0
  %2575 = vmatpush2.msra.mxu0 0.0
  %2576 = vmatprep.subr.mxu0 0.0
  %2577 = vmatpush2.msra.mxu0 0.0
  %2578 = vmatprep.subr.mxu0 0.0
  %2579 = vmatpush2.msra.mxu0 0.0
  %2580 = vmatprep.subr.mxu0 0.0
  %2581 = vmatpush2.msra.mxu0 0.0
  %2582 = vmatprep.subr.mxu0 0.0
  %2583 = vmatpush2.msra.mxu0 0.0
  %2584 = vmatprep.subr.mxu0 0.0
  %2585 = vmatpush2.msra.mxu0 0.0
  %2586 = vmatprep.subr.mxu0 0.0
  %2587 = vmatpush2.msra.mxu0 0.0
  %2588 = vmatprep.subr.mxu0 0.0
  %2589 = vmatpush2.msra.mxu0 0.0
  %2590 = vmatprep.subr.mxu0 0.0
  %2591 = vmatpush2.msra.mxu0 0.0
  %2592 = vmatprep.subr.mxu0 0.0
  %2593 = vmatpush2.msra.mxu0 0.0
  %2594 = vmatprep.subr.mxu0 0.0
  %2595 = vmatpush2.msra.mxu0 0.0
  %2596 = vmatprep.subr.mxu0 0.0
  %2597 = vmatpush2.msra.mxu0 0.0
  %2598 = vmatprep.subr.mxu0 0.0
  %2599 = vmatpush2.msra.mxu0 0.0
  %2600 = vmatprep.mubr.f32.mxu0 0.0
  %2601 = vmatmul.mubr.f32.gmra.mxu0 %v2084
  %v2602 = vpop.f32.mrf.mxu0
  %v2603 = vadd.f32 0.0, %v2602
  %v2604 = vpop.f32.mrf.mxu0
  %2605 = vdwg.mxu0
  %v2606 = vadd.f32 %v182, %v2603
  %v2607 = vxor.u32 %v2606, 2147483648
  %v2608 = vmul.f32 %v2607, 1.442695
  %v2609 = vpow.pop %v2608
  %v2610 = vadd.f32 %v2609, 1.0
  %v2611 = vrcp.pop %v2610
  %v2612 = vmul.f32 1.0, %v2611
  %2613 = vmatprep.subr.mxu0 0.0
  %2614 = vmatpush1.msra.mxu0 0.0
  %2615 = vmatprep.subr.mxu0 0.0
  %2616 = vmatpush1.msra.mxu0 0.0
  %2617 = vmatprep.subr.mxu0 0.0
  %2618 = vmatpush1.msra.mxu0 0.0
  %2619 = vmatprep.subr.mxu0 0.0
  %2620 = vmatpush1.msra.mxu0 0.0
  %2621 = vmatprep.subr.mxu0 0.0
  %2622 = vmatpush1.msra.mxu0 0.0
  %2623 = vmatprep.subr.mxu0 0.0
  %2624 = vmatpush1.msra.mxu0 0.0
  %2625 = vmatprep.subr.mxu0 0.0
  %2626 = vmatpush1.msra.mxu0 0.0
  %2627 = vmatprep.subr.mxu0 0.0
  %2628 = vmatpush1.msra.mxu0 0.0
  %2629 = vmatprep.subr.mxu0 0.0
  %2630 = vmatpush1.msra.mxu0 0.0
  %2631 = vmatprep.subr.mxu0 0.0
  %2632 = vmatpush1.msra.mxu0 0.0
  %2633 = vmatprep.subr.mxu0 0.0
  %2634 = vmatpush1.msra.mxu0 0.0
  %2635 = vmatprep.subr.mxu0 0.0
  %2636 = vmatpush1.msra.mxu0 0.0
  %2637 = vmatprep.subr.mxu0 0.0
  %2638 = vmatpush1.msra.mxu0 %v53
  %2639 = vmatprep.subr.mxu0 0.0
  %2640 = vmatpush1.msra.mxu0 %v52
  %2641 = vmatprep.subr.mxu0 0.0
  %2642 = vmatpush1.msra.mxu0 %v51
  %2643 = vmatprep.subr.mxu0 0.0
  %2644 = vmatpush1.msra.mxu0 %v50
  %2645 = vmatprep.subr.mxu0 0.0
  %2646 = vmatpush2.msra.mxu0 0.0
  %2647 = vmatprep.subr.mxu0 0.0
  %2648 = vmatpush2.msra.mxu0 0.0
  %2649 = vmatprep.subr.mxu0 0.0
  %2650 = vmatpush2.msra.mxu0 0.0
  %2651 = vmatprep.subr.mxu0 0.0
  %2652 = vmatpush2.msra.mxu0 0.0
  %2653 = vmatprep.subr.mxu0 0.0
  %2654 = vmatpush2.msra.mxu0 0.0
  %2655 = vmatprep.subr.mxu0 0.0
  %2656 = vmatpush2.msra.mxu0 0.0
  %2657 = vmatprep.subr.mxu0 0.0
  %2658 = vmatpush2.msra.mxu0 0.0
  %2659 = vmatprep.subr.mxu0 0.0
  %2660 = vmatpush2.msra.mxu0 0.0
  %2661 = vmatprep.subr.mxu0 0.0
  %2662 = vmatpush2.msra.mxu0 0.0
  %2663 = vmatprep.subr.mxu0 0.0
  %2664 = vmatpush2.msra.mxu0 0.0
  %2665 = vmatprep.subr.mxu0 0.0
  %2666 = vmatpush2.msra.mxu0 0.0
  %2667 = vmatprep.subr.mxu0 0.0
  %2668 = vmatpush2.msra.mxu0 0.0
  %2669 = vmatprep.subr.mxu0 0.0
  %2670 = vmatpush2.msra.mxu0 0.0
  %2671 = vmatprep.subr.mxu0 0.0
  %2672 = vmatpush2.msra.mxu0 0.0
  %2673 = vmatprep.subr.mxu0 0.0
  %2674 = vmatpush2.msra.mxu0 0.0
  %2675 = vmatprep.subr.mxu0 0.0
  %2676 = vmatpush2.msra.mxu0 0.0
  %2677 = vmatprep.mubr.f32.mxu0 0.0
  %2678 = vmatmul.mubr.f32.gmra.mxu0 %v2084
  %v2679 = vpop.f32.mrf.mxu0
  %v2680 = vadd.f32 0.0, %v2679
  %v2681 = vpop.f32.mrf.mxu0
  %2682 = vdwg.mxu0
  %v2683 = vadd.f32 %v210, %v2680
  %v2684 = vxor.u32 %v2683, 2147483648
  %v2685 = vmul.f32 %v2684, 1.442695
  %v2686 = vpow.pop %v2685
  %v2687 = vadd.f32 %v2686, 1.0
  %v2688 = vrcp.pop %v2687
  %v2689 = vmul.f32 1.0, %v2688
  %2690 = vmatprep.subr.mxu0 0.0
  %2691 = vmatpush1.msra.mxu0 0.0
  %2692 = vmatprep.subr.mxu0 0.0
  %2693 = vmatpush1.msra.mxu0 0.0
  %2694 = vmatprep.subr.mxu0 0.0
  %2695 = vmatpush1.msra.mxu0 0.0
  %2696 = vmatprep.subr.mxu0 0.0
  %2697 = vmatpush1.msra.mxu0 0.0
  %2698 = vmatprep.subr.mxu0 0.0
  %2699 = vmatpush1.msra.mxu0 0.0
  %2700 = vmatprep.subr.mxu0 0.0
  %2701 = vmatpush1.msra.mxu0 0.0
  %2702 = vmatprep.subr.mxu0 0.0
  %2703 = vmatpush1.msra.mxu0 0.0
  %2704 = vmatprep.subr.mxu0 0.0
  %2705 = vmatpush1.msra.mxu0 0.0
  %2706 = vmatprep.subr.mxu0 0.0
  %2707 = vmatpush1.msra.mxu0 0.0
  %2708 = vmatprep.subr.mxu0 0.0
  %2709 = vmatpush1.msra.mxu0 0.0
  %2710 = vmatprep.subr.mxu0 0.0
  %2711 = vmatpush1.msra.mxu0 0.0
  %2712 = vmatprep.subr.mxu0 0.0
  %2713 = vmatpush1.msra.mxu0 0.0
  %2714 = vmatprep.subr.mxu0 0.0
  %2715 = vmatpush1.msra.mxu0 %v58
  %2716 = vmatprep.subr.mxu0 0.0
  %2717 = vmatpush1.msra.mxu0 %v57
  %2718 = vmatprep.subr.mxu0 0.0
  %2719 = vmatpush1.msra.mxu0 %v56
  %2720 = vmatprep.subr.mxu0 0.0
  %2721 = vmatpush1.msra.mxu0 %v55
  %2722 = vmatprep.subr.mxu0 0.0
  %2723 = vmatpush2.msra.mxu0 0.0
  %2724 = vmatprep.subr.mxu0 0.0
  %2725 = vmatpush2.msra.mxu0 0.0
  %2726 = vmatprep.subr.mxu0 0.0
  %2727 = vmatpush2.msra.mxu0 0.0
  %2728 = vmatprep.subr.mxu0 0.0
  %2729 = vmatpush2.msra.mxu0 0.0
  %2730 = vmatprep.subr.mxu0 0.0
  %2731 = vmatpush2.msra.mxu0 0.0
  %2732 = vmatprep.subr.mxu0 0.0
  %2733 = vmatpush2.msra.mxu0 0.0
  %2734 = vmatprep.subr.mxu0 0.0
  %2735 = vmatpush2.msra.mxu0 0.0
  %2736 = vmatprep.subr.mxu0 0.0
  %2737 = vmatpush2.msra.mxu0 0.0
  %2738 = vmatprep.subr.mxu0 0.0
  %2739 = vmatpush2.msra.mxu0 0.0
  %2740 = vmatprep.subr.mxu0 0.0
  %2741 = vmatpush2.msra.mxu0 0.0
  %2742 = vmatprep.subr.mxu0 0.0
  %2743 = vmatpush2.msra.mxu0 0.0
  %2744 = vmatprep.subr.mxu0 0.0
  %2745 = vmatpush2.msra.mxu0 0.0
  %2746 = vmatprep.subr.mxu0 0.0
  %2747 = vmatpush2.msra.mxu0 0.0
  %2748 = vmatprep.subr.mxu0 0.0
  %2749 = vmatpush2.msra.mxu0 0.0
  %2750 = vmatprep.subr.mxu0 0.0
  %2751 = vmatpush2.msra.mxu0 0.0
  %2752 = vmatprep.subr.mxu0 0.0
  %2753 = vmatpush2.msra.mxu0 0.0
  %2754 = vmatprep.mubr.f32.mxu0 0.0
  %2755 = vmatmul.mubr.f32.gmra.mxu0 %v2084
  %v2756 = vpop.f32.mrf.mxu0
  %v2757 = vadd.f32 %v405, %v2756
  %v2758 = vpop.f32.mrf.mxu0
  %2759 = vdwg.mxu0
  %v2760 = vmul.f32 %v2612, %v2757
  %v2761 = vadd.f32 %v238, %v2760
  %v2762 = vtanh.pop %v2761
  %v2763 = vsub.f32 1.0, %v2689
  %v2764 = vmul.f32 %v2763, %v2762
  %v2765 = vmul.f32 %v2689, %v2012
  %v2766 = vadd.f32 %v2764, %v2765
  %2767 = vmatprep.subr.mxu0 0.0
  %2768 = vmatpush1.msra.mxu0 0.0
  %2769 = vmatprep.subr.mxu0 0.0
  %2770 = vmatpush1.msra.mxu0 0.0
  %2771 = vmatprep.subr.mxu0 0.0
  %2772 = vmatpush1.msra.mxu0 0.0
  %2773 = vmatprep.subr.mxu0 0.0
  %2774 = vmatpush1.msra.mxu0 0.0
  %2775 = vmatprep.subr.mxu0 0.0
  %2776 = vmatpush1.msra.mxu0 0.0
  %2777 = vmatprep.subr.mxu0 0.0
  %2778 = vmatpush1.msra.mxu0 0.0
  %2779 = vmatprep.subr.mxu0 0.0
  %2780 = vmatpush1.msra.mxu0 0.0
  %2781 = vmatprep.subr.mxu0 0.0
  %2782 = vmatpush1.msra.mxu0 0.0
  %2783 = vmatprep.subr.mxu0 0.0
  %2784 = vmatpush1.msra.mxu0 0.0
  %2785 = vmatprep.subr.mxu0 0.0
  %2786 = vmatpush1.msra.mxu0 0.0
  %2787 = vmatprep.subr.mxu0 0.0
  %2788 = vmatpush1.msra.mxu0 0.0
  %2789 = vmatprep.subr.mxu0 0.0
  %2790 = vmatpush1.msra.mxu0 0.0
  %2791 = vmatprep.subr.mxu0 0.0
  %2792 = vmatpush1.msra.mxu0 %v76
  %2793 = vmatprep.subr.mxu0 0.0
  %2794 = vmatpush1.msra.mxu0 %v75
  %2795 = vmatprep.subr.mxu0 0.0
  %2796 = vmatpush1.msra.mxu0 %v74
  %2797 = vmatprep.subr.mxu0 0.0
  %2798 = vmatpush1.msra.mxu0 %v73
  %2799 = vmatprep.subr.mxu0 0.0
  %2800 = vmatpush2.msra.mxu0 0.0
  %2801 = vmatprep.subr.mxu0 0.0
  %2802 = vmatpush2.msra.mxu0 0.0
  %2803 = vmatprep.subr.mxu0 0.0
  %2804 = vmatpush2.msra.mxu0 0.0
  %2805 = vmatprep.subr.mxu0 0.0
  %2806 = vmatpush2.msra.mxu0 0.0
  %2807 = vmatprep.subr.mxu0 0.0
  %2808 = vmatpush2.msra.mxu0 0.0
  %2809 = vmatprep.subr.mxu0 0.0
  %2810 = vmatpush2.msra.mxu0 0.0
  %2811 = vmatprep.subr.mxu0 0.0
  %2812 = vmatpush2.msra.mxu0 0.0
  %2813 = vmatprep.subr.mxu0 0.0
  %2814 = vmatpush2.msra.mxu0 0.0
  %2815 = vmatprep.subr.mxu0 0.0
  %2816 = vmatpush2.msra.mxu0 0.0
  %2817 = vmatprep.subr.mxu0 0.0
  %2818 = vmatpush2.msra.mxu0 0.0
  %2819 = vmatprep.subr.mxu0 0.0
  %2820 = vmatpush2.msra.mxu0 0.0
  %2821 = vmatprep.subr.mxu0 0.0
  %2822 = vmatpush2.msra.mxu0 0.0
  %2823 = vmatprep.subr.mxu0 0.0
  %2824 = vmatpush2.msra.mxu0 0.0
  %2825 = vmatprep.subr.mxu0 0.0
  %2826 = vmatpush2.msra.mxu0 0.0
  %2827 = vmatprep.subr.mxu0 0.0
  %2828 = vmatpush2.msra.mxu0 0.0
  %2829 = vmatprep.subr.mxu0 0.0
  %2830 = vmatpush2.msra.mxu0 0.0
  %2831 = vmatprep.mubr.f32.mxu0 0.0
  %2832 = vmatmul.mubr.f32.gmra.mxu0 %v2463
  %v2833 = vpop.f32.mrf.mxu0
  %v2834 = vadd.f32 0.0, %v2833
  %v2835 = vpop.f32.mrf.mxu0
  %2836 = vdwg.mxu0
  %v2838 = vsel %vm243, %v2766, 0
  %2840 = vmatprep.subr.mxu0 0.0
  %2841 = vmatpush1.msra.mxu0 0.0
  %2842 = vmatprep.subr.mxu0 0.0
  %2843 = vmatpush1.msra.mxu0 0.0
  %2844 = vmatprep.subr.mxu0 0.0
  %2845 = vmatpush1.msra.mxu0 0.0
  %2846 = vmatprep.subr.mxu0 0.0
  %2847 = vmatpush1.msra.mxu0 0.0
  %2848 = vmatprep.subr.mxu0 0.0
  %2849 = vmatpush1.msra.mxu0 0.0
  %2850 = vmatprep.subr.mxu0 0.0
  %2851 = vmatpush1.msra.mxu0 0.0
  %2852 = vmatprep.subr.mxu0 0.0
  %2853 = vmatpush1.msra.mxu0 0.0
  %2854 = vmatprep.subr.mxu0 0.0
  %2855 = vmatpush1.msra.mxu0 0.0
  %2856 = vmatprep.subr.mxu0 0.0
  %2857 = vmatpush1.msra.mxu0 0.0
  %2858 = vmatprep.subr.mxu0 0.0
  %2859 = vmatpush1.msra.mxu0 0.0
  %2860 = vmatprep.subr.mxu0 0.0
  %2861 = vmatpush1.msra.mxu0 0.0
  %2862 = vmatprep.subr.mxu0 0.0
  %2863 = vmatpush1.msra.mxu0 0.0
  %2864 = vmatprep.subr.mxu0 0.0
  %2865 = vmatpush1.msra.mxu0 %v62
  %2866 = vmatprep.subr.mxu0 0.0
  %2867 = vmatpush1.msra.mxu0 %v61
  %2868 = vmatprep.subr.mxu0 0.0
  %2869 = vmatpush1.msra.mxu0 %v60
  %2870 = vmatprep.subr.mxu0 0.0
  %2871 = vmatpush1.msra.mxu0 %v59
  %2872 = vmatprep.subr.mxu0 0.0
  %2873 = vmatpush2.msra.mxu0 0.0
  %2874 = vmatprep.subr.mxu0 0.0
  %2875 = vmatpush2.msra.mxu0 0.0
  %2876 = vmatprep.subr.mxu0 0.0
  %2877 = vmatpush2.msra.mxu0 0.0
  %2878 = vmatprep.subr.mxu0 0.0
  %2879 = vmatpush2.msra.mxu0 0.0
  %2880 = vmatprep.subr.mxu0 0.0
  %2881 = vmatpush2.msra.mxu0 0.0
  %2882 = vmatprep.subr.mxu0 0.0
  %2883 = vmatpush2.msra.mxu0 0.0
  %2884 = vmatprep.subr.mxu0 0.0
  %2885 = vmatpush2.msra.mxu0 0.0
  %2886 = vmatprep.subr.mxu0 0.0
  %2887 = vmatpush2.msra.mxu0 0.0
  %2888 = vmatprep.subr.mxu0 0.0
  %2889 = vmatpush2.msra.mxu0 0.0
  %2890 = vmatprep.subr.mxu0 0.0
  %2891 = vmatpush2.msra.mxu0 0.0
  %2892 = vmatprep.subr.mxu0 0.0
  %2893 = vmatpush2.msra.mxu0 0.0
  %2894 = vmatprep.subr.mxu0 0.0
  %2895 = vmatpush2.msra.mxu0 0.0
  %2896 = vmatprep.subr.mxu0 0.0
  %2897 = vmatpush2.msra.mxu0 0.0
  %2898 = vmatprep.subr.mxu0 0.0
  %2899 = vmatpush2.msra.mxu0 0.0
  %2900 = vmatprep.subr.mxu0 0.0
  %2901 = vmatpush2.msra.mxu0 0.0
  %2902 = vmatprep.subr.mxu0 0.0
  %2903 = vmatpush2.msra.mxu0 0.0
  %2904 = vmatprep.mubr.f32.mxu0 0.0
  %2905 = vmatmul.mubr.f32.gmra.mxu0 %v2838
  %v2906 = vpop.f32.mrf.mxu0
  %v2907 = vadd.f32 %v2834, %v2906
  %v2908 = vpop.f32.mrf.mxu0
  %2909 = vdwg.mxu0
  %v2910 = vadd.f32 %v2907, %v631
  %v2911 = vxor.u32 %v2910, 2147483648
  %v2912 = vmul.f32 %v2911, 1.442695
  %v2913 = vpow.pop %v2912
  %v2914 = vadd.f32 %v2913, 1.0
  %v2915 = vrcp.pop %v2914
  %v2916 = vmul.f32 1.0, %v2915
  %2917 = vmatprep.subr.mxu0 0.0
  %2918 = vmatpush1.msra.mxu0 0.0
  %2919 = vmatprep.subr.mxu0 0.0
  %2920 = vmatpush1.msra.mxu0 0.0
  %2921 = vmatprep.subr.mxu0 0.0
  %2922 = vmatpush1.msra.mxu0 0.0
  %2923 = vmatprep.subr.mxu0 0.0
  %2924 = vmatpush1.msra.mxu0 0.0
  %2925 = vmatprep.subr.mxu0 0.0
  %2926 = vmatpush1.msra.mxu0 0.0
  %2927 = vmatprep.subr.mxu0 0.0
  %2928 = vmatpush1.msra.mxu0 0.0
  %2929 = vmatprep.subr.mxu0 0.0
  %2930 = vmatpush1.msra.mxu0 0.0
  %2931 = vmatprep.subr.mxu0 0.0
  %2932 = vmatpush1.msra.mxu0 0.0
  %2933 = vmatprep.subr.mxu0 0.0
  %2934 = vmatpush1.msra.mxu0 0.0
  %2935 = vmatprep.subr.mxu0 0.0
  %2936 = vmatpush1.msra.mxu0 0.0
  %2937 = vmatprep.subr.mxu0 0.0
  %2938 = vmatpush1.msra.mxu0 0.0
  %2939 = vmatprep.subr.mxu0 0.0
  %2940 = vmatpush1.msra.mxu0 0.0
  %2941 = vmatprep.subr.mxu0 0.0
  %2942 = vmatpush1.msra.mxu0 %v81
  %2943 = vmatprep.subr.mxu0 0.0
  %2944 = vmatpush1.msra.mxu0 %v80
  %2945 = vmatprep.subr.mxu0 0.0
  %2946 = vmatpush1.msra.mxu0 %v79
  %2947 = vmatprep.subr.mxu0 0.0
  %2948 = vmatpush1.msra.mxu0 %v78
  %2949 = vmatprep.subr.mxu0 0.0
  %2950 = vmatpush2.msra.mxu0 0.0
  %2951 = vmatprep.subr.mxu0 0.0
  %2952 = vmatpush2.msra.mxu0 0.0
  %2953 = vmatprep.subr.mxu0 0.0
  %2954 = vmatpush2.msra.mxu0 0.0
  %2955 = vmatprep.subr.mxu0 0.0
  %2956 = vmatpush2.msra.mxu0 0.0
  %2957 = vmatprep.subr.mxu0 0.0
  %2958 = vmatpush2.msra.mxu0 0.0
  %2959 = vmatprep.subr.mxu0 0.0
  %2960 = vmatpush2.msra.mxu0 0.0
  %2961 = vmatprep.subr.mxu0 0.0
  %2962 = vmatpush2.msra.mxu0 0.0
  %2963 = vmatprep.subr.mxu0 0.0
  %2964 = vmatpush2.msra.mxu0 0.0
  %2965 = vmatprep.subr.mxu0 0.0
  %2966 = vmatpush2.msra.mxu0 0.0
  %2967 = vmatprep.subr.mxu0 0.0
  %2968 = vmatpush2.msra.mxu0 0.0
  %2969 = vmatprep.subr.mxu0 0.0
  %2970 = vmatpush2.msra.mxu0 0.0
  %2971 = vmatprep.subr.mxu0 0.0
  %2972 = vmatpush2.msra.mxu0 0.0
  %2973 = vmatprep.subr.mxu0 0.0
  %2974 = vmatpush2.msra.mxu0 0.0
  %2975 = vmatprep.subr.mxu0 0.0
  %2976 = vmatpush2.msra.mxu0 0.0
  %2977 = vmatprep.subr.mxu0 0.0
  %2978 = vmatpush2.msra.mxu0 0.0
  %2979 = vmatprep.subr.mxu0 0.0
  %2980 = vmatpush2.msra.mxu0 0.0
  %2981 = vmatprep.mubr.f32.mxu0 0.0
  %2982 = vmatmul.mubr.f32.gmra.mxu0 %v2463
  %v2983 = vpop.f32.mrf.mxu0
  %v2984 = vadd.f32 0.0, %v2983
  %v2985 = vpop.f32.mrf.mxu0
  %2986 = vdwg.mxu0
  %2987 = vmatprep.subr.mxu0 0.0
  %2988 = vmatpush1.msra.mxu0 0.0
  %2989 = vmatprep.subr.mxu0 0.0
  %2990 = vmatpush1.msra.mxu0 0.0
  %2991 = vmatprep.subr.mxu0 0.0
  %2992 = vmatpush1.msra.mxu0 0.0
  %2993 = vmatprep.subr.mxu0 0.0
  %2994 = vmatpush1.msra.mxu0 0.0
  %2995 = vmatprep.subr.mxu0 0.0
  %2996 = vmatpush1.msra.mxu0 0.0
  %2997 = vmatprep.subr.mxu0 0.0
  %2998 = vmatpush1.msra.mxu0 0.0
  %2999 = vmatprep.subr.mxu0 0.0
  %3000 = vmatpush1.msra.mxu0 0.0
  %3001 = vmatprep.subr.mxu0 0.0
  %3002 = vmatpush1.msra.mxu0 0.0
  %3003 = vmatprep.subr.mxu0 0.0
  %3004 = vmatpush1.msra.mxu0 0.0
  %3005 = vmatprep.subr.mxu0 0.0
  %3006 = vmatpush1.msra.mxu0 0.0
  %3007 = vmatprep.subr.mxu0 0.0
  %3008 = vmatpush1.msra.mxu0 0.0
  %3009 = vmatprep.subr.mxu0 0.0
  %3010 = vmatpush1.msra.mxu0 0.0
  %3011 = vmatprep.subr.mxu0 0.0
  %3012 = vmatpush1.msra.mxu0 %v67
  %3013 = vmatprep.subr.mxu0 0.0
  %3014 = vmatpush1.msra.mxu0 %v66
  %3015 = vmatprep.subr.mxu0 0.0
  %3016 = vmatpush1.msra.mxu0 %v65
  %3017 = vmatprep.subr.mxu0 0.0
  %3018 = vmatpush1.msra.mxu0 %v64
  %3019 = vmatprep.subr.mxu0 0.0
  %3020 = vmatpush2.msra.mxu0 0.0
  %3021 = vmatprep.subr.mxu0 0.0
  %3022 = vmatpush2.msra.mxu0 0.0
  %3023 = vmatprep.subr.mxu0 0.0
  %3024 = vmatpush2.msra.mxu0 0.0
  %3025 = vmatprep.subr.mxu0 0.0
  %3026 = vmatpush2.msra.mxu0 0.0
  %3027 = vmatprep.subr.mxu0 0.0
  %3028 = vmatpush2.msra.mxu0 0.0
  %3029 = vmatprep.subr.mxu0 0.0
  %3030 = vmatpush2.msra.mxu0 0.0
  %3031 = vmatprep.subr.mxu0 0.0
  %3032 = vmatpush2.msra.mxu0 0.0
  %3033 = vmatprep.subr.mxu0 0.0
  %3034 = vmatpush2.msra.mxu0 0.0
  %3035 = vmatprep.subr.mxu0 0.0
  %3036 = vmatpush2.msra.mxu0 0.0
  %3037 = vmatprep.subr.mxu0 0.0
  %3038 = vmatpush2.msra.mxu0 0.0
  %3039 = vmatprep.subr.mxu0 0.0
  %3040 = vmatpush2.msra.mxu0 0.0
  %3041 = vmatprep.subr.mxu0 0.0
  %3042 = vmatpush2.msra.mxu0 0.0
  %3043 = vmatprep.subr.mxu0 0.0
  %3044 = vmatpush2.msra.mxu0 0.0
  %3045 = vmatprep.subr.mxu0 0.0
  %3046 = vmatpush2.msra.mxu0 0.0
  %3047 = vmatprep.subr.mxu0 0.0
  %3048 = vmatpush2.msra.mxu0 0.0
  %3049 = vmatprep.subr.mxu0 0.0
  %3050 = vmatpush2.msra.mxu0 0.0
  %3051 = vmatprep.mubr.f32.mxu0 0.0
  %3052 = vmatmul.mubr.f32.gmra.mxu0 %v2838
  %v3053 = vpop.f32.mrf.mxu0
  %v3054 = vadd.f32 %v2984, %v3053
  %v3055 = vpop.f32.mrf.mxu0
  %3056 = vdwg.mxu0
  %v3057 = vadd.f32 %v3054, %v784
  %v3058 = vxor.u32 %v3057, 2147483648
  %v3059 = vmul.f32 %v3058, 1.442695
  %v3060 = vpow.pop %v3059
  %v3061 = vadd.f32 %v3060, 1.0
  %v3062 = vrcp.pop %v3061
  %v3063 = vmul.f32 1.0, %v3062
  %3064 = vmatprep.subr.mxu0 0.0
  %3065 = vmatpush1.msra.mxu0 0.0
  %3066 = vmatprep.subr.mxu0 0.0
  %3067 = vmatpush1.msra.mxu0 0.0
  %3068 = vmatprep.subr.mxu0 0.0
  %3069 = vmatpush1.msra.mxu0 0.0
  %3070 = vmatprep.subr.mxu0 0.0
  %3071 = vmatpush1.msra.mxu0 0.0
  %3072 = vmatprep.subr.mxu0 0.0
  %3073 = vmatpush1.msra.mxu0 0.0
  %3074 = vmatprep.subr.mxu0 0.0
  %3075 = vmatpush1.msra.mxu0 0.0
  %3076 = vmatprep.subr.mxu0 0.0
  %3077 = vmatpush1.msra.mxu0 0.0
  %3078 = vmatprep.subr.mxu0 0.0
  %3079 = vmatpush1.msra.mxu0 0.0
  %3080 = vmatprep.subr.mxu0 0.0
  %3081 = vmatpush1.msra.mxu0 0.0
  %3082 = vmatprep.subr.mxu0 0.0
  %3083 = vmatpush1.msra.mxu0 0.0
  %3084 = vmatprep.subr.mxu0 0.0
  %3085 = vmatpush1.msra.mxu0 0.0
  %3086 = vmatprep.subr.mxu0 0.0
  %3087 = vmatpush1.msra.mxu0 0.0
  %3088 = vmatprep.subr.mxu0 0.0
  %3089 = vmatpush1.msra.mxu0 %v72
  %3090 = vmatprep.subr.mxu0 0.0
  %3091 = vmatpush1.msra.mxu0 %v71
  %3092 = vmatprep.subr.mxu0 0.0
  %3093 = vmatpush1.msra.mxu0 %v70
  %3094 = vmatprep.subr.mxu0 0.0
  %3095 = vmatpush1.msra.mxu0 %v69
  %3096 = vmatprep.subr.mxu0 0.0
  %3097 = vmatpush2.msra.mxu0 0.0
  %3098 = vmatprep.subr.mxu0 0.0
  %3099 = vmatpush2.msra.mxu0 0.0
  %3100 = vmatprep.subr.mxu0 0.0
  %3101 = vmatpush2.msra.mxu0 0.0
  %3102 = vmatprep.subr.mxu0 0.0
  %3103 = vmatpush2.msra.mxu0 0.0
  %3104 = vmatprep.subr.mxu0 0.0
  %3105 = vmatpush2.msra.mxu0 0.0
  %3106 = vmatprep.subr.mxu0 0.0
  %3107 = vmatpush2.msra.mxu0 0.0
  %3108 = vmatprep.subr.mxu0 0.0
  %3109 = vmatpush2.msra.mxu0 0.0
  %3110 = vmatprep.subr.mxu0 0.0
  %3111 = vmatpush2.msra.mxu0 0.0
  %3112 = vmatprep.subr.mxu0 0.0
  %3113 = vmatpush2.msra.mxu0 0.0
  %3114 = vmatprep.subr.mxu0 0.0
  %3115 = vmatpush2.msra.mxu0 0.0
  %3116 = vmatprep.subr.mxu0 0.0
  %3117 = vmatpush2.msra.mxu0 0.0
  %3118 = vmatprep.subr.mxu0 0.0
  %3119 = vmatpush2.msra.mxu0 0.0
  %3120 = vmatprep.subr.mxu0 0.0
  %3121 = vmatpush2.msra.mxu0 0.0
  %3122 = vmatprep.subr.mxu0 0.0
  %3123 = vmatpush2.msra.mxu0 0.0
  %3124 = vmatprep.subr.mxu0 0.0
  %3125 = vmatpush2.msra.mxu0 0.0
  %3126 = vmatprep.subr.mxu0 0.0
  %3127 = vmatpush2.msra.mxu0 0.0
  %3128 = vmatprep.mubr.f32.mxu0 0.0
  %3129 = vmatmul.mubr.f32.gmra.mxu0 %v2838
  %v3130 = vpop.f32.mrf.mxu0
  %v3131 = vadd.f32 %v797, %v3130
  %v3132 = vpop.f32.mrf.mxu0
  %3133 = vdwg.mxu0
  %3134 = vmatprep.subr.mxu0 0.0
  %3135 = vmatpush1.msra.mxu0 0.0
  %3136 = vmatprep.subr.mxu0 0.0
  %3137 = vmatpush1.msra.mxu0 0.0
  %3138 = vmatprep.subr.mxu0 0.0
  %3139 = vmatpush1.msra.mxu0 0.0
  %3140 = vmatprep.subr.mxu0 0.0
  %3141 = vmatpush1.msra.mxu0 0.0
  %3142 = vmatprep.subr.mxu0 0.0
  %3143 = vmatpush1.msra.mxu0 0.0
  %3144 = vmatprep.subr.mxu0 0.0
  %3145 = vmatpush1.msra.mxu0 0.0
  %3146 = vmatprep.subr.mxu0 0.0
  %3147 = vmatpush1.msra.mxu0 0.0
  %3148 = vmatprep.subr.mxu0 0.0
  %3149 = vmatpush1.msra.mxu0 0.0
  %3150 = vmatprep.subr.mxu0 0.0
  %3151 = vmatpush1.msra.mxu0 0.0
  %3152 = vmatprep.subr.mxu0 0.0
  %3153 = vmatpush1.msra.mxu0 0.0
  %3154 = vmatprep.subr.mxu0 0.0
  %3155 = vmatpush1.msra.mxu0 0.0
  %3156 = vmatprep.subr.mxu0 0.0
  %3157 = vmatpush1.msra.mxu0 0.0
  %3158 = vmatprep.subr.mxu0 0.0
  %3159 = vmatpush1.msra.mxu0 %v86
  %3160 = vmatprep.subr.mxu0 0.0
  %3161 = vmatpush1.msra.mxu0 %v85
  %3162 = vmatprep.subr.mxu0 0.0
  %3163 = vmatpush1.msra.mxu0 %v84
  %3164 = vmatprep.subr.mxu0 0.0
  %3165 = vmatpush1.msra.mxu0 %v83
  %3166 = vmatprep.subr.mxu0 0.0
  %3167 = vmatpush2.msra.mxu0 0.0
  %3168 = vmatprep.subr.mxu0 0.0
  %3169 = vmatpush2.msra.mxu0 0.0
  %3170 = vmatprep.subr.mxu0 0.0
  %3171 = vmatpush2.msra.mxu0 0.0
  %3172 = vmatprep.subr.mxu0 0.0
  %3173 = vmatpush2.msra.mxu0 0.0
  %3174 = vmatprep.subr.mxu0 0.0
  %3175 = vmatpush2.msra.mxu0 0.0
  %3176 = vmatprep.subr.mxu0 0.0
  %3177 = vmatpush2.msra.mxu0 0.0
  %3178 = vmatprep.subr.mxu0 0.0
  %3179 = vmatpush2.msra.mxu0 0.0
  %3180 = vmatprep.subr.mxu0 0.0
  %3181 = vmatpush2.msra.mxu0 0.0
  %3182 = vmatprep.subr.mxu0 0.0
  %3183 = vmatpush2.msra.mxu0 0.0
  %3184 = vmatprep.subr.mxu0 0.0
  %3185 = vmatpush2.msra.mxu0 0.0
  %3186 = vmatprep.subr.mxu0 0.0
  %3187 = vmatpush2.msra.mxu0 0.0
  %3188 = vmatprep.subr.mxu0 0.0
  %3189 = vmatpush2.msra.mxu0 0.0
  %3190 = vmatprep.subr.mxu0 0.0
  %3191 = vmatpush2.msra.mxu0 0.0
  %3192 = vmatprep.subr.mxu0 0.0
  %3193 = vmatpush2.msra.mxu0 0.0
  %3194 = vmatprep.subr.mxu0 0.0
  %3195 = vmatpush2.msra.mxu0 0.0
  %3196 = vmatprep.subr.mxu0 0.0
  %3197 = vmatpush2.msra.mxu0 0.0
  %3198 = vmatprep.mubr.f32.mxu0 0.0
  %3199 = vmatmul.mubr.f32.gmra.mxu0 %v2463
  %v3200 = vpop.f32.mrf.mxu0
  %v3201 = vadd.f32 %v873, %v3200
  %v3202 = vpop.f32.mrf.mxu0
  %3203 = vdwg.mxu0
  %v3204 = vmul.f32 %v2916, %v3201
  %v3205 = vadd.f32 %v3131, %v3204
  %v3206 = vtanh.pop %v3205
  %v3207 = vsub.f32 1.0, %v3063
  %v3208 = vmul.f32 %v3207, %v3206
  %v3209 = vmul.f32 %v3063, %v2456
  %v3210 = vadd.f32 %v3208, %v3209
  %s3211 = scalar_lea.vmem %s9, 96
  %v3212 = vld [vmem:[%s3211] sm:$0xff]
  %v3213 = vld [vmem:[%s3211 + $0x8] sm:$0xff]
  %v3214 = vld [vmem:[%s3211 + $0x10] sm:$0xff]
  %v3215 = vld [vmem:[%s3211 + $0x18] sm:$0xff]
  %v3217 = vsel %vm243, %v3210, 0
  %3219 = vmatprep.subr.mxu0 0.0
  %3220 = vmatpush1.msra.mxu0 0.0
  %3221 = vmatprep.subr.mxu0 0.0
  %3222 = vmatpush1.msra.mxu0 0.0
  %3223 = vmatprep.subr.mxu0 0.0
  %3224 = vmatpush1.msra.mxu0 0.0
  %3225 = vmatprep.subr.mxu0 0.0
  %3226 = vmatpush1.msra.mxu0 0.0
  %3227 = vmatprep.subr.mxu0 0.0
  %3228 = vmatpush1.msra.mxu0 0.0
  %3229 = vmatprep.subr.mxu0 0.0
  %3230 = vmatpush1.msra.mxu0 0.0
  %3231 = vmatprep.subr.mxu0 0.0
  %3232 = vmatpush1.msra.mxu0 0.0
  %3233 = vmatprep.subr.mxu0 0.0
  %3234 = vmatpush1.msra.mxu0 0.0
  %3235 = vmatprep.subr.mxu0 0.0
  %3236 = vmatpush1.msra.mxu0 0.0
  %3237 = vmatprep.subr.mxu0 0.0
  %3238 = vmatpush1.msra.mxu0 0.0
  %3239 = vmatprep.subr.mxu0 0.0
  %3240 = vmatpush1.msra.mxu0 0.0
  %3241 = vmatprep.subr.mxu0 0.0
  %3242 = vmatpush1.msra.mxu0 0.0
  %3243 = vmatprep.subr.mxu0 0.0
  %3244 = vmatpush1.msra.mxu0 %v3215
  %3245 = vmatprep.subr.mxu0 0.0
  %3246 = vmatpush1.msra.mxu0 %v3214
  %3247 = vmatprep.subr.mxu0 0.0
  %3248 = vmatpush1.msra.mxu0 %v3213
  %3249 = vmatprep.subr.mxu0 0.0
  %3250 = vmatpush1.msra.mxu0 %v3212
  %3251 = vmatprep.subr.mxu0 0.0
  %3252 = vmatpush2.msra.mxu0 0.0
  %3253 = vmatprep.subr.mxu0 0.0
  %3254 = vmatpush2.msra.mxu0 0.0
  %3255 = vmatprep.subr.mxu0 0.0
  %3256 = vmatpush2.msra.mxu0 0.0
  %3257 = vmatprep.subr.mxu0 0.0
  %3258 = vmatpush2.msra.mxu0 0.0
  %3259 = vmatprep.subr.mxu0 0.0
  %3260 = vmatpush2.msra.mxu0 0.0
  %3261 = vmatprep.subr.mxu0 0.0
  %3262 = vmatpush2.msra.mxu0 0.0
  %3263 = vmatprep.subr.mxu0 0.0
  %3264 = vmatpush2.msra.mxu0 0.0
  %3265 = vmatprep.subr.mxu0 0.0
  %3266 = vmatpush2.msra.mxu0 0.0
  %3267 = vmatprep.subr.mxu0 0.0
  %3268 = vmatpush2.msra.mxu0 0.0
  %3269 = vmatprep.subr.mxu0 0.0
  %3270 = vmatpush2.msra.mxu0 0.0
  %3271 = vmatprep.subr.mxu0 0.0
  %3272 = vmatpush2.msra.mxu0 0.0
  %3273 = vmatprep.subr.mxu0 0.0
  %3274 = vmatpush2.msra.mxu0 0.0
  %3275 = vmatprep.subr.mxu0 0.0
  %3276 = vmatpush2.msra.mxu0 0.0
  %3277 = vmatprep.subr.mxu0 0.0
  %3278 = vmatpush2.msra.mxu0 0.0
  %3279 = vmatprep.subr.mxu0 0.0
  %3280 = vmatpush2.msra.mxu0 0.0
  %3281 = vmatprep.subr.mxu0 0.0
  %3282 = vmatpush2.msra.mxu0 0.0
  %3283 = vmatprep.mubr.f32.mxu0 0.0
  %3284 = vmatmul.mubr.f32.gmra.mxu0 %v3217
  %v3285 = vpop.f32.mrf.mxu0
  %v3286 = vadd.f32 0.0, %v3285
  %v3287 = vpop.f32.mrf.mxu0
  %3288 = vdwg.mxu0
  %v3289 = vadd.f32 %v2535, %v3286
  %3290 = vmatprep.subr.mxu0 0.0
  %3291 = vmatpush1.msra.mxu0 0.0
  %3292 = vmatprep.subr.mxu0 0.0
  %3293 = vmatpush1.msra.mxu0 0.0
  %3294 = vmatprep.subr.mxu0 0.0
  %3295 = vmatpush1.msra.mxu0 0.0
  %3296 = vmatprep.subr.mxu0 0.0
  %3297 = vmatpush1.msra.mxu0 0.0
  %3298 = vmatprep.subr.mxu0 0.0
  %3299 = vmatpush1.msra.mxu0 0.0
  %3300 = vmatprep.subr.mxu0 0.0
  %3301 = vmatpush1.msra.mxu0 0.0
  %3302 = vmatprep.subr.mxu0 0.0
  %3303 = vmatpush1.msra.mxu0 0.0
  %3304 = vmatprep.subr.mxu0 0.0
  %3305 = vmatpush1.msra.mxu0 0.0
  %3306 = vmatprep.subr.mxu0 0.0
  %3307 = vmatpush1.msra.mxu0 0.0
  %3308 = vmatprep.subr.mxu0 0.0
  %3309 = vmatpush1.msra.mxu0 0.0
  %3310 = vmatprep.subr.mxu0 0.0
  %3311 = vmatpush1.msra.mxu0 0.0
  %3312 = vmatprep.subr.mxu0 0.0
  %3313 = vmatpush1.msra.mxu0 0.0
  %3314 = vmatprep.subr.mxu0 0.0
  %3315 = vmatpush1.msra.mxu0 %v48
  %3316 = vmatprep.subr.mxu0 0.0
  %3317 = vmatpush1.msra.mxu0 %v47
  %3318 = vmatprep.subr.mxu0 0.0
  %3319 = vmatpush1.msra.mxu0 %v46
  %3320 = vmatprep.subr.mxu0 0.0
  %3321 = vmatpush1.msra.mxu0 %v45
  %3322 = vmatprep.subr.mxu0 0.0
  %3323 = vmatpush2.msra.mxu0 0.0
  %3324 = vmatprep.subr.mxu0 0.0
  %3325 = vmatpush2.msra.mxu0 0.0
  %3326 = vmatprep.subr.mxu0 0.0
  %3327 = vmatpush2.msra.mxu0 0.0
  %3328 = vmatprep.subr.mxu0 0.0
  %3329 = vmatpush2.msra.mxu0 0.0
  %3330 = vmatprep.subr.mxu0 0.0
  %3331 = vmatpush2.msra.mxu0 0.0
  %3332 = vmatprep.subr.mxu0 0.0
  %3333 = vmatpush2.msra.mxu0 0.0
  %3334 = vmatprep.subr.mxu0 0.0
  %3335 = vmatpush2.msra.mxu0 0.0
  %3336 = vmatprep.subr.mxu0 0.0
  %3337 = vmatpush2.msra.mxu0 0.0
  %3338 = vmatprep.subr.mxu0 0.0
  %3339 = vmatpush2.msra.mxu0 0.0
  %3340 = vmatprep.subr.mxu0 0.0
  %3341 = vmatpush2.msra.mxu0 0.0
  %3342 = vmatprep.subr.mxu0 0.0
  %3343 = vmatpush2.msra.mxu0 0.0
  %3344 = vmatprep.subr.mxu0 0.0
  %3345 = vmatpush2.msra.mxu0 0.0
  %3346 = vmatprep.subr.mxu0 0.0
  %3347 = vmatpush2.msra.mxu0 0.0
  %3348 = vmatprep.subr.mxu0 0.0
  %3349 = vmatpush2.msra.mxu0 0.0
  %3350 = vmatprep.subr.mxu0 0.0
  %3351 = vmatpush2.msra.mxu0 0.0
  %3352 = vmatprep.subr.mxu0 0.0
  %3353 = vmatpush2.msra.mxu0 0.0
  %3354 = vmatprep.mubr.f32.mxu0 0.0
  %3355 = vmatmul.mubr.f32.gmra.mxu0 %v2838
  %v3356 = vpop.f32.mrf.mxu0
  %v3357 = vadd.f32 0.0, %v3356
  %v3358 = vpop.f32.mrf.mxu0
  %3359 = vdwg.mxu0
  %v3360 = vadd.f32 %v183, %v3357
  %v3361 = vxor.u32 %v3360, 2147483648
  %v3362 = vmul.f32 %v3361, 1.442695
  %v3363 = vpow.pop %v3362
  %v3364 = vadd.f32 %v3363, 1.0
  %v3365 = vrcp.pop %v3364
  %v3366 = vmul.f32 1.0, %v3365
  %3367 = vmatprep.subr.mxu0 0.0
  %3368 = vmatpush1.msra.mxu0 0.0
  %3369 = vmatprep.subr.mxu0 0.0
  %3370 = vmatpush1.msra.mxu0 0.0
  %3371 = vmatprep.subr.mxu0 0.0
  %3372 = vmatpush1.msra.mxu0 0.0
  %3373 = vmatprep.subr.mxu0 0.0
  %3374 = vmatpush1.msra.mxu0 0.0
  %3375 = vmatprep.subr.mxu0 0.0
  %3376 = vmatpush1.msra.mxu0 0.0
  %3377 = vmatprep.subr.mxu0 0.0
  %3378 = vmatpush1.msra.mxu0 0.0
  %3379 = vmatprep.subr.mxu0 0.0
  %3380 = vmatpush1.msra.mxu0 0.0
  %3381 = vmatprep.subr.mxu0 0.0
  %3382 = vmatpush1.msra.mxu0 0.0
  %3383 = vmatprep.subr.mxu0 0.0
  %3384 = vmatpush1.msra.mxu0 0.0
  %3385 = vmatprep.subr.mxu0 0.0
  %3386 = vmatpush1.msra.mxu0 0.0
  %3387 = vmatprep.subr.mxu0 0.0
  %3388 = vmatpush1.msra.mxu0 0.0
  %3389 = vmatprep.subr.mxu0 0.0
  %3390 = vmatpush1.msra.mxu0 0.0
  %3391 = vmatprep.subr.mxu0 0.0
  %3392 = vmatpush1.msra.mxu0 %v53
  %3393 = vmatprep.subr.mxu0 0.0
  %3394 = vmatpush1.msra.mxu0 %v52
  %3395 = vmatprep.subr.mxu0 0.0
  %3396 = vmatpush1.msra.mxu0 %v51
  %3397 = vmatprep.subr.mxu0 0.0
  %3398 = vmatpush1.msra.mxu0 %v50
  %3399 = vmatprep.subr.mxu0 0.0
  %3400 = vmatpush2.msra.mxu0 0.0
  %3401 = vmatprep.subr.mxu0 0.0
  %3402 = vmatpush2.msra.mxu0 0.0
  %3403 = vmatprep.subr.mxu0 0.0
  %3404 = vmatpush2.msra.mxu0 0.0
  %3405 = vmatprep.subr.mxu0 0.0
  %3406 = vmatpush2.msra.mxu0 0.0
  %3407 = vmatprep.subr.mxu0 0.0
  %3408 = vmatpush2.msra.mxu0 0.0
  %3409 = vmatprep.subr.mxu0 0.0
  %3410 = vmatpush2.msra.mxu0 0.0
  %3411 = vmatprep.subr.mxu0 0.0
  %3412 = vmatpush2.msra.mxu0 0.0
  %3413 = vmatprep.subr.mxu0 0.0
  %3414 = vmatpush2.msra.mxu0 0.0
  %3415 = vmatprep.subr.mxu0 0.0
  %3416 = vmatpush2.msra.mxu0 0.0
  %3417 = vmatprep.subr.mxu0 0.0
  %3418 = vmatpush2.msra.mxu0 0.0
  %3419 = vmatprep.subr.mxu0 0.0
  %3420 = vmatpush2.msra.mxu0 0.0
  %3421 = vmatprep.subr.mxu0 0.0
  %3422 = vmatpush2.msra.mxu0 0.0
  %3423 = vmatprep.subr.mxu0 0.0
  %3424 = vmatpush2.msra.mxu0 0.0
  %3425 = vmatprep.subr.mxu0 0.0
  %3426 = vmatpush2.msra.mxu0 0.0
  %3427 = vmatprep.subr.mxu0 0.0
  %3428 = vmatpush2.msra.mxu0 0.0
  %3429 = vmatprep.subr.mxu0 0.0
  %3430 = vmatpush2.msra.mxu0 0.0
  %3431 = vmatprep.mubr.f32.mxu0 0.0
  %3432 = vmatmul.mubr.f32.gmra.mxu0 %v2838
  %v3433 = vpop.f32.mrf.mxu0
  %v3434 = vadd.f32 0.0, %v3433
  %v3435 = vpop.f32.mrf.mxu0
  %3436 = vdwg.mxu0
  %v3437 = vadd.f32 %v211, %v3434
  %v3438 = vxor.u32 %v3437, 2147483648
  %v3439 = vmul.f32 %v3438, 1.442695
  %v3440 = vpow.pop %v3439
  %v3441 = vadd.f32 %v3440, 1.0
  %v3442 = vrcp.pop %v3441
  %v3443 = vmul.f32 1.0, %v3442
  %3444 = vmatprep.subr.mxu0 0.0
  %3445 = vmatpush1.msra.mxu0 0.0
  %3446 = vmatprep.subr.mxu0 0.0
  %3447 = vmatpush1.msra.mxu0 0.0
  %3448 = vmatprep.subr.mxu0 0.0
  %3449 = vmatpush1.msra.mxu0 0.0
  %3450 = vmatprep.subr.mxu0 0.0
  %3451 = vmatpush1.msra.mxu0 0.0
  %3452 = vmatprep.subr.mxu0 0.0
  %3453 = vmatpush1.msra.mxu0 0.0
  %3454 = vmatprep.subr.mxu0 0.0
  %3455 = vmatpush1.msra.mxu0 0.0
  %3456 = vmatprep.subr.mxu0 0.0
  %3457 = vmatpush1.msra.mxu0 0.0
  %3458 = vmatprep.subr.mxu0 0.0
  %3459 = vmatpush1.msra.mxu0 0.0
  %3460 = vmatprep.subr.mxu0 0.0
  %3461 = vmatpush1.msra.mxu0 0.0
  %3462 = vmatprep.subr.mxu0 0.0
  %3463 = vmatpush1.msra.mxu0 0.0
  %3464 = vmatprep.subr.mxu0 0.0
  %3465 = vmatpush1.msra.mxu0 0.0
  %3466 = vmatprep.subr.mxu0 0.0
  %3467 = vmatpush1.msra.mxu0 0.0
  %3468 = vmatprep.subr.mxu0 0.0
  %3469 = vmatpush1.msra.mxu0 %v58
  %3470 = vmatprep.subr.mxu0 0.0
  %3471 = vmatpush1.msra.mxu0 %v57
  %3472 = vmatprep.subr.mxu0 0.0
  %3473 = vmatpush1.msra.mxu0 %v56
  %3474 = vmatprep.subr.mxu0 0.0
  %3475 = vmatpush1.msra.mxu0 %v55
  %3476 = vmatprep.subr.mxu0 0.0
  %3477 = vmatpush2.msra.mxu0 0.0
  %3478 = vmatprep.subr.mxu0 0.0
  %3479 = vmatpush2.msra.mxu0 0.0
  %3480 = vmatprep.subr.mxu0 0.0
  %3481 = vmatpush2.msra.mxu0 0.0
  %3482 = vmatprep.subr.mxu0 0.0
  %3483 = vmatpush2.msra.mxu0 0.0
  %3484 = vmatprep.subr.mxu0 0.0
  %3485 = vmatpush2.msra.mxu0 0.0
  %3486 = vmatprep.subr.mxu0 0.0
  %3487 = vmatpush2.msra.mxu0 0.0
  %3488 = vmatprep.subr.mxu0 0.0
  %3489 = vmatpush2.msra.mxu0 0.0
  %3490 = vmatprep.subr.mxu0 0.0
  %3491 = vmatpush2.msra.mxu0 0.0
  %3492 = vmatprep.subr.mxu0 0.0
  %3493 = vmatpush2.msra.mxu0 0.0
  %3494 = vmatprep.subr.mxu0 0.0
  %3495 = vmatpush2.msra.mxu0 0.0
  %3496 = vmatprep.subr.mxu0 0.0
  %3497 = vmatpush2.msra.mxu0 0.0
  %3498 = vmatprep.subr.mxu0 0.0
  %3499 = vmatpush2.msra.mxu0 0.0
  %3500 = vmatprep.subr.mxu0 0.0
  %3501 = vmatpush2.msra.mxu0 0.0
  %3502 = vmatprep.subr.mxu0 0.0
  %3503 = vmatpush2.msra.mxu0 0.0
  %3504 = vmatprep.subr.mxu0 0.0
  %3505 = vmatpush2.msra.mxu0 0.0
  %3506 = vmatprep.subr.mxu0 0.0
  %3507 = vmatpush2.msra.mxu0 0.0
  %3508 = vmatprep.mubr.f32.mxu0 0.0
  %3509 = vmatmul.mubr.f32.gmra.mxu0 %v2838
  %v3510 = vpop.f32.mrf.mxu0
  %v3511 = vadd.f32 %v405, %v3510
  %v3512 = vpop.f32.mrf.mxu0
  %3513 = vdwg.mxu0
  %v3514 = vmul.f32 %v3366, %v3511
  %v3515 = vadd.f32 %v239, %v3514
  %v3516 = vtanh.pop %v3515
  %v3517 = vsub.f32 1.0, %v3443
  %v3518 = vmul.f32 %v3517, %v3516
  %v3519 = vmul.f32 %v3443, %v2766
  %v3520 = vadd.f32 %v3518, %v3519
  %3521 = vmatprep.subr.mxu0 0.0
  %3522 = vmatpush1.msra.mxu0 0.0
  %3523 = vmatprep.subr.mxu0 0.0
  %3524 = vmatpush1.msra.mxu0 0.0
  %3525 = vmatprep.subr.mxu0 0.0
  %3526 = vmatpush1.msra.mxu0 0.0
  %3527 = vmatprep.subr.mxu0 0.0
  %3528 = vmatpush1.msra.mxu0 0.0
  %3529 = vmatprep.subr.mxu0 0.0
  %3530 = vmatpush1.msra.mxu0 0.0
  %3531 = vmatprep.subr.mxu0 0.0
  %3532 = vmatpush1.msra.mxu0 0.0
  %3533 = vmatprep.subr.mxu0 0.0
  %3534 = vmatpush1.msra.mxu0 0.0
  %3535 = vmatprep.subr.mxu0 0.0
  %3536 = vmatpush1.msra.mxu0 0.0
  %3537 = vmatprep.subr.mxu0 0.0
  %3538 = vmatpush1.msra.mxu0 0.0
  %3539 = vmatprep.subr.mxu0 0.0
  %3540 = vmatpush1.msra.mxu0 0.0
  %3541 = vmatprep.subr.mxu0 0.0
  %3542 = vmatpush1.msra.mxu0 0.0
  %3543 = vmatprep.subr.mxu0 0.0
  %3544 = vmatpush1.msra.mxu0 0.0
  %3545 = vmatprep.subr.mxu0 0.0
  %3546 = vmatpush1.msra.mxu0 %v76
  %3547 = vmatprep.subr.mxu0 0.0
  %3548 = vmatpush1.msra.mxu0 %v75
  %3549 = vmatprep.subr.mxu0 0.0
  %3550 = vmatpush1.msra.mxu0 %v74
  %3551 = vmatprep.subr.mxu0 0.0
  %3552 = vmatpush1.msra.mxu0 %v73
  %3553 = vmatprep.subr.mxu0 0.0
  %3554 = vmatpush2.msra.mxu0 0.0
  %3555 = vmatprep.subr.mxu0 0.0
  %3556 = vmatpush2.msra.mxu0 0.0
  %3557 = vmatprep.subr.mxu0 0.0
  %3558 = vmatpush2.msra.mxu0 0.0
  %3559 = vmatprep.subr.mxu0 0.0
  %3560 = vmatpush2.msra.mxu0 0.0
  %3561 = vmatprep.subr.mxu0 0.0
  %3562 = vmatpush2.msra.mxu0 0.0
  %3563 = vmatprep.subr.mxu0 0.0
  %3564 = vmatpush2.msra.mxu0 0.0
  %3565 = vmatprep.subr.mxu0 0.0
  %3566 = vmatpush2.msra.mxu0 0.0
  %3567 = vmatprep.subr.mxu0 0.0
  %3568 = vmatpush2.msra.mxu0 0.0
  %3569 = vmatprep.subr.mxu0 0.0
  %3570 = vmatpush2.msra.mxu0 0.0
  %3571 = vmatprep.subr.mxu0 0.0
  %3572 = vmatpush2.msra.mxu0 0.0
  %3573 = vmatprep.subr.mxu0 0.0
  %3574 = vmatpush2.msra.mxu0 0.0
  %3575 = vmatprep.subr.mxu0 0.0
  %3576 = vmatpush2.msra.mxu0 0.0
  %3577 = vmatprep.subr.mxu0 0.0
  %3578 = vmatpush2.msra.mxu0 0.0
  %3579 = vmatprep.subr.mxu0 0.0
  %3580 = vmatpush2.msra.mxu0 0.0
  %3581 = vmatprep.subr.mxu0 0.0
  %3582 = vmatpush2.msra.mxu0 0.0
  %3583 = vmatprep.subr.mxu0 0.0
  %3584 = vmatpush2.msra.mxu0 0.0
  %3585 = vmatprep.mubr.f32.mxu0 0.0
  %3586 = vmatmul.mubr.f32.gmra.mxu0 %v3217
  %v3587 = vpop.f32.mrf.mxu0
  %v3588 = vadd.f32 0.0, %v3587
  %v3589 = vpop.f32.mrf.mxu0
  %3590 = vdwg.mxu0
  %v3592 = vsel %vm243, %v3520, 0
  %3594 = vmatprep.subr.mxu0 0.0
  %3595 = vmatpush1.msra.mxu0 0.0
  %3596 = vmatprep.subr.mxu0 0.0
  %3597 = vmatpush1.msra.mxu0 0.0
  %3598 = vmatprep.subr.mxu0 0.0
  %3599 = vmatpush1.msra.mxu0 0.0
  %3600 = vmatprep.subr.mxu0 0.0
  %3601 = vmatpush1.msra.mxu0 0.0
  %3602 = vmatprep.subr.mxu0 0.0
  %3603 = vmatpush1.msra.mxu0 0.0
  %3604 = vmatprep.subr.mxu0 0.0
  %3605 = vmatpush1.msra.mxu0 0.0
  %3606 = vmatprep.subr.mxu0 0.0
  %3607 = vmatpush1.msra.mxu0 0.0
  %3608 = vmatprep.subr.mxu0 0.0
  %3609 = vmatpush1.msra.mxu0 0.0
  %3610 = vmatprep.subr.mxu0 0.0
  %3611 = vmatpush1.msra.mxu0 0.0
  %3612 = vmatprep.subr.mxu0 0.0
  %3613 = vmatpush1.msra.mxu0 0.0
  %3614 = vmatprep.subr.mxu0 0.0
  %3615 = vmatpush1.msra.mxu0 0.0
  %3616 = vmatprep.subr.mxu0 0.0
  %3617 = vmatpush1.msra.mxu0 0.0
  %3618 = vmatprep.subr.mxu0 0.0
  %3619 = vmatpush1.msra.mxu0 %v62
  %3620 = vmatprep.subr.mxu0 0.0
  %3621 = vmatpush1.msra.mxu0 %v61
  %3622 = vmatprep.subr.mxu0 0.0
  %3623 = vmatpush1.msra.mxu0 %v60
  %3624 = vmatprep.subr.mxu0 0.0
  %3625 = vmatpush1.msra.mxu0 %v59
  %3626 = vmatprep.subr.mxu0 0.0
  %3627 = vmatpush2.msra.mxu0 0.0
  %3628 = vmatprep.subr.mxu0 0.0
  %3629 = vmatpush2.msra.mxu0 0.0
  %3630 = vmatprep.subr.mxu0 0.0
  %3631 = vmatpush2.msra.mxu0 0.0
  %3632 = vmatprep.subr.mxu0 0.0
  %3633 = vmatpush2.msra.mxu0 0.0
  %3634 = vmatprep.subr.mxu0 0.0
  %3635 = vmatpush2.msra.mxu0 0.0
  %3636 = vmatprep.subr.mxu0 0.0
  %3637 = vmatpush2.msra.mxu0 0.0
  %3638 = vmatprep.subr.mxu0 0.0
  %3639 = vmatpush2.msra.mxu0 0.0
  %3640 = vmatprep.subr.mxu0 0.0
  %3641 = vmatpush2.msra.mxu0 0.0
  %3642 = vmatprep.subr.mxu0 0.0
  %3643 = vmatpush2.msra.mxu0 0.0
  %3644 = vmatprep.subr.mxu0 0.0
  %3645 = vmatpush2.msra.mxu0 0.0
  %3646 = vmatprep.subr.mxu0 0.0
  %3647 = vmatpush2.msra.mxu0 0.0
  %3648 = vmatprep.subr.mxu0 0.0
  %3649 = vmatpush2.msra.mxu0 0.0
  %3650 = vmatprep.subr.mxu0 0.0
  %3651 = vmatpush2.msra.mxu0 0.0
  %3652 = vmatprep.subr.mxu0 0.0
  %3653 = vmatpush2.msra.mxu0 0.0
  %3654 = vmatprep.subr.mxu0 0.0
  %3655 = vmatpush2.msra.mxu0 0.0
  %3656 = vmatprep.subr.mxu0 0.0
  %3657 = vmatpush2.msra.mxu0 0.0
  %3658 = vmatprep.mubr.f32.mxu0 0.0
  %3659 = vmatmul.mubr.f32.gmra.mxu0 %v3592
  %v3660 = vpop.f32.mrf.mxu0
  %v3661 = vadd.f32 %v3588, %v3660
  %v3662 = vpop.f32.mrf.mxu0
  %3663 = vdwg.mxu0
  %v3664 = vadd.f32 %v3661, %v631
  %v3665 = vxor.u32 %v3664, 2147483648
  %v3666 = vmul.f32 %v3665, 1.442695
  %v3667 = vpow.pop %v3666
  %v3668 = vadd.f32 %v3667, 1.0
  %v3669 = vrcp.pop %v3668
  %v3670 = vmul.f32 1.0, %v3669
  %3671 = vmatprep.subr.mxu0 0.0
  %3672 = vmatpush1.msra.mxu0 0.0
  %3673 = vmatprep.subr.mxu0 0.0
  %3674 = vmatpush1.msra.mxu0 0.0
  %3675 = vmatprep.subr.mxu0 0.0
  %3676 = vmatpush1.msra.mxu0 0.0
  %3677 = vmatprep.subr.mxu0 0.0
  %3678 = vmatpush1.msra.mxu0 0.0
  %3679 = vmatprep.subr.mxu0 0.0
  %3680 = vmatpush1.msra.mxu0 0.0
  %3681 = vmatprep.subr.mxu0 0.0
  %3682 = vmatpush1.msra.mxu0 0.0
  %3683 = vmatprep.subr.mxu0 0.0
  %3684 = vmatpush1.msra.mxu0 0.0
  %3685 = vmatprep.subr.mxu0 0.0
  %3686 = vmatpush1.msra.mxu0 0.0
  %3687 = vmatprep.subr.mxu0 0.0
  %3688 = vmatpush1.msra.mxu0 0.0
  %3689 = vmatprep.subr.mxu0 0.0
  %3690 = vmatpush1.msra.mxu0 0.0
  %3691 = vmatprep.subr.mxu0 0.0
  %3692 = vmatpush1.msra.mxu0 0.0
  %3693 = vmatprep.subr.mxu0 0.0
  %3694 = vmatpush1.msra.mxu0 0.0
  %3695 = vmatprep.subr.mxu0 0.0
  %3696 = vmatpush1.msra.mxu0 %v81
  %3697 = vmatprep.subr.mxu0 0.0
  %3698 = vmatpush1.msra.mxu0 %v80
  %3699 = vmatprep.subr.mxu0 0.0
  %3700 = vmatpush1.msra.mxu0 %v79
  %3701 = vmatprep.subr.mxu0 0.0
  %3702 = vmatpush1.msra.mxu0 %v78
  %3703 = vmatprep.subr.mxu0 0.0
  %3704 = vmatpush2.msra.mxu0 0.0
  %3705 = vmatprep.subr.mxu0 0.0
  %3706 = vmatpush2.msra.mxu0 0.0
  %3707 = vmatprep.subr.mxu0 0.0
  %3708 = vmatpush2.msra.mxu0 0.0
  %3709 = vmatprep.subr.mxu0 0.0
  %3710 = vmatpush2.msra.mxu0 0.0
  %3711 = vmatprep.subr.mxu0 0.0
  %3712 = vmatpush2.msra.mxu0 0.0
  %3713 = vmatprep.subr.mxu0 0.0
  %3714 = vmatpush2.msra.mxu0 0.0
  %3715 = vmatprep.subr.mxu0 0.0
  %3716 = vmatpush2.msra.mxu0 0.0
  %3717 = vmatprep.subr.mxu0 0.0
  %3718 = vmatpush2.msra.mxu0 0.0
  %3719 = vmatprep.subr.mxu0 0.0
  %3720 = vmatpush2.msra.mxu0 0.0
  %3721 = vmatprep.subr.mxu0 0.0
  %3722 = vmatpush2.msra.mxu0 0.0
  %3723 = vmatprep.subr.mxu0 0.0
  %3724 = vmatpush2.msra.mxu0 0.0
  %3725 = vmatprep.subr.mxu0 0.0
  %3726 = vmatpush2.msra.mxu0 0.0
  %3727 = vmatprep.subr.mxu0 0.0
  %3728 = vmatpush2.msra.mxu0 0.0
  %3729 = vmatprep.subr.mxu0 0.0
  %3730 = vmatpush2.msra.mxu0 0.0
  %3731 = vmatprep.subr.mxu0 0.0
  %3732 = vmatpush2.msra.mxu0 0.0
  %3733 = vmatprep.subr.mxu0 0.0
  %3734 = vmatpush2.msra.mxu0 0.0
  %3735 = vmatprep.mubr.f32.mxu0 0.0
  %3736 = vmatmul.mubr.f32.gmra.mxu0 %v3217
  %v3737 = vpop.f32.mrf.mxu0
  %v3738 = vadd.f32 0.0, %v3737
  %v3739 = vpop.f32.mrf.mxu0
  %3740 = vdwg.mxu0
  %3741 = vmatprep.subr.mxu0 0.0
  %3742 = vmatpush1.msra.mxu0 0.0
  %3743 = vmatprep.subr.mxu0 0.0
  %3744 = vmatpush1.msra.mxu0 0.0
  %3745 = vmatprep.subr.mxu0 0.0
  %3746 = vmatpush1.msra.mxu0 0.0
  %3747 = vmatprep.subr.mxu0 0.0
  %3748 = vmatpush1.msra.mxu0 0.0
  %3749 = vmatprep.subr.mxu0 0.0
  %3750 = vmatpush1.msra.mxu0 0.0
  %3751 = vmatprep.subr.mxu0 0.0
  %3752 = vmatpush1.msra.mxu0 0.0
  %3753 = vmatprep.subr.mxu0 0.0
  %3754 = vmatpush1.msra.mxu0 0.0
  %3755 = vmatprep.subr.mxu0 0.0
  %3756 = vmatpush1.msra.mxu0 0.0
  %3757 = vmatprep.subr.mxu0 0.0
  %3758 = vmatpush1.msra.mxu0 0.0
  %3759 = vmatprep.subr.mxu0 0.0
  %3760 = vmatpush1.msra.mxu0 0.0
  %3761 = vmatprep.subr.mxu0 0.0
  %3762 = vmatpush1.msra.mxu0 0.0
  %3763 = vmatprep.subr.mxu0 0.0
  %3764 = vmatpush1.msra.mxu0 0.0
  %3765 = vmatprep.subr.mxu0 0.0
  %3766 = vmatpush1.msra.mxu0 %v67
  %3767 = vmatprep.subr.mxu0 0.0
  %3768 = vmatpush1.msra.mxu0 %v66
  %3769 = vmatprep.subr.mxu0 0.0
  %3770 = vmatpush1.msra.mxu0 %v65
  %3771 = vmatprep.subr.mxu0 0.0
  %3772 = vmatpush1.msra.mxu0 %v64
  %3773 = vmatprep.subr.mxu0 0.0
  %3774 = vmatpush2.msra.mxu0 0.0
  %3775 = vmatprep.subr.mxu0 0.0
  %3776 = vmatpush2.msra.mxu0 0.0
  %3777 = vmatprep.subr.mxu0 0.0
  %3778 = vmatpush2.msra.mxu0 0.0
  %3779 = vmatprep.subr.mxu0 0.0
  %3780 = vmatpush2.msra.mxu0 0.0
  %3781 = vmatprep.subr.mxu0 0.0
  %3782 = vmatpush2.msra.mxu0 0.0
  %3783 = vmatprep.subr.mxu0 0.0
  %3784 = vmatpush2.msra.mxu0 0.0
  %3785 = vmatprep.subr.mxu0 0.0
  %3786 = vmatpush2.msra.mxu0 0.0
  %3787 = vmatprep.subr.mxu0 0.0
  %3788 = vmatpush2.msra.mxu0 0.0
  %3789 = vmatprep.subr.mxu0 0.0
  %3790 = vmatpush2.msra.mxu0 0.0
  %3791 = vmatprep.subr.mxu0 0.0
  %3792 = vmatpush2.msra.mxu0 0.0
  %3793 = vmatprep.subr.mxu0 0.0
  %3794 = vmatpush2.msra.mxu0 0.0
  %3795 = vmatprep.subr.mxu0 0.0
  %3796 = vmatpush2.msra.mxu0 0.0
  %3797 = vmatprep.subr.mxu0 0.0
  %3798 = vmatpush2.msra.mxu0 0.0
  %3799 = vmatprep.subr.mxu0 0.0
  %3800 = vmatpush2.msra.mxu0 0.0
  %3801 = vmatprep.subr.mxu0 0.0
  %3802 = vmatpush2.msra.mxu0 0.0
  %3803 = vmatprep.subr.mxu0 0.0
  %3804 = vmatpush2.msra.mxu0 0.0
  %3805 = vmatprep.mubr.f32.mxu0 0.0
  %3806 = vmatmul.mubr.f32.gmra.mxu0 %v3592
  %v3807 = vpop.f32.mrf.mxu0
  %v3808 = vadd.f32 %v3738, %v3807
  %v3809 = vpop.f32.mrf.mxu0
  %3810 = vdwg.mxu0
  %v3811 = vadd.f32 %v3808, %v784
  %v3812 = vxor.u32 %v3811, 2147483648
  %v3813 = vmul.f32 %v3812, 1.442695
  %v3814 = vpow.pop %v3813
  %v3815 = vadd.f32 %v3814, 1.0
  %v3816 = vrcp.pop %v3815
  %v3817 = vmul.f32 1.0, %v3816
  %3818 = vmatprep.subr.mxu0 0.0
  %3819 = vmatpush1.msra.mxu0 0.0
  %3820 = vmatprep.subr.mxu0 0.0
  %3821 = vmatpush1.msra.mxu0 0.0
  %3822 = vmatprep.subr.mxu0 0.0
  %3823 = vmatpush1.msra.mxu0 0.0
  %3824 = vmatprep.subr.mxu0 0.0
  %3825 = vmatpush1.msra.mxu0 0.0
  %3826 = vmatprep.subr.mxu0 0.0
  %3827 = vmatpush1.msra.mxu0 0.0
  %3828 = vmatprep.subr.mxu0 0.0
  %3829 = vmatpush1.msra.mxu0 0.0
  %3830 = vmatprep.subr.mxu0 0.0
  %3831 = vmatpush1.msra.mxu0 0.0
  %3832 = vmatprep.subr.mxu0 0.0
  %3833 = vmatpush1.msra.mxu0 0.0
  %3834 = vmatprep.subr.mxu0 0.0
  %3835 = vmatpush1.msra.mxu0 0.0
  %3836 = vmatprep.subr.mxu0 0.0
  %3837 = vmatpush1.msra.mxu0 0.0
  %3838 = vmatprep.subr.mxu0 0.0
  %3839 = vmatpush1.msra.mxu0 0.0
  %3840 = vmatprep.subr.mxu0 0.0
  %3841 = vmatpush1.msra.mxu0 0.0
  %3842 = vmatprep.subr.mxu0 0.0
  %3843 = vmatpush1.msra.mxu0 %v72
  %3844 = vmatprep.subr.mxu0 0.0
  %3845 = vmatpush1.msra.mxu0 %v71
  %3846 = vmatprep.subr.mxu0 0.0
  %3847 = vmatpush1.msra.mxu0 %v70
  %3848 = vmatprep.subr.mxu0 0.0
  %3849 = vmatpush1.msra.mxu0 %v69
  %3850 = vmatprep.subr.mxu0 0.0
  %3851 = vmatpush2.msra.mxu0 0.0
  %3852 = vmatprep.subr.mxu0 0.0
  %3853 = vmatpush2.msra.mxu0 0.0
  %3854 = vmatprep.subr.mxu0 0.0
  %3855 = vmatpush2.msra.mxu0 0.0
  %3856 = vmatprep.subr.mxu0 0.0
  %3857 = vmatpush2.msra.mxu0 0.0
  %3858 = vmatprep.subr.mxu0 0.0
  %3859 = vmatpush2.msra.mxu0 0.0
  %3860 = vmatprep.subr.mxu0 0.0
  %3861 = vmatpush2.msra.mxu0 0.0
  %3862 = vmatprep.subr.mxu0 0.0
  %3863 = vmatpush2.msra.mxu0 0.0
  %3864 = vmatprep.subr.mxu0 0.0
  %3865 = vmatpush2.msra.mxu0 0.0
  %3866 = vmatprep.subr.mxu0 0.0
  %3867 = vmatpush2.msra.mxu0 0.0
  %3868 = vmatprep.subr.mxu0 0.0
  %3869 = vmatpush2.msra.mxu0 0.0
  %3870 = vmatprep.subr.mxu0 0.0
  %3871 = vmatpush2.msra.mxu0 0.0
  %3872 = vmatprep.subr.mxu0 0.0
  %3873 = vmatpush2.msra.mxu0 0.0
  %3874 = vmatprep.subr.mxu0 0.0
  %3875 = vmatpush2.msra.mxu0 0.0
  %3876 = vmatprep.subr.mxu0 0.0
  %3877 = vmatpush2.msra.mxu0 0.0
  %3878 = vmatprep.subr.mxu0 0.0
  %3879 = vmatpush2.msra.mxu0 0.0
  %3880 = vmatprep.subr.mxu0 0.0
  %3881 = vmatpush2.msra.mxu0 0.0
  %3882 = vmatprep.mubr.f32.mxu0 0.0
  %3883 = vmatmul.mubr.f32.gmra.mxu0 %v3592
  %v3884 = vpop.f32.mrf.mxu0
  %v3885 = vadd.f32 %v797, %v3884
  %v3886 = vpop.f32.mrf.mxu0
  %3887 = vdwg.mxu0
  %3888 = vmatprep.subr.mxu0 0.0
  %3889 = vmatpush1.msra.mxu0 0.0
  %3890 = vmatprep.subr.mxu0 0.0
  %3891 = vmatpush1.msra.mxu0 0.0
  %3892 = vmatprep.subr.mxu0 0.0
  %3893 = vmatpush1.msra.mxu0 0.0
  %3894 = vmatprep.subr.mxu0 0.0
  %3895 = vmatpush1.msra.mxu0 0.0
  %3896 = vmatprep.subr.mxu0 0.0
  %3897 = vmatpush1.msra.mxu0 0.0
  %3898 = vmatprep.subr.mxu0 0.0
  %3899 = vmatpush1.msra.mxu0 0.0
  %3900 = vmatprep.subr.mxu0 0.0
  %3901 = vmatpush1.msra.mxu0 0.0
  %3902 = vmatprep.subr.mxu0 0.0
  %3903 = vmatpush1.msra.mxu0 0.0
  %3904 = vmatprep.subr.mxu0 0.0
  %3905 = vmatpush1.msra.mxu0 0.0
  %3906 = vmatprep.subr.mxu0 0.0
  %3907 = vmatpush1.msra.mxu0 0.0
  %3908 = vmatprep.subr.mxu0 0.0
  %3909 = vmatpush1.msra.mxu0 0.0
  %3910 = vmatprep.subr.mxu0 0.0
  %3911 = vmatpush1.msra.mxu0 0.0
  %3912 = vmatprep.subr.mxu0 0.0
  %3913 = vmatpush1.msra.mxu0 %v86
  %3914 = vmatprep.subr.mxu0 0.0
  %3915 = vmatpush1.msra.mxu0 %v85
  %3916 = vmatprep.subr.mxu0 0.0
  %3917 = vmatpush1.msra.mxu0 %v84
  %3918 = vmatprep.subr.mxu0 0.0
  %3919 = vmatpush1.msra.mxu0 %v83
  %3920 = vmatprep.subr.mxu0 0.0
  %3921 = vmatpush2.msra.mxu0 0.0
  %3922 = vmatprep.subr.mxu0 0.0
  %3923 = vmatpush2.msra.mxu0 0.0
  %3924 = vmatprep.subr.mxu0 0.0
  %3925 = vmatpush2.msra.mxu0 0.0
  %3926 = vmatprep.subr.mxu0 0.0
  %3927 = vmatpush2.msra.mxu0 0.0
  %3928 = vmatprep.subr.mxu0 0.0
  %3929 = vmatpush2.msra.mxu0 0.0
  %3930 = vmatprep.subr.mxu0 0.0
  %3931 = vmatpush2.msra.mxu0 0.0
  %3932 = vmatprep.subr.mxu0 0.0
  %3933 = vmatpush2.msra.mxu0 0.0
  %3934 = vmatprep.subr.mxu0 0.0
  %3935 = vmatpush2.msra.mxu0 0.0
  %3936 = vmatprep.subr.mxu0 0.0
  %3937 = vmatpush2.msra.mxu0 0.0
  %3938 = vmatprep.subr.mxu0 0.0
  %3939 = vmatpush2.msra.mxu0 0.0
  %3940 = vmatprep.subr.mxu0 0.0
  %3941 = vmatpush2.msra.mxu0 0.0
  %3942 = vmatprep.subr.mxu0 0.0
  %3943 = vmatpush2.msra.mxu0 0.0
  %3944 = vmatprep.subr.mxu0 0.0
  %3945 = vmatpush2.msra.mxu0 0.0
  %3946 = vmatprep.subr.mxu0 0.0
  %3947 = vmatpush2.msra.mxu0 0.0
  %3948 = vmatprep.subr.mxu0 0.0
  %3949 = vmatpush2.msra.mxu0 0.0
  %3950 = vmatprep.subr.mxu0 0.0
  %3951 = vmatpush2.msra.mxu0 0.0
  %3952 = vmatprep.mubr.f32.mxu0 0.0
  %3953 = vmatmul.mubr.f32.gmra.mxu0 %v3217
  %v3954 = vpop.f32.mrf.mxu0
  %v3955 = vadd.f32 %v873, %v3954
  %v3956 = vpop.f32.mrf.mxu0
  %3957 = vdwg.mxu0
  %v3958 = vmul.f32 %v3670, %v3955
  %v3959 = vadd.f32 %v3885, %v3958
  %v3960 = vtanh.pop %v3959
  %v3961 = vsub.f32 1.0, %v3817
  %v3962 = vmul.f32 %v3961, %v3960
  %v3963 = vmul.f32 %v3817, %v3210
  %v3964 = vadd.f32 %v3962, %v3963
  %s3965 = scalar_lea.vmem %s9, 128
  %v3966 = vld [vmem:[%s3965] sm:$0xff]
  %v3967 = vld [vmem:[%s3965 + $0x8] sm:$0xff]
  %v3968 = vld [vmem:[%s3965 + $0x10] sm:$0xff]
  %v3969 = vld [vmem:[%s3965 + $0x18] sm:$0xff]
  %v3971 = vsel %vm243, %v3964, 0
  %3973 = vmatprep.subr.mxu0 0.0
  %3974 = vmatpush1.msra.mxu0 0.0
  %3975 = vmatprep.subr.mxu0 0.0
  %3976 = vmatpush1.msra.mxu0 0.0
  %3977 = vmatprep.subr.mxu0 0.0
  %3978 = vmatpush1.msra.mxu0 0.0
  %3979 = vmatprep.subr.mxu0 0.0
  %3980 = vmatpush1.msra.mxu0 0.0
  %3981 = vmatprep.subr.mxu0 0.0
  %3982 = vmatpush1.msra.mxu0 0.0
  %3983 = vmatprep.subr.mxu0 0.0
  %3984 = vmatpush1.msra.mxu0 0.0
  %3985 = vmatprep.subr.mxu0 0.0
  %3986 = vmatpush1.msra.mxu0 0.0
  %3987 = vmatprep.subr.mxu0 0.0
  %3988 = vmatpush1.msra.mxu0 0.0
  %3989 = vmatprep.subr.mxu0 0.0
  %3990 = vmatpush1.msra.mxu0 0.0
  %3991 = vmatprep.subr.mxu0 0.0
  %3992 = vmatpush1.msra.mxu0 0.0
  %3993 = vmatprep.subr.mxu0 0.0
  %3994 = vmatpush1.msra.mxu0 0.0
  %3995 = vmatprep.subr.mxu0 0.0
  %3996 = vmatpush1.msra.mxu0 0.0
  %3997 = vmatprep.subr.mxu0 0.0
  %3998 = vmatpush1.msra.mxu0 %v3969
  %3999 = vmatprep.subr.mxu0 0.0
  %4000 = vmatpush1.msra.mxu0 %v3968
  %4001 = vmatprep.subr.mxu0 0.0
  %4002 = vmatpush1.msra.mxu0 %v3967
  %4003 = vmatprep.subr.mxu0 0.0
  %4004 = vmatpush1.msra.mxu0 %v3966
  %4005 = vmatprep.subr.mxu0 0.0
  %4006 = vmatpush2.msra.mxu0 0.0
  %4007 = vmatprep.subr.mxu0 0.0
  %4008 = vmatpush2.msra.mxu0 0.0
  %4009 = vmatprep.subr.mxu0 0.0
  %4010 = vmatpush2.msra.mxu0 0.0
  %4011 = vmatprep.subr.mxu0 0.0
  %4012 = vmatpush2.msra.mxu0 0.0
  %4013 = vmatprep.subr.mxu0 0.0
  %4014 = vmatpush2.msra.mxu0 0.0
  %4015 = vmatprep.subr.mxu0 0.0
  %4016 = vmatpush2.msra.mxu0 0.0
  %4017 = vmatprep.subr.mxu0 0.0
  %4018 = vmatpush2.msra.mxu0 0.0
  %4019 = vmatprep.subr.mxu0 0.0
  %4020 = vmatpush2.msra.mxu0 0.0
  %4021 = vmatprep.subr.mxu0 0.0
  %4022 = vmatpush2.msra.mxu0 0.0
  %4023 = vmatprep.subr.mxu0 0.0
  %4024 = vmatpush2.msra.mxu0 0.0
  %4025 = vmatprep.subr.mxu0 0.0
  %4026 = vmatpush2.msra.mxu0 0.0
  %4027 = vmatprep.subr.mxu0 0.0
  %4028 = vmatpush2.msra.mxu0 0.0
  %4029 = vmatprep.subr.mxu0 0.0
  %4030 = vmatpush2.msra.mxu0 0.0
  %4031 = vmatprep.subr.mxu0 0.0
  %4032 = vmatpush2.msra.mxu0 0.0
  %4033 = vmatprep.subr.mxu0 0.0
  %4034 = vmatpush2.msra.mxu0 0.0
  %4035 = vmatprep.subr.mxu0 0.0
  %4036 = vmatpush2.msra.mxu0 0.0
  %4037 = vmatprep.mubr.f32.mxu0 0.0
  %4038 = vmatmul.mubr.f32.gmra.mxu0 %v3971
  %v4039 = vpop.f32.mrf.mxu0
  %v4040 = vadd.f32 0.0, %v4039
  %v4041 = vpop.f32.mrf.mxu0
  %4042 = vdwg.mxu0
  %v4043 = vadd.f32 %v3289, %v4040
  %4044 = vmatprep.subr.mxu0 0.0
  %4045 = vmatpush1.msra.mxu0 0.0
  %4046 = vmatprep.subr.mxu0 0.0
  %4047 = vmatpush1.msra.mxu0 0.0
  %4048 = vmatprep.subr.mxu0 0.0
  %4049 = vmatpush1.msra.mxu0 0.0
  %4050 = vmatprep.subr.mxu0 0.0
  %4051 = vmatpush1.msra.mxu0 0.0
  %4052 = vmatprep.subr.mxu0 0.0
  %4053 = vmatpush1.msra.mxu0 0.0
  %4054 = vmatprep.subr.mxu0 0.0
  %4055 = vmatpush1.msra.mxu0 0.0
  %4056 = vmatprep.subr.mxu0 0.0
  %4057 = vmatpush1.msra.mxu0 0.0
  %4058 = vmatprep.subr.mxu0 0.0
  %4059 = vmatpush1.msra.mxu0 0.0
  %4060 = vmatprep.subr.mxu0 0.0
  %4061 = vmatpush1.msra.mxu0 0.0
  %4062 = vmatprep.subr.mxu0 0.0
  %4063 = vmatpush1.msra.mxu0 0.0
  %4064 = vmatprep.subr.mxu0 0.0
  %4065 = vmatpush1.msra.mxu0 0.0
  %4066 = vmatprep.subr.mxu0 0.0
  %4067 = vmatpush1.msra.mxu0 0.0
  %4068 = vmatprep.subr.mxu0 0.0
  %4069 = vmatpush1.msra.mxu0 %v48
  %4070 = vmatprep.subr.mxu0 0.0
  %4071 = vmatpush1.msra.mxu0 %v47
  %4072 = vmatprep.subr.mxu0 0.0
  %4073 = vmatpush1.msra.mxu0 %v46
  %4074 = vmatprep.subr.mxu0 0.0
  %4075 = vmatpush1.msra.mxu0 %v45
  %4076 = vmatprep.subr.mxu0 0.0
  %4077 = vmatpush2.msra.mxu0 0.0
  %4078 = vmatprep.subr.mxu0 0.0
  %4079 = vmatpush2.msra.mxu0 0.0
  %4080 = vmatprep.subr.mxu0 0.0
  %4081 = vmatpush2.msra.mxu0 0.0
  %4082 = vmatprep.subr.mxu0 0.0
  %4083 = vmatpush2.msra.mxu0 0.0
  %4084 = vmatprep.subr.mxu0 0.0
  %4085 = vmatpush2.msra.mxu0 0.0
  %4086 = vmatprep.subr.mxu0 0.0
  %4087 = vmatpush2.msra.mxu0 0.0
  %4088 = vmatprep.subr.mxu0 0.0
  %4089 = vmatpush2.msra.mxu0 0.0
  %4090 = vmatprep.subr.mxu0 0.0
  %4091 = vmatpush2.msra.mxu0 0.0
  %4092 = vmatprep.subr.mxu0 0.0
  %4093 = vmatpush2.msra.mxu0 0.0
  %4094 = vmatprep.subr.mxu0 0.0
  %4095 = vmatpush2.msra.mxu0 0.0
  %4096 = vmatprep.subr.mxu0 0.0
  %4097 = vmatpush2.msra.mxu0 0.0
  %4098 = vmatprep.subr.mxu0 0.0
  %4099 = vmatpush2.msra.mxu0 0.0
  %4100 = vmatprep.subr.mxu0 0.0
  %4101 = vmatpush2.msra.mxu0 0.0
  %4102 = vmatprep.subr.mxu0 0.0
  %4103 = vmatpush2.msra.mxu0 0.0
  %4104 = vmatprep.subr.mxu0 0.0
  %4105 = vmatpush2.msra.mxu0 0.0
  %4106 = vmatprep.subr.mxu0 0.0
  %4107 = vmatpush2.msra.mxu0 0.0
  %4108 = vmatprep.mubr.f32.mxu0 0.0
  %4109 = vmatmul.mubr.f32.gmra.mxu0 %v3592
  %v4110 = vpop.f32.mrf.mxu0
  %v4111 = vadd.f32 0.0, %v4110
  %v4112 = vpop.f32.mrf.mxu0
  %4113 = vdwg.mxu0
  %v4114 = vadd.f32 %v184, %v4111
  %v4115 = vxor.u32 %v4114, 2147483648
  %v4116 = vmul.f32 %v4115, 1.442695
  %v4117 = vpow.pop %v4116
  %v4118 = vadd.f32 %v4117, 1.0
  %v4119 = vrcp.pop %v4118
  %v4120 = vmul.f32 1.0, %v4119
  %4121 = vmatprep.subr.mxu0 0.0
  %4122 = vmatpush1.msra.mxu0 0.0
  %4123 = vmatprep.subr.mxu0 0.0
  %4124 = vmatpush1.msra.mxu0 0.0
  %4125 = vmatprep.subr.mxu0 0.0
  %4126 = vmatpush1.msra.mxu0 0.0
  %4127 = vmatprep.subr.mxu0 0.0
  %4128 = vmatpush1.msra.mxu0 0.0
  %4129 = vmatprep.subr.mxu0 0.0
  %4130 = vmatpush1.msra.mxu0 0.0
  %4131 = vmatprep.subr.mxu0 0.0
  %4132 = vmatpush1.msra.mxu0 0.0
  %4133 = vmatprep.subr.mxu0 0.0
  %4134 = vmatpush1.msra.mxu0 0.0
  %4135 = vmatprep.subr.mxu0 0.0
  %4136 = vmatpush1.msra.mxu0 0.0
  %4137 = vmatprep.subr.mxu0 0.0
  %4138 = vmatpush1.msra.mxu0 0.0
  %4139 = vmatprep.subr.mxu0 0.0
  %4140 = vmatpush1.msra.mxu0 0.0
  %4141 = vmatprep.subr.mxu0 0.0
  %4142 = vmatpush1.msra.mxu0 0.0
  %4143 = vmatprep.subr.mxu0 0.0
  %4144 = vmatpush1.msra.mxu0 0.0
  %4145 = vmatprep.subr.mxu0 0.0
  %4146 = vmatpush1.msra.mxu0 %v53
  %4147 = vmatprep.subr.mxu0 0.0
  %4148 = vmatpush1.msra.mxu0 %v52
  %4149 = vmatprep.subr.mxu0 0.0
  %4150 = vmatpush1.msra.mxu0 %v51
  %4151 = vmatprep.subr.mxu0 0.0
  %4152 = vmatpush1.msra.mxu0 %v50
  %4153 = vmatprep.subr.mxu0 0.0
  %4154 = vmatpush2.msra.mxu0 0.0
  %4155 = vmatprep.subr.mxu0 0.0
  %4156 = vmatpush2.msra.mxu0 0.0
  %4157 = vmatprep.subr.mxu0 0.0
  %4158 = vmatpush2.msra.mxu0 0.0
  %4159 = vmatprep.subr.mxu0 0.0
  %4160 = vmatpush2.msra.mxu0 0.0
  %4161 = vmatprep.subr.mxu0 0.0
  %4162 = vmatpush2.msra.mxu0 0.0
  %4163 = vmatprep.subr.mxu0 0.0
  %4164 = vmatpush2.msra.mxu0 0.0
  %4165 = vmatprep.subr.mxu0 0.0
  %4166 = vmatpush2.msra.mxu0 0.0
  %4167 = vmatprep.subr.mxu0 0.0
  %4168 = vmatpush2.msra.mxu0 0.0
  %4169 = vmatprep.subr.mxu0 0.0
  %4170 = vmatpush2.msra.mxu0 0.0
  %4171 = vmatprep.subr.mxu0 0.0
  %4172 = vmatpush2.msra.mxu0 0.0
  %4173 = vmatprep.subr.mxu0 0.0
  %4174 = vmatpush2.msra.mxu0 0.0
  %4175 = vmatprep.subr.mxu0 0.0
  %4176 = vmatpush2.msra.mxu0 0.0
  %4177 = vmatprep.subr.mxu0 0.0
  %4178 = vmatpush2.msra.mxu0 0.0
  %4179 = vmatprep.subr.mxu0 0.0
  %4180 = vmatpush2.msra.mxu0 0.0
  %4181 = vmatprep.subr.mxu0 0.0
  %4182 = vmatpush2.msra.mxu0 0.0
  %4183 = vmatprep.subr.mxu0 0.0
  %4184 = vmatpush2.msra.mxu0 0.0
  %4185 = vmatprep.mubr.f32.mxu0 0.0
  %4186 = vmatmul.mubr.f32.gmra.mxu0 %v3592
  %v4187 = vpop.f32.mrf.mxu0
  %v4188 = vadd.f32 0.0, %v4187
  %v4189 = vpop.f32.mrf.mxu0
  %4190 = vdwg.mxu0
  %v4191 = vadd.f32 %v212, %v4188
  %v4192 = vxor.u32 %v4191, 2147483648
  %v4193 = vmul.f32 %v4192, 1.442695
  %v4194 = vpow.pop %v4193
  %v4195 = vadd.f32 %v4194, 1.0
  %v4196 = vrcp.pop %v4195
  %v4197 = vmul.f32 1.0, %v4196
  %4198 = vmatprep.subr.mxu0 0.0
  %4199 = vmatpush1.msra.mxu0 0.0
  %4200 = vmatprep.subr.mxu0 0.0
  %4201 = vmatpush1.msra.mxu0 0.0
  %4202 = vmatprep.subr.mxu0 0.0
  %4203 = vmatpush1.msra.mxu0 0.0
  %4204 = vmatprep.subr.mxu0 0.0
  %4205 = vmatpush1.msra.mxu0 0.0
  %4206 = vmatprep.subr.mxu0 0.0
  %4207 = vmatpush1.msra.mxu0 0.0
  %4208 = vmatprep.subr.mxu0 0.0
  %4209 = vmatpush1.msra.mxu0 0.0
  %4210 = vmatprep.subr.mxu0 0.0
  %4211 = vmatpush1.msra.mxu0 0.0
  %4212 = vmatprep.subr.mxu0 0.0
  %4213 = vmatpush1.msra.mxu0 0.0
  %4214 = vmatprep.subr.mxu0 0.0
  %4215 = vmatpush1.msra.mxu0 0.0
  %4216 = vmatprep.subr.mxu0 0.0
  %4217 = vmatpush1.msra.mxu0 0.0
  %4218 = vmatprep.subr.mxu0 0.0
  %4219 = vmatpush1.msra.mxu0 0.0
  %4220 = vmatprep.subr.mxu0 0.0
  %4221 = vmatpush1.msra.mxu0 0.0
  %4222 = vmatprep.subr.mxu0 0.0
  %4223 = vmatpush1.msra.mxu0 %v58
  %4224 = vmatprep.subr.mxu0 0.0
  %4225 = vmatpush1.msra.mxu0 %v57
  %4226 = vmatprep.subr.mxu0 0.0
  %4227 = vmatpush1.msra.mxu0 %v56
  %4228 = vmatprep.subr.mxu0 0.0
  %4229 = vmatpush1.msra.mxu0 %v55
  %4230 = vmatprep.subr.mxu0 0.0
  %4231 = vmatpush2.msra.mxu0 0.0
  %4232 = vmatprep.subr.mxu0 0.0
  %4233 = vmatpush2.msra.mxu0 0.0
  %4234 = vmatprep.subr.mxu0 0.0
  %4235 = vmatpush2.msra.mxu0 0.0
  %4236 = vmatprep.subr.mxu0 0.0
  %4237 = vmatpush2.msra.mxu0 0.0
  %4238 = vmatprep.subr.mxu0 0.0
  %4239 = vmatpush2.msra.mxu0 0.0
  %4240 = vmatprep.subr.mxu0 0.0
  %4241 = vmatpush2.msra.mxu0 0.0
  %4242 = vmatprep.subr.mxu0 0.0
  %4243 = vmatpush2.msra.mxu0 0.0
  %4244 = vmatprep.subr.mxu0 0.0
  %4245 = vmatpush2.msra.mxu0 0.0
  %4246 = vmatprep.subr.mxu0 0.0
  %4247 = vmatpush2.msra.mxu0 0.0
  %4248 = vmatprep.subr.mxu0 0.0
  %4249 = vmatpush2.msra.mxu0 0.0
  %4250 = vmatprep.subr.mxu0 0.0
  %4251 = vmatpush2.msra.mxu0 0.0
  %4252 = vmatprep.subr.mxu0 0.0
  %4253 = vmatpush2.msra.mxu0 0.0
  %4254 = vmatprep.subr.mxu0 0.0
  %4255 = vmatpush2.msra.mxu0 0.0
  %4256 = vmatprep.subr.mxu0 0.0
  %4257 = vmatpush2.msra.mxu0 0.0
  %4258 = vmatprep.subr.mxu0 0.0
  %4259 = vmatpush2.msra.mxu0 0.0
  %4260 = vmatprep.subr.mxu0 0.0
  %4261 = vmatpush2.msra.mxu0 0.0
  %4262 = vmatprep.mubr.f32.mxu0 0.0
  %4263 = vmatmul.mubr.f32.gmra.mxu0 %v3592
  %v4264 = vpop.f32.mrf.mxu0
  %v4265 = vadd.f32 %v405, %v4264
  %v4266 = vpop.f32.mrf.mxu0
  %4267 = vdwg.mxu0
  %v4268 = vmul.f32 %v4120, %v4265
  %v4269 = vadd.f32 %v240, %v4268
  %v4270 = vtanh.pop %v4269
  %v4271 = vsub.f32 1.0, %v4197
  %v4272 = vmul.f32 %v4271, %v4270
  %v4273 = vmul.f32 %v4197, %v3520
  %v4274 = vadd.f32 %v4272, %v4273
  %4275 = vmatprep.subr.mxu0 0.0
  %4276 = vmatpush1.msra.mxu0 0.0
  %4277 = vmatprep.subr.mxu0 0.0
  %4278 = vmatpush1.msra.mxu0 0.0
  %4279 = vmatprep.subr.mxu0 0.0
  %4280 = vmatpush1.msra.mxu0 0.0
  %4281 = vmatprep.subr.mxu0 0.0
  %4282 = vmatpush1.msra.mxu0 0.0
  %4283 = vmatprep.subr.mxu0 0.0
  %4284 = vmatpush1.msra.mxu0 0.0
  %4285 = vmatprep.subr.mxu0 0.0
  %4286 = vmatpush1.msra.mxu0 0.0
  %4287 = vmatprep.subr.mxu0 0.0
  %4288 = vmatpush1.msra.mxu0 0.0
  %4289 = vmatprep.subr.mxu0 0.0
  %4290 = vmatpush1.msra.mxu0 0.0
  %4291 = vmatprep.subr.mxu0 0.0
  %4292 = vmatpush1.msra.mxu0 0.0
  %4293 = vmatprep.subr.mxu0 0.0
  %4294 = vmatpush1.msra.mxu0 0.0
  %4295 = vmatprep.subr.mxu0 0.0
  %4296 = vmatpush1.msra.mxu0 0.0
  %4297 = vmatprep.subr.mxu0 0.0
  %4298 = vmatpush1.msra.mxu0 0.0
  %4299 = vmatprep.subr.mxu0 0.0
  %4300 = vmatpush1.msra.mxu0 %v76
  %4301 = vmatprep.subr.mxu0 0.0
  %4302 = vmatpush1.msra.mxu0 %v75
  %4303 = vmatprep.subr.mxu0 0.0
  %4304 = vmatpush1.msra.mxu0 %v74
  %4305 = vmatprep.subr.mxu0 0.0
  %4306 = vmatpush1.msra.mxu0 %v73
  %4307 = vmatprep.subr.mxu0 0.0
  %4308 = vmatpush2.msra.mxu0 0.0
  %4309 = vmatprep.subr.mxu0 0.0
  %4310 = vmatpush2.msra.mxu0 0.0
  %4311 = vmatprep.subr.mxu0 0.0
  %4312 = vmatpush2.msra.mxu0 0.0
  %4313 = vmatprep.subr.mxu0 0.0
  %4314 = vmatpush2.msra.mxu0 0.0
  %4315 = vmatprep.subr.mxu0 0.0
  %4316 = vmatpush2.msra.mxu0 0.0
  %4317 = vmatprep.subr.mxu0 0.0
  %4318 = vmatpush2.msra.mxu0 0.0
  %4319 = vmatprep.subr.mxu0 0.0
  %4320 = vmatpush2.msra.mxu0 0.0
  %4321 = vmatprep.subr.mxu0 0.0
  %4322 = vmatpush2.msra.mxu0 0.0
  %4323 = vmatprep.subr.mxu0 0.0
  %4324 = vmatpush2.msra.mxu0 0.0
  %4325 = vmatprep.subr.mxu0 0.0
  %4326 = vmatpush2.msra.mxu0 0.0
  %4327 = vmatprep.subr.mxu0 0.0
  %4328 = vmatpush2.msra.mxu0 0.0
  %4329 = vmatprep.subr.mxu0 0.0
  %4330 = vmatpush2.msra.mxu0 0.0
  %4331 = vmatprep.subr.mxu0 0.0
  %4332 = vmatpush2.msra.mxu0 0.0
  %4333 = vmatprep.subr.mxu0 0.0
  %4334 = vmatpush2.msra.mxu0 0.0
  %4335 = vmatprep.subr.mxu0 0.0
  %4336 = vmatpush2.msra.mxu0 0.0
  %4337 = vmatprep.subr.mxu0 0.0
  %4338 = vmatpush2.msra.mxu0 0.0
  %4339 = vmatprep.mubr.f32.mxu0 0.0
  %4340 = vmatmul.mubr.f32.gmra.mxu0 %v3971
  %v4341 = vpop.f32.mrf.mxu0
  %v4342 = vadd.f32 0.0, %v4341
  %v4343 = vpop.f32.mrf.mxu0
  %4344 = vdwg.mxu0
  %v4346 = vsel %vm243, %v4274, 0
  %4348 = vmatprep.subr.mxu0 0.0
  %4349 = vmatpush1.msra.mxu0 0.0
  %4350 = vmatprep.subr.mxu0 0.0
  %4351 = vmatpush1.msra.mxu0 0.0
  %4352 = vmatprep.subr.mxu0 0.0
  %4353 = vmatpush1.msra.mxu0 0.0
  %4354 = vmatprep.subr.mxu0 0.0
  %4355 = vmatpush1.msra.mxu0 0.0
  %4356 = vmatprep.subr.mxu0 0.0
  %4357 = vmatpush1.msra.mxu0 0.0
  %4358 = vmatprep.subr.mxu0 0.0
  %4359 = vmatpush1.msra.mxu0 0.0
  %4360 = vmatprep.subr.mxu0 0.0
  %4361 = vmatpush1.msra.mxu0 0.0
  %4362 = vmatprep.subr.mxu0 0.0
  %4363 = vmatpush1.msra.mxu0 0.0
  %4364 = vmatprep.subr.mxu0 0.0
  %4365 = vmatpush1.msra.mxu0 0.0
  %4366 = vmatprep.subr.mxu0 0.0
  %4367 = vmatpush1.msra.mxu0 0.0
  %4368 = vmatprep.subr.mxu0 0.0
  %4369 = vmatpush1.msra.mxu0 0.0
  %4370 = vmatprep.subr.mxu0 0.0
  %4371 = vmatpush1.msra.mxu0 0.0
  %4372 = vmatprep.subr.mxu0 0.0
  %4373 = vmatpush1.msra.mxu0 %v62
  %4374 = vmatprep.subr.mxu0 0.0
  %4375 = vmatpush1.msra.mxu0 %v61
  %4376 = vmatprep.subr.mxu0 0.0
  %4377 = vmatpush1.msra.mxu0 %v60
  %4378 = vmatprep.subr.mxu0 0.0
  %4379 = vmatpush1.msra.mxu0 %v59
  %4380 = vmatprep.subr.mxu0 0.0
  %4381 = vmatpush2.msra.mxu0 0.0
  %4382 = vmatprep.subr.mxu0 0.0
  %4383 = vmatpush2.msra.mxu0 0.0
  %4384 = vmatprep.subr.mxu0 0.0
  %4385 = vmatpush2.msra.mxu0 0.0
  %4386 = vmatprep.subr.mxu0 0.0
  %4387 = vmatpush2.msra.mxu0 0.0
  %4388 = vmatprep.subr.mxu0 0.0
  %4389 = vmatpush2.msra.mxu0 0.0
  %4390 = vmatprep.subr.mxu0 0.0
  %4391 = vmatpush2.msra.mxu0 0.0
  %4392 = vmatprep.subr.mxu0 0.0
  %4393 = vmatpush2.msra.mxu0 0.0
  %4394 = vmatprep.subr.mxu0 0.0
  %4395 = vmatpush2.msra.mxu0 0.0
  %4396 = vmatprep.subr.mxu0 0.0
  %4397 = vmatpush2.msra.mxu0 0.0
  %4398 = vmatprep.subr.mxu0 0.0
  %4399 = vmatpush2.msra.mxu0 0.0
  %4400 = vmatprep.subr.mxu0 0.0
  %4401 = vmatpush2.msra.mxu0 0.0
  %4402 = vmatprep.subr.mxu0 0.0
  %4403 = vmatpush2.msra.mxu0 0.0
  %4404 = vmatprep.subr.mxu0 0.0
  %4405 = vmatpush2.msra.mxu0 0.0
  %4406 = vmatprep.subr.mxu0 0.0
  %4407 = vmatpush2.msra.mxu0 0.0
  %4408 = vmatprep.subr.mxu0 0.0
  %4409 = vmatpush2.msra.mxu0 0.0
  %4410 = vmatprep.subr.mxu0 0.0
  %4411 = vmatpush2.msra.mxu0 0.0
  %4412 = vmatprep.mubr.f32.mxu0 0.0
  %4413 = vmatmul.mubr.f32.gmra.mxu0 %v4346
  %v4414 = vpop.f32.mrf.mxu0
  %v4415 = vadd.f32 %v4342, %v4414
  %v4416 = vpop.f32.mrf.mxu0
  %4417 = vdwg.mxu0
  %v4418 = vadd.f32 %v4415, %v631
  %v4419 = vxor.u32 %v4418, 2147483648
  %v4420 = vmul.f32 %v4419, 1.442695
  %v4421 = vpow.pop %v4420
  %v4422 = vadd.f32 %v4421, 1.0
  %v4423 = vrcp.pop %v4422
  %v4424 = vmul.f32 1.0, %v4423
  %4425 = vmatprep.subr.mxu0 0.0
  %4426 = vmatpush1.msra.mxu0 0.0
  %4427 = vmatprep.subr.mxu0 0.0
  %4428 = vmatpush1.msra.mxu0 0.0
  %4429 = vmatprep.subr.mxu0 0.0
  %4430 = vmatpush1.msra.mxu0 0.0
  %4431 = vmatprep.subr.mxu0 0.0
  %4432 = vmatpush1.msra.mxu0 0.0
  %4433 = vmatprep.subr.mxu0 0.0
  %4434 = vmatpush1.msra.mxu0 0.0
  %4435 = vmatprep.subr.mxu0 0.0
  %4436 = vmatpush1.msra.mxu0 0.0
  %4437 = vmatprep.subr.mxu0 0.0
  %4438 = vmatpush1.msra.mxu0 0.0
  %4439 = vmatprep.subr.mxu0 0.0
  %4440 = vmatpush1.msra.mxu0 0.0
  %4441 = vmatprep.subr.mxu0 0.0
  %4442 = vmatpush1.msra.mxu0 0.0
  %4443 = vmatprep.subr.mxu0 0.0
  %4444 = vmatpush1.msra.mxu0 0.0
  %4445 = vmatprep.subr.mxu0 0.0
  %4446 = vmatpush1.msra.mxu0 0.0
  %4447 = vmatprep.subr.mxu0 0.0
  %4448 = vmatpush1.msra.mxu0 0.0
  %4449 = vmatprep.subr.mxu0 0.0
  %4450 = vmatpush1.msra.mxu0 %v81
  %4451 = vmatprep.subr.mxu0 0.0
  %4452 = vmatpush1.msra.mxu0 %v80
  %4453 = vmatprep.subr.mxu0 0.0
  %4454 = vmatpush1.msra.mxu0 %v79
  %4455 = vmatprep.subr.mxu0 0.0
  %4456 = vmatpush1.msra.mxu0 %v78
  %4457 = vmatprep.subr.mxu0 0.0
  %4458 = vmatpush2.msra.mxu0 0.0
  %4459 = vmatprep.subr.mxu0 0.0
  %4460 = vmatpush2.msra.mxu0 0.0
  %4461 = vmatprep.subr.mxu0 0.0
  %4462 = vmatpush2.msra.mxu0 0.0
  %4463 = vmatprep.subr.mxu0 0.0
  %4464 = vmatpush2.msra.mxu0 0.0
  %4465 = vmatprep.subr.mxu0 0.0
  %4466 = vmatpush2.msra.mxu0 0.0
  %4467 = vmatprep.subr.mxu0 0.0
  %4468 = vmatpush2.msra.mxu0 0.0
  %4469 = vmatprep.subr.mxu0 0.0
  %4470 = vmatpush2.msra.mxu0 0.0
  %4471 = vmatprep.subr.mxu0 0.0
  %4472 = vmatpush2.msra.mxu0 0.0
  %4473 = vmatprep.subr.mxu0 0.0
  %4474 = vmatpush2.msra.mxu0 0.0
  %4475 = vmatprep.subr.mxu0 0.0
  %4476 = vmatpush2.msra.mxu0 0.0
  %4477 = vmatprep.subr.mxu0 0.0
  %4478 = vmatpush2.msra.mxu0 0.0
  %4479 = vmatprep.subr.mxu0 0.0
  %4480 = vmatpush2.msra.mxu0 0.0
  %4481 = vmatprep.subr.mxu0 0.0
  %4482 = vmatpush2.msra.mxu0 0.0
  %4483 = vmatprep.subr.mxu0 0.0
  %4484 = vmatpush2.msra.mxu0 0.0
  %4485 = vmatprep.subr.mxu0 0.0
  %4486 = vmatpush2.msra.mxu0 0.0
  %4487 = vmatprep.subr.mxu0 0.0
  %4488 = vmatpush2.msra.mxu0 0.0
  %4489 = vmatprep.mubr.f32.mxu0 0.0
  %4490 = vmatmul.mubr.f32.gmra.mxu0 %v3971
  %v4491 = vpop.f32.mrf.mxu0
  %v4492 = vadd.f32 0.0, %v4491
  %v4493 = vpop.f32.mrf.mxu0
  %4494 = vdwg.mxu0
  %4495 = vmatprep.subr.mxu0 0.0
  %4496 = vmatpush1.msra.mxu0 0.0
  %4497 = vmatprep.subr.mxu0 0.0
  %4498 = vmatpush1.msra.mxu0 0.0
  %4499 = vmatprep.subr.mxu0 0.0
  %4500 = vmatpush1.msra.mxu0 0.0
  %4501 = vmatprep.subr.mxu0 0.0
  %4502 = vmatpush1.msra.mxu0 0.0
  %4503 = vmatprep.subr.mxu0 0.0
  %4504 = vmatpush1.msra.mxu0 0.0
  %4505 = vmatprep.subr.mxu0 0.0
  %4506 = vmatpush1.msra.mxu0 0.0
  %4507 = vmatprep.subr.mxu0 0.0
  %4508 = vmatpush1.msra.mxu0 0.0
  %4509 = vmatprep.subr.mxu0 0.0
  %4510 = vmatpush1.msra.mxu0 0.0
  %4511 = vmatprep.subr.mxu0 0.0
  %4512 = vmatpush1.msra.mxu0 0.0
  %4513 = vmatprep.subr.mxu0 0.0
  %4514 = vmatpush1.msra.mxu0 0.0
  %4515 = vmatprep.subr.mxu0 0.0
  %4516 = vmatpush1.msra.mxu0 0.0
  %4517 = vmatprep.subr.mxu0 0.0
  %4518 = vmatpush1.msra.mxu0 0.0
  %4519 = vmatprep.subr.mxu0 0.0
  %4520 = vmatpush1.msra.mxu0 %v67
  %4521 = vmatprep.subr.mxu0 0.0
  %4522 = vmatpush1.msra.mxu0 %v66
  %4523 = vmatprep.subr.mxu0 0.0
  %4524 = vmatpush1.msra.mxu0 %v65
  %4525 = vmatprep.subr.mxu0 0.0
  %4526 = vmatpush1.msra.mxu0 %v64
  %4527 = vmatprep.subr.mxu0 0.0
  %4528 = vmatpush2.msra.mxu0 0.0
  %4529 = vmatprep.subr.mxu0 0.0
  %4530 = vmatpush2.msra.mxu0 0.0
  %4531 = vmatprep.subr.mxu0 0.0
  %4532 = vmatpush2.msra.mxu0 0.0
  %4533 = vmatprep.subr.mxu0 0.0
  %4534 = vmatpush2.msra.mxu0 0.0
  %4535 = vmatprep.subr.mxu0 0.0
  %4536 = vmatpush2.msra.mxu0 0.0
  %4537 = vmatprep.subr.mxu0 0.0
  %4538 = vmatpush2.msra.mxu0 0.0
  %4539 = vmatprep.subr.mxu0 0.0
  %4540 = vmatpush2.msra.mxu0 0.0
  %4541 = vmatprep.subr.mxu0 0.0
  %4542 = vmatpush2.msra.mxu0 0.0
  %4543 = vmatprep.subr.mxu0 0.0
  %4544 = vmatpush2.msra.mxu0 0.0
  %4545 = vmatprep.subr.mxu0 0.0
  %4546 = vmatpush2.msra.mxu0 0.0
  %4547 = vmatprep.subr.mxu0 0.0
  %4548 = vmatpush2.msra.mxu0 0.0
  %4549 = vmatprep.subr.mxu0 0.0
  %4550 = vmatpush2.msra.mxu0 0.0
  %4551 = vmatprep.subr.mxu0 0.0
  %4552 = vmatpush2.msra.mxu0 0.0
  %4553 = vmatprep.subr.mxu0 0.0
  %4554 = vmatpush2.msra.mxu0 0.0
  %4555 = vmatprep.subr.mxu0 0.0
  %4556 = vmatpush2.msra.mxu0 0.0
  %4557 = vmatprep.subr.mxu0 0.0
  %4558 = vmatpush2.msra.mxu0 0.0
  %4559 = vmatprep.mubr.f32.mxu0 0.0
  %4560 = vmatmul.mubr.f32.gmra.mxu0 %v4346
  %v4561 = vpop.f32.mrf.mxu0
  %v4562 = vadd.f32 %v4492, %v4561
  %v4563 = vpop.f32.mrf.mxu0
  %4564 = vdwg.mxu0
  %v4565 = vadd.f32 %v4562, %v784
  %v4566 = vxor.u32 %v4565, 2147483648
  %v4567 = vmul.f32 %v4566, 1.442695
  %v4568 = vpow.pop %v4567
  %v4569 = vadd.f32 %v4568, 1.0
  %v4570 = vrcp.pop %v4569
  %v4571 = vmul.f32 1.0, %v4570
  %4572 = vmatprep.subr.mxu0 0.0
  %4573 = vmatpush1.msra.mxu0 0.0
  %4574 = vmatprep.subr.mxu0 0.0
  %4575 = vmatpush1.msra.mxu0 0.0
  %4576 = vmatprep.subr.mxu0 0.0
  %4577 = vmatpush1.msra.mxu0 0.0
  %4578 = vmatprep.subr.mxu0 0.0
  %4579 = vmatpush1.msra.mxu0 0.0
  %4580 = vmatprep.subr.mxu0 0.0
  %4581 = vmatpush1.msra.mxu0 0.0
  %4582 = vmatprep.subr.mxu0 0.0
  %4583 = vmatpush1.msra.mxu0 0.0
  %4584 = vmatprep.subr.mxu0 0.0
  %4585 = vmatpush1.msra.mxu0 0.0
  %4586 = vmatprep.subr.mxu0 0.0
  %4587 = vmatpush1.msra.mxu0 0.0
  %4588 = vmatprep.subr.mxu0 0.0
  %4589 = vmatpush1.msra.mxu0 0.0
  %4590 = vmatprep.subr.mxu0 0.0
  %4591 = vmatpush1.msra.mxu0 0.0
  %4592 = vmatprep.subr.mxu0 0.0
  %4593 = vmatpush1.msra.mxu0 0.0
  %4594 = vmatprep.subr.mxu0 0.0
  %4595 = vmatpush1.msra.mxu0 0.0
  %4596 = vmatprep.subr.mxu0 0.0
  %4597 = vmatpush1.msra.mxu0 %v72
  %4598 = vmatprep.subr.mxu0 0.0
  %4599 = vmatpush1.msra.mxu0 %v71
  %4600 = vmatprep.subr.mxu0 0.0
  %4601 = vmatpush1.msra.mxu0 %v70
  %4602 = vmatprep.subr.mxu0 0.0
  %4603 = vmatpush1.msra.mxu0 %v69
  %4604 = vmatprep.subr.mxu0 0.0
  %4605 = vmatpush2.msra.mxu0 0.0
  %4606 = vmatprep.subr.mxu0 0.0
  %4607 = vmatpush2.msra.mxu0 0.0
  %4608 = vmatprep.subr.mxu0 0.0
  %4609 = vmatpush2.msra.mxu0 0.0
  %4610 = vmatprep.subr.mxu0 0.0
  %4611 = vmatpush2.msra.mxu0 0.0
  %4612 = vmatprep.subr.mxu0 0.0
  %4613 = vmatpush2.msra.mxu0 0.0
  %4614 = vmatprep.subr.mxu0 0.0
  %4615 = vmatpush2.msra.mxu0 0.0
  %4616 = vmatprep.subr.mxu0 0.0
  %4617 = vmatpush2.msra.mxu0 0.0
  %4618 = vmatprep.subr.mxu0 0.0
  %4619 = vmatpush2.msra.mxu0 0.0
  %4620 = vmatprep.subr.mxu0 0.0
  %4621 = vmatpush2.msra.mxu0 0.0
  %4622 = vmatprep.subr.mxu0 0.0
  %4623 = vmatpush2.msra.mxu0 0.0
  %4624 = vmatprep.subr.mxu0 0.0
  %4625 = vmatpush2.msra.mxu0 0.0
  %4626 = vmatprep.subr.mxu0 0.0
  %4627 = vmatpush2.msra.mxu0 0.0
  %4628 = vmatprep.subr.mxu0 0.0
  %4629 = vmatpush2.msra.mxu0 0.0
  %4630 = vmatprep.subr.mxu0 0.0
  %4631 = vmatpush2.msra.mxu0 0.0
  %4632 = vmatprep.subr.mxu0 0.0
  %4633 = vmatpush2.msra.mxu0 0.0
  %4634 = vmatprep.subr.mxu0 0.0
  %4635 = vmatpush2.msra.mxu0 0.0
  %4636 = vmatprep.mubr.f32.mxu0 0.0
  %4637 = vmatmul.mubr.f32.gmra.mxu0 %v4346
  %v4638 = vpop.f32.mrf.mxu0
  %v4639 = vadd.f32 %v797, %v4638
  %v4640 = vpop.f32.mrf.mxu0
  %4641 = vdwg.mxu0
  %4642 = vmatprep.subr.mxu0 0.0
  %4643 = vmatpush1.msra.mxu0 0.0
  %4644 = vmatprep.subr.mxu0 0.0
  %4645 = vmatpush1.msra.mxu0 0.0
  %4646 = vmatprep.subr.mxu0 0.0
  %4647 = vmatpush1.msra.mxu0 0.0
  %4648 = vmatprep.subr.mxu0 0.0
  %4649 = vmatpush1.msra.mxu0 0.0
  %4650 = vmatprep.subr.mxu0 0.0
  %4651 = vmatpush1.msra.mxu0 0.0
  %4652 = vmatprep.subr.mxu0 0.0
  %4653 = vmatpush1.msra.mxu0 0.0
  %4654 = vmatprep.subr.mxu0 0.0
  %4655 = vmatpush1.msra.mxu0 0.0
  %4656 = vmatprep.subr.mxu0 0.0
  %4657 = vmatpush1.msra.mxu0 0.0
  %4658 = vmatprep.subr.mxu0 0.0
  %4659 = vmatpush1.msra.mxu0 0.0
  %4660 = vmatprep.subr.mxu0 0.0
  %4661 = vmatpush1.msra.mxu0 0.0
  %4662 = vmatprep.subr.mxu0 0.0
  %4663 = vmatpush1.msra.mxu0 0.0
  %4664 = vmatprep.subr.mxu0 0.0
  %4665 = vmatpush1.msra.mxu0 0.0
  %4666 = vmatprep.subr.mxu0 0.0
  %4667 = vmatpush1.msra.mxu0 %v86
  %4668 = vmatprep.subr.mxu0 0.0
  %4669 = vmatpush1.msra.mxu0 %v85
  %4670 = vmatprep.subr.mxu0 0.0
  %4671 = vmatpush1.msra.mxu0 %v84
  %4672 = vmatprep.subr.mxu0 0.0
  %4673 = vmatpush1.msra.mxu0 %v83
  %4674 = vmatprep.subr.mxu0 0.0
  %4675 = vmatpush2.msra.mxu0 0.0
  %4676 = vmatprep.subr.mxu0 0.0
  %4677 = vmatpush2.msra.mxu0 0.0
  %4678 = vmatprep.subr.mxu0 0.0
  %4679 = vmatpush2.msra.mxu0 0.0
  %4680 = vmatprep.subr.mxu0 0.0
  %4681 = vmatpush2.msra.mxu0 0.0
  %4682 = vmatprep.subr.mxu0 0.0
  %4683 = vmatpush2.msra.mxu0 0.0
  %4684 = vmatprep.subr.mxu0 0.0
  %4685 = vmatpush2.msra.mxu0 0.0
  %4686 = vmatprep.subr.mxu0 0.0
  %4687 = vmatpush2.msra.mxu0 0.0
  %4688 = vmatprep.subr.mxu0 0.0
  %4689 = vmatpush2.msra.mxu0 0.0
  %4690 = vmatprep.subr.mxu0 0.0
  %4691 = vmatpush2.msra.mxu0 0.0
  %4692 = vmatprep.subr.mxu0 0.0
  %4693 = vmatpush2.msra.mxu0 0.0
  %4694 = vmatprep.subr.mxu0 0.0
  %4695 = vmatpush2.msra.mxu0 0.0
  %4696 = vmatprep.subr.mxu0 0.0
  %4697 = vmatpush2.msra.mxu0 0.0
  %4698 = vmatprep.subr.mxu0 0.0
  %4699 = vmatpush2.msra.mxu0 0.0
  %4700 = vmatprep.subr.mxu0 0.0
  %4701 = vmatpush2.msra.mxu0 0.0
  %4702 = vmatprep.subr.mxu0 0.0
  %4703 = vmatpush2.msra.mxu0 0.0
  %4704 = vmatprep.subr.mxu0 0.0
  %4705 = vmatpush2.msra.mxu0 0.0
  %4706 = vmatprep.mubr.f32.mxu0 0.0
  %4707 = vmatmul.mubr.f32.gmra.mxu0 %v3971
  %v4708 = vpop.f32.mrf.mxu0
  %v4709 = vadd.f32 %v873, %v4708
  %v4710 = vpop.f32.mrf.mxu0
  %4711 = vdwg.mxu0
  %v4712 = vmul.f32 %v4424, %v4709
  %v4713 = vadd.f32 %v4639, %v4712
  %v4714 = vtanh.pop %v4713
  %v4715 = vsub.f32 1.0, %v4571
  %v4716 = vmul.f32 %v4715, %v4714
  %v4717 = vmul.f32 %v4571, %v3964
  %v4718 = vadd.f32 %v4716, %v4717
  %s4719 = scalar_lea.vmem %s9, 160
  %v4720 = vld [vmem:[%s4719] sm:$0xff]
  %v4721 = vld [vmem:[%s4719 + $0x8] sm:$0xff]
  %v4722 = vld [vmem:[%s4719 + $0x10] sm:$0xff]
  %v4723 = vld [vmem:[%s4719 + $0x18] sm:$0xff]
  %v4725 = vsel %vm243, %v4718, 0
  %4727 = vmatprep.subr.mxu0 0.0
  %4728 = vmatpush1.msra.mxu0 0.0
  %4729 = vmatprep.subr.mxu0 0.0
  %4730 = vmatpush1.msra.mxu0 0.0
  %4731 = vmatprep.subr.mxu0 0.0
  %4732 = vmatpush1.msra.mxu0 0.0
  %4733 = vmatprep.subr.mxu0 0.0
  %4734 = vmatpush1.msra.mxu0 0.0
  %4735 = vmatprep.subr.mxu0 0.0
  %4736 = vmatpush1.msra.mxu0 0.0
  %4737 = vmatprep.subr.mxu0 0.0
  %4738 = vmatpush1.msra.mxu0 0.0
  %4739 = vmatprep.subr.mxu0 0.0
  %4740 = vmatpush1.msra.mxu0 0.0
  %4741 = vmatprep.subr.mxu0 0.0
  %4742 = vmatpush1.msra.mxu0 0.0
  %4743 = vmatprep.subr.mxu0 0.0
  %4744 = vmatpush1.msra.mxu0 0.0
  %4745 = vmatprep.subr.mxu0 0.0
  %4746 = vmatpush1.msra.mxu0 0.0
  %4747 = vmatprep.subr.mxu0 0.0
  %4748 = vmatpush1.msra.mxu0 0.0
  %4749 = vmatprep.subr.mxu0 0.0
  %4750 = vmatpush1.msra.mxu0 0.0
  %4751 = vmatprep.subr.mxu0 0.0
  %4752 = vmatpush1.msra.mxu0 %v4723
  %4753 = vmatprep.subr.mxu0 0.0
  %4754 = vmatpush1.msra.mxu0 %v4722
  %4755 = vmatprep.subr.mxu0 0.0
  %4756 = vmatpush1.msra.mxu0 %v4721
  %4757 = vmatprep.subr.mxu0 0.0
  %4758 = vmatpush1.msra.mxu0 %v4720
  %4759 = vmatprep.subr.mxu0 0.0
  %4760 = vmatpush2.msra.mxu0 0.0
  %4761 = vmatprep.subr.mxu0 0.0
  %4762 = vmatpush2.msra.mxu0 0.0
  %4763 = vmatprep.subr.mxu0 0.0
  %4764 = vmatpush2.msra.mxu0 0.0
  %4765 = vmatprep.subr.mxu0 0.0
  %4766 = vmatpush2.msra.mxu0 0.0
  %4767 = vmatprep.subr.mxu0 0.0
  %4768 = vmatpush2.msra.mxu0 0.0
  %4769 = vmatprep.subr.mxu0 0.0
  %4770 = vmatpush2.msra.mxu0 0.0
  %4771 = vmatprep.subr.mxu0 0.0
  %4772 = vmatpush2.msra.mxu0 0.0
  %4773 = vmatprep.subr.mxu0 0.0
  %4774 = vmatpush2.msra.mxu0 0.0
  %4775 = vmatprep.subr.mxu0 0.0
  %4776 = vmatpush2.msra.mxu0 0.0
  %4777 = vmatprep.subr.mxu0 0.0
  %4778 = vmatpush2.msra.mxu0 0.0
  %4779 = vmatprep.subr.mxu0 0.0
  %4780 = vmatpush2.msra.mxu0 0.0
  %4781 = vmatprep.subr.mxu0 0.0
  %4782 = vmatpush2.msra.mxu0 0.0
  %4783 = vmatprep.subr.mxu0 0.0
  %4784 = vmatpush2.msra.mxu0 0.0
  %4785 = vmatprep.subr.mxu0 0.0
  %4786 = vmatpush2.msra.mxu0 0.0
  %4787 = vmatprep.subr.mxu0 0.0
  %4788 = vmatpush2.msra.mxu0 0.0
  %4789 = vmatprep.subr.mxu0 0.0
  %4790 = vmatpush2.msra.mxu0 0.0
  %4791 = vmatprep.mubr.f32.mxu0 0.0
  %4792 = vmatmul.mubr.f32.gmra.mxu0 %v4725
  %v4793 = vpop.f32.mrf.mxu0
  %v4794 = vadd.f32 0.0, %v4793
  %v4795 = vpop.f32.mrf.mxu0
  %4796 = vdwg.mxu0
  %v4797 = vadd.f32 %v4043, %v4794
  %4798 = vmatprep.subr.mxu0 0.0
  %4799 = vmatpush1.msra.mxu0 0.0
  %4800 = vmatprep.subr.mxu0 0.0
  %4801 = vmatpush1.msra.mxu0 0.0
  %4802 = vmatprep.subr.mxu0 0.0
  %4803 = vmatpush1.msra.mxu0 0.0
  %4804 = vmatprep.subr.mxu0 0.0
  %4805 = vmatpush1.msra.mxu0 0.0
  %4806 = vmatprep.subr.mxu0 0.0
  %4807 = vmatpush1.msra.mxu0 0.0
  %4808 = vmatprep.subr.mxu0 0.0
  %4809 = vmatpush1.msra.mxu0 0.0
  %4810 = vmatprep.subr.mxu0 0.0
  %4811 = vmatpush1.msra.mxu0 0.0
  %4812 = vmatprep.subr.mxu0 0.0
  %4813 = vmatpush1.msra.mxu0 0.0
  %4814 = vmatprep.subr.mxu0 0.0
  %4815 = vmatpush1.msra.mxu0 0.0
  %4816 = vmatprep.subr.mxu0 0.0
  %4817 = vmatpush1.msra.mxu0 0.0
  %4818 = vmatprep.subr.mxu0 0.0
  %4819 = vmatpush1.msra.mxu0 0.0
  %4820 = vmatprep.subr.mxu0 0.0
  %4821 = vmatpush1.msra.mxu0 0.0
  %4822 = vmatprep.subr.mxu0 0.0
  %4823 = vmatpush1.msra.mxu0 %v48
  %4824 = vmatprep.subr.mxu0 0.0
  %4825 = vmatpush1.msra.mxu0 %v47
  %4826 = vmatprep.subr.mxu0 0.0
  %4827 = vmatpush1.msra.mxu0 %v46
  %4828 = vmatprep.subr.mxu0 0.0
  %4829 = vmatpush1.msra.mxu0 %v45
  %4830 = vmatprep.subr.mxu0 0.0
  %4831 = vmatpush2.msra.mxu0 0.0
  %4832 = vmatprep.subr.mxu0 0.0
  %4833 = vmatpush2.msra.mxu0 0.0
  %4834 = vmatprep.subr.mxu0 0.0
  %4835 = vmatpush2.msra.mxu0 0.0
  %4836 = vmatprep.subr.mxu0 0.0
  %4837 = vmatpush2.msra.mxu0 0.0
  %4838 = vmatprep.subr.mxu0 0.0
  %4839 = vmatpush2.msra.mxu0 0.0
  %4840 = vmatprep.subr.mxu0 0.0
  %4841 = vmatpush2.msra.mxu0 0.0
  %4842 = vmatprep.subr.mxu0 0.0
  %4843 = vmatpush2.msra.mxu0 0.0
  %4844 = vmatprep.subr.mxu0 0.0
  %4845 = vmatpush2.msra.mxu0 0.0
  %4846 = vmatprep.subr.mxu0 0.0
  %4847 = vmatpush2.msra.mxu0 0.0
  %4848 = vmatprep.subr.mxu0 0.0
  %4849 = vmatpush2.msra.mxu0 0.0
  %4850 = vmatprep.subr.mxu0 0.0
  %4851 = vmatpush2.msra.mxu0 0.0
  %4852 = vmatprep.subr.mxu0 0.0
  %4853 = vmatpush2.msra.mxu0 0.0
  %4854 = vmatprep.subr.mxu0 0.0
  %4855 = vmatpush2.msra.mxu0 0.0
  %4856 = vmatprep.subr.mxu0 0.0
  %4857 = vmatpush2.msra.mxu0 0.0
  %4858 = vmatprep.subr.mxu0 0.0
  %4859 = vmatpush2.msra.mxu0 0.0
  %4860 = vmatprep.subr.mxu0 0.0
  %4861 = vmatpush2.msra.mxu0 0.0
  %4862 = vmatprep.mubr.f32.mxu0 0.0
  %4863 = vmatmul.mubr.f32.gmra.mxu0 %v4346
  %v4864 = vpop.f32.mrf.mxu0
  %v4865 = vadd.f32 0.0, %v4864
  %v4866 = vpop.f32.mrf.mxu0
  %4867 = vdwg.mxu0
  %v4868 = vadd.f32 %v185, %v4865
  %v4869 = vxor.u32 %v4868, 2147483648
  %v4870 = vmul.f32 %v4869, 1.442695
  %v4871 = vpow.pop %v4870
  %v4872 = vadd.f32 %v4871, 1.0
  %v4873 = vrcp.pop %v4872
  %v4874 = vmul.f32 1.0, %v4873
  %4875 = vmatprep.subr.mxu0 0.0
  %4876 = vmatpush1.msra.mxu0 0.0
  %4877 = vmatprep.subr.mxu0 0.0
  %4878 = vmatpush1.msra.mxu0 0.0
  %4879 = vmatprep.subr.mxu0 0.0
  %4880 = vmatpush1.msra.mxu0 0.0
  %4881 = vmatprep.subr.mxu0 0.0
  %4882 = vmatpush1.msra.mxu0 0.0
  %4883 = vmatprep.subr.mxu0 0.0
  %4884 = vmatpush1.msra.mxu0 0.0
  %4885 = vmatprep.subr.mxu0 0.0
  %4886 = vmatpush1.msra.mxu0 0.0
  %4887 = vmatprep.subr.mxu0 0.0
  %4888 = vmatpush1.msra.mxu0 0.0
  %4889 = vmatprep.subr.mxu0 0.0
  %4890 = vmatpush1.msra.mxu0 0.0
  %4891 = vmatprep.subr.mxu0 0.0
  %4892 = vmatpush1.msra.mxu0 0.0
  %4893 = vmatprep.subr.mxu0 0.0
  %4894 = vmatpush1.msra.mxu0 0.0
  %4895 = vmatprep.subr.mxu0 0.0
  %4896 = vmatpush1.msra.mxu0 0.0
  %4897 = vmatprep.subr.mxu0 0.0
  %4898 = vmatpush1.msra.mxu0 0.0
  %4899 = vmatprep.subr.mxu0 0.0
  %4900 = vmatpush1.msra.mxu0 %v53
  %4901 = vmatprep.subr.mxu0 0.0
  %4902 = vmatpush1.msra.mxu0 %v52
  %4903 = vmatprep.subr.mxu0 0.0
  %4904 = vmatpush1.msra.mxu0 %v51
  %4905 = vmatprep.subr.mxu0 0.0
  %4906 = vmatpush1.msra.mxu0 %v50
  %4907 = vmatprep.subr.mxu0 0.0
  %4908 = vmatpush2.msra.mxu0 0.0
  %4909 = vmatprep.subr.mxu0 0.0
  %4910 = vmatpush2.msra.mxu0 0.0
  %4911 = vmatprep.subr.mxu0 0.0
  %4912 = vmatpush2.msra.mxu0 0.0
  %4913 = vmatprep.subr.mxu0 0.0
  %4914 = vmatpush2.msra.mxu0 0.0
  %4915 = vmatprep.subr.mxu0 0.0
  %4916 = vmatpush2.msra.mxu0 0.0
  %4917 = vmatprep.subr.mxu0 0.0
  %4918 = vmatpush2.msra.mxu0 0.0
  %4919 = vmatprep.subr.mxu0 0.0
  %4920 = vmatpush2.msra.mxu0 0.0
  %4921 = vmatprep.subr.mxu0 0.0
  %4922 = vmatpush2.msra.mxu0 0.0
  %4923 = vmatprep.subr.mxu0 0.0
  %4924 = vmatpush2.msra.mxu0 0.0
  %4925 = vmatprep.subr.mxu0 0.0
  %4926 = vmatpush2.msra.mxu0 0.0
  %4927 = vmatprep.subr.mxu0 0.0
  %4928 = vmatpush2.msra.mxu0 0.0
  %4929 = vmatprep.subr.mxu0 0.0
  %4930 = vmatpush2.msra.mxu0 0.0
  %4931 = vmatprep.subr.mxu0 0.0
  %4932 = vmatpush2.msra.mxu0 0.0
  %4933 = vmatprep.subr.mxu0 0.0
  %4934 = vmatpush2.msra.mxu0 0.0
  %4935 = vmatprep.subr.mxu0 0.0
  %4936 = vmatpush2.msra.mxu0 0.0
  %4937 = vmatprep.subr.mxu0 0.0
  %4938 = vmatpush2.msra.mxu0 0.0
  %4939 = vmatprep.mubr.f32.mxu0 0.0
  %4940 = vmatmul.mubr.f32.gmra.mxu0 %v4346
  %v4941 = vpop.f32.mrf.mxu0
  %v4942 = vadd.f32 0.0, %v4941
  %v4943 = vpop.f32.mrf.mxu0
  %4944 = vdwg.mxu0
  %v4945 = vadd.f32 %v213, %v4942
  %v4946 = vxor.u32 %v4945, 2147483648
  %v4947 = vmul.f32 %v4946, 1.442695
  %v4948 = vpow.pop %v4947
  %v4949 = vadd.f32 %v4948, 1.0
  %v4950 = vrcp.pop %v4949
  %v4951 = vmul.f32 1.0, %v4950
  %4952 = vmatprep.subr.mxu0 0.0
  %4953 = vmatpush1.msra.mxu0 0.0
  %4954 = vmatprep.subr.mxu0 0.0
  %4955 = vmatpush1.msra.mxu0 0.0
  %4956 = vmatprep.subr.mxu0 0.0
  %4957 = vmatpush1.msra.mxu0 0.0
  %4958 = vmatprep.subr.mxu0 0.0
  %4959 = vmatpush1.msra.mxu0 0.0
  %4960 = vmatprep.subr.mxu0 0.0
  %4961 = vmatpush1.msra.mxu0 0.0
  %4962 = vmatprep.subr.mxu0 0.0
  %4963 = vmatpush1.msra.mxu0 0.0
  %4964 = vmatprep.subr.mxu0 0.0
  %4965 = vmatpush1.msra.mxu0 0.0
  %4966 = vmatprep.subr.mxu0 0.0
  %4967 = vmatpush1.msra.mxu0 0.0
  %4968 = vmatprep.subr.mxu0 0.0
  %4969 = vmatpush1.msra.mxu0 0.0
  %4970 = vmatprep.subr.mxu0 0.0
  %4971 = vmatpush1.msra.mxu0 0.0
  %4972 = vmatprep.subr.mxu0 0.0
  %4973 = vmatpush1.msra.mxu0 0.0
  %4974 = vmatprep.subr.mxu0 0.0
  %4975 = vmatpush1.msra.mxu0 0.0
  %4976 = vmatprep.subr.mxu0 0.0
  %4977 = vmatpush1.msra.mxu0 %v58
  %4978 = vmatprep.subr.mxu0 0.0
  %4979 = vmatpush1.msra.mxu0 %v57
  %4980 = vmatprep.subr.mxu0 0.0
  %4981 = vmatpush1.msra.mxu0 %v56
  %4982 = vmatprep.subr.mxu0 0.0
  %4983 = vmatpush1.msra.mxu0 %v55
  %4984 = vmatprep.subr.mxu0 0.0
  %4985 = vmatpush2.msra.mxu0 0.0
  %4986 = vmatprep.subr.mxu0 0.0
  %4987 = vmatpush2.msra.mxu0 0.0
  %4988 = vmatprep.subr.mxu0 0.0
  %4989 = vmatpush2.msra.mxu0 0.0
  %4990 = vmatprep.subr.mxu0 0.0
  %4991 = vmatpush2.msra.mxu0 0.0
  %4992 = vmatprep.subr.mxu0 0.0
  %4993 = vmatpush2.msra.mxu0 0.0
  %4994 = vmatprep.subr.mxu0 0.0
  %4995 = vmatpush2.msra.mxu0 0.0
  %4996 = vmatprep.subr.mxu0 0.0
  %4997 = vmatpush2.msra.mxu0 0.0
  %4998 = vmatprep.subr.mxu0 0.0
  %4999 = vmatpush2.msra.mxu0 0.0
  %5000 = vmatprep.subr.mxu0 0.0
  %5001 = vmatpush2.msra.mxu0 0.0
  %5002 = vmatprep.subr.mxu0 0.0
  %5003 = vmatpush2.msra.mxu0 0.0
  %5004 = vmatprep.subr.mxu0 0.0
  %5005 = vmatpush2.msra.mxu0 0.0
  %5006 = vmatprep.subr.mxu0 0.0
  %5007 = vmatpush2.msra.mxu0 0.0
  %5008 = vmatprep.subr.mxu0 0.0
  %5009 = vmatpush2.msra.mxu0 0.0
  %5010 = vmatprep.subr.mxu0 0.0
  %5011 = vmatpush2.msra.mxu0 0.0
  %5012 = vmatprep.subr.mxu0 0.0
  %5013 = vmatpush2.msra.mxu0 0.0
  %5014 = vmatprep.subr.mxu0 0.0
  %5015 = vmatpush2.msra.mxu0 0.0
  %5016 = vmatprep.mubr.f32.mxu0 0.0
  %5017 = vmatmul.mubr.f32.gmra.mxu0 %v4346
  %v5018 = vpop.f32.mrf.mxu0
  %v5019 = vadd.f32 %v405, %v5018
  %v5020 = vpop.f32.mrf.mxu0
  %5021 = vdwg.mxu0
  %v5022 = vmul.f32 %v4874, %v5019
  %v5023 = vadd.f32 %v241, %v5022
  %v5024 = vtanh.pop %v5023
  %v5025 = vsub.f32 1.0, %v4951
  %v5026 = vmul.f32 %v5025, %v5024
  %v5027 = vmul.f32 %v4951, %v4274
  %v5028 = vadd.f32 %v5026, %v5027
  %5029 = vmatprep.subr.mxu0 0.0
  %5030 = vmatpush1.msra.mxu0 0.0
  %5031 = vmatprep.subr.mxu0 0.0
  %5032 = vmatpush1.msra.mxu0 0.0
  %5033 = vmatprep.subr.mxu0 0.0
  %5034 = vmatpush1.msra.mxu0 0.0
  %5035 = vmatprep.subr.mxu0 0.0
  %5036 = vmatpush1.msra.mxu0 0.0
  %5037 = vmatprep.subr.mxu0 0.0
  %5038 = vmatpush1.msra.mxu0 0.0
  %5039 = vmatprep.subr.mxu0 0.0
  %5040 = vmatpush1.msra.mxu0 0.0
  %5041 = vmatprep.subr.mxu0 0.0
  %5042 = vmatpush1.msra.mxu0 0.0
  %5043 = vmatprep.subr.mxu0 0.0
  %5044 = vmatpush1.msra.mxu0 0.0
  %5045 = vmatprep.subr.mxu0 0.0
  %5046 = vmatpush1.msra.mxu0 0.0
  %5047 = vmatprep.subr.mxu0 0.0
  %5048 = vmatpush1.msra.mxu0 0.0
  %5049 = vmatprep.subr.mxu0 0.0
  %5050 = vmatpush1.msra.mxu0 0.0
  %5051 = vmatprep.subr.mxu0 0.0
  %5052 = vmatpush1.msra.mxu0 0.0
  %5053 = vmatprep.subr.mxu0 0.0
  %5054 = vmatpush1.msra.mxu0 %v76
  %5055 = vmatprep.subr.mxu0 0.0
  %5056 = vmatpush1.msra.mxu0 %v75
  %5057 = vmatprep.subr.mxu0 0.0
  %5058 = vmatpush1.msra.mxu0 %v74
  %5059 = vmatprep.subr.mxu0 0.0
  %5060 = vmatpush1.msra.mxu0 %v73
  %5061 = vmatprep.subr.mxu0 0.0
  %5062 = vmatpush2.msra.mxu0 0.0
  %5063 = vmatprep.subr.mxu0 0.0
  %5064 = vmatpush2.msra.mxu0 0.0
  %5065 = vmatprep.subr.mxu0 0.0
  %5066 = vmatpush2.msra.mxu0 0.0
  %5067 = vmatprep.subr.mxu0 0.0
  %5068 = vmatpush2.msra.mxu0 0.0
  %5069 = vmatprep.subr.mxu0 0.0
  %5070 = vmatpush2.msra.mxu0 0.0
  %5071 = vmatprep.subr.mxu0 0.0
  %5072 = vmatpush2.msra.mxu0 0.0
  %5073 = vmatprep.subr.mxu0 0.0
  %5074 = vmatpush2.msra.mxu0 0.0
  %5075 = vmatprep.subr.mxu0 0.0
  %5076 = vmatpush2.msra.mxu0 0.0
  %5077 = vmatprep.subr.mxu0 0.0
  %5078 = vmatpush2.msra.mxu0 0.0
  %5079 = vmatprep.subr.mxu0 0.0
  %5080 = vmatpush2.msra.mxu0 0.0
  %5081 = vmatprep.subr.mxu0 0.0
  %5082 = vmatpush2.msra.mxu0 0.0
  %5083 = vmatprep.subr.mxu0 0.0
  %5084 = vmatpush2.msra.mxu0 0.0
  %5085 = vmatprep.subr.mxu0 0.0
  %5086 = vmatpush2.msra.mxu0 0.0
  %5087 = vmatprep.subr.mxu0 0.0
  %5088 = vmatpush2.msra.mxu0 0.0
  %5089 = vmatprep.subr.mxu0 0.0
  %5090 = vmatpush2.msra.mxu0 0.0
  %5091 = vmatprep.subr.mxu0 0.0
  %5092 = vmatpush2.msra.mxu0 0.0
  %5093 = vmatprep.mubr.f32.mxu0 0.0
  %5094 = vmatmul.mubr.f32.gmra.mxu0 %v4725
  %v5095 = vpop.f32.mrf.mxu0
  %v5096 = vadd.f32 0.0, %v5095
  %v5097 = vpop.f32.mrf.mxu0
  %5098 = vdwg.mxu0
  %v5100 = vsel %vm243, %v5028, 0
  %5102 = vmatprep.subr.mxu0 0.0
  %5103 = vmatpush1.msra.mxu0 0.0
  %5104 = vmatprep.subr.mxu0 0.0
  %5105 = vmatpush1.msra.mxu0 0.0
  %5106 = vmatprep.subr.mxu0 0.0
  %5107 = vmatpush1.msra.mxu0 0.0
  %5108 = vmatprep.subr.mxu0 0.0
  %5109 = vmatpush1.msra.mxu0 0.0
  %5110 = vmatprep.subr.mxu0 0.0
  %5111 = vmatpush1.msra.mxu0 0.0
  %5112 = vmatprep.subr.mxu0 0.0
  %5113 = vmatpush1.msra.mxu0 0.0
  %5114 = vmatprep.subr.mxu0 0.0
  %5115 = vmatpush1.msra.mxu0 0.0
  %5116 = vmatprep.subr.mxu0 0.0
  %5117 = vmatpush1.msra.mxu0 0.0
  %5118 = vmatprep.subr.mxu0 0.0
  %5119 = vmatpush1.msra.mxu0 0.0
  %5120 = vmatprep.subr.mxu0 0.0
  %5121 = vmatpush1.msra.mxu0 0.0
  %5122 = vmatprep.subr.mxu0 0.0
  %5123 = vmatpush1.msra.mxu0 0.0
  %5124 = vmatprep.subr.mxu0 0.0
  %5125 = vmatpush1.msra.mxu0 0.0
  %5126 = vmatprep.subr.mxu0 0.0
  %5127 = vmatpush1.msra.mxu0 %v62
  %5128 = vmatprep.subr.mxu0 0.0
  %5129 = vmatpush1.msra.mxu0 %v61
  %5130 = vmatprep.subr.mxu0 0.0
  %5131 = vmatpush1.msra.mxu0 %v60
  %5132 = vmatprep.subr.mxu0 0.0
  %5133 = vmatpush1.msra.mxu0 %v59
  %5134 = vmatprep.subr.mxu0 0.0
  %5135 = vmatpush2.msra.mxu0 0.0
  %5136 = vmatprep.subr.mxu0 0.0
  %5137 = vmatpush2.msra.mxu0 0.0
  %5138 = vmatprep.subr.mxu0 0.0
  %5139 = vmatpush2.msra.mxu0 0.0
  %5140 = vmatprep.subr.mxu0 0.0
  %5141 = vmatpush2.msra.mxu0 0.0
  %5142 = vmatprep.subr.mxu0 0.0
  %5143 = vmatpush2.msra.mxu0 0.0
  %5144 = vmatprep.subr.mxu0 0.0
  %5145 = vmatpush2.msra.mxu0 0.0
  %5146 = vmatprep.subr.mxu0 0.0
  %5147 = vmatpush2.msra.mxu0 0.0
  %5148 = vmatprep.subr.mxu0 0.0
  %5149 = vmatpush2.msra.mxu0 0.0
  %5150 = vmatprep.subr.mxu0 0.0
  %5151 = vmatpush2.msra.mxu0 0.0
  %5152 = vmatprep.subr.mxu0 0.0
  %5153 = vmatpush2.msra.mxu0 0.0
  %5154 = vmatprep.subr.mxu0 0.0
  %5155 = vmatpush2.msra.mxu0 0.0
  %5156 = vmatprep.subr.mxu0 0.0
  %5157 = vmatpush2.msra.mxu0 0.0
  %5158 = vmatprep.subr.mxu0 0.0
  %5159 = vmatpush2.msra.mxu0 0.0
  %5160 = vmatprep.subr.mxu0 0.0
  %5161 = vmatpush2.msra.mxu0 0.0
  %5162 = vmatprep.subr.mxu0 0.0
  %5163 = vmatpush2.msra.mxu0 0.0
  %5164 = vmatprep.subr.mxu0 0.0
  %5165 = vmatpush2.msra.mxu0 0.0
  %5166 = vmatprep.mubr.f32.mxu0 0.0
  %5167 = vmatmul.mubr.f32.gmra.mxu0 %v5100
  %v5168 = vpop.f32.mrf.mxu0
  %v5169 = vadd.f32 %v5096, %v5168
  %v5170 = vpop.f32.mrf.mxu0
  %5171 = vdwg.mxu0
  %v5172 = vadd.f32 %v5169, %v631
  %v5173 = vxor.u32 %v5172, 2147483648
  %v5174 = vmul.f32 %v5173, 1.442695
  %v5175 = vpow.pop %v5174
  %v5176 = vadd.f32 %v5175, 1.0
  %v5177 = vrcp.pop %v5176
  %v5178 = vmul.f32 1.0, %v5177
  %5179 = vmatprep.subr.mxu0 0.0
  %5180 = vmatpush1.msra.mxu0 0.0
  %5181 = vmatprep.subr.mxu0 0.0
  %5182 = vmatpush1.msra.mxu0 0.0
  %5183 = vmatprep.subr.mxu0 0.0
  %5184 = vmatpush1.msra.mxu0 0.0
  %5185 = vmatprep.subr.mxu0 0.0
  %5186 = vmatpush1.msra.mxu0 0.0
  %5187 = vmatprep.subr.mxu0 0.0
  %5188 = vmatpush1.msra.mxu0 0.0
  %5189 = vmatprep.subr.mxu0 0.0
  %5190 = vmatpush1.msra.mxu0 0.0
  %5191 = vmatprep.subr.mxu0 0.0
  %5192 = vmatpush1.msra.mxu0 0.0
  %5193 = vmatprep.subr.mxu0 0.0
  %5194 = vmatpush1.msra.mxu0 0.0
  %5195 = vmatprep.subr.mxu0 0.0
  %5196 = vmatpush1.msra.mxu0 0.0
  %5197 = vmatprep.subr.mxu0 0.0
  %5198 = vmatpush1.msra.mxu0 0.0
  %5199 = vmatprep.subr.mxu0 0.0
  %5200 = vmatpush1.msra.mxu0 0.0
  %5201 = vmatprep.subr.mxu0 0.0
  %5202 = vmatpush1.msra.mxu0 0.0
  %5203 = vmatprep.subr.mxu0 0.0
  %5204 = vmatpush1.msra.mxu0 %v81
  %5205 = vmatprep.subr.mxu0 0.0
  %5206 = vmatpush1.msra.mxu0 %v80
  %5207 = vmatprep.subr.mxu0 0.0
  %5208 = vmatpush1.msra.mxu0 %v79
  %5209 = vmatprep.subr.mxu0 0.0
  %5210 = vmatpush1.msra.mxu0 %v78
  %5211 = vmatprep.subr.mxu0 0.0
  %5212 = vmatpush2.msra.mxu0 0.0
  %5213 = vmatprep.subr.mxu0 0.0
  %5214 = vmatpush2.msra.mxu0 0.0
  %5215 = vmatprep.subr.mxu0 0.0
  %5216 = vmatpush2.msra.mxu0 0.0
  %5217 = vmatprep.subr.mxu0 0.0
  %5218 = vmatpush2.msra.mxu0 0.0
  %5219 = vmatprep.subr.mxu0 0.0
  %5220 = vmatpush2.msra.mxu0 0.0
  %5221 = vmatprep.subr.mxu0 0.0
  %5222 = vmatpush2.msra.mxu0 0.0
  %5223 = vmatprep.subr.mxu0 0.0
  %5224 = vmatpush2.msra.mxu0 0.0
  %5225 = vmatprep.subr.mxu0 0.0
  %5226 = vmatpush2.msra.mxu0 0.0
  %5227 = vmatprep.subr.mxu0 0.0
  %5228 = vmatpush2.msra.mxu0 0.0
  %5229 = vmatprep.subr.mxu0 0.0
  %5230 = vmatpush2.msra.mxu0 0.0
  %5231 = vmatprep.subr.mxu0 0.0
  %5232 = vmatpush2.msra.mxu0 0.0
  %5233 = vmatprep.subr.mxu0 0.0
  %5234 = vmatpush2.msra.mxu0 0.0
  %5235 = vmatprep.subr.mxu0 0.0
  %5236 = vmatpush2.msra.mxu0 0.0
  %5237 = vmatprep.subr.mxu0 0.0
  %5238 = vmatpush2.msra.mxu0 0.0
  %5239 = vmatprep.subr.mxu0 0.0
  %5240 = vmatpush2.msra.mxu0 0.0
  %5241 = vmatprep.subr.mxu0 0.0
  %5242 = vmatpush2.msra.mxu0 0.0
  %5243 = vmatprep.mubr.f32.mxu0 0.0
  %5244 = vmatmul.mubr.f32.gmra.mxu0 %v4725
  %v5245 = vpop.f32.mrf.mxu0
  %v5246 = vadd.f32 0.0, %v5245
  %v5247 = vpop.f32.mrf.mxu0
  %5248 = vdwg.mxu0
  %5249 = vmatprep.subr.mxu0 0.0
  %5250 = vmatpush1.msra.mxu0 0.0
  %5251 = vmatprep.subr.mxu0 0.0
  %5252 = vmatpush1.msra.mxu0 0.0
  %5253 = vmatprep.subr.mxu0 0.0
  %5254 = vmatpush1.msra.mxu0 0.0
  %5255 = vmatprep.subr.mxu0 0.0
  %5256 = vmatpush1.msra.mxu0 0.0
  %5257 = vmatprep.subr.mxu0 0.0
  %5258 = vmatpush1.msra.mxu0 0.0
  %5259 = vmatprep.subr.mxu0 0.0
  %5260 = vmatpush1.msra.mxu0 0.0
  %5261 = vmatprep.subr.mxu0 0.0
  %5262 = vmatpush1.msra.mxu0 0.0
  %5263 = vmatprep.subr.mxu0 0.0
  %5264 = vmatpush1.msra.mxu0 0.0
  %5265 = vmatprep.subr.mxu0 0.0
  %5266 = vmatpush1.msra.mxu0 0.0
  %5267 = vmatprep.subr.mxu0 0.0
  %5268 = vmatpush1.msra.mxu0 0.0
  %5269 = vmatprep.subr.mxu0 0.0
  %5270 = vmatpush1.msra.mxu0 0.0
  %5271 = vmatprep.subr.mxu0 0.0
  %5272 = vmatpush1.msra.mxu0 0.0
  %5273 = vmatprep.subr.mxu0 0.0
  %5274 = vmatpush1.msra.mxu0 %v67
  %5275 = vmatprep.subr.mxu0 0.0
  %5276 = vmatpush1.msra.mxu0 %v66
  %5277 = vmatprep.subr.mxu0 0.0
  %5278 = vmatpush1.msra.mxu0 %v65
  %5279 = vmatprep.subr.mxu0 0.0
  %5280 = vmatpush1.msra.mxu0 %v64
  %5281 = vmatprep.subr.mxu0 0.0
  %5282 = vmatpush2.msra.mxu0 0.0
  %5283 = vmatprep.subr.mxu0 0.0
  %5284 = vmatpush2.msra.mxu0 0.0
  %5285 = vmatprep.subr.mxu0 0.0
  %5286 = vmatpush2.msra.mxu0 0.0
  %5287 = vmatprep.subr.mxu0 0.0
  %5288 = vmatpush2.msra.mxu0 0.0
  %5289 = vmatprep.subr.mxu0 0.0
  %5290 = vmatpush2.msra.mxu0 0.0
  %5291 = vmatprep.subr.mxu0 0.0
  %5292 = vmatpush2.msra.mxu0 0.0
  %5293 = vmatprep.subr.mxu0 0.0
  %5294 = vmatpush2.msra.mxu0 0.0
  %5295 = vmatprep.subr.mxu0 0.0
  %5296 = vmatpush2.msra.mxu0 0.0
  %5297 = vmatprep.subr.mxu0 0.0
  %5298 = vmatpush2.msra.mxu0 0.0
  %5299 = vmatprep.subr.mxu0 0.0
  %5300 = vmatpush2.msra.mxu0 0.0
  %5301 = vmatprep.subr.mxu0 0.0
  %5302 = vmatpush2.msra.mxu0 0.0
  %5303 = vmatprep.subr.mxu0 0.0
  %5304 = vmatpush2.msra.mxu0 0.0
  %5305 = vmatprep.subr.mxu0 0.0
  %5306 = vmatpush2.msra.mxu0 0.0
  %5307 = vmatprep.subr.mxu0 0.0
  %5308 = vmatpush2.msra.mxu0 0.0
  %5309 = vmatprep.subr.mxu0 0.0
  %5310 = vmatpush2.msra.mxu0 0.0
  %5311 = vmatprep.subr.mxu0 0.0
  %5312 = vmatpush2.msra.mxu0 0.0
  %5313 = vmatprep.mubr.f32.mxu0 0.0
  %5314 = vmatmul.mubr.f32.gmra.mxu0 %v5100
  %v5315 = vpop.f32.mrf.mxu0
  %v5316 = vadd.f32 %v5246, %v5315
  %v5317 = vpop.f32.mrf.mxu0
  %5318 = vdwg.mxu0
  %v5319 = vadd.f32 %v5316, %v784
  %v5320 = vxor.u32 %v5319, 2147483648
  %v5321 = vmul.f32 %v5320, 1.442695
  %v5322 = vpow.pop %v5321
  %v5323 = vadd.f32 %v5322, 1.0
  %v5324 = vrcp.pop %v5323
  %v5325 = vmul.f32 1.0, %v5324
  %5326 = vmatprep.subr.mxu0 0.0
  %5327 = vmatpush1.msra.mxu0 0.0
  %5328 = vmatprep.subr.mxu0 0.0
  %5329 = vmatpush1.msra.mxu0 0.0
  %5330 = vmatprep.subr.mxu0 0.0
  %5331 = vmatpush1.msra.mxu0 0.0
  %5332 = vmatprep.subr.mxu0 0.0
  %5333 = vmatpush1.msra.mxu0 0.0
  %5334 = vmatprep.subr.mxu0 0.0
  %5335 = vmatpush1.msra.mxu0 0.0
  %5336 = vmatprep.subr.mxu0 0.0
  %5337 = vmatpush1.msra.mxu0 0.0
  %5338 = vmatprep.subr.mxu0 0.0
  %5339 = vmatpush1.msra.mxu0 0.0
  %5340 = vmatprep.subr.mxu0 0.0
  %5341 = vmatpush1.msra.mxu0 0.0
  %5342 = vmatprep.subr.mxu0 0.0
  %5343 = vmatpush1.msra.mxu0 0.0
  %5344 = vmatprep.subr.mxu0 0.0
  %5345 = vmatpush1.msra.mxu0 0.0
  %5346 = vmatprep.subr.mxu0 0.0
  %5347 = vmatpush1.msra.mxu0 0.0
  %5348 = vmatprep.subr.mxu0 0.0
  %5349 = vmatpush1.msra.mxu0 0.0
  %5350 = vmatprep.subr.mxu0 0.0
  %5351 = vmatpush1.msra.mxu0 %v72
  %5352 = vmatprep.subr.mxu0 0.0
  %5353 = vmatpush1.msra.mxu0 %v71
  %5354 = vmatprep.subr.mxu0 0.0
  %5355 = vmatpush1.msra.mxu0 %v70
  %5356 = vmatprep.subr.mxu0 0.0
  %5357 = vmatpush1.msra.mxu0 %v69
  %5358 = vmatprep.subr.mxu0 0.0
  %5359 = vmatpush2.msra.mxu0 0.0
  %5360 = vmatprep.subr.mxu0 0.0
  %5361 = vmatpush2.msra.mxu0 0.0
  %5362 = vmatprep.subr.mxu0 0.0
  %5363 = vmatpush2.msra.mxu0 0.0
  %5364 = vmatprep.subr.mxu0 0.0
  %5365 = vmatpush2.msra.mxu0 0.0
  %5366 = vmatprep.subr.mxu0 0.0
  %5367 = vmatpush2.msra.mxu0 0.0
  %5368 = vmatprep.subr.mxu0 0.0
  %5369 = vmatpush2.msra.mxu0 0.0
  %5370 = vmatprep.subr.mxu0 0.0
  %5371 = vmatpush2.msra.mxu0 0.0
  %5372 = vmatprep.subr.mxu0 0.0
  %5373 = vmatpush2.msra.mxu0 0.0
  %5374 = vmatprep.subr.mxu0 0.0
  %5375 = vmatpush2.msra.mxu0 0.0
  %5376 = vmatprep.subr.mxu0 0.0
  %5377 = vmatpush2.msra.mxu0 0.0
  %5378 = vmatprep.subr.mxu0 0.0
  %5379 = vmatpush2.msra.mxu0 0.0
  %5380 = vmatprep.subr.mxu0 0.0
  %5381 = vmatpush2.msra.mxu0 0.0
  %5382 = vmatprep.subr.mxu0 0.0
  %5383 = vmatpush2.msra.mxu0 0.0
  %5384 = vmatprep.subr.mxu0 0.0
  %5385 = vmatpush2.msra.mxu0 0.0
  %5386 = vmatprep.subr.mxu0 0.0
  %5387 = vmatpush2.msra.mxu0 0.0
  %5388 = vmatprep.subr.mxu0 0.0
  %5389 = vmatpush2.msra.mxu0 0.0
  %5390 = vmatprep.mubr.f32.mxu0 0.0
  %5391 = vmatmul.mubr.f32.gmra.mxu0 %v5100
  %v5392 = vpop.f32.mrf.mxu0
  %v5393 = vadd.f32 %v797, %v5392
  %v5394 = vpop.f32.mrf.mxu0
  %5395 = vdwg.mxu0
  %5396 = vmatprep.subr.mxu0 0.0
  %5397 = vmatpush1.msra.mxu0 0.0
  %5398 = vmatprep.subr.mxu0 0.0
  %5399 = vmatpush1.msra.mxu0 0.0
  %5400 = vmatprep.subr.mxu0 0.0
  %5401 = vmatpush1.msra.mxu0 0.0
  %5402 = vmatprep.subr.mxu0 0.0
  %5403 = vmatpush1.msra.mxu0 0.0
  %5404 = vmatprep.subr.mxu0 0.0
  %5405 = vmatpush1.msra.mxu0 0.0
  %5406 = vmatprep.subr.mxu0 0.0
  %5407 = vmatpush1.msra.mxu0 0.0
  %5408 = vmatprep.subr.mxu0 0.0
  %5409 = vmatpush1.msra.mxu0 0.0
  %5410 = vmatprep.subr.mxu0 0.0
  %5411 = vmatpush1.msra.mxu0 0.0
  %5412 = vmatprep.subr.mxu0 0.0
  %5413 = vmatpush1.msra.mxu0 0.0
  %5414 = vmatprep.subr.mxu0 0.0
  %5415 = vmatpush1.msra.mxu0 0.0
  %5416 = vmatprep.subr.mxu0 0.0
  %5417 = vmatpush1.msra.mxu0 0.0
  %5418 = vmatprep.subr.mxu0 0.0
  %5419 = vmatpush1.msra.mxu0 0.0
  %5420 = vmatprep.subr.mxu0 0.0
  %5421 = vmatpush1.msra.mxu0 %v86
  %5422 = vmatprep.subr.mxu0 0.0
  %5423 = vmatpush1.msra.mxu0 %v85
  %5424 = vmatprep.subr.mxu0 0.0
  %5425 = vmatpush1.msra.mxu0 %v84
  %5426 = vmatprep.subr.mxu0 0.0
  %5427 = vmatpush1.msra.mxu0 %v83
  %5428 = vmatprep.subr.mxu0 0.0
  %5429 = vmatpush2.msra.mxu0 0.0
  %5430 = vmatprep.subr.mxu0 0.0
  %5431 = vmatpush2.msra.mxu0 0.0
  %5432 = vmatprep.subr.mxu0 0.0
  %5433 = vmatpush2.msra.mxu0 0.0
  %5434 = vmatprep.subr.mxu0 0.0
  %5435 = vmatpush2.msra.mxu0 0.0
  %5436 = vmatprep.subr.mxu0 0.0
  %5437 = vmatpush2.msra.mxu0 0.0
  %5438 = vmatprep.subr.mxu0 0.0
  %5439 = vmatpush2.msra.mxu0 0.0
  %5440 = vmatprep.subr.mxu0 0.0
  %5441 = vmatpush2.msra.mxu0 0.0
  %5442 = vmatprep.subr.mxu0 0.0
  %5443 = vmatpush2.msra.mxu0 0.0
  %5444 = vmatprep.subr.mxu0 0.0
  %5445 = vmatpush2.msra.mxu0 0.0
  %5446 = vmatprep.subr.mxu0 0.0
  %5447 = vmatpush2.msra.mxu0 0.0
  %5448 = vmatprep.subr.mxu0 0.0
  %5449 = vmatpush2.msra.mxu0 0.0
  %5450 = vmatprep.subr.mxu0 0.0
  %5451 = vmatpush2.msra.mxu0 0.0
  %5452 = vmatprep.subr.mxu0 0.0
  %5453 = vmatpush2.msra.mxu0 0.0
  %5454 = vmatprep.subr.mxu0 0.0
  %5455 = vmatpush2.msra.mxu0 0.0
  %5456 = vmatprep.subr.mxu0 0.0
  %5457 = vmatpush2.msra.mxu0 0.0
  %5458 = vmatprep.subr.mxu0 0.0
  %5459 = vmatpush2.msra.mxu0 0.0
  %5460 = vmatprep.mubr.f32.mxu0 0.0
  %5461 = vmatmul.mubr.f32.gmra.mxu0 %v4725
  %v5462 = vpop.f32.mrf.mxu0
  %v5463 = vadd.f32 %v873, %v5462
  %v5464 = vpop.f32.mrf.mxu0
  %5465 = vdwg.mxu0
  %v5466 = vmul.f32 %v5178, %v5463
  %v5467 = vadd.f32 %v5393, %v5466
  %v5468 = vtanh.pop %v5467
  %v5469 = vsub.f32 1.0, %v5325
  %v5470 = vmul.f32 %v5469, %v5468
  %v5471 = vmul.f32 %v5325, %v4718
  %v5472 = vadd.f32 %v5470, %v5471
  %s5473 = scalar_lea.vmem %s9, 192
  %v5474 = vld [vmem:[%s5473] sm:$0xff]
  %v5475 = vld [vmem:[%s5473 + $0x8] sm:$0xff]
  %v5476 = vld [vmem:[%s5473 + $0x10] sm:$0xff]
  %v5477 = vld [vmem:[%s5473 + $0x18] sm:$0xff]
  %v5479 = vsel %vm243, %v5472, 0
  %5481 = vmatprep.subr.mxu0 0.0
  %5482 = vmatpush1.msra.mxu0 0.0
  %5483 = vmatprep.subr.mxu0 0.0
  %5484 = vmatpush1.msra.mxu0 0.0
  %5485 = vmatprep.subr.mxu0 0.0
  %5486 = vmatpush1.msra.mxu0 0.0
  %5487 = vmatprep.subr.mxu0 0.0
  %5488 = vmatpush1.msra.mxu0 0.0
  %5489 = vmatprep.subr.mxu0 0.0
  %5490 = vmatpush1.msra.mxu0 0.0
  %5491 = vmatprep.subr.mxu0 0.0
  %5492 = vmatpush1.msra.mxu0 0.0
  %5493 = vmatprep.subr.mxu0 0.0
  %5494 = vmatpush1.msra.mxu0 0.0
  %5495 = vmatprep.subr.mxu0 0.0
  %5496 = vmatpush1.msra.mxu0 0.0
  %5497 = vmatprep.subr.mxu0 0.0
  %5498 = vmatpush1.msra.mxu0 0.0
  %5499 = vmatprep.subr.mxu0 0.0
  %5500 = vmatpush1.msra.mxu0 0.0
  %5501 = vmatprep.subr.mxu0 0.0
  %5502 = vmatpush1.msra.mxu0 0.0
  %5503 = vmatprep.subr.mxu0 0.0
  %5504 = vmatpush1.msra.mxu0 0.0
  %5505 = vmatprep.subr.mxu0 0.0
  %5506 = vmatpush1.msra.mxu0 %v5477
  %5507 = vmatprep.subr.mxu0 0.0
  %5508 = vmatpush1.msra.mxu0 %v5476
  %5509 = vmatprep.subr.mxu0 0.0
  %5510 = vmatpush1.msra.mxu0 %v5475
  %5511 = vmatprep.subr.mxu0 0.0
  %5512 = vmatpush1.msra.mxu0 %v5474
  %5513 = vmatprep.subr.mxu0 0.0
  %5514 = vmatpush2.msra.mxu0 0.0
  %5515 = vmatprep.subr.mxu0 0.0
  %5516 = vmatpush2.msra.mxu0 0.0
  %5517 = vmatprep.subr.mxu0 0.0
  %5518 = vmatpush2.msra.mxu0 0.0
  %5519 = vmatprep.subr.mxu0 0.0
  %5520 = vmatpush2.msra.mxu0 0.0
  %5521 = vmatprep.subr.mxu0 0.0
  %5522 = vmatpush2.msra.mxu0 0.0
  %5523 = vmatprep.subr.mxu0 0.0
  %5524 = vmatpush2.msra.mxu0 0.0
  %5525 = vmatprep.subr.mxu0 0.0
  %5526 = vmatpush2.msra.mxu0 0.0
  %5527 = vmatprep.subr.mxu0 0.0
  %5528 = vmatpush2.msra.mxu0 0.0
  %5529 = vmatprep.subr.mxu0 0.0
  %5530 = vmatpush2.msra.mxu0 0.0
  %5531 = vmatprep.subr.mxu0 0.0
  %5532 = vmatpush2.msra.mxu0 0.0
  %5533 = vmatprep.subr.mxu0 0.0
  %5534 = vmatpush2.msra.mxu0 0.0
  %5535 = vmatprep.subr.mxu0 0.0
  %5536 = vmatpush2.msra.mxu0 0.0
  %5537 = vmatprep.subr.mxu0 0.0
  %5538 = vmatpush2.msra.mxu0 0.0
  %5539 = vmatprep.subr.mxu0 0.0
  %5540 = vmatpush2.msra.mxu0 0.0
  %5541 = vmatprep.subr.mxu0 0.0
  %5542 = vmatpush2.msra.mxu0 0.0
  %5543 = vmatprep.subr.mxu0 0.0
  %5544 = vmatpush2.msra.mxu0 0.0
  %5545 = vmatprep.mubr.f32.mxu0 0.0
  %5546 = vmatmul.mubr.f32.gmra.mxu0 %v5479
  %v5547 = vpop.f32.mrf.mxu0
  %v5548 = vadd.f32 0.0, %v5547
  %v5549 = vpop.f32.mrf.mxu0
  %5550 = vdwg.mxu0
  %v5551 = vadd.f32 %v4797, %v5548
  %5552 = vmatprep.subr.mxu0 0.0
  %5553 = vmatpush1.msra.mxu0 0.0
  %5554 = vmatprep.subr.mxu0 0.0
  %5555 = vmatpush1.msra.mxu0 0.0
  %5556 = vmatprep.subr.mxu0 0.0
  %5557 = vmatpush1.msra.mxu0 0.0
  %5558 = vmatprep.subr.mxu0 0.0
  %5559 = vmatpush1.msra.mxu0 0.0
  %5560 = vmatprep.subr.mxu0 0.0
  %5561 = vmatpush1.msra.mxu0 0.0
  %5562 = vmatprep.subr.mxu0 0.0
  %5563 = vmatpush1.msra.mxu0 0.0
  %5564 = vmatprep.subr.mxu0 0.0
  %5565 = vmatpush1.msra.mxu0 0.0
  %5566 = vmatprep.subr.mxu0 0.0
  %5567 = vmatpush1.msra.mxu0 0.0
  %5568 = vmatprep.subr.mxu0 0.0
  %5569 = vmatpush1.msra.mxu0 0.0
  %5570 = vmatprep.subr.mxu0 0.0
  %5571 = vmatpush1.msra.mxu0 0.0
  %5572 = vmatprep.subr.mxu0 0.0
  %5573 = vmatpush1.msra.mxu0 0.0
  %5574 = vmatprep.subr.mxu0 0.0
  %5575 = vmatpush1.msra.mxu0 0.0
  %5576 = vmatprep.subr.mxu0 0.0
  %5577 = vmatpush1.msra.mxu0 %v48
  %5578 = vmatprep.subr.mxu0 0.0
  %5579 = vmatpush1.msra.mxu0 %v47
  %5580 = vmatprep.subr.mxu0 0.0
  %5581 = vmatpush1.msra.mxu0 %v46
  %5582 = vmatprep.subr.mxu0 0.0
  %5583 = vmatpush1.msra.mxu0 %v45
  %5584 = vmatprep.subr.mxu0 0.0
  %5585 = vmatpush2.msra.mxu0 0.0
  %5586 = vmatprep.subr.mxu0 0.0
  %5587 = vmatpush2.msra.mxu0 0.0
  %5588 = vmatprep.subr.mxu0 0.0
  %5589 = vmatpush2.msra.mxu0 0.0
  %5590 = vmatprep.subr.mxu0 0.0
  %5591 = vmatpush2.msra.mxu0 0.0
  %5592 = vmatprep.subr.mxu0 0.0
  %5593 = vmatpush2.msra.mxu0 0.0
  %5594 = vmatprep.subr.mxu0 0.0
  %5595 = vmatpush2.msra.mxu0 0.0
  %5596 = vmatprep.subr.mxu0 0.0
  %5597 = vmatpush2.msra.mxu0 0.0
  %5598 = vmatprep.subr.mxu0 0.0
  %5599 = vmatpush2.msra.mxu0 0.0
  %5600 = vmatprep.subr.mxu0 0.0
  %5601 = vmatpush2.msra.mxu0 0.0
  %5602 = vmatprep.subr.mxu0 0.0
  %5603 = vmatpush2.msra.mxu0 0.0
  %5604 = vmatprep.subr.mxu0 0.0
  %5605 = vmatpush2.msra.mxu0 0.0
  %5606 = vmatprep.subr.mxu0 0.0
  %5607 = vmatpush2.msra.mxu0 0.0
  %5608 = vmatprep.subr.mxu0 0.0
  %5609 = vmatpush2.msra.mxu0 0.0
  %5610 = vmatprep.subr.mxu0 0.0
  %5611 = vmatpush2.msra.mxu0 0.0
  %5612 = vmatprep.subr.mxu0 0.0
  %5613 = vmatpush2.msra.mxu0 0.0
  %5614 = vmatprep.subr.mxu0 0.0
  %5615 = vmatpush2.msra.mxu0 0.0
  %5616 = vmatprep.mubr.f32.mxu0 0.0
  %5617 = vmatmul.mubr.f32.gmra.mxu0 %v5100
  %v5618 = vpop.f32.mrf.mxu0
  %v5619 = vadd.f32 0.0, %v5618
  %v5620 = vpop.f32.mrf.mxu0
  %5621 = vdwg.mxu0
  %v5622 = vadd.f32 %v186, %v5619
  %v5623 = vxor.u32 %v5622, 2147483648
  %v5624 = vmul.f32 %v5623, 1.442695
  %v5625 = vpow.pop %v5624
  %v5626 = vadd.f32 %v5625, 1.0
  %v5627 = vrcp.pop %v5626
  %v5628 = vmul.f32 1.0, %v5627
  %5629 = vmatprep.subr.mxu0 0.0
  %5630 = vmatpush1.msra.mxu0 0.0
  %5631 = vmatprep.subr.mxu0 0.0
  %5632 = vmatpush1.msra.mxu0 0.0
  %5633 = vmatprep.subr.mxu0 0.0
  %5634 = vmatpush1.msra.mxu0 0.0
  %5635 = vmatprep.subr.mxu0 0.0
  %5636 = vmatpush1.msra.mxu0 0.0
  %5637 = vmatprep.subr.mxu0 0.0
  %5638 = vmatpush1.msra.mxu0 0.0
  %5639 = vmatprep.subr.mxu0 0.0
  %5640 = vmatpush1.msra.mxu0 0.0
  %5641 = vmatprep.subr.mxu0 0.0
  %5642 = vmatpush1.msra.mxu0 0.0
  %5643 = vmatprep.subr.mxu0 0.0
  %5644 = vmatpush1.msra.mxu0 0.0
  %5645 = vmatprep.subr.mxu0 0.0
  %5646 = vmatpush1.msra.mxu0 0.0
  %5647 = vmatprep.subr.mxu0 0.0
  %5648 = vmatpush1.msra.mxu0 0.0
  %5649 = vmatprep.subr.mxu0 0.0
  %5650 = vmatpush1.msra.mxu0 0.0
  %5651 = vmatprep.subr.mxu0 0.0
  %5652 = vmatpush1.msra.mxu0 0.0
  %5653 = vmatprep.subr.mxu0 0.0
  %5654 = vmatpush1.msra.mxu0 %v53
  %5655 = vmatprep.subr.mxu0 0.0
  %5656 = vmatpush1.msra.mxu0 %v52
  %5657 = vmatprep.subr.mxu0 0.0
  %5658 = vmatpush1.msra.mxu0 %v51
  %5659 = vmatprep.subr.mxu0 0.0
  %5660 = vmatpush1.msra.mxu0 %v50
  %5661 = vmatprep.subr.mxu0 0.0
  %5662 = vmatpush2.msra.mxu0 0.0
  %5663 = vmatprep.subr.mxu0 0.0
  %5664 = vmatpush2.msra.mxu0 0.0
  %5665 = vmatprep.subr.mxu0 0.0
  %5666 = vmatpush2.msra.mxu0 0.0
  %5667 = vmatprep.subr.mxu0 0.0
  %5668 = vmatpush2.msra.mxu0 0.0
  %5669 = vmatprep.subr.mxu0 0.0
  %5670 = vmatpush2.msra.mxu0 0.0
  %5671 = vmatprep.subr.mxu0 0.0
  %5672 = vmatpush2.msra.mxu0 0.0
  %5673 = vmatprep.subr.mxu0 0.0
  %5674 = vmatpush2.msra.mxu0 0.0
  %5675 = vmatprep.subr.mxu0 0.0
  %5676 = vmatpush2.msra.mxu0 0.0
  %5677 = vmatprep.subr.mxu0 0.0
  %5678 = vmatpush2.msra.mxu0 0.0
  %5679 = vmatprep.subr.mxu0 0.0
  %5680 = vmatpush2.msra.mxu0 0.0
  %5681 = vmatprep.subr.mxu0 0.0
  %5682 = vmatpush2.msra.mxu0 0.0
  %5683 = vmatprep.subr.mxu0 0.0
  %5684 = vmatpush2.msra.mxu0 0.0
  %5685 = vmatprep.subr.mxu0 0.0
  %5686 = vmatpush2.msra.mxu0 0.0
  %5687 = vmatprep.subr.mxu0 0.0
  %5688 = vmatpush2.msra.mxu0 0.0
  %5689 = vmatprep.subr.mxu0 0.0
  %5690 = vmatpush2.msra.mxu0 0.0
  %5691 = vmatprep.subr.mxu0 0.0
  %5692 = vmatpush2.msra.mxu0 0.0
  %5693 = vmatprep.mubr.f32.mxu0 0.0
  %5694 = vmatmul.mubr.f32.gmra.mxu0 %v5100
  %v5695 = vpop.f32.mrf.mxu0
  %v5696 = vadd.f32 0.0, %v5695
  %v5697 = vpop.f32.mrf.mxu0
  %5698 = vdwg.mxu0
  %v5699 = vadd.f32 %v214, %v5696
  %v5700 = vxor.u32 %v5699, 2147483648
  %v5701 = vmul.f32 %v5700, 1.442695
  %v5702 = vpow.pop %v5701
  %v5703 = vadd.f32 %v5702, 1.0
  %v5704 = vrcp.pop %v5703
  %v5705 = vmul.f32 1.0, %v5704
  %5706 = vmatprep.subr.mxu0 0.0
  %5707 = vmatpush1.msra.mxu0 0.0
  %5708 = vmatprep.subr.mxu0 0.0
  %5709 = vmatpush1.msra.mxu0 0.0
  %5710 = vmatprep.subr.mxu0 0.0
  %5711 = vmatpush1.msra.mxu0 0.0
  %5712 = vmatprep.subr.mxu0 0.0
  %5713 = vmatpush1.msra.mxu0 0.0
  %5714 = vmatprep.subr.mxu0 0.0
  %5715 = vmatpush1.msra.mxu0 0.0
  %5716 = vmatprep.subr.mxu0 0.0
  %5717 = vmatpush1.msra.mxu0 0.0
  %5718 = vmatprep.subr.mxu0 0.0
  %5719 = vmatpush1.msra.mxu0 0.0
  %5720 = vmatprep.subr.mxu0 0.0
  %5721 = vmatpush1.msra.mxu0 0.0
  %5722 = vmatprep.subr.mxu0 0.0
  %5723 = vmatpush1.msra.mxu0 0.0
  %5724 = vmatprep.subr.mxu0 0.0
  %5725 = vmatpush1.msra.mxu0 0.0
  %5726 = vmatprep.subr.mxu0 0.0
  %5727 = vmatpush1.msra.mxu0 0.0
  %5728 = vmatprep.subr.mxu0 0.0
  %5729 = vmatpush1.msra.mxu0 0.0
  %5730 = vmatprep.subr.mxu0 0.0
  %5731 = vmatpush1.msra.mxu0 %v58
  %5732 = vmatprep.subr.mxu0 0.0
  %5733 = vmatpush1.msra.mxu0 %v57
  %5734 = vmatprep.subr.mxu0 0.0
  %5735 = vmatpush1.msra.mxu0 %v56
  %5736 = vmatprep.subr.mxu0 0.0
  %5737 = vmatpush1.msra.mxu0 %v55
  %5738 = vmatprep.subr.mxu0 0.0
  %5739 = vmatpush2.msra.mxu0 0.0
  %5740 = vmatprep.subr.mxu0 0.0
  %5741 = vmatpush2.msra.mxu0 0.0
  %5742 = vmatprep.subr.mxu0 0.0
  %5743 = vmatpush2.msra.mxu0 0.0
  %5744 = vmatprep.subr.mxu0 0.0
  %5745 = vmatpush2.msra.mxu0 0.0
  %5746 = vmatprep.subr.mxu0 0.0
  %5747 = vmatpush2.msra.mxu0 0.0
  %5748 = vmatprep.subr.mxu0 0.0
  %5749 = vmatpush2.msra.mxu0 0.0
  %5750 = vmatprep.subr.mxu0 0.0
  %5751 = vmatpush2.msra.mxu0 0.0
  %5752 = vmatprep.subr.mxu0 0.0
  %5753 = vmatpush2.msra.mxu0 0.0
  %5754 = vmatprep.subr.mxu0 0.0
  %5755 = vmatpush2.msra.mxu0 0.0
  %5756 = vmatprep.subr.mxu0 0.0
  %5757 = vmatpush2.msra.mxu0 0.0
  %5758 = vmatprep.subr.mxu0 0.0
  %5759 = vmatpush2.msra.mxu0 0.0
  %5760 = vmatprep.subr.mxu0 0.0
  %5761 = vmatpush2.msra.mxu0 0.0
  %5762 = vmatprep.subr.mxu0 0.0
  %5763 = vmatpush2.msra.mxu0 0.0
  %5764 = vmatprep.subr.mxu0 0.0
  %5765 = vmatpush2.msra.mxu0 0.0
  %5766 = vmatprep.subr.mxu0 0.0
  %5767 = vmatpush2.msra.mxu0 0.0
  %5768 = vmatprep.subr.mxu0 0.0
  %5769 = vmatpush2.msra.mxu0 0.0
  %5770 = vmatprep.mubr.f32.mxu0 0.0
  %5771 = vmatmul.mubr.f32.gmra.mxu0 %v5100
  %v5772 = vpop.f32.mrf.mxu0
  %v5773 = vadd.f32 %v405, %v5772
  %v5774 = vpop.f32.mrf.mxu0
  %5775 = vdwg.mxu0
  %v5776 = vmul.f32 %v5628, %v5773
  %v5777 = vadd.f32 %v242, %v5776
  %v5778 = vtanh.pop %v5777
  %v5779 = vsub.f32 1.0, %v5705
  %v5780 = vmul.f32 %v5779, %v5778
  %v5781 = vmul.f32 %v5705, %v5028
  %v5782 = vadd.f32 %v5780, %v5781
  %5783 = vmatprep.subr.mxu0 0.0
  %5784 = vmatpush1.msra.mxu0 0.0
  %5785 = vmatprep.subr.mxu0 0.0
  %5786 = vmatpush1.msra.mxu0 0.0
  %5787 = vmatprep.subr.mxu0 0.0
  %5788 = vmatpush1.msra.mxu0 0.0
  %5789 = vmatprep.subr.mxu0 0.0
  %5790 = vmatpush1.msra.mxu0 0.0
  %5791 = vmatprep.subr.mxu0 0.0
  %5792 = vmatpush1.msra.mxu0 0.0
  %5793 = vmatprep.subr.mxu0 0.0
  %5794 = vmatpush1.msra.mxu0 0.0
  %5795 = vmatprep.subr.mxu0 0.0
  %5796 = vmatpush1.msra.mxu0 0.0
  %5797 = vmatprep.subr.mxu0 0.0
  %5798 = vmatpush1.msra.mxu0 0.0
  %5799 = vmatprep.subr.mxu0 0.0
  %5800 = vmatpush1.msra.mxu0 0.0
  %5801 = vmatprep.subr.mxu0 0.0
  %5802 = vmatpush1.msra.mxu0 0.0
  %5803 = vmatprep.subr.mxu0 0.0
  %5804 = vmatpush1.msra.mxu0 0.0
  %5805 = vmatprep.subr.mxu0 0.0
  %5806 = vmatpush1.msra.mxu0 0.0
  %5807 = vmatprep.subr.mxu0 0.0
  %5808 = vmatpush1.msra.mxu0 %v76
  %5809 = vmatprep.subr.mxu0 0.0
  %5810 = vmatpush1.msra.mxu0 %v75
  %5811 = vmatprep.subr.mxu0 0.0
  %5812 = vmatpush1.msra.mxu0 %v74
  %5813 = vmatprep.subr.mxu0 0.0
  %5814 = vmatpush1.msra.mxu0 %v73
  %5815 = vmatprep.subr.mxu0 0.0
  %5816 = vmatpush2.msra.mxu0 0.0
  %5817 = vmatprep.subr.mxu0 0.0
  %5818 = vmatpush2.msra.mxu0 0.0
  %5819 = vmatprep.subr.mxu0 0.0
  %5820 = vmatpush2.msra.mxu0 0.0
  %5821 = vmatprep.subr.mxu0 0.0
  %5822 = vmatpush2.msra.mxu0 0.0
  %5823 = vmatprep.subr.mxu0 0.0
  %5824 = vmatpush2.msra.mxu0 0.0
  %5825 = vmatprep.subr.mxu0 0.0
  %5826 = vmatpush2.msra.mxu0 0.0
  %5827 = vmatprep.subr.mxu0 0.0
  %5828 = vmatpush2.msra.mxu0 0.0
  %5829 = vmatprep.subr.mxu0 0.0
  %5830 = vmatpush2.msra.mxu0 0.0
  %5831 = vmatprep.subr.mxu0 0.0
  %5832 = vmatpush2.msra.mxu0 0.0
  %5833 = vmatprep.subr.mxu0 0.0
  %5834 = vmatpush2.msra.mxu0 0.0
  %5835 = vmatprep.subr.mxu0 0.0
  %5836 = vmatpush2.msra.mxu0 0.0
  %5837 = vmatprep.subr.mxu0 0.0
  %5838 = vmatpush2.msra.mxu0 0.0
  %5839 = vmatprep.subr.mxu0 0.0
  %5840 = vmatpush2.msra.mxu0 0.0
  %5841 = vmatprep.subr.mxu0 0.0
  %5842 = vmatpush2.msra.mxu0 0.0
  %5843 = vmatprep.subr.mxu0 0.0
  %5844 = vmatpush2.msra.mxu0 0.0
  %5845 = vmatprep.subr.mxu0 0.0
  %5846 = vmatpush2.msra.mxu0 0.0
  %5847 = vmatprep.mubr.f32.mxu0 0.0
  %5848 = vmatmul.mubr.f32.gmra.mxu0 %v5479
  %v5849 = vpop.f32.mrf.mxu0
  %v5850 = vadd.f32 0.0, %v5849
  %v5851 = vpop.f32.mrf.mxu0
  %5852 = vdwg.mxu0
  %v5854 = vsel %vm243, %v5782, 0
  %5856 = vmatprep.subr.mxu0 0.0
  %5857 = vmatpush1.msra.mxu0 0.0
  %5858 = vmatprep.subr.mxu0 0.0
  %5859 = vmatpush1.msra.mxu0 0.0
  %5860 = vmatprep.subr.mxu0 0.0
  %5861 = vmatpush1.msra.mxu0 0.0
  %5862 = vmatprep.subr.mxu0 0.0
  %5863 = vmatpush1.msra.mxu0 0.0
  %5864 = vmatprep.subr.mxu0 0.0
  %5865 = vmatpush1.msra.mxu0 0.0
  %5866 = vmatprep.subr.mxu0 0.0
  %5867 = vmatpush1.msra.mxu0 0.0
  %5868 = vmatprep.subr.mxu0 0.0
  %5869 = vmatpush1.msra.mxu0 0.0
  %5870 = vmatprep.subr.mxu0 0.0
  %5871 = vmatpush1.msra.mxu0 0.0
  %5872 = vmatprep.subr.mxu0 0.0
  %5873 = vmatpush1.msra.mxu0 0.0
  %5874 = vmatprep.subr.mxu0 0.0
  %5875 = vmatpush1.msra.mxu0 0.0
  %5876 = vmatprep.subr.mxu0 0.0
  %5877 = vmatpush1.msra.mxu0 0.0
  %5878 = vmatprep.subr.mxu0 0.0
  %5879 = vmatpush1.msra.mxu0 0.0
  %5880 = vmatprep.subr.mxu0 0.0
  %5881 = vmatpush1.msra.mxu0 %v62
  %5882 = vmatprep.subr.mxu0 0.0
  %5883 = vmatpush1.msra.mxu0 %v61
  %5884 = vmatprep.subr.mxu0 0.0
  %5885 = vmatpush1.msra.mxu0 %v60
  %5886 = vmatprep.subr.mxu0 0.0
  %5887 = vmatpush1.msra.mxu0 %v59
  %5888 = vmatprep.subr.mxu0 0.0
  %5889 = vmatpush2.msra.mxu0 0.0
  %5890 = vmatprep.subr.mxu0 0.0
  %5891 = vmatpush2.msra.mxu0 0.0
  %5892 = vmatprep.subr.mxu0 0.0
  %5893 = vmatpush2.msra.mxu0 0.0
  %5894 = vmatprep.subr.mxu0 0.0
  %5895 = vmatpush2.msra.mxu0 0.0
  %5896 = vmatprep.subr.mxu0 0.0
  %5897 = vmatpush2.msra.mxu0 0.0
  %5898 = vmatprep.subr.mxu0 0.0
  %5899 = vmatpush2.msra.mxu0 0.0
  %5900 = vmatprep.subr.mxu0 0.0
  %5901 = vmatpush2.msra.mxu0 0.0
  %5902 = vmatprep.subr.mxu0 0.0
  %5903 = vmatpush2.msra.mxu0 0.0
  %5904 = vmatprep.subr.mxu0 0.0
  %5905 = vmatpush2.msra.mxu0 0.0
  %5906 = vmatprep.subr.mxu0 0.0
  %5907 = vmatpush2.msra.mxu0 0.0
  %5908 = vmatprep.subr.mxu0 0.0
  %5909 = vmatpush2.msra.mxu0 0.0
  %5910 = vmatprep.subr.mxu0 0.0
  %5911 = vmatpush2.msra.mxu0 0.0
  %5912 = vmatprep.subr.mxu0 0.0
  %5913 = vmatpush2.msra.mxu0 0.0
  %5914 = vmatprep.subr.mxu0 0.0
  %5915 = vmatpush2.msra.mxu0 0.0
  %5916 = vmatprep.subr.mxu0 0.0
  %5917 = vmatpush2.msra.mxu0 0.0
  %5918 = vmatprep.subr.mxu0 0.0
  %5919 = vmatpush2.msra.mxu0 0.0
  %5920 = vmatprep.mubr.f32.mxu0 0.0
  %5921 = vmatmul.mubr.f32.gmra.mxu0 %v5854
  %v5922 = vpop.f32.mrf.mxu0
  %v5923 = vadd.f32 %v5850, %v5922
  %v5924 = vpop.f32.mrf.mxu0
  %5925 = vdwg.mxu0
  %v5926 = vadd.f32 %v5923, %v631
  %v5927 = vxor.u32 %v5926, 2147483648
  %v5928 = vmul.f32 %v5927, 1.442695
  %v5929 = vpow.pop %v5928
  %v5930 = vadd.f32 %v5929, 1.0
  %v5931 = vrcp.pop %v5930
  %v5932 = vmul.f32 1.0, %v5931
  %5933 = vmatprep.subr.mxu0 0.0
  %5934 = vmatpush1.msra.mxu0 0.0
  %5935 = vmatprep.subr.mxu0 0.0
  %5936 = vmatpush1.msra.mxu0 0.0
  %5937 = vmatprep.subr.mxu0 0.0
  %5938 = vmatpush1.msra.mxu0 0.0
  %5939 = vmatprep.subr.mxu0 0.0
  %5940 = vmatpush1.msra.mxu0 0.0
  %5941 = vmatprep.subr.mxu0 0.0
  %5942 = vmatpush1.msra.mxu0 0.0
  %5943 = vmatprep.subr.mxu0 0.0
  %5944 = vmatpush1.msra.mxu0 0.0
  %5945 = vmatprep.subr.mxu0 0.0
  %5946 = vmatpush1.msra.mxu0 0.0
  %5947 = vmatprep.subr.mxu0 0.0
  %5948 = vmatpush1.msra.mxu0 0.0
  %5949 = vmatprep.subr.mxu0 0.0
  %5950 = vmatpush1.msra.mxu0 0.0
  %5951 = vmatprep.subr.mxu0 0.0
  %5952 = vmatpush1.msra.mxu0 0.0
  %5953 = vmatprep.subr.mxu0 0.0
  %5954 = vmatpush1.msra.mxu0 0.0
  %5955 = vmatprep.subr.mxu0 0.0
  %5956 = vmatpush1.msra.mxu0 0.0
  %5957 = vmatprep.subr.mxu0 0.0
  %5958 = vmatpush1.msra.mxu0 %v81
  %5959 = vmatprep.subr.mxu0 0.0
  %5960 = vmatpush1.msra.mxu0 %v80
  %5961 = vmatprep.subr.mxu0 0.0
  %5962 = vmatpush1.msra.mxu0 %v79
  %5963 = vmatprep.subr.mxu0 0.0
  %5964 = vmatpush1.msra.mxu0 %v78
  %5965 = vmatprep.subr.mxu0 0.0
  %5966 = vmatpush2.msra.mxu0 0.0
  %5967 = vmatprep.subr.mxu0 0.0
  %5968 = vmatpush2.msra.mxu0 0.0
  %5969 = vmatprep.subr.mxu0 0.0
  %5970 = vmatpush2.msra.mxu0 0.0
  %5971 = vmatprep.subr.mxu0 0.0
  %5972 = vmatpush2.msra.mxu0 0.0
  %5973 = vmatprep.subr.mxu0 0.0
  %5974 = vmatpush2.msra.mxu0 0.0
  %5975 = vmatprep.subr.mxu0 0.0
  %5976 = vmatpush2.msra.mxu0 0.0
  %5977 = vmatprep.subr.mxu0 0.0
  %5978 = vmatpush2.msra.mxu0 0.0
  %5979 = vmatprep.subr.mxu0 0.0
  %5980 = vmatpush2.msra.mxu0 0.0
  %5981 = vmatprep.subr.mxu0 0.0
  %5982 = vmatpush2.msra.mxu0 0.0
  %5983 = vmatprep.subr.mxu0 0.0
  %5984 = vmatpush2.msra.mxu0 0.0
  %5985 = vmatprep.subr.mxu0 0.0
  %5986 = vmatpush2.msra.mxu0 0.0
  %5987 = vmatprep.subr.mxu0 0.0
  %5988 = vmatpush2.msra.mxu0 0.0
  %5989 = vmatprep.subr.mxu0 0.0
  %5990 = vmatpush2.msra.mxu0 0.0
  %5991 = vmatprep.subr.mxu0 0.0
  %5992 = vmatpush2.msra.mxu0 0.0
  %5993 = vmatprep.subr.mxu0 0.0
  %5994 = vmatpush2.msra.mxu0 0.0
  %5995 = vmatprep.subr.mxu0 0.0
  %5996 = vmatpush2.msra.mxu0 0.0
  %5997 = vmatprep.mubr.f32.mxu0 0.0
  %5998 = vmatmul.mubr.f32.gmra.mxu0 %v5479
  %v5999 = vpop.f32.mrf.mxu0
  %v6000 = vadd.f32 0.0, %v5999
  %v6001 = vpop.f32.mrf.mxu0
  %6002 = vdwg.mxu0
  %6003 = vmatprep.subr.mxu0 0.0
  %6004 = vmatpush1.msra.mxu0 0.0
  %6005 = vmatprep.subr.mxu0 0.0
  %6006 = vmatpush1.msra.mxu0 0.0
  %6007 = vmatprep.subr.mxu0 0.0
  %6008 = vmatpush1.msra.mxu0 0.0
  %6009 = vmatprep.subr.mxu0 0.0
  %6010 = vmatpush1.msra.mxu0 0.0
  %6011 = vmatprep.subr.mxu0 0.0
  %6012 = vmatpush1.msra.mxu0 0.0
  %6013 = vmatprep.subr.mxu0 0.0
  %6014 = vmatpush1.msra.mxu0 0.0
  %6015 = vmatprep.subr.mxu0 0.0
  %6016 = vmatpush1.msra.mxu0 0.0
  %6017 = vmatprep.subr.mxu0 0.0
  %6018 = vmatpush1.msra.mxu0 0.0
  %6019 = vmatprep.subr.mxu0 0.0
  %6020 = vmatpush1.msra.mxu0 0.0
  %6021 = vmatprep.subr.mxu0 0.0
  %6022 = vmatpush1.msra.mxu0 0.0
  %6023 = vmatprep.subr.mxu0 0.0
  %6024 = vmatpush1.msra.mxu0 0.0
  %6025 = vmatprep.subr.mxu0 0.0
  %6026 = vmatpush1.msra.mxu0 0.0
  %6027 = vmatprep.subr.mxu0 0.0
  %6028 = vmatpush1.msra.mxu0 %v67
  %6029 = vmatprep.subr.mxu0 0.0
  %6030 = vmatpush1.msra.mxu0 %v66
  %6031 = vmatprep.subr.mxu0 0.0
  %6032 = vmatpush1.msra.mxu0 %v65
  %6033 = vmatprep.subr.mxu0 0.0
  %6034 = vmatpush1.msra.mxu0 %v64
  %6035 = vmatprep.subr.mxu0 0.0
  %6036 = vmatpush2.msra.mxu0 0.0
  %6037 = vmatprep.subr.mxu0 0.0
  %6038 = vmatpush2.msra.mxu0 0.0
  %6039 = vmatprep.subr.mxu0 0.0
  %6040 = vmatpush2.msra.mxu0 0.0
  %6041 = vmatprep.subr.mxu0 0.0
  %6042 = vmatpush2.msra.mxu0 0.0
  %6043 = vmatprep.subr.mxu0 0.0
  %6044 = vmatpush2.msra.mxu0 0.0
  %6045 = vmatprep.subr.mxu0 0.0
  %6046 = vmatpush2.msra.mxu0 0.0
  %6047 = vmatprep.subr.mxu0 0.0
  %6048 = vmatpush2.msra.mxu0 0.0
  %6049 = vmatprep.subr.mxu0 0.0
  %6050 = vmatpush2.msra.mxu0 0.0
  %6051 = vmatprep.subr.mxu0 0.0
  %6052 = vmatpush2.msra.mxu0 0.0
  %6053 = vmatprep.subr.mxu0 0.0
  %6054 = vmatpush2.msra.mxu0 0.0
  %6055 = vmatprep.subr.mxu0 0.0
  %6056 = vmatpush2.msra.mxu0 0.0
  %6057 = vmatprep.subr.mxu0 0.0
  %6058 = vmatpush2.msra.mxu0 0.0
  %6059 = vmatprep.subr.mxu0 0.0
  %6060 = vmatpush2.msra.mxu0 0.0
  %6061 = vmatprep.subr.mxu0 0.0
  %6062 = vmatpush2.msra.mxu0 0.0
  %6063 = vmatprep.subr.mxu0 0.0
  %6064 = vmatpush2.msra.mxu0 0.0
  %6065 = vmatprep.subr.mxu0 0.0
  %6066 = vmatpush2.msra.mxu0 0.0
  %6067 = vmatprep.mubr.f32.mxu0 0.0
  %6068 = vmatmul.mubr.f32.gmra.mxu0 %v5854
  %v6069 = vpop.f32.mrf.mxu0
  %v6070 = vadd.f32 %v6000, %v6069
  %v6071 = vpop.f32.mrf.mxu0
  %6072 = vdwg.mxu0
  %v6073 = vadd.f32 %v6070, %v784
  %v6074 = vxor.u32 %v6073, 2147483648
  %v6075 = vmul.f32 %v6074, 1.442695
  %v6076 = vpow.pop %v6075
  %v6077 = vadd.f32 %v6076, 1.0
  %v6078 = vrcp.pop %v6077
  %v6079 = vmul.f32 1.0, %v6078
  %6080 = vmatprep.subr.mxu0 0.0
  %6081 = vmatpush1.msra.mxu0 0.0
  %6082 = vmatprep.subr.mxu0 0.0
  %6083 = vmatpush1.msra.mxu0 0.0
  %6084 = vmatprep.subr.mxu0 0.0
  %6085 = vmatpush1.msra.mxu0 0.0
  %6086 = vmatprep.subr.mxu0 0.0
  %6087 = vmatpush1.msra.mxu0 0.0
  %6088 = vmatprep.subr.mxu0 0.0
  %6089 = vmatpush1.msra.mxu0 0.0
  %6090 = vmatprep.subr.mxu0 0.0
  %6091 = vmatpush1.msra.mxu0 0.0
  %6092 = vmatprep.subr.mxu0 0.0
  %6093 = vmatpush1.msra.mxu0 0.0
  %6094 = vmatprep.subr.mxu0 0.0
  %6095 = vmatpush1.msra.mxu0 0.0
  %6096 = vmatprep.subr.mxu0 0.0
  %6097 = vmatpush1.msra.mxu0 0.0
  %6098 = vmatprep.subr.mxu0 0.0
  %6099 = vmatpush1.msra.mxu0 0.0
  %6100 = vmatprep.subr.mxu0 0.0
  %6101 = vmatpush1.msra.mxu0 0.0
  %6102 = vmatprep.subr.mxu0 0.0
  %6103 = vmatpush1.msra.mxu0 0.0
  %6104 = vmatprep.subr.mxu0 0.0
  %6105 = vmatpush1.msra.mxu0 %v72
  %6106 = vmatprep.subr.mxu0 0.0
  %6107 = vmatpush1.msra.mxu0 %v71
  %6108 = vmatprep.subr.mxu0 0.0
  %6109 = vmatpush1.msra.mxu0 %v70
  %6110 = vmatprep.subr.mxu0 0.0
  %6111 = vmatpush1.msra.mxu0 %v69
  %6112 = vmatprep.subr.mxu0 0.0
  %6113 = vmatpush2.msra.mxu0 0.0
  %6114 = vmatprep.subr.mxu0 0.0
  %6115 = vmatpush2.msra.mxu0 0.0
  %6116 = vmatprep.subr.mxu0 0.0
  %6117 = vmatpush2.msra.mxu0 0.0
  %6118 = vmatprep.subr.mxu0 0.0
  %6119 = vmatpush2.msra.mxu0 0.0
  %6120 = vmatprep.subr.mxu0 0.0
  %6121 = vmatpush2.msra.mxu0 0.0
  %6122 = vmatprep.subr.mxu0 0.0
  %6123 = vmatpush2.msra.mxu0 0.0
  %6124 = vmatprep.subr.mxu0 0.0
  %6125 = vmatpush2.msra.mxu0 0.0
  %6126 = vmatprep.subr.mxu0 0.0
  %6127 = vmatpush2.msra.mxu0 0.0
  %6128 = vmatprep.subr.mxu0 0.0
  %6129 = vmatpush2.msra.mxu0 0.0
  %6130 = vmatprep.subr.mxu0 0.0
  %6131 = vmatpush2.msra.mxu0 0.0
  %6132 = vmatprep.subr.mxu0 0.0
  %6133 = vmatpush2.msra.mxu0 0.0
  %6134 = vmatprep.subr.mxu0 0.0
  %6135 = vmatpush2.msra.mxu0 0.0
  %6136 = vmatprep.subr.mxu0 0.0
  %6137 = vmatpush2.msra.mxu0 0.0
  %6138 = vmatprep.subr.mxu0 0.0
  %6139 = vmatpush2.msra.mxu0 0.0
  %6140 = vmatprep.subr.mxu0 0.0
  %6141 = vmatpush2.msra.mxu0 0.0
  %6142 = vmatprep.subr.mxu0 0.0
  %6143 = vmatpush2.msra.mxu0 0.0
  %6144 = vmatprep.mubr.f32.mxu0 0.0
  %6145 = vmatmul.mubr.f32.gmra.mxu0 %v5854
  %v6146 = vpop.f32.mrf.mxu0
  %v6147 = vadd.f32 %v797, %v6146
  %v6148 = vpop.f32.mrf.mxu0
  %6149 = vdwg.mxu0
  %6150 = vmatprep.subr.mxu0 0.0
  %6151 = vmatpush1.msra.mxu0 0.0
  %6152 = vmatprep.subr.mxu0 0.0
  %6153 = vmatpush1.msra.mxu0 0.0
  %6154 = vmatprep.subr.mxu0 0.0
  %6155 = vmatpush1.msra.mxu0 0.0
  %6156 = vmatprep.subr.mxu0 0.0
  %6157 = vmatpush1.msra.mxu0 0.0
  %6158 = vmatprep.subr.mxu0 0.0
  %6159 = vmatpush1.msra.mxu0 0.0
  %6160 = vmatprep.subr.mxu0 0.0
  %6161 = vmatpush1.msra.mxu0 0.0
  %6162 = vmatprep.subr.mxu0 0.0
  %6163 = vmatpush1.msra.mxu0 0.0
  %6164 = vmatprep.subr.mxu0 0.0
  %6165 = vmatpush1.msra.mxu0 0.0
  %6166 = vmatprep.subr.mxu0 0.0
  %6167 = vmatpush1.msra.mxu0 0.0
  %6168 = vmatprep.subr.mxu0 0.0
  %6169 = vmatpush1.msra.mxu0 0.0
  %6170 = vmatprep.subr.mxu0 0.0
  %6171 = vmatpush1.msra.mxu0 0.0
  %6172 = vmatprep.subr.mxu0 0.0
  %6173 = vmatpush1.msra.mxu0 0.0
  %6174 = vmatprep.subr.mxu0 0.0
  %6175 = vmatpush1.msra.mxu0 %v86
  %6176 = vmatprep.subr.mxu0 0.0
  %6177 = vmatpush1.msra.mxu0 %v85
  %6178 = vmatprep.subr.mxu0 0.0
  %6179 = vmatpush1.msra.mxu0 %v84
  %6180 = vmatprep.subr.mxu0 0.0
  %6181 = vmatpush1.msra.mxu0 %v83
  %6182 = vmatprep.subr.mxu0 0.0
  %6183 = vmatpush2.msra.mxu0 0.0
  %6184 = vmatprep.subr.mxu0 0.0
  %6185 = vmatpush2.msra.mxu0 0.0
  %6186 = vmatprep.subr.mxu0 0.0
  %6187 = vmatpush2.msra.mxu0 0.0
  %6188 = vmatprep.subr.mxu0 0.0
  %6189 = vmatpush2.msra.mxu0 0.0
  %6190 = vmatprep.subr.mxu0 0.0
  %6191 = vmatpush2.msra.mxu0 0.0
  %6192 = vmatprep.subr.mxu0 0.0
  %6193 = vmatpush2.msra.mxu0 0.0
  %6194 = vmatprep.subr.mxu0 0.0
  %6195 = vmatpush2.msra.mxu0 0.0
  %6196 = vmatprep.subr.mxu0 0.0
  %6197 = vmatpush2.msra.mxu0 0.0
  %6198 = vmatprep.subr.mxu0 0.0
  %6199 = vmatpush2.msra.mxu0 0.0
  %6200 = vmatprep.subr.mxu0 0.0
  %6201 = vmatpush2.msra.mxu0 0.0
  %6202 = vmatprep.subr.mxu0 0.0
  %6203 = vmatpush2.msra.mxu0 0.0
  %6204 = vmatprep.subr.mxu0 0.0
  %6205 = vmatpush2.msra.mxu0 0.0
  %6206 = vmatprep.subr.mxu0 0.0
  %6207 = vmatpush2.msra.mxu0 0.0
  %6208 = vmatprep.subr.mxu0 0.0
  %6209 = vmatpush2.msra.mxu0 0.0
  %6210 = vmatprep.subr.mxu0 0.0
  %6211 = vmatpush2.msra.mxu0 0.0
  %6212 = vmatprep.subr.mxu0 0.0
  %6213 = vmatpush2.msra.mxu0 0.0
  %6214 = vmatprep.mubr.f32.mxu0 0.0
  %6215 = vmatmul.mubr.f32.gmra.mxu0 %v5479
  %v6216 = vpop.f32.mrf.mxu0
  %v6217 = vadd.f32 %v873, %v6216
  %v6218 = vpop.f32.mrf.mxu0
  %6219 = vdwg.mxu0
  %v6220 = vmul.f32 %v5932, %v6217
  %v6221 = vadd.f32 %v6147, %v6220
  %v6222 = vtanh.pop %v6221
  %v6223 = vsub.f32 1.0, %v6079
  %v6224 = vmul.f32 %v6223, %v6222
  %v6225 = vmul.f32 %v6079, %v5472
  %v6226 = vadd.f32 %v6224, %v6225
  %s6227 = scalar_lea.vmem %s9, 224
  %v6228 = vld [vmem:[%s6227] sm:$0xff]
  %v6229 = vld [vmem:[%s6227 + $0x8] sm:$0xff]
  %v6230 = vld [vmem:[%s6227 + $0x10] sm:$0xff]
  %v6231 = vld [vmem:[%s6227 + $0x18] sm:$0xff]
  %v6233 = vsel %vm243, %v6226, 0
  %6235 = vmatprep.subr.mxu0 0.0
  %6236 = vmatpush1.msra.mxu0 0.0
  %6237 = vmatprep.subr.mxu0 0.0
  %6238 = vmatpush1.msra.mxu0 0.0
  %6239 = vmatprep.subr.mxu0 0.0
  %6240 = vmatpush1.msra.mxu0 0.0
  %6241 = vmatprep.subr.mxu0 0.0
  %6242 = vmatpush1.msra.mxu0 0.0
  %6243 = vmatprep.subr.mxu0 0.0
  %6244 = vmatpush1.msra.mxu0 0.0
  %6245 = vmatprep.subr.mxu0 0.0
  %6246 = vmatpush1.msra.mxu0 0.0
  %6247 = vmatprep.subr.mxu0 0.0
  %6248 = vmatpush1.msra.mxu0 0.0
  %6249 = vmatprep.subr.mxu0 0.0
  %6250 = vmatpush1.msra.mxu0 0.0
  %6251 = vmatprep.subr.mxu0 0.0
  %6252 = vmatpush1.msra.mxu0 0.0
  %6253 = vmatprep.subr.mxu0 0.0
  %6254 = vmatpush1.msra.mxu0 0.0
  %6255 = vmatprep.subr.mxu0 0.0
  %6256 = vmatpush1.msra.mxu0 0.0
  %6257 = vmatprep.subr.mxu0 0.0
  %6258 = vmatpush1.msra.mxu0 0.0
  %6259 = vmatprep.subr.mxu0 0.0
  %6260 = vmatpush1.msra.mxu0 %v6231
  %6261 = vmatprep.subr.mxu0 0.0
  %6262 = vmatpush1.msra.mxu0 %v6230
  %6263 = vmatprep.subr.mxu0 0.0
  %6264 = vmatpush1.msra.mxu0 %v6229
  %6265 = vmatprep.subr.mxu0 0.0
  %6266 = vmatpush1.msra.mxu0 %v6228
  %6267 = vmatprep.subr.mxu0 0.0
  %6268 = vmatpush2.msra.mxu0 0.0
  %6269 = vmatprep.subr.mxu0 0.0
  %6270 = vmatpush2.msra.mxu0 0.0
  %6271 = vmatprep.subr.mxu0 0.0
  %6272 = vmatpush2.msra.mxu0 0.0
  %6273 = vmatprep.subr.mxu0 0.0
  %6274 = vmatpush2.msra.mxu0 0.0
  %6275 = vmatprep.subr.mxu0 0.0
  %6276 = vmatpush2.msra.mxu0 0.0
  %6277 = vmatprep.subr.mxu0 0.0
  %6278 = vmatpush2.msra.mxu0 0.0
  %6279 = vmatprep.subr.mxu0 0.0
  %6280 = vmatpush2.msra.mxu0 0.0
  %6281 = vmatprep.subr.mxu0 0.0
  %6282 = vmatpush2.msra.mxu0 0.0
  %6283 = vmatprep.subr.mxu0 0.0
  %6284 = vmatpush2.msra.mxu0 0.0
  %6285 = vmatprep.subr.mxu0 0.0
  %6286 = vmatpush2.msra.mxu0 0.0
  %6287 = vmatprep.subr.mxu0 0.0
  %6288 = vmatpush2.msra.mxu0 0.0
  %6289 = vmatprep.subr.mxu0 0.0
  %6290 = vmatpush2.msra.mxu0 0.0
  %6291 = vmatprep.subr.mxu0 0.0
  %6292 = vmatpush2.msra.mxu0 0.0
  %6293 = vmatprep.subr.mxu0 0.0
  %6294 = vmatpush2.msra.mxu0 0.0
  %6295 = vmatprep.subr.mxu0 0.0
  %6296 = vmatpush2.msra.mxu0 0.0
  %6297 = vmatprep.subr.mxu0 0.0
  %6298 = vmatpush2.msra.mxu0 0.0
  %6299 = vmatprep.mubr.f32.mxu0 0.0
  %6300 = vmatmul.mubr.f32.gmra.mxu0 %v6233
  %v6301 = vpop.f32.mrf.mxu0
  %v6302 = vadd.f32 0.0, %v6301
  %v6303 = vpop.f32.mrf.mxu0
  %6304 = vdwg.mxu0
  %v6305 = vadd.f32 %v5551, %v6302
  %v6306 = vld [vmem:[#allocation2] sm:$0x1]
  %v6308 = vlaneseq
  %v6309 = vshrl.u32 %v6308, 7
  %v6310 = vsub.s32 0, %v6309
  %v6311 = vrot.slane %v6306, %v6310
  %v6313 = vadd.f32 %v6305, %v6311
  %vm6314 = vcmask 7168
  %6315 = vst.msk [vmem:[%s11] sm:$0xff] %vm6314, %v6313
  // Predicated region
  $region46: #{tpu_custom_call.1} parent=0 // pred_check
    _
  $region47: #{tpu_custom_call.1} parent=0 // pred_check_branch
    %6317 = sbr.rel (0) target = $region49
  $region48: #{tpu_custom_call.1} parent=0 // pred_region
    _
  $region49: #{tpu_custom_call.1} parent=0 // pred_fallthru
    _
  // Predicated region
  $region50: #{tpu_custom_call.1} parent=0 // pred_check
    _
  $region51: #{tpu_custom_call.1} parent=0 // pred_check_branch
    %6319 = sbr.rel (0) target = $region53
  $region52: #{tpu_custom_call.1} parent=0 // pred_region
    _
  $region53: #{tpu_custom_call.1} parent=0 // pred_fallthru
    _

</llo_original>
